<compile_context>
chip_gen: v7x
topology: tpu7x:2x2x1
jax: 0.10.0
libtpu: 0.0.40
codegen_flags: <defaults>
</compile_context>

<pallas_src>
import functools

import jax
import jax.numpy as jnp
from jax.experimental import pallas as pl
from jax.experimental.pallas import tpu as pltpu


# --------------------------------------------------------------------------
# Glue: im2col for 3x3 / stride-2 / pad-1 conv (pure data rearrangement,
# runs as plain XLA ops in the wrapper / at parameter-prep time).
# --------------------------------------------------------------------------
def im2col(x, k=3, s=2, p=1):
    B, C, H, W = x.shape
    OH = (H + 2 * p - k) // s + 1
    OW = (W + 2 * p - k) // s + 1
    xp = jnp.pad(x, ((0, 0), (0, 0), (p, p), (p, p)))
    cols = []
    for kh in range(k):
        for kw in range(k):
            cols.append(xp[:, :, kh:kh + s * OH:s, kw:kw + s * OW:s])  # (B,C,OH,OW)
    patches = jnp.stack(cols, axis=-1)          # (B, C, OH, OW, k*k), q = kh*3+kw
    patches = patches.transpose(0, 2, 3, 1, 4)  # (B, OH, OW, C, k*k)
    return patches.reshape(B * OH * OW, C * k * k), (B, OH, OW)


def _expand_index():
    # idx[p2*9 + q] = conv_1 output position (row-major 14x14) feeding conv_2
    # output p2 at kernel offset q, or 196 (a zero row) where conv_2 pads.
    idx = []
    for oh in range(7):
        for ow in range(7):
            for kh in range(3):
                for kw in range(3):
                    r, c = 2 * oh + kh - 1, 2 * ow + kw - 1
                    idx.append(r * 14 + c if (0 <= r < 14 and 0 <= c < 14) else 196)
    return jnp.asarray(idx, dtype=jnp.int32)     # (441,)


# --------------------------------------------------------------------------
# Deterministic parameter init (shapes follow the PyTorch module).
# --------------------------------------------------------------------------
def init_params(key):
    ks = jax.random.split(key, 11)
    p = {}
    p["emb"] = jax.random.normal(ks[0], (10, 50), jnp.float32)                    # Embedding(10, 50)
    p["lin1_w"] = jax.random.normal(ks[1], (784, 50), jnp.float32) * 0.05         # Linear(50, 784)
    p["lin1_b"] = jax.random.normal(ks[2], (784,), jnp.float32) * 0.05
    p["conv1_w"] = jax.random.normal(ks[3], (64, 2, 3, 3), jnp.float32) * 0.05    # Conv2d(2, 64)
    p["conv1_b"] = jax.random.normal(ks[4], (64,), jnp.float32) * 0.05
    p["conv2_w"] = jax.random.normal(ks[5], (128, 64, 3, 3), jnp.float32) * 0.05  # Conv2d(64, 128)
    p["conv2_b"] = jax.random.normal(ks[6], (128,), jnp.float32) * 0.05
    p["lin2_w"] = jax.random.normal(ks[7], (1, 6272), jnp.float32) * 0.02         # Linear(6272, 1)
    p["lin2_b"] = jax.random.normal(ks[8], (1,), jnp.float32) * 0.02
    p["bn_gamma"] = 1.0 + 0.1 * jax.random.normal(ks[9], (64,), jnp.float32)      # BatchNorm2d(64)
    p["bn_beta"] = 0.1 * jax.random.normal(ks[10], (64,), jnp.float32)
    p["bn_mean"] = jnp.zeros((64,), jnp.float32)   # running stats of a fresh module
    p["bn_var"] = jnp.ones((64,), jnp.float32)
    return p


# --------------------------------------------------------------------------
# One-time parameter packing: fold eval-mode BatchNorm + biases into a
# block-diagonal conv_1 weight, build the label-patch operator, repack
# conv_2 / last_linear weights into matmul-ready channels-last layouts.
# --------------------------------------------------------------------------
def prepare_params(p, eps=1e-5):
    f32, bf16 = jnp.float32, jnp.bfloat16

    s = p["bn_gamma"] / jnp.sqrt(p["bn_var"] + eps)            # (64,)
    shift = p["bn_beta"] - p["bn_mean"] * s                    # (64,)

    w1c = p["conv1_w"]                                         # (64, 2, 3, 3) OIHW
    wx = w1c[:, 0].reshape(64, 9).T * s[None, :]               # (9, 64)  x channel, BN folded
    wl = w1c[:, 1].reshape(64, 9).T * s[None, :]               # (9, 64)  label channel, BN folded
    brow = (p["conv1_b"] * s + shift)[None, :]                 # (1, 64)  bias via valid-flag column
    w19 = jnp.concatenate([wx, wl, brow], axis=0)              # (19, 64)

    # Block-diagonal conv_1 weight: input row = 9 chunks of 19 (one per conv_2
    # kernel offset), output row = 9 chunks of 64 (the matching h1 values), so
    # conv_1 emits the conv_2 im2col row directly with zero in-kernel gather.
    w1big = jnp.zeros((171, 576), f32)
    for q in range(9):
        w1big = w1big.at[q * 19:(q + 1) * 19, q * 64:(q + 1) * 64].set(w19)

    # Label patch operator: im2col(label_image) = emb @ Lmat + cb.
    basis, _ = im2col(p["lin1_w"].T.reshape(50, 1, 28, 28))    # (50*196, 9)
    lmat = basis.reshape(50, 196 * 9)                          # (50, 1764)
    cb, _ = im2col(p["lin1_b"].reshape(1, 1, 28, 28))          # (196, 9)
    cb = cb.reshape(1, 196 * 9)                                # (1, 1764)

    # conv_2 weight, rows ordered (q*64 + c_in), columns = c_out.
    w2big = p["conv2_w"].reshape(128, 64, 9).transpose(2, 1, 0).reshape(576, 128)

    # last_linear weight permuted from torch NCHW-flatten order (c*49+p2) to [p2, c].
    wlast = p["lin2_w"].reshape(128, 49).T                     # (49, 128)

    return {
        "emb": p["emb"].astype(f32),
        "Lmat": lmat.astype(f32),
        "cb": cb.astype(f32),
        "idx": _expand_index(),
        "w1big": w1big.astype(bf16),
        "w2big": w2big.astype(bf16),
        "b2": p["conv2_b"].reshape(1, 128).astype(f32),
        "wlast": wlast.astype(f32),
        "bl": p["lin2_b"].reshape(1, 1).astype(f32),
    }


# --------------------------------------------------------------------------
# Fused Pallas kernel: TB samples per grid step, three MXU matmuls, all VMEM.
# --------------------------------------------------------------------------
def _disc_kernel(p_ref, w1_ref, w2_ref, b2_ref, wl_ref, gs_ref, bl_ref, out_ref):
    f32 = jnp.float32
    # conv_1 + label path + eval-mode BatchNorm (all folded into w1big / the
    # patch's valid-flag column), emitted directly in conv_2 im2col layout.
    h1 = jnp.dot(p_ref[...], w1_ref[...], preferred_element_type=f32)     # (TB*49, 576)
    h1 = jnp.where(h1 > 0, h1, 0.2 * h1).astype(jnp.bfloat16)             # LeakyReLU(0.2)

    # conv_2: single K=576, N=128 matmul, bias + LeakyReLU epilogue in f32.
    h2 = jnp.dot(h1, w2_ref[...], preferred_element_type=f32) + b2_ref[...]
    h2 = jnp.where(h2 > 0, h2, 0.2 * h2)                                  # (TB*49, 128)

    # TODO(synk): Dropout / BatchNorm use eval-mode semantics (identity /
    # running stats); training-mode batch statistics and random masking are
    # not implemented.

    # last_linear(6272 -> 1): weighted lane reduce + per-sample group sum.
    t = h2 * wl_ref[...]                                                  # (TB*49, 128)
    rs = jnp.sum(t, axis=1, keepdims=True)                                # (TB*49, 1)
    logit = jnp.dot(gs_ref[...], rs, preferred_element_type=f32) + bl_ref[...]   # (TB, 1)
    out_ref[...] = pl.reciprocal(1.0 + jnp.exp(-logit), approx=True)      # sigmoid


def _disc_call(batch, tb):
    m2 = tb * 49
    macs = batch * 49 * (171 * 576 + 576 * 128) + batch * m2
    cost = pl.CostEstimate(
        flops=2 * macs + 6 * batch * 49 * (576 + 128),
        transcendentals=batch,
        bytes_accessed=(2 * (batch * 49 * 171 + 171 * 576 + 576 * 128)
                        + 4 * (128 + m2 * 128 + tb * m2 + 1 + batch)),
    )
    return pl.pallas_call(
        _disc_kernel,
        out_shape=jax.ShapeDtypeStruct((batch, 1), jnp.float32),
        grid=(batch // tb,),
        in_specs=[
            pl.BlockSpec((m2, 171), lambda i: (i, 0)),     # conv_2-layout input patches
            pl.BlockSpec((171, 576), lambda i: (0, 0)),    # block-diag conv_1 weight (+BN,+bias)
            pl.BlockSpec((576, 128), lambda i: (0, 0)),    # conv_2 weight
            pl.BlockSpec((1, 128), lambda i: (0, 0)),      # conv_2 bias
            pl.BlockSpec((m2, 128), lambda i: (0, 0)),     # last_linear weight, tiled x TB
            pl.BlockSpec((tb, m2), lambda i: (0, 0)),      # per-sample group-sum matrix
            pl.BlockSpec((1, 1), lambda i: (0, 0)),        # last_linear bias
        ],
        out_specs=pl.BlockSpec((tb, 1), lambda i: (i, 0)),
        compiler_params=pltpu.CompilerParams(dimension_semantics=("parallel",)),
        cost_estimate=cost,
    )


@functools.partial(jax.jit, static_argnames=("tb",))
def discriminator_forward(prep, x, labels, tb=16):
    # x: (B, 1, 28, 28) float32, labels: (B,) int32
    B = x.shape[0]
    assert B % tb == 0 and (tb % 16 == 0 or tb == B), (
        "tb must divide B; tb*49 must stay 16-row aligned (bf16 tiling) unless grid == 1")

    # --- wrapper glue (tiny, plain XLA ops) ---------------------------------
    emb = prep["emb"][labels]                                    # (B, 50) embedding gather
    lab = (emb @ prep["Lmat"] + prep["cb"]).reshape(B, 196, 9)   # label-channel im2col patches
    px, _ = im2col(x)                                            # x-channel im2col patches
    px = px.reshape(B, 196, 9)
    valid = jnp.ones((B, 196, 1), jnp.float32)                   # valid flag (carries conv_1 bias)
    patch = jnp.concatenate([px, lab, valid], axis=-1)           # (B, 196, 19)
    patch = jnp.concatenate(                                     # zero row for conv_2's padding
        [patch, jnp.zeros((B, 1, 19), jnp.float32)], axis=1)     # (B, 197, 19)
    pe = jnp.take(patch, prep["idx"], axis=1)                    # (B, 441, 19) conv_2-layout gather
    pe = pe.reshape(B * 49, 9 * 19).astype(jnp.bfloat16)         # (B*49, 171)

    wl_tiled = jnp.tile(prep["wlast"], (tb, 1))                           # (tb*49, 128)
    gsum = jnp.repeat(jnp.eye(tb, dtype=jnp.float32), 49, axis=1)         # (tb, tb*49)

    return _disc_call(B, tb)(pe, prep["w1big"], prep["w2big"], prep["b2"],
                             wl_tiled, gsum, prep["bl"])                  # (B, 1)


# --------------------------------------------------------------------------
# Pure-JAX reference for validation (mirrors the PyTorch module in eval mode).
# --------------------------------------------------------------------------
def reference_forward(params, x, labels):
    eps = 1e-5
    B = x.shape[0]
    emb = params["emb"][labels]
    lin = emb @ params["lin1_w"].T + params["lin1_b"]
    lin = lin.reshape(B, 1, 28, 28)
    xc = jnp.concatenate([x, lin], axis=1)

    def conv(y, w, b):
        return jax.lax.conv_general_dilated(
            y, w, window_strides=(2, 2), padding=((1, 1), (1, 1)),
            dimension_numbers=("NCHW", "OIHW", "NCHW")) + b[None, :, None, None]

    def lrelu(y):
        return jnp.where(y > 0, y, 0.2 * y)

    h1 = conv(xc, params["conv1_w"], params["conv1_b"])
    scale = params["bn_gamma"] / jnp.sqrt(params["bn_var"] + eps)
    shift = params["bn_beta"] - params["bn_mean"] * scale
    h1 = lrelu(h1 * scale[None, :, None, None] + shift[None, :, None, None])
    h2 = lrelu(conv(h1, params["conv2_w"], params["conv2_b"]))
    flat = h2.reshape(B, -1)
    return jax.nn.sigmoid(flat @ params["lin2_w"].T + params["lin2_b"])


if __name__ == "__main__":
    key = jax.random.PRNGKey(0)
    kx, kl, kp = jax.random.split(key, 3)

    B, TB = 32, 16        # grid = (2,): two blocks of 16 samples (both TCs busy on v7x)
    x = jax.random.normal(kx, (B, 1, 28, 28), jnp.float32)
    labels = jax.random.randint(kl, (B,), 0, 10, jnp.int32)
    params = init_params(kp)
    prep = prepare_params(params)

    out = jax.block_until_ready(discriminator_forward(prep, x, labels, tb=TB))
    ref = jax.block_until_ready(reference_forward(params, x, labels))

    assert out.shape == (B, 1)
    # bf16 matmul operands with f32 accumulation -> loosened tolerance (documented).
    assert jnp.allclose(out, ref, atol=1e-2, rtol=1e-2), (out, ref)

    print("KERNEL_OK")
</pallas_src>

<mosaic_0001>
module attributes {stable_mosaic.version = 11 : i64} {
  func.func @_disc_kernel(%arg0: i32, %arg1: memref<784x171xbf16, #tpu.memory_space<vmem>>, %arg2: memref<171x576xbf16, #tpu.memory_space<vmem>>, %arg3: memref<576x128xbf16, #tpu.memory_space<vmem>>, %arg4: memref<1x128xf32, #tpu.memory_space<vmem>>, %arg5: memref<784x128xf32, #tpu.memory_space<vmem>>, %arg6: memref<16x784xf32, #tpu.memory_space<vmem>>, %arg7: memref<1x1xf32, #tpu.memory_space<vmem>>, %arg8: memref<16x1xf32, #tpu.memory_space<vmem>>) attributes {dimension_semantics = [#tpu.dimension_semantics<parallel>], iteration_bounds = array<i64: 2>, scalar_prefetch = 0 : i64, scratch_operands = 0 : i64, tpu.core_type = #tpu.core_type<tc>, window_params = [{transform_indices = @transform_0, window_bounds = array<i64: 784, 171>}, {pipeline_mode = #tpu.pipeline_mode<synchronous>, transform_indices = @transform_1, window_bounds = array<i64: 171, 576>}, {pipeline_mode = #tpu.pipeline_mode<synchronous>, transform_indices = @transform_2, window_bounds = array<i64: 576, 128>}, {pipeline_mode = #tpu.pipeline_mode<synchronous>, transform_indices = @transform_3, window_bounds = array<i64: 1, 128>}, {pipeline_mode = #tpu.pipeline_mode<synchronous>, transform_indices = @transform_4, window_bounds = array<i64: 784, 128>}, {pipeline_mode = #tpu.pipeline_mode<synchronous>, transform_indices = @transform_5, window_bounds = array<i64: 16, 784>}, {pipeline_mode = #tpu.pipeline_mode<synchronous>, transform_indices = @transform_6, window_bounds = array<i64: 1, 1>}, {transform_indices = @transform_7, window_bounds = array<i64: 16, 1>}]} {
    %c0 = arith.constant 0 : index
    %c0_0 = arith.constant 0 : index
    %0 = vector.load %arg1[%c0, %c0_0] : memref<784x171xbf16, #tpu.memory_space<vmem>>, vector<784x171xbf16>
    %c0_1 = arith.constant 0 : index
    %c0_2 = arith.constant 0 : index
    %1 = vector.load %arg2[%c0_1, %c0_2] : memref<171x576xbf16, #tpu.memory_space<vmem>>, vector<171x576xbf16>
    %cst = arith.constant dense<0.000000e+00> : vector<784x576xf32>
    %2 = tpu.matmul %0, %1, %cst {dimension_numbers = #tpu.dot_dimension_numbers<[1], [0], [0], [1], [0, 0, 1, 1], [], []>} : vector<784x171xbf16>, vector<171x576xbf16>, vector<784x576xf32> -> vector<784x576xf32>
    %cst_3 = arith.constant 0.000000e+00 : f32
    %3 = vector.broadcast %cst_3 : f32 to vector<784x576xf32>
    %4 = arith.cmpf ogt, %2, %3 : vector<784x576xf32>
    %cst_4 = arith.constant 2.000000e-01 : f32
    %5 = vector.broadcast %cst_4 : f32 to vector<784x576xf32>
    %6 = arith.mulf %5, %2 : vector<784x576xf32>
    %7 = arith.select %4, %2, %6 : vector<784x576xi1>, vector<784x576xf32>
    %8 = arith.truncf %7 : vector<784x576xf32> to vector<784x576xbf16>
    %c0_5 = arith.constant 0 : index
    %c0_6 = arith.constant 0 : index
    %9 = vector.load %arg3[%c0_5, %c0_6] : memref<576x128xbf16, #tpu.memory_space<vmem>>, vector<576x128xbf16>
    %cst_7 = arith.constant dense<0.000000e+00> : vector<784x128xf32>
    %10 = tpu.matmul %8, %9, %cst_7 {dimension_numbers = #tpu.dot_dimension_numbers<[1], [0], [0], [1], [0, 0, 1, 1], [], []>} : vector<784x576xbf16>, vector<576x128xbf16>, vector<784x128xf32> -> vector<784x128xf32>
    %c0_8 = arith.constant 0 : index
    %c0_9 = arith.constant 0 : index
    %11 = vector.load %arg4[%c0_8, %c0_9] : memref<1x128xf32, #tpu.memory_space<vmem>>, vector<1x128xf32>
    %12 = vector.broadcast %11 : vector<1x128xf32> to vector<784x128xf32>
    %13 = arith.addf %10, %12 : vector<784x128xf32>
    %cst_10 = arith.constant 0.000000e+00 : f32
    %14 = vector.broadcast %cst_10 : f32 to vector<784x128xf32>
    %15 = arith.cmpf ogt, %13, %14 : vector<784x128xf32>
    %cst_11 = arith.constant 2.000000e-01 : f32
    %16 = vector.broadcast %cst_11 : f32 to vector<784x128xf32>
    %17 = arith.mulf %16, %13 : vector<784x128xf32>
    %18 = arith.select %15, %13, %17 : vector<784x128xi1>, vector<784x128xf32>
    %c0_12 = arith.constant 0 : index
    %c0_13 = arith.constant 0 : index
    %19 = vector.load %arg5[%c0_12, %c0_13] : memref<784x128xf32, #tpu.memory_space<vmem>>, vector<784x128xf32>
    %20 = arith.mulf %18, %19 : vector<784x128xf32>
    %cst_14 = arith.constant dense<0.000000e+00> : vector<784xf32>
    %21 = vector.multi_reduction <add>, %20, %cst_14 [1] : vector<784x128xf32> to vector<784xf32>
    %22 = vector.shape_cast %21 : vector<784xf32> to vector<784x1xf32>
    %c0_15 = arith.constant 0 : index
    %c0_16 = arith.constant 0 : index
    %23 = vector.load %arg6[%c0_15, %c0_16] : memref<16x784xf32, #tpu.memory_space<vmem>>, vector<16x784xf32>
    %cst_17 = arith.constant dense<0.000000e+00> : vector<16x1xf32>
    %24 = tpu.matmul %23, %22, %cst_17 {dimension_numbers = #tpu.dot_dimension_numbers<[1], [0], [0], [1], [0, 0, 1, 1], [], []>} : vector<16x784xf32>, vector<784x1xf32>, vector<16x1xf32> -> vector<16x1xf32>
    %c0_18 = arith.constant 0 : index
    %c0_19 = arith.constant 0 : index
    %25 = vector.load %arg7[%c0_18, %c0_19] : memref<1x1xf32, #tpu.memory_space<vmem>>, vector<1x1xf32>
    %26 = vector.broadcast %25 : vector<1x1xf32> to vector<16x1xf32>
    %27 = arith.addf %24, %26 : vector<16x1xf32>
    %cst_20 = arith.constant 0.000000e+00 : f32
    %28 = vector.broadcast %cst_20 : f32 to vector<16x1xf32>
    %29 = arith.subf %28, %27 : vector<16x1xf32>
    %30 = math.exp %29 : vector<16x1xf32>
    %cst_21 = arith.constant 1.000000e+00 : f32
    %31 = vector.broadcast %cst_21 : f32 to vector<16x1xf32>
    %32 = arith.addf %31, %30 : vector<16x1xf32>
    %33 = tpu.reciprocal %32 {approx = true} : vector<16x1xf32> -> vector<16x1xf32>
    %c0_22 = arith.constant 0 : index
    %c0_23 = arith.constant 0 : index
    %34 = vector.load %arg8[%c0_22, %c0_23] : memref<16x1xf32, #tpu.memory_space<vmem>>, vector<16x1xf32>
    tpu.vector_store %arg8[%c0_22, %c0_23], %33 {strides = array<i32>} : memref<16x1xf32, #tpu.memory_space<vmem>>, vector<16x1xf32>,
    return
  }
  func.func @transform_0(%arg0: i32) -> (i32, i32) {
    %c0_i32 = arith.constant 0 : i32
    %c0_i32_0 = arith.constant 0 : i32
    return %arg0, %c0_i32 : i32, i32
  }
  func.func @transform_1(%arg0: i32) -> (i32, i32) {
    %c0_i32 = arith.constant 0 : i32
    %c0_i32_0 = arith.constant 0 : i32
    %c0_i32_1 = arith.constant 0 : i32
    return %c0_i32, %c0_i32_0 : i32, i32
  }
  func.func @transform_2(%arg0: i32) -> (i32, i32) {
    %c0_i32 = arith.constant 0 : i32
    %c0_i32_0 = arith.constant 0 : i32
    %c0_i32_1 = arith.constant 0 : i32
    return %c0_i32, %c0_i32_0 : i32, i32
  }
  func.func @transform_3(%arg0: i32) -> (i32, i32) {
    %c0_i32 = arith.constant 0 : i32
    %c0_i32_0 = arith.constant 0 : i32
    %c0_i32_1 = arith.constant 0 : i32
    return %c0_i32, %c0_i32_0 : i32, i32
  }
  func.func @transform_4(%arg0: i32) -> (i32, i32) {
    %c0_i32 = arith.constant 0 : i32
    %c0_i32_0 = arith.constant 0 : i32
    %c0_i32_1 = arith.constant 0 : i32
    return %c0_i32, %c0_i32_0 : i32, i32
  }
  func.func @transform_5(%arg0: i32) -> (i32, i32) {
    %c0_i32 = arith.constant 0 : i32
    %c0_i32_0 = arith.constant 0 : i32
    %c0_i32_1 = arith.constant 0 : i32
    return %c0_i32, %c0_i32_0 : i32, i32
  }
  func.func @transform_6(%arg0: i32) -> (i32, i32) {
    %c0_i32 = arith.constant 0 : i32
    %c0_i32_0 = arith.constant 0 : i32
    %c0_i32_1 = arith.constant 0 : i32
    return %c0_i32, %c0_i32_0 : i32, i32
  }
  func.func @transform_7(%arg0: i32) -> (i32, i32) {
    %c0_i32 = arith.constant 0 : i32
    %c0_i32_0 = arith.constant 0 : i32
    return %arg0, %c0_i32 : i32, i32
  }
}

</mosaic_0001>

<llo_original>
// kernel: tile.9
$region0: #{tile.9}
  %s0 = inlined_call_operand.vmem [shape: f32[16,49,128], index: 0, kind: input, shape index: {}]
  %s1 = inlined_call_operand.vmem [shape: f32[784,128], index: 1, kind: output, shape index: {}]
  %v2 = vld [vmem:[%s0] sm:$0xff]
  %3 = vst [vmem:[%s1] sm:$0xff] %v2
  %s4 = scalar_lea.vmem %s0, 8
  %v5 = vld [vmem:[%s4] sm:$0xff]
  %s6 = scalar_lea.vmem %s1, 8
  %7 = vst [vmem:[%s6] sm:$0xff] %v5
  %s8 = scalar_lea.vmem %s0, 16
  %v9 = vld [vmem:[%s8] sm:$0xff]
  %s10 = scalar_lea.vmem %s1, 16
  %11 = vst [vmem:[%s10] sm:$0xff] %v9
  %s12 = scalar_lea.vmem %s0, 24
  %v13 = vld [vmem:[%s12] sm:$0xff]
  %s14 = scalar_lea.vmem %s1, 24
  %15 = vst [vmem:[%s14] sm:$0xff] %v13
  %s16 = scalar_lea.vmem %s0, 32
  %v17 = vld [vmem:[%s16] sm:$0xff]
  %s18 = scalar_lea.vmem %s1, 32
  %19 = vst [vmem:[%s18] sm:$0xff] %v17
  %s20 = scalar_lea.vmem %s0, 40
  %v21 = vld [vmem:[%s20] sm:$0xff]
  %s22 = scalar_lea.vmem %s1, 40
  %23 = vst [vmem:[%s22] sm:$0xff] %v21
  %s24 = scalar_lea.vmem %s0, 48
  %s25 = smov 3
  %v26 = vld [vmem:[%s24] ss:$8 sm:%s25]
  %s27 = scalar_lea.vmem %s1, 48
  %28 = vst [vmem:[%s27] sm:$0x3] %v26
  %s29 = scalar_lea.vmem %s0, 57
  %v30 = vld [vmem:[%s29] sm:$0xff]
  %s31 = scalar_lea.vmem %s1, 50
  %32 = vst [vmem:[%s31] sm:$0xff] %v30
  %s33 = scalar_lea.vmem %s0, 65
  %v34 = vld [vmem:[%s33] sm:$0xff]
  %s35 = scalar_lea.vmem %s1, 58
  %36 = vst [vmem:[%s35] sm:$0xff] %v34
  %s37 = scalar_lea.vmem %s0, 73
  %v38 = vld [vmem:[%s37] sm:$0xff]
  %s39 = scalar_lea.vmem %s1, 66
  %40 = vst [vmem:[%s39] sm:$0xff] %v38
  %s41 = scalar_lea.vmem %s0, 81
  %v42 = vld [vmem:[%s41] sm:$0xff]
  %s43 = scalar_lea.vmem %s1, 74
  %44 = vst [vmem:[%s43] sm:$0xff] %v42
  %s45 = scalar_lea.vmem %s0, 89
  %v46 = vld [vmem:[%s45] sm:$0xff]
  %s47 = scalar_lea.vmem %s1, 82
  %48 = vst [vmem:[%s47] sm:$0xff] %v46
  %s49 = scalar_lea.vmem %s0, 97
  %v50 = vld [vmem:[%s49] sm:$0xff]
  %s51 = scalar_lea.vmem %s1, 90
  %52 = vst [vmem:[%s51] sm:$0xff] %v50
  %s53 = scalar_lea.vmem %s0, 112
  %v54 = vld [vmem:[%s53] sm:$0xff]
  %s55 = scalar_lea.vmem %s1, 98
  %56 = vst [vmem:[%s55] sm:$0xff] %v54
  %s57 = scalar_lea.vmem %s0, 120
  %v58 = vld [vmem:[%s57] sm:$0xff]
  %s59 = scalar_lea.vmem %s1, 106
  %60 = vst [vmem:[%s59] sm:$0xff] %v58
  %s61 = scalar_lea.vmem %s0, 128
  %v62 = vld [vmem:[%s61] sm:$0xff]
  %s63 = scalar_lea.vmem %s1, 114
  %64 = vst [vmem:[%s63] sm:$0xff] %v62
  %s65 = scalar_lea.vmem %s0, 136
  %v66 = vld [vmem:[%s65] sm:$0xff]
  %s67 = scalar_lea.vmem %s1, 122
  %68 = vst [vmem:[%s67] sm:$0xff] %v66
  %s69 = scalar_lea.vmem %s0, 144
  %v70 = vld [vmem:[%s69] sm:$0xff]
  %s71 = scalar_lea.vmem %s1, 130
  %72 = vst [vmem:[%s71] sm:$0xff] %v70
  %s73 = scalar_lea.vmem %s0, 152
  %v74 = vld [vmem:[%s73] sm:$0xff]
  %s75 = scalar_lea.vmem %s1, 138
  %76 = vst [vmem:[%s75] sm:$0xff] %v74
  %s77 = scalar_lea.vmem %s0, 160
  %s78 = smov 3
  %v79 = vld [vmem:[%s77] ss:$8 sm:%s78]
  %s80 = scalar_lea.vmem %s1, 146
  %81 = vst [vmem:[%s80] sm:$0x3] %v79
  %s82 = scalar_lea.vmem %s0, 169
  %v83 = vld [vmem:[%s82] sm:$0xff]
  %s84 = scalar_lea.vmem %s1, 148
  %85 = vst [vmem:[%s84] sm:$0xff] %v83
  %s86 = scalar_lea.vmem %s0, 177
  %v87 = vld [vmem:[%s86] sm:$0xff]
  %s88 = scalar_lea.vmem %s1, 156
  %89 = vst [vmem:[%s88] sm:$0xff] %v87
  %s90 = scalar_lea.vmem %s0, 185
  %v91 = vld [vmem:[%s90] sm:$0xff]
  %s92 = scalar_lea.vmem %s1, 164
  %93 = vst [vmem:[%s92] sm:$0xff] %v91
  %s94 = scalar_lea.vmem %s0, 193
  %v95 = vld [vmem:[%s94] sm:$0xff]
  %s96 = scalar_lea.vmem %s1, 172
  %97 = vst [vmem:[%s96] sm:$0xff] %v95
  %s98 = scalar_lea.vmem %s0, 201
  %v99 = vld [vmem:[%s98] sm:$0xff]
  %s100 = scalar_lea.vmem %s1, 180
  %101 = vst [vmem:[%s100] sm:$0xff] %v99
  %s102 = scalar_lea.vmem %s0, 209
  %v103 = vld [vmem:[%s102] sm:$0xff]
  %s104 = scalar_lea.vmem %s1, 188
  %105 = vst [vmem:[%s104] sm:$0xff] %v103
  %s106 = scalar_lea.vmem %s0, 224
  %v107 = vld [vmem:[%s106] sm:$0xff]
  %s108 = scalar_lea.vmem %s1, 196
  %109 = vst [vmem:[%s108] sm:$0xff] %v107
  %s110 = scalar_lea.vmem %s0, 232
  %v111 = vld [vmem:[%s110] sm:$0xff]
  %s112 = scalar_lea.vmem %s1, 204
  %113 = vst [vmem:[%s112] sm:$0xff] %v111
  %s114 = scalar_lea.vmem %s0, 240
  %v115 = vld [vmem:[%s114] sm:$0xff]
  %s116 = scalar_lea.vmem %s1, 212
  %117 = vst [vmem:[%s116] sm:$0xff] %v115
  %s118 = scalar_lea.vmem %s0, 248
  %v119 = vld [vmem:[%s118] sm:$0xff]
  %s120 = scalar_lea.vmem %s1, 220
  %121 = vst [vmem:[%s120] sm:$0xff] %v119
  %s122 = scalar_lea.vmem %s0, 256
  %v123 = vld [vmem:[%s122] sm:$0xff]
  %s124 = scalar_lea.vmem %s1, 228
  %125 = vst [vmem:[%s124] sm:$0xff] %v123
  %s126 = scalar_lea.vmem %s0, 264
  %v127 = vld [vmem:[%s126] sm:$0xff]
  %s128 = scalar_lea.vmem %s1, 236
  %129 = vst [vmem:[%s128] sm:$0xff] %v127
  %s130 = scalar_lea.vmem %s0, 272
  %s131 = smov 3
  %v132 = vld [vmem:[%s130] ss:$8 sm:%s131]
  %s133 = scalar_lea.vmem %s1, 244
  %134 = vst [vmem:[%s133] sm:$0x3] %v132
  %s135 = scalar_lea.vmem %s0, 281
  %v136 = vld [vmem:[%s135] sm:$0xff]
  %s137 = scalar_lea.vmem %s1, 246
  %138 = vst [vmem:[%s137] sm:$0xff] %v136
  %s139 = scalar_lea.vmem %s0, 289
  %v140 = vld [vmem:[%s139] sm:$0xff]
  %s141 = scalar_lea.vmem %s1, 254
  %142 = vst [vmem:[%s141] sm:$0xff] %v140
  %s143 = scalar_lea.vmem %s0, 297
  %v144 = vld [vmem:[%s143] sm:$0xff]
  %s145 = scalar_lea.vmem %s1, 262
  %146 = vst [vmem:[%s145] sm:$0xff] %v144
  %s147 = scalar_lea.vmem %s0, 305
  %v148 = vld [vmem:[%s147] sm:$0xff]
  %s149 = scalar_lea.vmem %s1, 270
  %150 = vst [vmem:[%s149] sm:$0xff] %v148
  %s151 = scalar_lea.vmem %s0, 313
  %v152 = vld [vmem:[%s151] sm:$0xff]
  %s153 = scalar_lea.vmem %s1, 278
  %154 = vst [vmem:[%s153] sm:$0xff] %v152
  %s155 = scalar_lea.vmem %s0, 321
  %v156 = vld [vmem:[%s155] sm:$0xff]
  %s157 = scalar_lea.vmem %s1, 286
  %158 = vst [vmem:[%s157] sm:$0xff] %v156
  %s159 = scalar_lea.vmem %s0, 336
  %v160 = vld [vmem:[%s159] sm:$0xff]
  %s161 = scalar_lea.vmem %s1, 294
  %162 = vst [vmem:[%s161] sm:$0xff] %v160
  %s163 = scalar_lea.vmem %s0, 344
  %v164 = vld [vmem:[%s163] sm:$0xff]
  %s165 = scalar_lea.vmem %s1, 302
  %166 = vst [vmem:[%s165] sm:$0xff] %v164
  %s167 = scalar_lea.vmem %s0, 352
  %v168 = vld [vmem:[%s167] sm:$0xff]
  %s169 = scalar_lea.vmem %s1, 310
  %170 = vst [vmem:[%s169] sm:$0xff] %v168
  %s171 = scalar_lea.vmem %s0, 360
  %v172 = vld [vmem:[%s171] sm:$0xff]
  %s173 = scalar_lea.vmem %s1, 318
  %174 = vst [vmem:[%s173] sm:$0xff] %v172
  %s175 = scalar_lea.vmem %s0, 368
  %v176 = vld [vmem:[%s175] sm:$0xff]
  %s177 = scalar_lea.vmem %s1, 326
  %178 = vst [vmem:[%s177] sm:$0xff] %v176
  %s179 = scalar_lea.vmem %s0, 376
  %v180 = vld [vmem:[%s179] sm:$0xff]
  %s181 = scalar_lea.vmem %s1, 334
  %182 = vst [vmem:[%s181] sm:$0xff] %v180
  %s183 = scalar_lea.vmem %s0, 384
  %s184 = smov 3
  %v185 = vld [vmem:[%s183] ss:$8 sm:%s184]
  %s186 = scalar_lea.vmem %s1, 342
  %187 = vst [vmem:[%s186] sm:$0x3] %v185
  %s188 = scalar_lea.vmem %s0, 393
  %v189 = vld [vmem:[%s188] sm:$0xff]
  %s190 = scalar_lea.vmem %s1, 344
  %191 = vst [vmem:[%s190] sm:$0xff] %v189
  %s192 = scalar_lea.vmem %s0, 401
  %v193 = vld [vmem:[%s192] sm:$0xff]
  %s194 = scalar_lea.vmem %s1, 352
  %195 = vst [vmem:[%s194] sm:$0xff] %v193
  %s196 = scalar_lea.vmem %s0, 409
  %v197 = vld [vmem:[%s196] sm:$0xff]
  %s198 = scalar_lea.vmem %s1, 360
  %199 = vst [vmem:[%s198] sm:$0xff] %v197
  %s200 = scalar_lea.vmem %s0, 417
  %v201 = vld [vmem:[%s200] sm:$0xff]
  %s202 = scalar_lea.vmem %s1, 368
  %203 = vst [vmem:[%s202] sm:$0xff] %v201
  %s204 = scalar_lea.vmem %s0, 425
  %v205 = vld [vmem:[%s204] sm:$0xff]
  %s206 = scalar_lea.vmem %s1, 376
  %207 = vst [vmem:[%s206] sm:$0xff] %v205
  %s208 = scalar_lea.vmem %s0, 433
  %v209 = vld [vmem:[%s208] sm:$0xff]
  %s210 = scalar_lea.vmem %s1, 384
  %211 = vst [vmem:[%s210] sm:$0xff] %v209
  %s212 = scalar_lea.vmem %s0, 448
  %v213 = vld [vmem:[%s212] sm:$0xff]
  %s214 = scalar_lea.vmem %s1, 392
  %215 = vst [vmem:[%s214] sm:$0xff] %v213
  %s216 = scalar_lea.vmem %s0, 456
  %v217 = vld [vmem:[%s216] sm:$0xff]
  %s218 = scalar_lea.vmem %s1, 400
  %219 = vst [vmem:[%s218] sm:$0xff] %v217
  %s220 = scalar_lea.vmem %s0, 464
  %v221 = vld [vmem:[%s220] sm:$0xff]
  %s222 = scalar_lea.vmem %s1, 408
  %223 = vst [vmem:[%s222] sm:$0xff] %v221
  %s224 = scalar_lea.vmem %s0, 472
  %v225 = vld [vmem:[%s224] sm:$0xff]
  %s226 = scalar_lea.vmem %s1, 416
  %227 = vst [vmem:[%s226] sm:$0xff] %v225
  %s228 = scalar_lea.vmem %s0, 480
  %v229 = vld [vmem:[%s228] sm:$0xff]
  %s230 = scalar_lea.vmem %s1, 424
  %231 = vst [vmem:[%s230] sm:$0xff] %v229
  %s232 = scalar_lea.vmem %s0, 488
  %v233 = vld [vmem:[%s232] sm:$0xff]
  %s234 = scalar_lea.vmem %s1, 432
  %235 = vst [vmem:[%s234] sm:$0xff] %v233
  %s236 = scalar_lea.vmem %s0, 496
  %s237 = smov 3
  %v238 = vld [vmem:[%s236] ss:$8 sm:%s237]
  %s239 = scalar_lea.vmem %s1, 440
  %240 = vst [vmem:[%s239] sm:$0x3] %v238
  %s241 = scalar_lea.vmem %s0, 505
  %v242 = vld [vmem:[%s241] sm:$0xff]
  %s243 = scalar_lea.vmem %s1, 442
  %244 = vst [vmem:[%s243] sm:$0xff] %v242
  %s245 = scalar_lea.vmem %s0, 513
  %v246 = vld [vmem:[%s245] sm:$0xff]
  %s247 = scalar_lea.vmem %s1, 450
  %248 = vst [vmem:[%s247] sm:$0xff] %v246
  %s249 = scalar_lea.vmem %s0, 521
  %v250 = vld [vmem:[%s249] sm:$0xff]
  %s251 = scalar_lea.vmem %s1, 458
  %252 = vst [vmem:[%s251] sm:$0xff] %v250
  %s253 = scalar_lea.vmem %s0, 529
  %v254 = vld [vmem:[%s253] sm:$0xff]
  %s255 = scalar_lea.vmem %s1, 466
  %256 = vst [vmem:[%s255] sm:$0xff] %v254
  %s257 = scalar_lea.vmem %s0, 537
  %v258 = vld [vmem:[%s257] sm:$0xff]
  %s259 = scalar_lea.vmem %s1, 474
  %260 = vst [vmem:[%s259] sm:$0xff] %v258
  %s261 = scalar_lea.vmem %s0, 545
  %v262 = vld [vmem:[%s261] sm:$0xff]
  %s263 = scalar_lea.vmem %s1, 482
  %264 = vst [vmem:[%s263] sm:$0xff] %v262
  %s265 = scalar_lea.vmem %s0, 560
  %v266 = vld [vmem:[%s265] sm:$0xff]
  %s267 = scalar_lea.vmem %s1, 490
  %268 = vst [vmem:[%s267] sm:$0xff] %v266
  %s269 = scalar_lea.vmem %s0, 568
  %v270 = vld [vmem:[%s269] sm:$0xff]
  %s271 = scalar_lea.vmem %s1, 498
  %272 = vst [vmem:[%s271] sm:$0xff] %v270
  %s273 = scalar_lea.vmem %s0, 576
  %v274 = vld [vmem:[%s273] sm:$0xff]
  %s275 = scalar_lea.vmem %s1, 506
  %276 = vst [vmem:[%s275] sm:$0xff] %v274
  %s277 = scalar_lea.vmem %s0, 584
  %v278 = vld [vmem:[%s277] sm:$0xff]
  %s279 = scalar_lea.vmem %s1, 514
  %280 = vst [vmem:[%s279] sm:$0xff] %v278
  %s281 = scalar_lea.vmem %s0, 592
  %v282 = vld [vmem:[%s281] sm:$0xff]
  %s283 = scalar_lea.vmem %s1, 522
  %284 = vst [vmem:[%s283] sm:$0xff] %v282
  %s285 = scalar_lea.vmem %s0, 600
  %v286 = vld [vmem:[%s285] sm:$0xff]
  %s287 = scalar_lea.vmem %s1, 530
  %288 = vst [vmem:[%s287] sm:$0xff] %v286
  %s289 = scalar_lea.vmem %s0, 608
  %s290 = smov 3
  %v291 = vld [vmem:[%s289] ss:$8 sm:%s290]
  %s292 = scalar_lea.vmem %s1, 538
  %293 = vst [vmem:[%s292] sm:$0x3] %v291
  %s294 = scalar_lea.vmem %s0, 617
  %v295 = vld [vmem:[%s294] sm:$0xff]
  %s296 = scalar_lea.vmem %s1, 540
  %297 = vst [vmem:[%s296] sm:$0xff] %v295
  %s298 = scalar_lea.vmem %s0, 625
  %v299 = vld [vmem:[%s298] sm:$0xff]
  %s300 = scalar_lea.vmem %s1, 548
  %301 = vst [vmem:[%s300] sm:$0xff] %v299
  %s302 = scalar_lea.vmem %s0, 633
  %v303 = vld [vmem:[%s302] sm:$0xff]
  %s304 = scalar_lea.vmem %s1, 556
  %305 = vst [vmem:[%s304] sm:$0xff] %v303
  %s306 = scalar_lea.vmem %s0, 641
  %v307 = vld [vmem:[%s306] sm:$0xff]
  %s308 = scalar_lea.vmem %s1, 564
  %309 = vst [vmem:[%s308] sm:$0xff] %v307
  %s310 = scalar_lea.vmem %s0, 649
  %v311 = vld [vmem:[%s310] sm:$0xff]
  %s312 = scalar_lea.vmem %s1, 572
  %313 = vst [vmem:[%s312] sm:$0xff] %v311
  %s314 = scalar_lea.vmem %s0, 657
  %v315 = vld [vmem:[%s314] sm:$0xff]
  %s316 = scalar_lea.vmem %s1, 580
  %317 = vst [vmem:[%s316] sm:$0xff] %v315
  %s318 = scalar_lea.vmem %s0, 672
  %v319 = vld [vmem:[%s318] sm:$0xff]
  %s320 = scalar_lea.vmem %s1, 588
  %321 = vst [vmem:[%s320] sm:$0xff] %v319
  %s322 = scalar_lea.vmem %s0, 680
  %v323 = vld [vmem:[%s322] sm:$0xff]
  %s324 = scalar_lea.vmem %s1, 596
  %325 = vst [vmem:[%s324] sm:$0xff] %v323
  %s326 = scalar_lea.vmem %s0, 688
  %v327 = vld [vmem:[%s326] sm:$0xff]
  %s328 = scalar_lea.vmem %s1, 604
  %329 = vst [vmem:[%s328] sm:$0xff] %v327
  %s330 = scalar_lea.vmem %s0, 696
  %v331 = vld [vmem:[%s330] sm:$0xff]
  %s332 = scalar_lea.vmem %s1, 612
  %333 = vst [vmem:[%s332] sm:$0xff] %v331
  %s334 = scalar_lea.vmem %s0, 704
  %v335 = vld [vmem:[%s334] sm:$0xff]
  %s336 = scalar_lea.vmem %s1, 620
  %337 = vst [vmem:[%s336] sm:$0xff] %v335
  %s338 = scalar_lea.vmem %s0, 712
  %v339 = vld [vmem:[%s338] sm:$0xff]
  %s340 = scalar_lea.vmem %s1, 628
  %341 = vst [vmem:[%s340] sm:$0xff] %v339
  %s342 = scalar_lea.vmem %s0, 720
  %s343 = smov 3
  %v344 = vld [vmem:[%s342] ss:$8 sm:%s343]
  %s345 = scalar_lea.vmem %s1, 636
  %346 = vst [vmem:[%s345] sm:$0x3] %v344
  %s347 = scalar_lea.vmem %s0, 729
  %v348 = vld [vmem:[%s347] sm:$0xff]
  %s349 = scalar_lea.vmem %s1, 638
  %350 = vst [vmem:[%s349] sm:$0xff] %v348
  %s351 = scalar_lea.vmem %s0, 737
  %v352 = vld [vmem:[%s351] sm:$0xff]
  %s353 = scalar_lea.vmem %s1, 646
  %354 = vst [vmem:[%s353] sm:$0xff] %v352
  %s355 = scalar_lea.vmem %s0, 745
  %v356 = vld [vmem:[%s355] sm:$0xff]
  %s357 = scalar_lea.vmem %s1, 654
  %358 = vst [vmem:[%s357] sm:$0xff] %v356
  %s359 = scalar_lea.vmem %s0, 753
  %v360 = vld [vmem:[%s359] sm:$0xff]
  %s361 = scalar_lea.vmem %s1, 662
  %362 = vst [vmem:[%s361] sm:$0xff] %v360
  %s363 = scalar_lea.vmem %s0, 761
  %v364 = vld [vmem:[%s363] sm:$0xff]
  %s365 = scalar_lea.vmem %s1, 670
  %366 = vst [vmem:[%s365] sm:$0xff] %v364
  %s367 = scalar_lea.vmem %s0, 769
  %v368 = vld [vmem:[%s367] sm:$0xff]
  %s369 = scalar_lea.vmem %s1, 678
  %370 = vst [vmem:[%s369] sm:$0xff] %v368
  %s371 = scalar_lea.vmem %s0, 784
  %v372 = vld [vmem:[%s371] sm:$0xff]
  %s373 = scalar_lea.vmem %s1, 686
  %374 = vst [vmem:[%s373] sm:$0xff] %v372
  %s375 = scalar_lea.vmem %s0, 792
  %v376 = vld [vmem:[%s375] sm:$0xff]
  %s377 = scalar_lea.vmem %s1, 694
  %378 = vst [vmem:[%s377] sm:$0xff] %v376
  %s379 = scalar_lea.vmem %s0, 800
  %v380 = vld [vmem:[%s379] sm:$0xff]
  %s381 = scalar_lea.vmem %s1, 702
  %382 = vst [vmem:[%s381] sm:$0xff] %v380
  %s383 = scalar_lea.vmem %s0, 808
  %v384 = vld [vmem:[%s383] sm:$0xff]
  %s385 = scalar_lea.vmem %s1, 710
  %386 = vst [vmem:[%s385] sm:$0xff] %v384
  %s387 = scalar_lea.vmem %s0, 816
  %v388 = vld [vmem:[%s387] sm:$0xff]
  %s389 = scalar_lea.vmem %s1, 718
  %390 = vst [vmem:[%s389] sm:$0xff] %v388
  %s391 = scalar_lea.vmem %s0, 824
  %v392 = vld [vmem:[%s391] sm:$0xff]
  %s393 = scalar_lea.vmem %s1, 726
  %394 = vst [vmem:[%s393] sm:$0xff] %v392
  %s395 = scalar_lea.vmem %s0, 832
  %s396 = smov 3
  %v397 = vld [vmem:[%s395] ss:$8 sm:%s396]
  %s398 = scalar_lea.vmem %s1, 734
  %399 = vst [vmem:[%s398] sm:$0x3] %v397
  %s400 = scalar_lea.vmem %s0, 841
  %v401 = vld [vmem:[%s400] sm:$0xff]
  %s402 = scalar_lea.vmem %s1, 736
  %403 = vst [vmem:[%s402] sm:$0xff] %v401
  %s404 = scalar_lea.vmem %s0, 849
  %v405 = vld [vmem:[%s404] sm:$0xff]
  %s406 = scalar_lea.vmem %s1, 744
  %407 = vst [vmem:[%s406] sm:$0xff] %v405
  %s408 = scalar_lea.vmem %s0, 857
  %v409 = vld [vmem:[%s408] sm:$0xff]
  %s410 = scalar_lea.vmem %s1, 752
  %411 = vst [vmem:[%s410] sm:$0xff] %v409
  %s412 = scalar_lea.vmem %s0, 865
  %v413 = vld [vmem:[%s412] sm:$0xff]
  %s414 = scalar_lea.vmem %s1, 760
  %415 = vst [vmem:[%s414] sm:$0xff] %v413
  %s416 = scalar_lea.vmem %s0, 873
  %v417 = vld [vmem:[%s416] sm:$0xff]
  %s418 = scalar_lea.vmem %s1, 768
  %419 = vst [vmem:[%s418] sm:$0xff] %v417
  %s420 = scalar_lea.vmem %s0, 881
  %v421 = vld [vmem:[%s420] sm:$0xff]
  %s422 = scalar_lea.vmem %s1, 776
  %423 = vst [vmem:[%s422] sm:$0xff] %v421

// kernel: discriminator_forward.1
$region0: #{discriminator_forward.1}
  #allocation0 [shape = 'u32[]', space=smem, size = 0x4, offset = 0x4, fixed_abs, tag = 'smem constant byte address 0x4 - core index']
  #allocation1 [shape = 'u32[144,128]{1,0:T(1,128)}', space=vmem, size = 0x12000, scoped, tag = 'internal scratch']
  #allocation2 [shape = 'f32[1,1]{1,0:T(1,128)S(1)}', space=vmem, size = 0x200, scoped, tag = 'scoped memory for discriminator_forward.1']
  %s0 = inlined_call_operand.vmem [shape: bf16[1568,171], index: 0, kind: input, shape index: {}]
  %s1 = inlined_call_operand.vmem [shape: bf16[171,576], index: 1, kind: input, shape index: {}]
  %s2 = inlined_call_operand.vmem [shape: bf16[576,128], index: 2, kind: input, shape index: {}]
  %s3 = inlined_call_operand.vmem [shape: f32[1,128], index: 3, kind: input, shape index: {}]
  %s4 = inlined_call_operand.vmem [shape: f32[784,128], index: 4, kind: input, shape index: {}]
  %s5 = inlined_call_operand.vmem [shape: f32[16,784], index: 5, kind: input, shape index: {}]
  %s6 = inlined_call_operand.<no memory space> [shape: f32[1,1], index: 6, kind: input, shape index: {}]
  %s7 = inlined_call_operand.vmem [shape: f32[32,1], index: 7, kind: output, shape index: {}]
  %s8 = sld [smem:[#allocation0]]
  $region61: #{discriminator_forward.1} parent=0
    _
  %s10 = ssub.s32 1, %s8
  %s11 = scalar_select 0, %s10, %s8
  %v12 = vstv %s6
  %13 = vst [vmem:[#allocation2] sm:$0x1] %v12
  loop: start=0, step=1, limit=4
  $region2: #{discriminator_forward.1} parent=0 // loop_pre_header
    _
  $region3: #{discriminator_forward.1} parent=0 // loop_header
    %s15 = sphi 0, %s19
    %p16 = scmp.ge.s32.totalorder %s15, 4
    %s25 = sphi 0, %s27
    %s28 = sphi 0, %s25
    %s29 = sphi 0, %s28
    %s45 = sphi 0, %s29
    %s49 = sphi 0, %s49
    %s51 = sphi 0, %s49
    %s52 = sphi 0, %s51
    %s66 = sphi 0, %s52
    %s70 = sphi 0, %s70
    %s72 = sphi 0, %s70
    %s73 = sphi 0, %s72
    %s87 = sphi 0, %s73
    %s91 = sphi 0, %s91
    %s93 = sphi 0, %s91
    %s94 = sphi 0, %s93
    %s108 = sphi 0, %s94
    %s112 = sphi 0, %s112
    %s114 = sphi 0, %s112
    %s115 = sphi 0, %s114
    %s129 = sphi 0, %s115
    %s133 = sphi 0, %s133
    %s135 = sphi 0, %s133
    %s136 = sphi 0, %s135
    %s150 = sphi 0, %s136
    %s154 = sphi 0, %s154
    %s156 = sphi 0, %s154
    %s157 = sphi 0, %s156
    %s171 = sphi 0, %s157
    %s177 = sphi 0, %s179
    %s180 = sphi 0, %s177
    %s181 = sphi 0, %s180
    %s197 = sphi 0, %s181
  $region4: #{discriminator_forward.1} parent=0 // loop_header_branch
    %18 = sbr.rel (%p16) target = $region8
  $region5: #{discriminator_forward.1} parent=0 // loop_body
    %s20 = ssub.s32 %s15, 1
    %s21 = ssub.s32 %s15, 2
    %s22 = sadd.s32 %s15, 1
    %s23 = ssub.s32 %s15, %s22
    %p24 = scmp.eq.s32.totalorder %s23, 0
    %s26 = sadd.s32 %s25, 1
    %s27 = scalar_select %p24, %s25, %s26
    %p30 = pneg %p24
    %p31 = scmp.eq.s32.totalorder %s15, 1
    %p32 = por %p30, %p31
    %p33 = scmp.ne.s32.totalorder %s25, %s28
    %p34 = scmp.eq.s32.totalorder %s15, 0
    %p35 = por %p33, %p34
    %p36 = scmp.ne.s32.totalorder %s25, %s28
    %p37 = scmp.eq.s32.totalorder %s20, 1
    %p38 = por %p36, %p37
    %p39 = scmp.ne.s32.totalorder %s28, %s29
    %p40 = scmp.eq.s32.totalorder %s20, 0
    %p41 = por %p39, %p40
    %p42 = scmp.ne.s32.totalorder %s28, %s29
    %p43 = scmp.eq.s32.totalorder %s21, 1
    %p44 = por %p42, %p43
    %p46 = scmp.ne.s32.totalorder %s29, %s45
    %p47 = scmp.eq.s32.totalorder %s21, 0
    %p48 = por %p46, %p47
    %s50 = sadd.s32 %s49, 1
    %p53 = scmp.eq.s32.totalorder %s15, 1
    %p54 = scmp.ne.s32.totalorder %s49, %s51
    %p55 = scmp.eq.s32.totalorder %s15, 0
    %p56 = por %p54, %p55
    %p57 = scmp.ne.s32.totalorder %s49, %s51
    %p58 = scmp.eq.s32.totalorder %s20, 1
    %p59 = por %p57, %p58
    %p60 = scmp.ne.s32.totalorder %s51, %s52
    %p61 = scmp.eq.s32.totalorder %s20, 0
    %p62 = por %p60, %p61
    %p63 = scmp.ne.s32.totalorder %s51, %s52
    %p64 = scmp.eq.s32.totalorder %s21, 1
    %p65 = por %p63, %p64
    %p67 = scmp.ne.s32.totalorder %s52, %s66
    %p68 = scmp.eq.s32.totalorder %s21, 0
    %p69 = por %p67, %p68
    %s71 = sadd.s32 %s70, 1
    %p74 = scmp.eq.s32.totalorder %s15, 1
    %p75 = scmp.ne.s32.totalorder %s70, %s72
    %p76 = scmp.eq.s32.totalorder %s15, 0
    %p77 = por %p75, %p76
    %p78 = scmp.ne.s32.totalorder %s70, %s72
    %p79 = scmp.eq.s32.totalorder %s20, 1
    %p80 = por %p78, %p79
    %p81 = scmp.ne.s32.totalorder %s72, %s73
    %p82 = scmp.eq.s32.totalorder %s20, 0
    %p83 = por %p81, %p82
    %p84 = scmp.ne.s32.totalorder %s72, %s73
    %p85 = scmp.eq.s32.totalorder %s21, 1
    %p86 = por %p84, %p85
    %p88 = scmp.ne.s32.totalorder %s73, %s87
    %p89 = scmp.eq.s32.totalorder %s21, 0
    %p90 = por %p88, %p89
    %s92 = sadd.s32 %s91, 1
    %p95 = scmp.eq.s32.totalorder %s15, 1
    %p96 = scmp.ne.s32.totalorder %s91, %s93
    %p97 = scmp.eq.s32.totalorder %s15, 0
    %p98 = por %p96, %p97
    %p99 = scmp.ne.s32.totalorder %s91, %s93
    %p100 = scmp.eq.s32.totalorder %s20, 1
    %p101 = por %p99, %p100
    %p102 = scmp.ne.s32.totalorder %s93, %s94
    %p103 = scmp.eq.s32.totalorder %s20, 0
    %p104 = por %p102, %p103
    %p105 = scmp.ne.s32.totalorder %s93, %s94
    %p106 = scmp.eq.s32.totalorder %s21, 1
    %p107 = por %p105, %p106
    %p109 = scmp.ne.s32.totalorder %s94, %s108
    %p110 = scmp.eq.s32.totalorder %s21, 0
    %p111 = por %p109, %p110
    %s113 = sadd.s32 %s112, 1
    %p116 = scmp.eq.s32.totalorder %s15, 1
    %p117 = scmp.ne.s32.totalorder %s112, %s114
    %p118 = scmp.eq.s32.totalorder %s15, 0
    %p119 = por %p117, %p118
    %p120 = scmp.ne.s32.totalorder %s112, %s114
    %p121 = scmp.eq.s32.totalorder %s20, 1
    %p122 = por %p120, %p121
    %p123 = scmp.ne.s32.totalorder %s114, %s115
    %p124 = scmp.eq.s32.totalorder %s20, 0
    %p125 = por %p123, %p124
    %p126 = scmp.ne.s32.totalorder %s114, %s115
    %p127 = scmp.eq.s32.totalorder %s21, 1
    %p128 = por %p126, %p127
    %p130 = scmp.ne.s32.totalorder %s115, %s129
    %p131 = scmp.eq.s32.totalorder %s21, 0
    %p132 = por %p130, %p131
    %s134 = sadd.s32 %s133, 1
    %p137 = scmp.eq.s32.totalorder %s15, 1
    %p138 = scmp.ne.s32.totalorder %s133, %s135
    %p139 = scmp.eq.s32.totalorder %s15, 0
    %p140 = por %p138, %p139
    %p141 = scmp.ne.s32.totalorder %s133, %s135
    %p142 = scmp.eq.s32.totalorder %s20, 1
    %p143 = por %p141, %p142
    %p144 = scmp.ne.s32.totalorder %s135, %s136
    %p145 = scmp.eq.s32.totalorder %s20, 0
    %p146 = por %p144, %p145
    %p147 = scmp.ne.s32.totalorder %s135, %s136
    %p148 = scmp.eq.s32.totalorder %s21, 1
    %p149 = por %p147, %p148
    %p151 = scmp.ne.s32.totalorder %s136, %s150
    %p152 = scmp.eq.s32.totalorder %s21, 0
    %p153 = por %p151, %p152
    %s155 = sadd.s32 %s154, 1
    %p158 = scmp.eq.s32.totalorder %s15, 1
    %p159 = scmp.ne.s32.totalorder %s154, %s156
    %p160 = scmp.eq.s32.totalorder %s15, 0
    %p161 = por %p159, %p160
    %p162 = scmp.ne.s32.totalorder %s154, %s156
    %p163 = scmp.eq.s32.totalorder %s20, 1
    %p164 = por %p162, %p163
    %p165 = scmp.ne.s32.totalorder %s156, %s157
    %p166 = scmp.eq.s32.totalorder %s20, 0
    %p167 = por %p165, %p166
    %p168 = scmp.ne.s32.totalorder %s156, %s157
    %p169 = scmp.eq.s32.totalorder %s21, 1
    %p170 = por %p168, %p169
    %p172 = scmp.ne.s32.totalorder %s157, %s171
    %p173 = scmp.eq.s32.totalorder %s21, 0
    %p174 = por %p172, %p173
    %s175 = ssub.s32 %s15, %s22
    %p176 = scmp.eq.s32.totalorder %s175, 0
    %s178 = sadd.s32 %s177, 1
    %s179 = scalar_select %p176, %s177, %s178
    %p182 = pneg %p176
    %p183 = scmp.eq.s32.totalorder %s15, 1
    %p184 = por %p182, %p183
    %p185 = scmp.ne.s32.totalorder %s177, %s180
    %p186 = scmp.eq.s32.totalorder %s15, 0
    %p187 = por %p185, %p186
    %p188 = scmp.ne.s32.totalorder %s177, %s180
    %p189 = scmp.eq.s32.totalorder %s20, 1
    %p190 = por %p188, %p189
    %p191 = scmp.ne.s32.totalorder %s180, %s181
    %p192 = scmp.eq.s32.totalorder %s20, 0
    %p193 = por %p191, %p192
    %p194 = scmp.ne.s32.totalorder %s180, %s181
    %p195 = scmp.eq.s32.totalorder %s21, 1
    %p196 = por %p194, %p195
    %p198 = scmp.ne.s32.totalorder %s181, %s197
    %p199 = scmp.eq.s32.totalorder %s21, 0
    %p200 = por %p198, %p199
    %p201 = scmp.le.s32.totalorder 1, %s15
    %p202 = scmp.lt.s32.totalorder %s15, 3
    %p203 = pnand %p201, %p202
    %p204 = pneg %p203
    // Predicated region
    $region9: #{discriminator_forward.1} parent=5 // pred_check
      _
    $region10: #{discriminator_forward.1} parent=5 // pred_check_branch
      %206 = sbr.rel (%p203) target = $region12
    $region11: #{discriminator_forward.1} parent=5 // pred_region
      %s207 = ssub.s32 %s15, 1
      // Predicated region
      $region13: #{discriminator_forward.1} parent=11 // pred_check
        %p208 = pneg %p62
      $region14: #{discriminator_forward.1} parent=11 // pred_check_branch
        %210 = sbr.rel (%p208) target = $region16
      $region15: #{discriminator_forward.1} parent=11 // pred_region
        _
      $region16: #{discriminator_forward.1} parent=11 // pred_fallthru
        _
      // Predicated region
      $region17: #{discriminator_forward.1} parent=11 // pred_check
        %p211 = pneg %p83
      $region18: #{discriminator_forward.1} parent=11 // pred_check_branch
        %213 = sbr.rel (%p211) target = $region20
      $region19: #{discriminator_forward.1} parent=11 // pred_region
        _
      $region20: #{discriminator_forward.1} parent=11 // pred_fallthru
        _
      // Predicated region
      $region21: #{discriminator_forward.1} parent=11 // pred_check
        %p214 = pneg %p104
      $region22: #{discriminator_forward.1} parent=11 // pred_check_branch
        %216 = sbr.rel (%p214) target = $region24
      $region23: #{discriminator_forward.1} parent=11 // pred_region
        _
      $region24: #{discriminator_forward.1} parent=11 // pred_fallthru
        _
      // Predicated region
      $region25: #{discriminator_forward.1} parent=11 // pred_check
        %p217 = pneg %p125
      $region26: #{discriminator_forward.1} parent=11 // pred_check_branch
        %219 = sbr.rel (%p217) target = $region28
      $region27: #{discriminator_forward.1} parent=11 // pred_region
        _
      $region28: #{discriminator_forward.1} parent=11 // pred_fallthru
        _
      // Predicated region
      $region29: #{discriminator_forward.1} parent=11 // pred_check
        %p220 = pneg %p146
      $region30: #{discriminator_forward.1} parent=11 // pred_check_branch
        %222 = sbr.rel (%p220) target = $region32
      $region31: #{discriminator_forward.1} parent=11 // pred_region
        _
      $region32: #{discriminator_forward.1} parent=11 // pred_fallthru
        _
      // Predicated region
      $region33: #{discriminator_forward.1} parent=11 // pred_check
        %p223 = pneg %p167
      $region34: #{discriminator_forward.1} parent=11 // pred_check_branch
        %225 = sbr.rel (%p223) target = $region36
      $region35: #{discriminator_forward.1} parent=11 // pred_region
        _
      $region36: #{discriminator_forward.1} parent=11 // pred_fallthru
        _
    $region12: #{discriminator_forward.1} parent=5 // pred_fallthru
      _
    %p226 = scmp.lt.s32.totalorder %s15, 2
    // Predicated region
    $region37: #{discriminator_forward.1} parent=5 // pred_check
      %p227 = pneg %p226
    $region38: #{discriminator_forward.1} parent=5 // pred_check_branch
      %229 = sbr.rel (%p227) target = $region40
    $region39: #{discriminator_forward.1} parent=5 // pred_region
      // Predicated region
      $region41: #{discriminator_forward.1} parent=39 // pred_check
        %p230 = pneg %p35
      $region42: #{discriminator_forward.1} parent=39 // pred_check_branch
        %232 = sbr.rel (%p230) target = $region44
      $region43: #{discriminator_forward.1} parent=39 // pred_region
        %s233 = smul.u32 98, %s15
        %p234 = scmp.lt.s32.totalorder %s233, 195
        %s235 = scalar_select %p234, %s233, 195
        %s236 = smul.addr %s235, 2
        %s237 = smul.addr %s236, 4
        %s238 = scalar_lea.vmem %s0, %s237
        %s239 = smul.u32 98, %s15
      $region44: #{discriminator_forward.1} parent=39 // pred_fallthru
        _
    $region40: #{discriminator_forward.1} parent=5 // pred_fallthru
      _
    %p240 = scmp.le.s32.totalorder 1, %s15
    %p241 = scmp.lt.s32.totalorder %s15, 3
    %p242 = pnand %p240, %p241
    %p243 = pneg %p242
    // Predicated region
    $region45: #{discriminator_forward.1} parent=5 // pred_check
      _
    $region46: #{discriminator_forward.1} parent=5 // pred_check_branch
      %245 = sbr.rel (%p242) target = $region48
    $region47: #{discriminator_forward.1} parent=5 // pred_region
      %s246 = ssub.s32 %s15, 1
      %s247 = smul.u32 98, %s20
      %p248 = scmp.lt.s32.totalorder %s247, 195
      %s249 = scalar_select %p248, %s247, 195
      %s250 = smul.addr %s249, 2
      %s251 = smul.addr %s250, 4
      %s252 = scalar_lea.vmem %s0, %s251
      %p253 = pneg %p41
      %p254 = pneg %p38
      %p255 = pneg %p62
      %p256 = pneg %p59
      %p257 = pneg %p83
      %p258 = pneg %p80
      %p259 = pneg %p104
      %p260 = pneg %p101
      %p261 = pneg %p125
      %p262 = pneg %p122
      %p263 = pneg %p146
      %p264 = pneg %p143
      %p265 = pneg %p167
      %p266 = pneg %p164
      %p267 = pneg %p193
      %p268 = pneg %p190
      %s269 = smul.u32 2, %s20
      %p270 = scmp.lt.s32.totalorder %s269, 3
      %s271 = scalar_select %p270, %s269, 3
      %s272 = smul.addr %s271, 8
      %s273 = scalar_lea.vmem %s7, %s272
      %s274 = smul.u32 98, %s20
      %p275 = scmp.lt.s32.totalorder %s274, 195
      %s276 = scalar_select %p275, %s274, 195
      %s277 = smul.addr %s276, 2
      %s278 = smul.addr %s277, 4
      %s279 = scalar_lea.vmem %s0, %s278
      %s280 = smul.u32 98, %s20
      %s281 = smul.u32 2, %s20
      %p282 = scmp.lt.s32.totalorder %s281, 3
      %s283 = scalar_select %p282, %s281, 3
      %s284 = smul.addr %s283, 8
      %s285 = scalar_lea.vmem %s7, %s284
      %s286 = smul.u32 2, %s20
      %v288 = vld [vmem:[%s279] sm:$0xff]
      %v289 = vld [vmem:[%s279 + $0x8] sm:$0xff]
      %v290 = vld [vmem:[%s279 + $0x10] sm:$0xff]
      %v291 = vld [vmem:[%s279 + $0x18] sm:$0xff]
      %v292 = vld [vmem:[%s279 + $0x20] sm:$0xff]
      %v293 = vld [vmem:[%s279 + $0x28] sm:$0xff]
      %v294 = vld [vmem:[%s279 + $0x30] sm:$0xff]
      %v295 = vld [vmem:[%s279 + $0x38] sm:$0xff]
      %v296 = vld [vmem:[%s279 + $0x40] sm:$0xff]
      %v297 = vld [vmem:[%s279 + $0x48] sm:$0xff]
      %v298 = vld [vmem:[%s279 + $0x50] sm:$0xff]
      %v299 = vld [vmem:[%s279 + $0x58] sm:$0xff]
      %v300 = vld [vmem:[%s279 + $0x60] sm:$0xff]
      %v301 = vld [vmem:[%s279 + $0x68] sm:$0xff]
      %v302 = vld [vmem:[%s279 + $0x70] sm:$0xff]
      %v303 = vld [vmem:[%s279 + $0x78] sm:$0xff]
      %v304 = vld [vmem:[%s279 + $0x80] sm:$0xff]
      %v305 = vld [vmem:[%s279 + $0x88] sm:$0xff]
      %v306 = vld [vmem:[%s279 + $0x90] sm:$0xff]
      %v307 = vld [vmem:[%s279 + $0x98] sm:$0xff]
      %v308 = vld [vmem:[%s279 + $0xa0] sm:$0xff]
      %v309 = vld [vmem:[%s279 + $0xa8] sm:$0xff]
      %v310 = vld [vmem:[%s279 + $0xb0] sm:$0xff]
      %v311 = vld [vmem:[%s279 + $0xb8] sm:$0xff]
      %v312 = vld [vmem:[%s279 + $0xc0] sm:$0xff]
      %v313 = vld [vmem:[%s279 + $0xc8] sm:$0xff]
      %v314 = vld [vmem:[%s279 + $0xd0] sm:$0xff]
      %v315 = vld [vmem:[%s279 + $0xd8] sm:$0xff]
      %v316 = vld [vmem:[%s279 + $0xe0] sm:$0xff]
      %v317 = vld [vmem:[%s279 + $0xe8] sm:$0xff]
      %v318 = vld [vmem:[%s279 + $0xf0] sm:$0xff]
      %v319 = vld [vmem:[%s279 + $0xf8] sm:$0xff]
      %v320 = vld [vmem:[%s279 + $0x100] sm:$0xff]
      %v321 = vld [vmem:[%s279 + $0x108] sm:$0xff]
      %v322 = vld [vmem:[%s279 + $0x110] sm:$0xff]
      %v323 = vld [vmem:[%s279 + $0x118] sm:$0xff]
      %v324 = vld [vmem:[%s279 + $0x120] sm:$0xff]
      %v325 = vld [vmem:[%s279 + $0x128] sm:$0xff]
      %v326 = vld [vmem:[%s279 + $0x130] sm:$0xff]
      %v327 = vld [vmem:[%s279 + $0x138] sm:$0xff]
      %v328 = vld [vmem:[%s279 + $0x140] sm:$0xff]
      %v329 = vld [vmem:[%s279 + $0x148] sm:$0xff]
      %v330 = vld [vmem:[%s279 + $0x150] sm:$0xff]
      %v331 = vld [vmem:[%s279 + $0x158] sm:$0xff]
      %v332 = vld [vmem:[%s279 + $0x160] sm:$0xff]
      %v333 = vld [vmem:[%s279 + $0x168] sm:$0xff]
      %v334 = vld [vmem:[%s279 + $0x170] sm:$0xff]
      %v335 = vld [vmem:[%s279 + $0x178] sm:$0xff]
      %v336 = vld [vmem:[%s279 + $0x180] sm:$0xff]
      %v337 = vld [vmem:[%s279 + $0x188] sm:$0xff]
      %v338 = vld [vmem:[%s279 + $0x190] sm:$0xff]
      %v339 = vld [vmem:[%s279 + $0x198] sm:$0xff]
      %v340 = vld [vmem:[%s279 + $0x1a0] sm:$0xff]
      %v341 = vld [vmem:[%s279 + $0x1a8] sm:$0xff]
      %v342 = vld [vmem:[%s279 + $0x1b0] sm:$0xff]
      %v343 = vld [vmem:[%s279 + $0x1b8] sm:$0xff]
      %v344 = vld [vmem:[%s279 + $0x1c0] sm:$0xff]
      %v345 = vld [vmem:[%s279 + $0x1c8] sm:$0xff]
      %v346 = vld [vmem:[%s279 + $0x1d0] sm:$0xff]
      %v347 = vld [vmem:[%s279 + $0x1d8] sm:$0xff]
      %v348 = vld [vmem:[%s279 + $0x1e0] sm:$0xff]
      %v349 = vld [vmem:[%s279 + $0x1e8] sm:$0xff]
      %v350 = vld [vmem:[%s279 + $0x1f0] sm:$0xff]
      %v351 = vld [vmem:[%s279 + $0x1f8] sm:$0xff]
      %v352 = vld [vmem:[%s279 + $0x200] sm:$0xff]
      %v353 = vld [vmem:[%s279 + $0x208] sm:$0xff]
      %v354 = vld [vmem:[%s279 + $0x210] sm:$0xff]
      %v355 = vld [vmem:[%s279 + $0x218] sm:$0xff]
      %v356 = vld [vmem:[%s279 + $0x220] sm:$0xff]
      %v357 = vld [vmem:[%s279 + $0x228] sm:$0xff]
      %v358 = vld [vmem:[%s279 + $0x230] sm:$0xff]
      %v359 = vld [vmem:[%s279 + $0x238] sm:$0xff]
      %v360 = vld [vmem:[%s279 + $0x240] sm:$0xff]
      %v361 = vld [vmem:[%s279 + $0x248] sm:$0xff]
      %v362 = vld [vmem:[%s279 + $0x250] sm:$0xff]
      %v363 = vld [vmem:[%s279 + $0x258] sm:$0xff]
      %v364 = vld [vmem:[%s279 + $0x260] sm:$0xff]
      %v365 = vld [vmem:[%s279 + $0x268] sm:$0xff]
      %v366 = vld [vmem:[%s279 + $0x270] sm:$0xff]
      %v367 = vld [vmem:[%s279 + $0x278] sm:$0xff]
      %v368 = vld [vmem:[%s279 + $0x280] sm:$0xff]
      %v369 = vld [vmem:[%s279 + $0x288] sm:$0xff]
      %v370 = vld [vmem:[%s279 + $0x290] sm:$0xff]
      %v371 = vld [vmem:[%s279 + $0x298] sm:$0xff]
      %v372 = vld [vmem:[%s279 + $0x2a0] sm:$0xff]
      %v373 = vld [vmem:[%s279 + $0x2a8] sm:$0xff]
      %v374 = vld [vmem:[%s279 + $0x2b0] sm:$0xff]
      %v375 = vld [vmem:[%s279 + $0x2b8] sm:$0xff]
      %v376 = vld [vmem:[%s279 + $0x2c0] sm:$0xff]
      %v377 = vld [vmem:[%s279 + $0x2c8] sm:$0xff]
      %v378 = vld [vmem:[%s279 + $0x2d0] sm:$0xff]
      %v379 = vld [vmem:[%s279 + $0x2d8] sm:$0xff]
      %v380 = vld [vmem:[%s279 + $0x2e0] sm:$0xff]
      %v381 = vld [vmem:[%s279 + $0x2e8] sm:$0xff]
      %v382 = vld [vmem:[%s279 + $0x2f0] sm:$0xff]
      %v383 = vld [vmem:[%s279 + $0x2f8] sm:$0xff]
      %v384 = vld [vmem:[%s279 + $0x300] sm:$0xff]
      %v385 = vld [vmem:[%s279 + $0x308] sm:$0xff]
      %v386 = vld [vmem:[%s1] sm:$0xff]
      %v387 = vld [vmem:[%s1 + $0x8] sm:$0xff]
      %v388 = vld [vmem:[%s1 + $0x10] sm:$0xf]
      %v389 = vld [vmem:[%s1 + $0x14] sm:$0xff]
      %v390 = vld [vmem:[%s1 + $0x1c] sm:$0xff]
      %v391 = vld [vmem:[%s1 + $0x24] sm:$0xf]
      %v392 = vld [vmem:[%s1 + $0x28] sm:$0xff]
      %v393 = vld [vmem:[%s1 + $0x30] sm:$0xff]
      %v394 = vld [vmem:[%s1 + $0x38] sm:$0xf]
      %v395 = vld [vmem:[%s1 + $0x3c] sm:$0xff]
      %v396 = vld [vmem:[%s1 + $0x44] sm:$0xff]
      %v397 = vld [vmem:[%s1 + $0x4c] sm:$0xf]
      %v398 = vld [vmem:[%s1 + $0x50] sm:$0xff]
      %v399 = vld [vmem:[%s1 + $0x58] sm:$0xff]
      %v400 = vld [vmem:[%s1 + $0x60] sm:$0xf]
      %v401 = vld [vmem:[%s1 + $0x64] sm:$0xff]
      %v402 = vld [vmem:[%s1 + $0x6c] sm:$0xff]
      %v403 = vld [vmem:[%s1 + $0x74] sm:$0xf]
      %v404 = vld [vmem:[%s1 + $0x78] sm:$0xff]
      %v405 = vld [vmem:[%s1 + $0x80] sm:$0xff]
      %v406 = vld [vmem:[%s1 + $0x88] sm:$0xf]
      %v407 = vld [vmem:[%s1 + $0x8c] sm:$0xff]
      %v408 = vld [vmem:[%s1 + $0x94] sm:$0xff]
      %v409 = vld [vmem:[%s1 + $0x9c] sm:$0xf]
      %v410 = vld [vmem:[%s1 + $0xa0] sm:$0xff]
      %v411 = vld [vmem:[%s1 + $0xa8] sm:$0xff]
      %v412 = vld [vmem:[%s1 + $0xb0] sm:$0xf]
      %v413 = vld [vmem:[%s1 + $0xb4] sm:$0xff]
      %v414 = vld [vmem:[%s1 + $0xbc] sm:$0xff]
      %v415 = vld [vmem:[%s1 + $0xc4] sm:$0xf]
      %v416 = vld [vmem:[%s1 + $0xc8] sm:$0xff]
      %v417 = vld [vmem:[%s1 + $0xd0] sm:$0xff]
      %v418 = vld [vmem:[%s1 + $0xd8] sm:$0xf]
      %v419 = vld [vmem:[%s1 + $0xdc] sm:$0xff]
      %v420 = vld [vmem:[%s1 + $0xe4] sm:$0xff]
      %v421 = vld [vmem:[%s1 + $0xec] sm:$0xf]
      %v422 = vld [vmem:[%s1 + $0xf0] sm:$0xff]
      %v423 = vld [vmem:[%s1 + $0xf8] sm:$0xff]
      %v424 = vld [vmem:[%s1 + $0x100] sm:$0xf]
      %v425 = vld [vmem:[%s1 + $0x104] sm:$0xff]
      %v426 = vld [vmem:[%s1 + $0x10c] sm:$0xff]
      %v427 = vld [vmem:[%s1 + $0x114] sm:$0xf]
      %v428 = vld [vmem:[%s1 + $0x118] sm:$0xff]
      %v429 = vld [vmem:[%s1 + $0x120] sm:$0xff]
      %v430 = vld [vmem:[%s1 + $0x128] sm:$0xf]
      %v431 = vld [vmem:[%s1 + $0x12c] sm:$0xff]
      %v432 = vld [vmem:[%s1 + $0x134] sm:$0xff]
      %v433 = vld [vmem:[%s1 + $0x13c] sm:$0xf]
      %v434 = vld [vmem:[%s1 + $0x140] sm:$0xff]
      %v435 = vld [vmem:[%s1 + $0x148] sm:$0xff]
      %v436 = vld [vmem:[%s1 + $0x150] sm:$0xf]
      %v437 = vld [vmem:[%s1 + $0x154] sm:$0xff]
      %v438 = vld [vmem:[%s1 + $0x15c] sm:$0xff]
      %v439 = vld [vmem:[%s1 + $0x164] sm:$0xf]
      %v440 = vld [vmem:[%s1 + $0x168] sm:$0xff]
      %v441 = vld [vmem:[%s1 + $0x170] sm:$0xff]
      %v442 = vld [vmem:[%s1 + $0x178] sm:$0xf]
      %v443 = vld [vmem:[%s1 + $0x17c] sm:$0xff]
      %v444 = vld [vmem:[%s1 + $0x184] sm:$0xff]
      %v445 = vld [vmem:[%s1 + $0x18c] sm:$0xf]
      %v446 = vld [vmem:[%s1 + $0x190] sm:$0xff]
      %v447 = vld [vmem:[%s1 + $0x198] sm:$0xff]
      %v448 = vld [vmem:[%s1 + $0x1a0] sm:$0xf]
      %v449 = vld [vmem:[%s1 + $0x1a4] sm:$0x33]
      %v450 = vld [vmem:[%s1 + $0x1ac] sm:$0x33]
      %v451 = vld [vmem:[%s1 + $0x1b4] sm:$0x3]
      %v550 = vunpack.c.l.b16 %v288
      %v551 = vunpack.c.h.b16 %v288
      %v552 = vunpack.c.l.b16 %v289
      %v553 = vunpack.c.h.b16 %v289
      %v554 = vunpack.c.l.b16 %v290
      %v555 = vunpack.c.h.b16 %v290
      %v556 = vunpack.c.l.b16 %v291
      %v557 = vunpack.c.h.b16 %v291
      %v558 = vunpack.c.l.b16 %v292
      %v559 = vunpack.c.h.b16 %v292
      %v560 = vunpack.c.l.b16 %v293
      %v561 = vunpack.c.h.b16 %v293
      %v562 = vunpack.c.l.b16 %v294
      %v563 = vunpack.c.h.b16 %v294
      %v564 = vunpack.c.l.b16 %v295
      %v565 = vunpack.c.h.b16 %v295
      %v566 = vunpack.c.l.b16 %v296
      %v567 = vunpack.c.h.b16 %v296
      %v568 = vunpack.c.l.b16 %v297
      %v569 = vunpack.c.h.b16 %v297
      %v570 = vunpack.c.l.b16 %v298
      %v571 = vunpack.c.h.b16 %v298
      %v572 = vunpack.c.l.b16 %v299
      %v573 = vunpack.c.h.b16 %v299
      %v574 = vunpack.c.l.b16 %v300
      %v575 = vunpack.c.h.b16 %v300
      %v576 = vunpack.c.l.b16 %v301
      %v577 = vunpack.c.h.b16 %v301
      %v578 = vunpack.c.l.b16 %v302
      %v579 = vunpack.c.h.b16 %v302
      %v580 = vunpack.c.l.b16 %v303
      %v581 = vunpack.c.h.b16 %v303
      %v582 = vunpack.c.l.b16 %v304
      %v583 = vunpack.c.h.b16 %v304
      %v584 = vunpack.c.l.b16 %v305
      %v585 = vunpack.c.h.b16 %v305
      %v586 = vunpack.c.l.b16 %v306
      %v587 = vunpack.c.h.b16 %v306
      %v588 = vunpack.c.l.b16 %v307
      %v589 = vunpack.c.h.b16 %v307
      %v590 = vunpack.c.l.b16 %v308
      %v591 = vunpack.c.h.b16 %v308
      %v592 = vunpack.c.l.b16 %v309
      %v593 = vunpack.c.h.b16 %v309
      %v594 = vunpack.c.l.b16 %v310
      %v595 = vunpack.c.h.b16 %v310
      %v596 = vunpack.c.l.b16 %v311
      %v597 = vunpack.c.h.b16 %v311
      %v598 = vunpack.c.l.b16 %v312
      %v599 = vunpack.c.h.b16 %v312
      %v600 = vunpack.c.l.b16 %v313
      %v601 = vunpack.c.h.b16 %v313
      %v602 = vunpack.c.l.b16 %v314
      %v603 = vunpack.c.h.b16 %v314
      %v604 = vunpack.c.l.b16 %v315
      %v605 = vunpack.c.h.b16 %v315
      %v606 = vunpack.c.l.b16 %v316
      %v607 = vunpack.c.h.b16 %v316
      %v608 = vunpack.c.l.b16 %v317
      %v609 = vunpack.c.h.b16 %v317
      %v610 = vunpack.c.l.b16 %v318
      %v611 = vunpack.c.h.b16 %v318
      %v612 = vunpack.c.l.b16 %v319
      %v613 = vunpack.c.h.b16 %v319
      %v614 = vunpack.c.l.b16 %v320
      %v615 = vunpack.c.h.b16 %v320
      %v616 = vunpack.c.l.b16 %v321
      %v617 = vunpack.c.h.b16 %v321
      %v618 = vunpack.c.l.b16 %v322
      %v619 = vunpack.c.h.b16 %v322
      %v620 = vunpack.c.l.b16 %v323
      %v621 = vunpack.c.h.b16 %v323
      %v622 = vunpack.c.l.b16 %v324
      %v623 = vunpack.c.h.b16 %v324
      %v624 = vunpack.c.l.b16 %v325
      %v625 = vunpack.c.h.b16 %v325
      %v626 = vunpack.c.l.b16 %v326
      %v627 = vunpack.c.h.b16 %v326
      %v628 = vunpack.c.l.b16 %v327
      %v629 = vunpack.c.h.b16 %v327
      %v630 = vunpack.c.l.b16 %v328
      %v631 = vunpack.c.h.b16 %v328
      %v632 = vunpack.c.l.b16 %v329
      %v633 = vunpack.c.h.b16 %v329
      %v634 = vunpack.c.l.b16 %v330
      %v635 = vunpack.c.h.b16 %v330
      %v636 = vunpack.c.l.b16 %v331
      %v637 = vunpack.c.h.b16 %v331
      %v638 = vunpack.c.l.b16 %v332
      %v639 = vunpack.c.h.b16 %v332
      %v640 = vunpack.c.l.b16 %v333
      %v641 = vunpack.c.h.b16 %v333
      %v642 = vunpack.c.l.b16 %v334
      %v643 = vunpack.c.h.b16 %v334
      %v644 = vunpack.c.l.b16 %v335
      %v645 = vunpack.c.h.b16 %v335
      %v646 = vunpack.c.l.b16 %v336
      %v647 = vunpack.c.h.b16 %v336
      %v648 = vunpack.c.l.b16 %v337
      %v649 = vunpack.c.h.b16 %v337
      %v650 = vunpack.c.l.b16 %v338
      %v651 = vunpack.c.h.b16 %v338
      %v652 = vunpack.c.l.b16 %v339
      %v653 = vunpack.c.h.b16 %v339
      %v654 = vunpack.c.l.b16 %v340
      %v655 = vunpack.c.h.b16 %v340
      %v656 = vunpack.c.l.b16 %v341
      %v657 = vunpack.c.h.b16 %v341
      %v658 = vunpack.c.l.b16 %v342
      %v659 = vunpack.c.h.b16 %v342
      %v660 = vunpack.c.l.b16 %v343
      %v661 = vunpack.c.h.b16 %v343
      %v662 = vunpack.c.l.b16 %v344
      %v663 = vunpack.c.h.b16 %v344
      %v664 = vunpack.c.l.b16 %v345
      %v665 = vunpack.c.h.b16 %v345
      %v666 = vunpack.c.l.b16 %v346
      %v667 = vunpack.c.h.b16 %v346
      %v668 = vunpack.c.l.b16 %v347
      %v669 = vunpack.c.h.b16 %v347
      %v670 = vunpack.c.l.b16 %v348
      %v671 = vunpack.c.h.b16 %v348
      %v672 = vunpack.c.l.b16 %v349
      %v673 = vunpack.c.h.b16 %v349
      %v674 = vunpack.c.l.b16 %v350
      %v675 = vunpack.c.h.b16 %v350
      %v676 = vunpack.c.l.b16 %v351
      %v677 = vunpack.c.h.b16 %v351
      %v678 = vunpack.c.l.b16 %v352
      %v679 = vunpack.c.h.b16 %v352
      %v680 = vunpack.c.l.b16 %v353
      %v681 = vunpack.c.h.b16 %v353
      %v682 = vunpack.c.l.b16 %v354
      %v683 = vunpack.c.h.b16 %v354
      %v684 = vunpack.c.l.b16 %v355
      %v685 = vunpack.c.h.b16 %v355
      %v686 = vunpack.c.l.b16 %v356
      %v687 = vunpack.c.h.b16 %v356
      %v688 = vunpack.c.l.b16 %v357
      %v689 = vunpack.c.h.b16 %v357
      %v690 = vunpack.c.l.b16 %v358
      %v691 = vunpack.c.h.b16 %v358
      %v692 = vunpack.c.l.b16 %v359
      %v693 = vunpack.c.h.b16 %v359
      %v694 = vunpack.c.l.b16 %v360
      %v695 = vunpack.c.h.b16 %v360
      %v696 = vunpack.c.l.b16 %v361
      %v697 = vunpack.c.h.b16 %v361
      %v698 = vunpack.c.l.b16 %v362
      %v699 = vunpack.c.h.b16 %v362
      %v700 = vunpack.c.l.b16 %v363
      %v701 = vunpack.c.h.b16 %v363
      %v702 = vunpack.c.l.b16 %v364
      %v703 = vunpack.c.h.b16 %v364
      %v704 = vunpack.c.l.b16 %v365
      %v705 = vunpack.c.h.b16 %v365
      %v706 = vunpack.c.l.b16 %v366
      %v707 = vunpack.c.h.b16 %v366
      %v708 = vunpack.c.l.b16 %v367
      %v709 = vunpack.c.h.b16 %v367
      %v710 = vunpack.c.l.b16 %v368
      %v711 = vunpack.c.h.b16 %v368
      %v712 = vunpack.c.l.b16 %v369
      %v713 = vunpack.c.h.b16 %v369
      %v714 = vunpack.c.l.b16 %v370
      %v715 = vunpack.c.h.b16 %v370
      %v716 = vunpack.c.l.b16 %v371
      %v717 = vunpack.c.h.b16 %v371
      %v718 = vunpack.c.l.b16 %v372
      %v719 = vunpack.c.h.b16 %v372
      %v720 = vunpack.c.l.b16 %v373
      %v721 = vunpack.c.h.b16 %v373
      %v722 = vunpack.c.l.b16 %v374
      %v723 = vunpack.c.h.b16 %v374
      %v724 = vunpack.c.l.b16 %v375
      %v725 = vunpack.c.h.b16 %v375
      %v726 = vunpack.c.l.b16 %v376
      %v727 = vunpack.c.h.b16 %v376
      %v728 = vunpack.c.l.b16 %v377
      %v729 = vunpack.c.h.b16 %v377
      %v730 = vunpack.c.l.b16 %v378
      %v731 = vunpack.c.h.b16 %v378
      %v732 = vunpack.c.l.b16 %v379
      %v733 = vunpack.c.h.b16 %v379
      %v734 = vunpack.c.l.b16 %v380
      %v735 = vunpack.c.h.b16 %v380
      %v736 = vunpack.c.l.b16 %v381
      %v737 = vunpack.c.h.b16 %v381
      %v738 = vunpack.c.l.b16 %v382
      %v739 = vunpack.c.h.b16 %v382
      %v740 = vunpack.c.l.b16 %v383
      %v741 = vunpack.c.h.b16 %v383
      %v742 = vunpack.c.l.b16 %v384
      %v743 = vunpack.c.h.b16 %v384
      %v744 = vunpack.c.l.b16 %v385
      %v745 = vunpack.c.h.b16 %v385
      %v746 = vpack.c.b16 %v552, %v550
      %v747 = vpack.c.b16 %v553, %v551
      %v748 = vpack.c.b16 %v556, %v554
      %v749 = vpack.c.b16 %v557, %v555
      %v750 = vpack.c.b16 %v560, %v558
      %v751 = vpack.c.b16 %v561, %v559
      %v752 = vpack.c.b16 %v564, %v562
      %v753 = vpack.c.b16 %v565, %v563
      %v754 = vpack.c.b16 %v568, %v566
      %v755 = vpack.c.b16 %v569, %v567
      %v756 = vpack.c.b16 %v572, %v570
      %v757 = vpack.c.b16 %v573, %v571
      %v758 = vpack.c.b16 %v576, %v574
      %v759 = vpack.c.b16 %v577, %v575
      %v760 = vpack.c.b16 %v580, %v578
      %v761 = vpack.c.b16 %v581, %v579
      %v762 = vpack.c.b16 %v584, %v582
      %v763 = vpack.c.b16 %v585, %v583
      %v764 = vpack.c.b16 %v588, %v586
      %v765 = vpack.c.b16 %v589, %v587
      %v766 = vpack.c.b16 %v592, %v590
      %v767 = vpack.c.b16 %v593, %v591
      %v768 = vpack.c.b16 %v596, %v594
      %v769 = vpack.c.b16 %v597, %v595
      %v770 = vpack.c.b16 %v600, %v598
      %v771 = vpack.c.b16 %v601, %v599
      %v772 = vpack.c.b16 %v604, %v602
      %v773 = vpack.c.b16 %v605, %v603
      %v774 = vpack.c.b16 %v608, %v606
      %v775 = vpack.c.b16 %v609, %v607
      %v776 = vpack.c.b16 %v612, %v610
      %v777 = vpack.c.b16 %v613, %v611
      %v778 = vpack.c.b16 %v616, %v614
      %v779 = vpack.c.b16 %v617, %v615
      %v780 = vpack.c.b16 %v620, %v618
      %v781 = vpack.c.b16 %v621, %v619
      %v782 = vpack.c.b16 %v624, %v622
      %v783 = vpack.c.b16 %v625, %v623
      %v784 = vpack.c.b16 %v628, %v626
      %v785 = vpack.c.b16 %v629, %v627
      %v786 = vpack.c.b16 %v632, %v630
      %v787 = vpack.c.b16 %v633, %v631
      %v788 = vpack.c.b16 %v636, %v634
      %v789 = vpack.c.b16 %v637, %v635
      %v790 = vpack.c.b16 %v640, %v638
      %v791 = vpack.c.b16 %v641, %v639
      %v792 = vpack.c.b16 %v644, %v642
      %v793 = vpack.c.b16 %v645, %v643
      %v794 = vpack.c.b16 %v648, %v646
      %v795 = vpack.c.b16 %v649, %v647
      %v796 = vpack.c.b16 %v652, %v650
      %v797 = vpack.c.b16 %v653, %v651
      %v798 = vpack.c.b16 %v656, %v654
      %v799 = vpack.c.b16 %v657, %v655
      %v800 = vpack.c.b16 %v660, %v658
      %v801 = vpack.c.b16 %v661, %v659
      %v802 = vpack.c.b16 %v664, %v662
      %v803 = vpack.c.b16 %v665, %v663
      %v804 = vpack.c.b16 %v668, %v666
      %v805 = vpack.c.b16 %v669, %v667
      %v806 = vpack.c.b16 %v672, %v670
      %v807 = vpack.c.b16 %v673, %v671
      %v808 = vpack.c.b16 %v676, %v674
      %v809 = vpack.c.b16 %v677, %v675
      %v810 = vpack.c.b16 %v680, %v678
      %v811 = vpack.c.b16 %v681, %v679
      %v812 = vpack.c.b16 %v684, %v682
      %v813 = vpack.c.b16 %v685, %v683
      %v814 = vpack.c.b16 %v688, %v686
      %v815 = vpack.c.b16 %v689, %v687
      %v816 = vpack.c.b16 %v692, %v690
      %v817 = vpack.c.b16 %v693, %v691
      %v818 = vpack.c.b16 %v696, %v694
      %v819 = vpack.c.b16 %v697, %v695
      %v820 = vpack.c.b16 %v700, %v698
      %v821 = vpack.c.b16 %v701, %v699
      %v822 = vpack.c.b16 %v704, %v702
      %v823 = vpack.c.b16 %v705, %v703
      %v824 = vpack.c.b16 %v708, %v706
      %v825 = vpack.c.b16 %v709, %v707
      %v826 = vpack.c.b16 %v712, %v710
      %v827 = vpack.c.b16 %v713, %v711
      %v828 = vpack.c.b16 %v716, %v714
      %v829 = vpack.c.b16 %v717, %v715
      %v830 = vpack.c.b16 %v720, %v718
      %v831 = vpack.c.b16 %v721, %v719
      %v832 = vpack.c.b16 %v724, %v722
      %v833 = vpack.c.b16 %v725, %v723
      %v834 = vpack.c.b16 %v728, %v726
      %v835 = vpack.c.b16 %v729, %v727
      %v836 = vpack.c.b16 %v732, %v730
      %v837 = vpack.c.b16 %v733, %v731
      %v838 = vpack.c.b16 %v736, %v734
      %v839 = vpack.c.b16 %v737, %v735
      %v840 = vpack.c.b16 %v740, %v738
      %v841 = vpack.c.b16 %v741, %v739
      %v842 = vpack.c.b16 %v744, %v742
      %v843 = vpack.c.b16 %v745, %v743
      %v959 = vunpack.c.l.b16 %v386
      %v960 = vunpack.c.h.b16 %v386
      %v961 = vunpack.c.l.b16 %v387
      %v962 = vunpack.c.h.b16 %v387
      %v963 = vunpack.c.l.b16 %v388
      %v964 = vunpack.c.l.b16 %v389
      %v965 = vunpack.c.h.b16 %v389
      %v966 = vunpack.c.l.b16 %v390
      %v967 = vunpack.c.h.b16 %v390
      %v968 = vunpack.c.l.b16 %v391
      %v969 = vunpack.c.l.b16 %v392
      %v970 = vunpack.c.h.b16 %v392
      %v971 = vunpack.c.l.b16 %v393
      %v972 = vunpack.c.h.b16 %v393
      %v973 = vunpack.c.l.b16 %v394
      %v974 = vunpack.c.l.b16 %v395
      %v975 = vunpack.c.h.b16 %v395
      %v976 = vunpack.c.l.b16 %v396
      %v977 = vunpack.c.h.b16 %v396
      %v978 = vunpack.c.l.b16 %v397
      %v979 = vunpack.c.l.b16 %v398
      %v980 = vunpack.c.h.b16 %v398
      %v981 = vunpack.c.l.b16 %v399
      %v982 = vunpack.c.h.b16 %v399
      %v983 = vunpack.c.l.b16 %v400
      %v984 = vunpack.c.l.b16 %v401
      %v985 = vunpack.c.h.b16 %v401
      %v986 = vunpack.c.l.b16 %v402
      %v987 = vunpack.c.h.b16 %v402
      %v988 = vunpack.c.l.b16 %v403
      %v989 = vunpack.c.l.b16 %v404
      %v990 = vunpack.c.h.b16 %v404
      %v991 = vunpack.c.l.b16 %v405
      %v992 = vunpack.c.h.b16 %v405
      %v993 = vunpack.c.l.b16 %v406
      %v994 = vunpack.c.l.b16 %v407
      %v995 = vunpack.c.h.b16 %v407
      %v996 = vunpack.c.l.b16 %v408
      %v997 = vunpack.c.h.b16 %v408
      %v998 = vunpack.c.l.b16 %v409
      %v999 = vunpack.c.l.b16 %v410
      %v1000 = vunpack.c.h.b16 %v410
      %v1001 = vunpack.c.l.b16 %v411
      %v1002 = vunpack.c.h.b16 %v411
      %v1003 = vunpack.c.l.b16 %v412
      %v1004 = vunpack.c.l.b16 %v413
      %v1005 = vunpack.c.h.b16 %v413
      %v1006 = vunpack.c.l.b16 %v414
      %v1007 = vunpack.c.h.b16 %v414
      %v1008 = vunpack.c.l.b16 %v415
      %v1009 = vunpack.c.l.b16 %v416
      %v1010 = vunpack.c.h.b16 %v416
      %v1011 = vunpack.c.l.b16 %v417
      %v1012 = vunpack.c.h.b16 %v417
      %v1013 = vunpack.c.l.b16 %v418
      %v1014 = vunpack.c.l.b16 %v419
      %v1015 = vunpack.c.h.b16 %v419
      %v1016 = vunpack.c.l.b16 %v420
      %v1017 = vunpack.c.h.b16 %v420
      %v1018 = vunpack.c.l.b16 %v421
      %v1019 = vunpack.c.l.b16 %v422
      %v1020 = vunpack.c.h.b16 %v422
      %v1021 = vunpack.c.l.b16 %v423
      %v1022 = vunpack.c.h.b16 %v423
      %v1023 = vunpack.c.l.b16 %v424
      %v1024 = vunpack.c.l.b16 %v425
      %v1025 = vunpack.c.h.b16 %v425
      %v1026 = vunpack.c.l.b16 %v426
      %v1027 = vunpack.c.h.b16 %v426
      %v1028 = vunpack.c.l.b16 %v427
      %v1029 = vunpack.c.l.b16 %v428
      %v1030 = vunpack.c.h.b16 %v428
      %v1031 = vunpack.c.l.b16 %v429
      %v1032 = vunpack.c.h.b16 %v429
      %v1033 = vunpack.c.l.b16 %v430
      %v1034 = vunpack.c.l.b16 %v431
      %v1035 = vunpack.c.h.b16 %v431
      %v1036 = vunpack.c.l.b16 %v432
      %v1037 = vunpack.c.h.b16 %v432
      %v1038 = vunpack.c.l.b16 %v433
      %v1039 = vunpack.c.l.b16 %v434
      %v1040 = vunpack.c.h.b16 %v434
      %v1041 = vunpack.c.l.b16 %v435
      %v1042 = vunpack.c.h.b16 %v435
      %v1043 = vunpack.c.l.b16 %v436
      %v1044 = vunpack.c.l.b16 %v437
      %v1045 = vunpack.c.h.b16 %v437
      %v1046 = vunpack.c.l.b16 %v438
      %v1047 = vunpack.c.h.b16 %v438
      %v1048 = vunpack.c.l.b16 %v439
      %v1049 = vunpack.c.l.b16 %v440
      %v1050 = vunpack.c.h.b16 %v440
      %v1051 = vunpack.c.l.b16 %v441
      %v1052 = vunpack.c.h.b16 %v441
      %v1053 = vunpack.c.l.b16 %v442
      %v1054 = vunpack.c.l.b16 %v443
      %v1055 = vunpack.c.h.b16 %v443
      %v1056 = vunpack.c.l.b16 %v444
      %v1057 = vunpack.c.h.b16 %v444
      %v1058 = vunpack.c.l.b16 %v445
      %v1059 = vunpack.c.l.b16 %v446
      %v1060 = vunpack.c.h.b16 %v446
      %v1061 = vunpack.c.l.b16 %v447
      %v1062 = vunpack.c.h.b16 %v447
      %v1063 = vunpack.c.l.b16 %v448
      %v1064 = vunpack.c.l.b16 %v449
      %v1065 = vunpack.c.h.b16 %v449
      %v1066 = vunpack.c.l.b16 %v450
      %v1067 = vunpack.c.h.b16 %v450
      %v1068 = vunpack.c.l.b16 %v451
      %v1069 = vpack.c.b16 %v964, %v959
      %v1070 = vpack.c.b16 %v965, %v960
      %v1071 = vpack.c.b16 %v966, %v961
      %v1072 = vpack.c.b16 %v967, %v962
      %v1073 = vpack.c.b16 %v968, %v963
      %v1074 = vpack.c.b16 %v974, %v969
      %v1075 = vpack.c.b16 %v975, %v970
      %v1076 = vpack.c.b16 %v976, %v971
      %v1077 = vpack.c.b16 %v977, %v972
      %v1078 = vpack.c.b16 %v978, %v973
      %v1079 = vpack.c.b16 %v984, %v979
      %v1080 = vpack.c.b16 %v985, %v980
      %v1081 = vpack.c.b16 %v986, %v981
      %v1082 = vpack.c.b16 %v987, %v982
      %v1083 = vpack.c.b16 %v988, %v983
      %v1084 = vpack.c.b16 %v994, %v989
      %v1085 = vpack.c.b16 %v995, %v990
      %v1086 = vpack.c.b16 %v996, %v991
      %v1087 = vpack.c.b16 %v997, %v992
      %v1088 = vpack.c.b16 %v998, %v993
      %v1089 = vpack.c.b16 %v1004, %v999
      %v1090 = vpack.c.b16 %v1005, %v1000
      %v1091 = vpack.c.b16 %v1006, %v1001
      %v1092 = vpack.c.b16 %v1007, %v1002
      %v1093 = vpack.c.b16 %v1008, %v1003
      %v1094 = vpack.c.b16 %v1014, %v1009
      %v1095 = vpack.c.b16 %v1015, %v1010
      %v1096 = vpack.c.b16 %v1016, %v1011
      %v1097 = vpack.c.b16 %v1017, %v1012
      %v1098 = vpack.c.b16 %v1018, %v1013
      %v1099 = vpack.c.b16 %v1024, %v1019
      %v1100 = vpack.c.b16 %v1025, %v1020
      %v1101 = vpack.c.b16 %v1026, %v1021
      %v1102 = vpack.c.b16 %v1027, %v1022
      %v1103 = vpack.c.b16 %v1028, %v1023
      %v1104 = vpack.c.b16 %v1034, %v1029
      %v1105 = vpack.c.b16 %v1035, %v1030
      %v1106 = vpack.c.b16 %v1036, %v1031
      %v1107 = vpack.c.b16 %v1037, %v1032
      %v1108 = vpack.c.b16 %v1038, %v1033
      %v1109 = vpack.c.b16 %v1044, %v1039
      %v1110 = vpack.c.b16 %v1045, %v1040
      %v1111 = vpack.c.b16 %v1046, %v1041
      %v1112 = vpack.c.b16 %v1047, %v1042
      %v1113 = vpack.c.b16 %v1048, %v1043
      %v1114 = vpack.c.b16 %v1054, %v1049
      %v1115 = vpack.c.b16 %v1055, %v1050
      %v1116 = vpack.c.b16 %v1056, %v1051
      %v1117 = vpack.c.b16 %v1057, %v1052
      %v1118 = vpack.c.b16 %v1058, %v1053
      %v1119 = vpack.c.b16 %v1064, %v1059
      %v1120 = vpack.c.b16 %v1065, %v1060
      %v1121 = vpack.c.b16 %v1066, %v1061
      %v1122 = vpack.c.b16 %v1067, %v1062
      %v1123 = vpack.c.b16 %v1068, %v1063
      %vm1174 = vcmask 351232
      %v1176 = vsel %vm1174, %v747, 0
      %v1179 = vsel %vm1174, %v749, 0
      %v1182 = vsel %vm1174, %v751, 0
      %v1185 = vsel %vm1174, %v753, 0
      %v1188 = vsel %vm1174, %v755, 0
      %v1191 = vsel %vm1174, %v757, 0
      %v1194 = vsel %vm1174, %v759, 0
      %v1197 = vsel %vm1174, %v761, 0
      %v1200 = vsel %vm1174, %v763, 0
      %v1203 = vsel %vm1174, %v765, 0
      %v1206 = vsel %vm1174, %v767, 0
      %v1209 = vsel %vm1174, %v769, 0
      %v1212 = vsel %vm1174, %v771, 0
      %v1215 = vsel %vm1174, %v773, 0
      %v1218 = vsel %vm1174, %v775, 0
      %v1221 = vsel %vm1174, %v777, 0
      %v1224 = vsel %vm1174, %v779, 0
      %v1227 = vsel %vm1174, %v781, 0
      %v1230 = vsel %vm1174, %v783, 0
      %v1233 = vsel %vm1174, %v785, 0
      %v1236 = vsel %vm1174, %v787, 0
      %v1239 = vsel %vm1174, %v789, 0
      %v1242 = vsel %vm1174, %v791, 0
      %v1245 = vsel %vm1174, %v793, 0
      %v1248 = vsel %vm1174, %v795, 0
      %v1251 = vsel %vm1174, %v797, 0
      %v1254 = vsel %vm1174, %v799, 0
      %v1257 = vsel %vm1174, %v801, 0
      %v1260 = vsel %vm1174, %v803, 0
      %v1263 = vsel %vm1174, %v805, 0
      %v1266 = vsel %vm1174, %v807, 0
      %v1269 = vsel %vm1174, %v809, 0
      %v1272 = vsel %vm1174, %v811, 0
      %v1275 = vsel %vm1174, %v813, 0
      %v1278 = vsel %vm1174, %v815, 0
      %v1281 = vsel %vm1174, %v817, 0
      %v1284 = vsel %vm1174, %v819, 0
      %v1287 = vsel %vm1174, %v821, 0
      %v1290 = vsel %vm1174, %v823, 0
      %v1293 = vsel %vm1174, %v825, 0
      %v1296 = vsel %vm1174, %v827, 0
      %v1299 = vsel %vm1174, %v829, 0
      %v1302 = vsel %vm1174, %v831, 0
      %v1305 = vsel %vm1174, %v833, 0
      %v1308 = vsel %vm1174, %v835, 0
      %v1311 = vsel %vm1174, %v837, 0
      %v1314 = vsel %vm1174, %v839, 0
      %v1317 = vsel %vm1174, %v841, 0
      %v1320 = vsel %vm1174, %v843, 0
      %vm1322 = vcmask 1044480
      %vm1323 = vcmask 1045504
      %v1324 = vsel %vm1322, 4294967295, 65535
      %v1325 = vsel %vm1323, %v1324, 0
      %v1327 = vand.u32 %v1119, %v1325
      %v1330 = vand.u32 %v1120, %v1325
      %v1333 = vand.u32 %v1121, %v1325
      %v1336 = vand.u32 %v1122, %v1325
      %v1339 = vand.u32 %v1123, %v1325
      %1341 = vmatprep.subr.bf16.mxu0 %v1070
      %1342 = vmatpush1.bf16.msra.mxu0 %v1069
      %1343 = vmatprep.subr.bf16.mxu0 %v1075
      %1344 = vmatpush1.bf16.msra.mxu0 %v1074
      %1345 = vmatprep.subr.bf16.mxu0 %v1080
      %1346 = vmatpush1.bf16.msra.mxu0 %v1079
      %1347 = vmatprep.subr.bf16.mxu0 %v1085
      %1348 = vmatpush1.bf16.msra.mxu0 %v1084
      %1349 = vmatprep.subr.bf16.mxu0 %v1090
      %1350 = vmatpush1.bf16.msra.mxu0 %v1089
      %1351 = vmatprep.subr.bf16.mxu0 %v1095
      %1352 = vmatpush1.bf16.msra.mxu0 %v1094
      %1353 = vmatprep.subr.bf16.mxu0 %v1100
      %1354 = vmatpush1.bf16.msra.mxu0 %v1099
      %1355 = vmatprep.subr.bf16.mxu0 %v1105
      %1356 = vmatpush1.bf16.msra.mxu0 %v1104
      %1357 = vmatprep.subr.bf16.mxu0 %v1110
      %1358 = vmatpush1.bf16.msra.mxu0 %v1109
      %1359 = vmatprep.subr.bf16.mxu0 %v1115
      %1360 = vmatpush1.bf16.msra.mxu0 %v1114
      %1361 = vmatprep.subr.bf16.mxu0 %v1330
      %1362 = vmatpush1.bf16.msra.mxu0 %v1327
      %1363 = vmatprep.subr.bf16.mxu0 0
      %1364 = vmatpush1.bf16.msra.mxu0 0
      %1365 = vmatprep.subr.bf16.mxu0 0
      %1366 = vmatpush1.bf16.msra.mxu0 0
      %1367 = vmatprep.subr.bf16.mxu0 0
      %1368 = vmatpush1.bf16.msra.mxu0 0
      %1369 = vmatprep.subr.bf16.mxu0 0
      %1370 = vmatpush1.bf16.msra.mxu0 0
      %1371 = vmatprep.subr.bf16.mxu0 0
      %1372 = vmatpush1.bf16.msra.mxu0 0
      %1373 = vmatprep.mubr.bf16.mxu0 %v1176
      %1374 = vmatmul.mubr.bf16.gmra.mrb[0].mxu0 %v746
      %v1375 = vpop.f32.mrb[0].mxu0
      %v1376 = vadd.f32 0.0, %v1375
      %v1377 = vpop.f32.mrb[0].mxu0
      %v1378 = vadd.f32 0.0, %v1377
      %v1379 = vpop.f32.mrb[0].mxu0
      %v1380 = vadd.f32 0.0, %v1379
      %v1381 = vpop.f32.mrb[0].mxu0
      %v1382 = vadd.f32 0.0, %v1381
      %1383 = vmatprep.mubr.bf16.mxu0 %v1179
      %1384 = vmatmul.mubr.bf16.gmra.mrb[0].mxu0 %v748
      %v1385 = vpop.f32.mrb[0].mxu0
      %v1386 = vadd.f32 0.0, %v1385
      %v1387 = vpop.f32.mrb[0].mxu0
      %v1388 = vadd.f32 0.0, %v1387
      %v1389 = vpop.f32.mrb[0].mxu0
      %v1390 = vadd.f32 0.0, %v1389
      %v1391 = vpop.f32.mrb[0].mxu0
      %v1392 = vadd.f32 0.0, %v1391
      %1393 = vmatprep.mubr.bf16.mxu0 %v1182
      %1394 = vmatmul.mubr.bf16.gmra.mrb[0].mxu0 %v750
      %v1395 = vpop.f32.mrb[0].mxu0
      %v1396 = vadd.f32 0.0, %v1395
      %v1397 = vpop.f32.mrb[0].mxu0
      %v1398 = vadd.f32 0.0, %v1397
      %v1399 = vpop.f32.mrb[0].mxu0
      %v1400 = vadd.f32 0.0, %v1399
      %v1401 = vpop.f32.mrb[0].mxu0
      %v1402 = vadd.f32 0.0, %v1401
      %1403 = vmatprep.mubr.bf16.mxu0 %v1185
      %1404 = vmatmul.mubr.bf16.gmra.mrb[0].mxu0 %v752
      %v1405 = vpop.f32.mrb[0].mxu0
      %v1406 = vadd.f32 0.0, %v1405
      %v1407 = vpop.f32.mrb[0].mxu0
      %v1408 = vadd.f32 0.0, %v1407
      %v1409 = vpop.f32.mrb[0].mxu0
      %v1410 = vadd.f32 0.0, %v1409
      %v1411 = vpop.f32.mrb[0].mxu0
      %v1412 = vadd.f32 0.0, %v1411
      %1413 = vmatprep.mubr.bf16.mxu0 %v1188
      %1414 = vmatmul.mubr.bf16.gmra.mrb[0].mxu0 %v754
      %v1415 = vpop.f32.mrb[0].mxu0
      %v1416 = vadd.f32 0.0, %v1415
      %v1417 = vpop.f32.mrb[0].mxu0
      %v1418 = vadd.f32 0.0, %v1417
      %v1419 = vpop.f32.mrb[0].mxu0
      %v1420 = vadd.f32 0.0, %v1419
      %v1421 = vpop.f32.mrb[0].mxu0
      %v1422 = vadd.f32 0.0, %v1421
      %1423 = vmatprep.mubr.bf16.mxu0 %v1191
      %1424 = vmatmul.mubr.bf16.gmra.mrb[0].mxu0 %v756
      %v1425 = vpop.f32.mrb[0].mxu0
      %v1426 = vadd.f32 0.0, %v1425
      %v1427 = vpop.f32.mrb[0].mxu0
      %v1428 = vadd.f32 0.0, %v1427
      %v1429 = vpop.f32.mrb[0].mxu0
      %v1430 = vadd.f32 0.0, %v1429
      %v1431 = vpop.f32.mrb[0].mxu0
      %v1432 = vadd.f32 0.0, %v1431
      %1433 = vmatprep.mubr.bf16.mxu0 %v1194
      %1434 = vmatmul.mubr.bf16.gmra.mrb[0].mxu0 %v758
      %v1435 = vpop.f32.mrb[0].mxu0
      %v1436 = vadd.f32 0.0, %v1435
      %v1437 = vpop.f32.mrb[0].mxu0
      %v1438 = vadd.f32 0.0, %v1437
      %v1439 = vpop.f32.mrb[0].mxu0
      %v1440 = vadd.f32 0.0, %v1439
      %v1441 = vpop.f32.mrb[0].mxu0
      %v1442 = vadd.f32 0.0, %v1441
      %1443 = vmatprep.mubr.bf16.mxu0 %v1197
      %1444 = vmatmul.mubr.bf16.gmra.mrb[0].mxu0 %v760
      %v1445 = vpop.f32.mrb[0].mxu0
      %v1446 = vadd.f32 0.0, %v1445
      %v1447 = vpop.f32.mrb[0].mxu0
      %v1448 = vadd.f32 0.0, %v1447
      %v1449 = vpop.f32.mrb[0].mxu0
      %v1450 = vadd.f32 0.0, %v1449
      %v1451 = vpop.f32.mrb[0].mxu0
      %v1452 = vadd.f32 0.0, %v1451
      %1453 = vmatprep.mubr.bf16.mxu0 %v1200
      %1454 = vmatmul.mubr.bf16.gmra.mrb[0].mxu0 %v762
      %v1455 = vpop.f32.mrb[0].mxu0
      %v1456 = vadd.f32 0.0, %v1455
      %v1457 = vpop.f32.mrb[0].mxu0
      %v1458 = vadd.f32 0.0, %v1457
      %v1459 = vpop.f32.mrb[0].mxu0
      %v1460 = vadd.f32 0.0, %v1459
      %v1461 = vpop.f32.mrb[0].mxu0
      %v1462 = vadd.f32 0.0, %v1461
      %1463 = vmatprep.mubr.bf16.mxu0 %v1203
      %1464 = vmatmul.mubr.bf16.gmra.mrb[0].mxu0 %v764
      %v1465 = vpop.f32.mrb[0].mxu0
      %v1466 = vadd.f32 0.0, %v1465
      %v1467 = vpop.f32.mrb[0].mxu0
      %v1468 = vadd.f32 0.0, %v1467
      %v1469 = vpop.f32.mrb[0].mxu0
      %v1470 = vadd.f32 0.0, %v1469
      %v1471 = vpop.f32.mrb[0].mxu0
      %v1472 = vadd.f32 0.0, %v1471
      %1473 = vmatprep.mubr.bf16.mxu0 %v1206
      %1474 = vmatmul.mubr.bf16.gmra.mrb[0].mxu0 %v766
      %v1475 = vpop.f32.mrb[0].mxu0
      %v1476 = vadd.f32 0.0, %v1475
      %v1477 = vpop.f32.mrb[0].mxu0
      %v1478 = vadd.f32 0.0, %v1477
      %v1479 = vpop.f32.mrb[0].mxu0
      %v1480 = vadd.f32 0.0, %v1479
      %v1481 = vpop.f32.mrb[0].mxu0
      %v1482 = vadd.f32 0.0, %v1481
      %1483 = vmatprep.mubr.bf16.mxu0 %v1209
      %1484 = vmatmul.mubr.bf16.gmra.mrb[0].mxu0 %v768
      %v1485 = vpop.f32.mrb[0].mxu0
      %v1486 = vadd.f32 0.0, %v1485
      %v1487 = vpop.f32.mrb[0].mxu0
      %v1488 = vadd.f32 0.0, %v1487
      %v1489 = vpop.f32.mrb[0].mxu0
      %v1490 = vadd.f32 0.0, %v1489
      %v1491 = vpop.f32.mrb[0].mxu0
      %v1492 = vadd.f32 0.0, %v1491
      %1493 = vmatprep.mubr.bf16.mxu0 %v1212
      %1494 = vmatmul.mubr.bf16.gmra.mrb[0].mxu0 %v770
      %v1495 = vpop.f32.mrb[0].mxu0
      %v1496 = vadd.f32 0.0, %v1495
      %v1497 = vpop.f32.mrb[0].mxu0
      %v1498 = vadd.f32 0.0, %v1497
      %v1499 = vpop.f32.mrb[0].mxu0
      %v1500 = vadd.f32 0.0, %v1499
      %v1501 = vpop.f32.mrb[0].mxu0
      %v1502 = vadd.f32 0.0, %v1501
      %1503 = vmatprep.mubr.bf16.mxu0 %v1215
      %1504 = vmatmul.mubr.bf16.gmra.mrb[0].mxu0 %v772
      %v1505 = vpop.f32.mrb[0].mxu0
      %v1506 = vadd.f32 0.0, %v1505
      %v1507 = vpop.f32.mrb[0].mxu0
      %v1508 = vadd.f32 0.0, %v1507
      %v1509 = vpop.f32.mrb[0].mxu0
      %v1510 = vadd.f32 0.0, %v1509
      %v1511 = vpop.f32.mrb[0].mxu0
      %v1512 = vadd.f32 0.0, %v1511
      %1513 = vmatprep.mubr.bf16.mxu0 %v1218
      %1514 = vmatmul.mubr.bf16.gmra.mrb[0].mxu0 %v774
      %v1515 = vpop.f32.mrb[0].mxu0
      %v1516 = vadd.f32 0.0, %v1515
      %v1517 = vpop.f32.mrb[0].mxu0
      %v1518 = vadd.f32 0.0, %v1517
      %v1519 = vpop.f32.mrb[0].mxu0
      %v1520 = vadd.f32 0.0, %v1519
      %v1521 = vpop.f32.mrb[0].mxu0
      %v1522 = vadd.f32 0.0, %v1521
      %1523 = vmatprep.mubr.bf16.mxu0 %v1221
      %1524 = vmatmul.mubr.bf16.gmra.mrb[0].mxu0 %v776
      %v1525 = vpop.f32.mrb[0].mxu0
      %v1526 = vadd.f32 0.0, %v1525
      %v1527 = vpop.f32.mrb[0].mxu0
      %v1528 = vadd.f32 0.0, %v1527
      %v1529 = vpop.f32.mrb[0].mxu0
      %v1530 = vadd.f32 0.0, %v1529
      %v1531 = vpop.f32.mrb[0].mxu0
      %v1532 = vadd.f32 0.0, %v1531
      %1533 = vmatprep.mubr.bf16.mxu0 %v1224
      %1534 = vmatmul.mubr.bf16.gmra.mrb[0].mxu0 %v778
      %v1535 = vpop.f32.mrb[0].mxu0
      %v1536 = vadd.f32 0.0, %v1535
      %v1537 = vpop.f32.mrb[0].mxu0
      %v1538 = vadd.f32 0.0, %v1537
      %v1539 = vpop.f32.mrb[0].mxu0
      %v1540 = vadd.f32 0.0, %v1539
      %v1541 = vpop.f32.mrb[0].mxu0
      %v1542 = vadd.f32 0.0, %v1541
      %1543 = vmatprep.mubr.bf16.mxu0 %v1227
      %1544 = vmatmul.mubr.bf16.gmra.mrb[0].mxu0 %v780
      %v1545 = vpop.f32.mrb[0].mxu0
      %v1546 = vadd.f32 0.0, %v1545
      %v1547 = vpop.f32.mrb[0].mxu0
      %v1548 = vadd.f32 0.0, %v1547
      %v1549 = vpop.f32.mrb[0].mxu0
      %v1550 = vadd.f32 0.0, %v1549
      %v1551 = vpop.f32.mrb[0].mxu0
      %v1552 = vadd.f32 0.0, %v1551
      %1553 = vmatprep.mubr.bf16.mxu0 %v1230
      %1554 = vmatmul.mubr.bf16.gmra.mrb[0].mxu0 %v782
      %v1555 = vpop.f32.mrb[0].mxu0
      %v1556 = vadd.f32 0.0, %v1555
      %v1557 = vpop.f32.mrb[0].mxu0
      %v1558 = vadd.f32 0.0, %v1557
      %v1559 = vpop.f32.mrb[0].mxu0
      %v1560 = vadd.f32 0.0, %v1559
      %v1561 = vpop.f32.mrb[0].mxu0
      %v1562 = vadd.f32 0.0, %v1561
      %1563 = vmatprep.mubr.bf16.mxu0 %v1233
      %1564 = vmatmul.mubr.bf16.gmra.mrb[0].mxu0 %v784
      %v1565 = vpop.f32.mrb[0].mxu0
      %v1566 = vadd.f32 0.0, %v1565
      %v1567 = vpop.f32.mrb[0].mxu0
      %v1568 = vadd.f32 0.0, %v1567
      %v1569 = vpop.f32.mrb[0].mxu0
      %v1570 = vadd.f32 0.0, %v1569
      %v1571 = vpop.f32.mrb[0].mxu0
      %v1572 = vadd.f32 0.0, %v1571
      %1573 = vmatprep.mubr.bf16.mxu0 %v1236
      %1574 = vmatmul.mubr.bf16.gmra.mrb[0].mxu0 %v786
      %v1575 = vpop.f32.mrb[0].mxu0
      %v1576 = vadd.f32 0.0, %v1575
      %v1577 = vpop.f32.mrb[0].mxu0
      %v1578 = vadd.f32 0.0, %v1577
      %v1579 = vpop.f32.mrb[0].mxu0
      %v1580 = vadd.f32 0.0, %v1579
      %v1581 = vpop.f32.mrb[0].mxu0
      %v1582 = vadd.f32 0.0, %v1581
      %1583 = vmatprep.mubr.bf16.mxu0 %v1239
      %1584 = vmatmul.mubr.bf16.gmra.mrb[0].mxu0 %v788
      %v1585 = vpop.f32.mrb[0].mxu0
      %v1586 = vadd.f32 0.0, %v1585
      %v1587 = vpop.f32.mrb[0].mxu0
      %v1588 = vadd.f32 0.0, %v1587
      %v1589 = vpop.f32.mrb[0].mxu0
      %v1590 = vadd.f32 0.0, %v1589
      %v1591 = vpop.f32.mrb[0].mxu0
      %v1592 = vadd.f32 0.0, %v1591
      %1593 = vmatprep.mubr.bf16.mxu0 %v1242
      %1594 = vmatmul.mubr.bf16.gmra.mrb[0].mxu0 %v790
      %v1595 = vpop.f32.mrb[0].mxu0
      %v1596 = vadd.f32 0.0, %v1595
      %v1597 = vpop.f32.mrb[0].mxu0
      %v1598 = vadd.f32 0.0, %v1597
      %v1599 = vpop.f32.mrb[0].mxu0
      %v1600 = vadd.f32 0.0, %v1599
      %v1601 = vpop.f32.mrb[0].mxu0
      %v1602 = vadd.f32 0.0, %v1601
      %1603 = vmatprep.mubr.bf16.mxu0 %v1245
      %1604 = vmatmul.mubr.bf16.gmra.mrb[0].mxu0 %v792
      %v1605 = vpop.f32.mrb[0].mxu0
      %v1606 = vadd.f32 0.0, %v1605
      %v1607 = vpop.f32.mrb[0].mxu0
      %v1608 = vadd.f32 0.0, %v1607
      %v1609 = vpop.f32.mrb[0].mxu0
      %v1610 = vadd.f32 0.0, %v1609
      %v1611 = vpop.f32.mrb[0].mxu0
      %v1612 = vadd.f32 0.0, %v1611
      %1613 = vmatprep.mubr.bf16.mxu0 %v1248
      %1614 = vmatmul.mubr.bf16.gmra.mrb[0].mxu0 %v794
      %v1615 = vpop.f32.mrb[0].mxu0
      %v1616 = vadd.f32 0.0, %v1615
      %v1617 = vpop.f32.mrb[0].mxu0
      %v1618 = vadd.f32 0.0, %v1617
      %v1619 = vpop.f32.mrb[0].mxu0
      %v1620 = vadd.f32 0.0, %v1619
      %v1621 = vpop.f32.mrb[0].mxu0
      %v1622 = vadd.f32 0.0, %v1621
      %1623 = vmatprep.mubr.bf16.mxu0 %v1251
      %1624 = vmatmul.mubr.bf16.gmra.mrb[0].mxu0 %v796
      %v1625 = vpop.f32.mrb[0].mxu0
      %v1626 = vadd.f32 0.0, %v1625
      %v1627 = vpop.f32.mrb[0].mxu0
      %v1628 = vadd.f32 0.0, %v1627
      %v1629 = vpop.f32.mrb[0].mxu0
      %v1630 = vadd.f32 0.0, %v1629
      %v1631 = vpop.f32.mrb[0].mxu0
      %v1632 = vadd.f32 0.0, %v1631
      %1633 = vmatprep.mubr.bf16.mxu0 %v1254
      %1634 = vmatmul.mubr.bf16.gmra.mrb[0].mxu0 %v798
      %v1635 = vpop.f32.mrb[0].mxu0
      %v1636 = vadd.f32 0.0, %v1635
      %v1637 = vpop.f32.mrb[0].mxu0
      %v1638 = vadd.f32 0.0, %v1637
      %v1639 = vpop.f32.mrb[0].mxu0
      %v1640 = vadd.f32 0.0, %v1639
      %v1641 = vpop.f32.mrb[0].mxu0
      %v1642 = vadd.f32 0.0, %v1641
      %1643 = vmatprep.mubr.bf16.mxu0 %v1257
      %1644 = vmatmul.mubr.bf16.gmra.mrb[0].mxu0 %v800
      %v1645 = vpop.f32.mrb[0].mxu0
      %v1646 = vadd.f32 0.0, %v1645
      %v1647 = vpop.f32.mrb[0].mxu0
      %v1648 = vadd.f32 0.0, %v1647
      %v1649 = vpop.f32.mrb[0].mxu0
      %v1650 = vadd.f32 0.0, %v1649
      %v1651 = vpop.f32.mrb[0].mxu0
      %v1652 = vadd.f32 0.0, %v1651
      %1653 = vmatprep.mubr.bf16.mxu0 %v1260
      %1654 = vmatmul.mubr.bf16.gmra.mrb[0].mxu0 %v802
      %v1655 = vpop.f32.mrb[0].mxu0
      %v1656 = vadd.f32 0.0, %v1655
      %v1657 = vpop.f32.mrb[0].mxu0
      %v1658 = vadd.f32 0.0, %v1657
      %v1659 = vpop.f32.mrb[0].mxu0
      %v1660 = vadd.f32 0.0, %v1659
      %v1661 = vpop.f32.mrb[0].mxu0
      %v1662 = vadd.f32 0.0, %v1661
      %1663 = vmatprep.mubr.bf16.mxu0 %v1263
      %1664 = vmatmul.mubr.bf16.gmra.mrb[0].mxu0 %v804
      %v1665 = vpop.f32.mrb[0].mxu0
      %v1666 = vadd.f32 0.0, %v1665
      %v1667 = vpop.f32.mrb[0].mxu0
      %v1668 = vadd.f32 0.0, %v1667
      %v1669 = vpop.f32.mrb[0].mxu0
      %v1670 = vadd.f32 0.0, %v1669
      %v1671 = vpop.f32.mrb[0].mxu0
      %v1672 = vadd.f32 0.0, %v1671
      %1673 = vmatprep.mubr.bf16.mxu0 %v1266
      %1674 = vmatmul.mubr.bf16.gmra.mrb[0].mxu0 %v806
      %v1675 = vpop.f32.mrb[0].mxu0
      %v1676 = vadd.f32 0.0, %v1675
      %v1677 = vpop.f32.mrb[0].mxu0
      %v1678 = vadd.f32 0.0, %v1677
      %v1679 = vpop.f32.mrb[0].mxu0
      %v1680 = vadd.f32 0.0, %v1679
      %v1681 = vpop.f32.mrb[0].mxu0
      %v1682 = vadd.f32 0.0, %v1681
      %1683 = vmatprep.mubr.bf16.mxu0 %v1269
      %1684 = vmatmul.mubr.bf16.gmra.mrb[0].mxu0 %v808
      %v1685 = vpop.f32.mrb[0].mxu0
      %v1686 = vadd.f32 0.0, %v1685
      %v1687 = vpop.f32.mrb[0].mxu0
      %v1688 = vadd.f32 0.0, %v1687
      %v1689 = vpop.f32.mrb[0].mxu0
      %v1690 = vadd.f32 0.0, %v1689
      %v1691 = vpop.f32.mrb[0].mxu0
      %v1692 = vadd.f32 0.0, %v1691
      %1693 = vmatprep.mubr.bf16.mxu0 %v1272
      %1694 = vmatmul.mubr.bf16.gmra.mrb[0].mxu0 %v810
      %v1695 = vpop.f32.mrb[0].mxu0
      %v1696 = vadd.f32 0.0, %v1695
      %v1697 = vpop.f32.mrb[0].mxu0
      %v1698 = vadd.f32 0.0, %v1697
      %v1699 = vpop.f32.mrb[0].mxu0
      %v1700 = vadd.f32 0.0, %v1699
      %v1701 = vpop.f32.mrb[0].mxu0
      %v1702 = vadd.f32 0.0, %v1701
      %1703 = vmatprep.mubr.bf16.mxu0 %v1275
      %1704 = vmatmul.mubr.bf16.gmra.mrb[0].mxu0 %v812
      %v1705 = vpop.f32.mrb[0].mxu0
      %v1706 = vadd.f32 0.0, %v1705
      %v1707 = vpop.f32.mrb[0].mxu0
      %v1708 = vadd.f32 0.0, %v1707
      %v1709 = vpop.f32.mrb[0].mxu0
      %v1710 = vadd.f32 0.0, %v1709
      %v1711 = vpop.f32.mrb[0].mxu0
      %v1712 = vadd.f32 0.0, %v1711
      %1713 = vmatprep.mubr.bf16.mxu0 %v1278
      %1714 = vmatmul.mubr.bf16.gmra.mrb[0].mxu0 %v814
      %v1715 = vpop.f32.mrb[0].mxu0
      %v1716 = vadd.f32 0.0, %v1715
      %v1717 = vpop.f32.mrb[0].mxu0
      %v1718 = vadd.f32 0.0, %v1717
      %v1719 = vpop.f32.mrb[0].mxu0
      %v1720 = vadd.f32 0.0, %v1719
      %v1721 = vpop.f32.mrb[0].mxu0
      %v1722 = vadd.f32 0.0, %v1721
      %1723 = vmatprep.mubr.bf16.mxu0 %v1281
      %1724 = vmatmul.mubr.bf16.gmra.mrb[0].mxu0 %v816
      %v1725 = vpop.f32.mrb[0].mxu0
      %v1726 = vadd.f32 0.0, %v1725
      %v1727 = vpop.f32.mrb[0].mxu0
      %v1728 = vadd.f32 0.0, %v1727
      %v1729 = vpop.f32.mrb[0].mxu0
      %v1730 = vadd.f32 0.0, %v1729
      %v1731 = vpop.f32.mrb[0].mxu0
      %v1732 = vadd.f32 0.0, %v1731
      %1733 = vmatprep.mubr.bf16.mxu0 %v1284
      %1734 = vmatmul.mubr.bf16.gmra.mrb[0].mxu0 %v818
      %v1735 = vpop.f32.mrb[0].mxu0
      %v1736 = vadd.f32 0.0, %v1735
      %v1737 = vpop.f32.mrb[0].mxu0
      %v1738 = vadd.f32 0.0, %v1737
      %v1739 = vpop.f32.mrb[0].mxu0
      %v1740 = vadd.f32 0.0, %v1739
      %v1741 = vpop.f32.mrb[0].mxu0
      %v1742 = vadd.f32 0.0, %v1741
      %1743 = vmatprep.mubr.bf16.mxu0 %v1287
      %1744 = vmatmul.mubr.bf16.gmra.mrb[0].mxu0 %v820
      %v1745 = vpop.f32.mrb[0].mxu0
      %v1746 = vadd.f32 0.0, %v1745
      %v1747 = vpop.f32.mrb[0].mxu0
      %v1748 = vadd.f32 0.0, %v1747
      %v1749 = vpop.f32.mrb[0].mxu0
      %v1750 = vadd.f32 0.0, %v1749
      %v1751 = vpop.f32.mrb[0].mxu0
      %v1752 = vadd.f32 0.0, %v1751
      %1753 = vmatprep.mubr.bf16.mxu0 %v1290
      %1754 = vmatmul.mubr.bf16.gmra.mrb[0].mxu0 %v822
      %v1755 = vpop.f32.mrb[0].mxu0
      %v1756 = vadd.f32 0.0, %v1755
      %v1757 = vpop.f32.mrb[0].mxu0
      %v1758 = vadd.f32 0.0, %v1757
      %v1759 = vpop.f32.mrb[0].mxu0
      %v1760 = vadd.f32 0.0, %v1759
      %v1761 = vpop.f32.mrb[0].mxu0
      %v1762 = vadd.f32 0.0, %v1761
      %1763 = vmatprep.mubr.bf16.mxu0 %v1293
      %1764 = vmatmul.mubr.bf16.gmra.mrb[0].mxu0 %v824
      %v1765 = vpop.f32.mrb[0].mxu0
      %v1766 = vadd.f32 0.0, %v1765
      %v1767 = vpop.f32.mrb[0].mxu0
      %v1768 = vadd.f32 0.0, %v1767
      %v1769 = vpop.f32.mrb[0].mxu0
      %v1770 = vadd.f32 0.0, %v1769
      %v1771 = vpop.f32.mrb[0].mxu0
      %v1772 = vadd.f32 0.0, %v1771
      %1773 = vmatprep.mubr.bf16.mxu0 %v1296
      %1774 = vmatmul.mubr.bf16.gmra.mrb[0].mxu0 %v826
      %v1775 = vpop.f32.mrb[0].mxu0
      %v1776 = vadd.f32 0.0, %v1775
      %v1777 = vpop.f32.mrb[0].mxu0
      %v1778 = vadd.f32 0.0, %v1777
      %v1779 = vpop.f32.mrb[0].mxu0
      %v1780 = vadd.f32 0.0, %v1779
      %v1781 = vpop.f32.mrb[0].mxu0
      %v1782 = vadd.f32 0.0, %v1781
      %1783 = vmatprep.mubr.bf16.mxu0 %v1299
      %1784 = vmatmul.mubr.bf16.gmra.mrb[0].mxu0 %v828
      %v1785 = vpop.f32.mrb[0].mxu0
      %v1786 = vadd.f32 0.0, %v1785
      %v1787 = vpop.f32.mrb[0].mxu0
      %v1788 = vadd.f32 0.0, %v1787
      %v1789 = vpop.f32.mrb[0].mxu0
      %v1790 = vadd.f32 0.0, %v1789
      %v1791 = vpop.f32.mrb[0].mxu0
      %v1792 = vadd.f32 0.0, %v1791
      %1793 = vmatprep.mubr.bf16.mxu0 %v1302
      %1794 = vmatmul.mubr.bf16.gmra.mrb[0].mxu0 %v830
      %v1795 = vpop.f32.mrb[0].mxu0
      %v1796 = vadd.f32 0.0, %v1795
      %v1797 = vpop.f32.mrb[0].mxu0
      %v1798 = vadd.f32 0.0, %v1797
      %v1799 = vpop.f32.mrb[0].mxu0
      %v1800 = vadd.f32 0.0, %v1799
      %v1801 = vpop.f32.mrb[0].mxu0
      %v1802 = vadd.f32 0.0, %v1801
      %1803 = vmatprep.mubr.bf16.mxu0 %v1305
      %1804 = vmatmul.mubr.bf16.gmra.mrb[0].mxu0 %v832
      %v1805 = vpop.f32.mrb[0].mxu0
      %v1806 = vadd.f32 0.0, %v1805
      %v1807 = vpop.f32.mrb[0].mxu0
      %v1808 = vadd.f32 0.0, %v1807
      %v1809 = vpop.f32.mrb[0].mxu0
      %v1810 = vadd.f32 0.0, %v1809
      %v1811 = vpop.f32.mrb[0].mxu0
      %v1812 = vadd.f32 0.0, %v1811
      %1813 = vmatprep.mubr.bf16.mxu0 %v1308
      %1814 = vmatmul.mubr.bf16.gmra.mrb[0].mxu0 %v834
      %v1815 = vpop.f32.mrb[0].mxu0
      %v1816 = vadd.f32 0.0, %v1815
      %v1817 = vpop.f32.mrb[0].mxu0
      %v1818 = vadd.f32 0.0, %v1817
      %v1819 = vpop.f32.mrb[0].mxu0
      %v1820 = vadd.f32 0.0, %v1819
      %v1821 = vpop.f32.mrb[0].mxu0
      %v1822 = vadd.f32 0.0, %v1821
      %1823 = vmatprep.mubr.bf16.mxu0 %v1311
      %1824 = vmatmul.mubr.bf16.gmra.mrb[0].mxu0 %v836
      %v1825 = vpop.f32.mrb[0].mxu0
      %v1826 = vadd.f32 0.0, %v1825
      %v1827 = vpop.f32.mrb[0].mxu0
      %v1828 = vadd.f32 0.0, %v1827
      %v1829 = vpop.f32.mrb[0].mxu0
      %v1830 = vadd.f32 0.0, %v1829
      %v1831 = vpop.f32.mrb[0].mxu0
      %v1832 = vadd.f32 0.0, %v1831
      %1833 = vmatprep.mubr.bf16.mxu0 %v1314
      %1834 = vmatmul.mubr.bf16.gmra.mrb[0].mxu0 %v838
      %v1835 = vpop.f32.mrb[0].mxu0
      %v1836 = vadd.f32 0.0, %v1835
      %v1837 = vpop.f32.mrb[0].mxu0
      %v1838 = vadd.f32 0.0, %v1837
      %v1839 = vpop.f32.mrb[0].mxu0
      %v1840 = vadd.f32 0.0, %v1839
      %v1841 = vpop.f32.mrb[0].mxu0
      %v1842 = vadd.f32 0.0, %v1841
      %1843 = vmatprep.mubr.bf16.mxu0 %v1317
      %1844 = vmatmul.mubr.bf16.gmra.mrb[0].mxu0 %v840
      %v1845 = vpop.f32.mrb[0].mxu0
      %v1846 = vadd.f32 0.0, %v1845
      %v1847 = vpop.f32.mrb[0].mxu0
      %v1848 = vadd.f32 0.0, %v1847
      %v1849 = vpop.f32.mrb[0].mxu0
      %v1850 = vadd.f32 0.0, %v1849
      %v1851 = vpop.f32.mrb[0].mxu0
      %v1852 = vadd.f32 0.0, %v1851
      %1853 = vmatprep.mubr.bf16.mxu0 %v1320
      %1854 = vmatmul.mubr.bf16.gmra.mrb[0].mxu0 %v842
      %v1855 = vpop.f32.mrb[0].mxu0
      %v1856 = vadd.f32 0.0, %v1855
      %v1857 = vpop.f32.mrb[0].mxu0
      %v1858 = vadd.f32 0.0, %v1857
      %v1859 = vpop.f32.mrb[0].mxu0
      %v1860 = vadd.f32 0.0, %v1859
      %v1861 = vpop.f32.mrb[0].mxu0
      %v1862 = vadd.f32 0.0, %v1861
      %1863 = vdwg.mxu0
      %1864 = vmatprep.subr.bf16.mxu0 %v1072
      %1865 = vmatpush1.bf16.msra.mxu0 %v1071
      %1866 = vmatprep.subr.bf16.mxu0 %v1077
      %1867 = vmatpush1.bf16.msra.mxu0 %v1076
      %1868 = vmatprep.subr.bf16.mxu0 %v1082
      %1869 = vmatpush1.bf16.msra.mxu0 %v1081
      %1870 = vmatprep.subr.bf16.mxu0 %v1087
      %1871 = vmatpush1.bf16.msra.mxu0 %v1086
      %1872 = vmatprep.subr.bf16.mxu0 %v1092
      %1873 = vmatpush1.bf16.msra.mxu0 %v1091
      %1874 = vmatprep.subr.bf16.mxu0 %v1097
      %1875 = vmatpush1.bf16.msra.mxu0 %v1096
      %1876 = vmatprep.subr.bf16.mxu0 %v1102
      %1877 = vmatpush1.bf16.msra.mxu0 %v1101
      %1878 = vmatprep.subr.bf16.mxu0 %v1107
      %1879 = vmatpush1.bf16.msra.mxu0 %v1106
      %1880 = vmatprep.subr.bf16.mxu0 %v1112
      %1881 = vmatpush1.bf16.msra.mxu0 %v1111
      %1882 = vmatprep.subr.bf16.mxu0 %v1117
      %1883 = vmatpush1.bf16.msra.mxu0 %v1116
      %1884 = vmatprep.subr.bf16.mxu0 %v1336
      %1885 = vmatpush1.bf16.msra.mxu0 %v1333
      %1886 = vmatprep.subr.bf16.mxu0 0
      %1887 = vmatpush1.bf16.msra.mxu0 0
      %1888 = vmatprep.subr.bf16.mxu0 0
      %1889 = vmatpush1.bf16.msra.mxu0 0
      %1890 = vmatprep.subr.bf16.mxu0 0
      %1891 = vmatpush1.bf16.msra.mxu0 0
      %1892 = vmatprep.subr.bf16.mxu0 0
      %1893 = vmatpush1.bf16.msra.mxu0 0
      %1894 = vmatprep.subr.bf16.mxu0 0
      %1895 = vmatpush1.bf16.msra.mxu0 0
      %1896 = vmatprep.mubr.bf16.mxu0 %v1176
      %1897 = vmatmul.mubr.bf16.gmra.mrb[0].mxu0 %v746
      %v1898 = vpop.f32.mrb[0].mxu0
      %v1899 = vadd.f32 0.0, %v1898
      %v1900 = vpop.f32.mrb[0].mxu0
      %v1901 = vadd.f32 0.0, %v1900
      %v1902 = vpop.f32.mrb[0].mxu0
      %v1903 = vadd.f32 0.0, %v1902
      %v1904 = vpop.f32.mrb[0].mxu0
      %v1905 = vadd.f32 0.0, %v1904
      %1906 = vmatprep.mubr.bf16.mxu0 %v1179
      %1907 = vmatmul.mubr.bf16.gmra.mrb[0].mxu0 %v748
      %v1908 = vpop.f32.mrb[0].mxu0
      %v1909 = vadd.f32 0.0, %v1908
      %v1910 = vpop.f32.mrb[0].mxu0
      %v1911 = vadd.f32 0.0, %v1910
      %v1912 = vpop.f32.mrb[0].mxu0
      %v1913 = vadd.f32 0.0, %v1912
      %v1914 = vpop.f32.mrb[0].mxu0
      %v1915 = vadd.f32 0.0, %v1914
      %1916 = vmatprep.mubr.bf16.mxu0 %v1182
      %1917 = vmatmul.mubr.bf16.gmra.mrb[0].mxu0 %v750
      %v1918 = vpop.f32.mrb[0].mxu0
      %v1919 = vadd.f32 0.0, %v1918
      %v1920 = vpop.f32.mrb[0].mxu0
      %v1921 = vadd.f32 0.0, %v1920
      %v1922 = vpop.f32.mrb[0].mxu0
      %v1923 = vadd.f32 0.0, %v1922
      %v1924 = vpop.f32.mrb[0].mxu0
      %v1925 = vadd.f32 0.0, %v1924
      %1926 = vmatprep.mubr.bf16.mxu0 %v1185
      %1927 = vmatmul.mubr.bf16.gmra.mrb[0].mxu0 %v752
      %v1928 = vpop.f32.mrb[0].mxu0
      %v1929 = vadd.f32 0.0, %v1928
      %v1930 = vpop.f32.mrb[0].mxu0
      %v1931 = vadd.f32 0.0, %v1930
      %v1932 = vpop.f32.mrb[0].mxu0
      %v1933 = vadd.f32 0.0, %v1932
      %v1934 = vpop.f32.mrb[0].mxu0
      %v1935 = vadd.f32 0.0, %v1934
      %1936 = vmatprep.mubr.bf16.mxu0 %v1188
      %1937 = vmatmul.mubr.bf16.gmra.mrb[0].mxu0 %v754
      %v1938 = vpop.f32.mrb[0].mxu0
      %v1939 = vadd.f32 0.0, %v1938
      %v1940 = vpop.f32.mrb[0].mxu0
      %v1941 = vadd.f32 0.0, %v1940
      %v1942 = vpop.f32.mrb[0].mxu0
      %v1943 = vadd.f32 0.0, %v1942
      %v1944 = vpop.f32.mrb[0].mxu0
      %v1945 = vadd.f32 0.0, %v1944
      %1946 = vmatprep.mubr.bf16.mxu0 %v1191
      %1947 = vmatmul.mubr.bf16.gmra.mrb[0].mxu0 %v756
      %v1948 = vpop.f32.mrb[0].mxu0
      %v1949 = vadd.f32 0.0, %v1948
      %v1950 = vpop.f32.mrb[0].mxu0
      %v1951 = vadd.f32 0.0, %v1950
      %v1952 = vpop.f32.mrb[0].mxu0
      %v1953 = vadd.f32 0.0, %v1952
      %v1954 = vpop.f32.mrb[0].mxu0
      %v1955 = vadd.f32 0.0, %v1954
      %1956 = vmatprep.mubr.bf16.mxu0 %v1194
      %1957 = vmatmul.mubr.bf16.gmra.mrb[0].mxu0 %v758
      %v1958 = vpop.f32.mrb[0].mxu0
      %v1959 = vadd.f32 0.0, %v1958
      %v1960 = vpop.f32.mrb[0].mxu0
      %v1961 = vadd.f32 0.0, %v1960
      %v1962 = vpop.f32.mrb[0].mxu0
      %v1963 = vadd.f32 0.0, %v1962
      %v1964 = vpop.f32.mrb[0].mxu0
      %v1965 = vadd.f32 0.0, %v1964
      %1966 = vmatprep.mubr.bf16.mxu0 %v1197
      %1967 = vmatmul.mubr.bf16.gmra.mrb[0].mxu0 %v760
      %v1968 = vpop.f32.mrb[0].mxu0
      %v1969 = vadd.f32 0.0, %v1968
      %v1970 = vpop.f32.mrb[0].mxu0
      %v1971 = vadd.f32 0.0, %v1970
      %v1972 = vpop.f32.mrb[0].mxu0
      %v1973 = vadd.f32 0.0, %v1972
      %v1974 = vpop.f32.mrb[0].mxu0
      %v1975 = vadd.f32 0.0, %v1974
      %1976 = vmatprep.mubr.bf16.mxu0 %v1200
      %1977 = vmatmul.mubr.bf16.gmra.mrb[0].mxu0 %v762
      %v1978 = vpop.f32.mrb[0].mxu0
      %v1979 = vadd.f32 0.0, %v1978
      %v1980 = vpop.f32.mrb[0].mxu0
      %v1981 = vadd.f32 0.0, %v1980
      %v1982 = vpop.f32.mrb[0].mxu0
      %v1983 = vadd.f32 0.0, %v1982
      %v1984 = vpop.f32.mrb[0].mxu0
      %v1985 = vadd.f32 0.0, %v1984
      %1986 = vmatprep.mubr.bf16.mxu0 %v1203
      %1987 = vmatmul.mubr.bf16.gmra.mrb[0].mxu0 %v764
      %v1988 = vpop.f32.mrb[0].mxu0
      %v1989 = vadd.f32 0.0, %v1988
      %v1990 = vpop.f32.mrb[0].mxu0
      %v1991 = vadd.f32 0.0, %v1990
      %v1992 = vpop.f32.mrb[0].mxu0
      %v1993 = vadd.f32 0.0, %v1992
      %v1994 = vpop.f32.mrb[0].mxu0
      %v1995 = vadd.f32 0.0, %v1994
      %1996 = vmatprep.mubr.bf16.mxu0 %v1206
      %1997 = vmatmul.mubr.bf16.gmra.mrb[0].mxu0 %v766
      %v1998 = vpop.f32.mrb[0].mxu0
      %v1999 = vadd.f32 0.0, %v1998
      %v2000 = vpop.f32.mrb[0].mxu0
      %v2001 = vadd.f32 0.0, %v2000
      %v2002 = vpop.f32.mrb[0].mxu0
      %v2003 = vadd.f32 0.0, %v2002
      %v2004 = vpop.f32.mrb[0].mxu0
      %v2005 = vadd.f32 0.0, %v2004
      %2006 = vmatprep.mubr.bf16.mxu0 %v1209
      %2007 = vmatmul.mubr.bf16.gmra.mrb[0].mxu0 %v768
      %v2008 = vpop.f32.mrb[0].mxu0
      %v2009 = vadd.f32 0.0, %v2008
      %v2010 = vpop.f32.mrb[0].mxu0
      %v2011 = vadd.f32 0.0, %v2010
      %v2012 = vpop.f32.mrb[0].mxu0
      %v2013 = vadd.f32 0.0, %v2012
      %v2014 = vpop.f32.mrb[0].mxu0
      %v2015 = vadd.f32 0.0, %v2014
      %2016 = vmatprep.mubr.bf16.mxu0 %v1212
      %2017 = vmatmul.mubr.bf16.gmra.mrb[0].mxu0 %v770
      %v2018 = vpop.f32.mrb[0].mxu0
      %v2019 = vadd.f32 0.0, %v2018
      %v2020 = vpop.f32.mrb[0].mxu0
      %v2021 = vadd.f32 0.0, %v2020
      %v2022 = vpop.f32.mrb[0].mxu0
      %v2023 = vadd.f32 0.0, %v2022
      %v2024 = vpop.f32.mrb[0].mxu0
      %v2025 = vadd.f32 0.0, %v2024
      %2026 = vmatprep.mubr.bf16.mxu0 %v1215
      %2027 = vmatmul.mubr.bf16.gmra.mrb[0].mxu0 %v772
      %v2028 = vpop.f32.mrb[0].mxu0
      %v2029 = vadd.f32 0.0, %v2028
      %v2030 = vpop.f32.mrb[0].mxu0
      %v2031 = vadd.f32 0.0, %v2030
      %v2032 = vpop.f32.mrb[0].mxu0
      %v2033 = vadd.f32 0.0, %v2032
      %v2034 = vpop.f32.mrb[0].mxu0
      %v2035 = vadd.f32 0.0, %v2034
      %2036 = vmatprep.mubr.bf16.mxu0 %v1218
      %2037 = vmatmul.mubr.bf16.gmra.mrb[0].mxu0 %v774
      %v2038 = vpop.f32.mrb[0].mxu0
      %v2039 = vadd.f32 0.0, %v2038
      %v2040 = vpop.f32.mrb[0].mxu0
      %v2041 = vadd.f32 0.0, %v2040
      %v2042 = vpop.f32.mrb[0].mxu0
      %v2043 = vadd.f32 0.0, %v2042
      %v2044 = vpop.f32.mrb[0].mxu0
      %v2045 = vadd.f32 0.0, %v2044
      %2046 = vmatprep.mubr.bf16.mxu0 %v1221
      %2047 = vmatmul.mubr.bf16.gmra.mrb[0].mxu0 %v776
      %v2048 = vpop.f32.mrb[0].mxu0
      %v2049 = vadd.f32 0.0, %v2048
      %v2050 = vpop.f32.mrb[0].mxu0
      %v2051 = vadd.f32 0.0, %v2050
      %v2052 = vpop.f32.mrb[0].mxu0
      %v2053 = vadd.f32 0.0, %v2052
      %v2054 = vpop.f32.mrb[0].mxu0
      %v2055 = vadd.f32 0.0, %v2054
      %2056 = vmatprep.mubr.bf16.mxu0 %v1224
      %2057 = vmatmul.mubr.bf16.gmra.mrb[0].mxu0 %v778
      %v2058 = vpop.f32.mrb[0].mxu0
      %v2059 = vadd.f32 0.0, %v2058
      %v2060 = vpop.f32.mrb[0].mxu0
      %v2061 = vadd.f32 0.0, %v2060
      %v2062 = vpop.f32.mrb[0].mxu0
      %v2063 = vadd.f32 0.0, %v2062
      %v2064 = vpop.f32.mrb[0].mxu0
      %v2065 = vadd.f32 0.0, %v2064
      %2066 = vmatprep.mubr.bf16.mxu0 %v1227
      %2067 = vmatmul.mubr.bf16.gmra.mrb[0].mxu0 %v780
      %v2068 = vpop.f32.mrb[0].mxu0
      %v2069 = vadd.f32 0.0, %v2068
      %v2070 = vpop.f32.mrb[0].mxu0
      %v2071 = vadd.f32 0.0, %v2070
      %v2072 = vpop.f32.mrb[0].mxu0
      %v2073 = vadd.f32 0.0, %v2072
      %v2074 = vpop.f32.mrb[0].mxu0
      %v2075 = vadd.f32 0.0, %v2074
      %2076 = vmatprep.mubr.bf16.mxu0 %v1230
      %2077 = vmatmul.mubr.bf16.gmra.mrb[0].mxu0 %v782
      %v2078 = vpop.f32.mrb[0].mxu0
      %v2079 = vadd.f32 0.0, %v2078
      %v2080 = vpop.f32.mrb[0].mxu0
      %v2081 = vadd.f32 0.0, %v2080
      %v2082 = vpop.f32.mrb[0].mxu0
      %v2083 = vadd.f32 0.0, %v2082
      %v2084 = vpop.f32.mrb[0].mxu0
      %v2085 = vadd.f32 0.0, %v2084
      %2086 = vmatprep.mubr.bf16.mxu0 %v1233
      %2087 = vmatmul.mubr.bf16.gmra.mrb[0].mxu0 %v784
      %v2088 = vpop.f32.mrb[0].mxu0
      %v2089 = vadd.f32 0.0, %v2088
      %v2090 = vpop.f32.mrb[0].mxu0
      %v2091 = vadd.f32 0.0, %v2090
      %v2092 = vpop.f32.mrb[0].mxu0
      %v2093 = vadd.f32 0.0, %v2092
      %v2094 = vpop.f32.mrb[0].mxu0
      %v2095 = vadd.f32 0.0, %v2094
      %2096 = vmatprep.mubr.bf16.mxu0 %v1236
      %2097 = vmatmul.mubr.bf16.gmra.mrb[0].mxu0 %v786
      %v2098 = vpop.f32.mrb[0].mxu0
      %v2099 = vadd.f32 0.0, %v2098
      %v2100 = vpop.f32.mrb[0].mxu0
      %v2101 = vadd.f32 0.0, %v2100
      %v2102 = vpop.f32.mrb[0].mxu0
      %v2103 = vadd.f32 0.0, %v2102
      %v2104 = vpop.f32.mrb[0].mxu0
      %v2105 = vadd.f32 0.0, %v2104
      %2106 = vmatprep.mubr.bf16.mxu0 %v1239
      %2107 = vmatmul.mubr.bf16.gmra.mrb[0].mxu0 %v788
      %v2108 = vpop.f32.mrb[0].mxu0
      %v2109 = vadd.f32 0.0, %v2108
      %v2110 = vpop.f32.mrb[0].mxu0
      %v2111 = vadd.f32 0.0, %v2110
      %v2112 = vpop.f32.mrb[0].mxu0
      %v2113 = vadd.f32 0.0, %v2112
      %v2114 = vpop.f32.mrb[0].mxu0
      %v2115 = vadd.f32 0.0, %v2114
      %2116 = vmatprep.mubr.bf16.mxu0 %v1242
      %2117 = vmatmul.mubr.bf16.gmra.mrb[0].mxu0 %v790
      %v2118 = vpop.f32.mrb[0].mxu0
      %v2119 = vadd.f32 0.0, %v2118
      %v2120 = vpop.f32.mrb[0].mxu0
      %v2121 = vadd.f32 0.0, %v2120
      %v2122 = vpop.f32.mrb[0].mxu0
      %v2123 = vadd.f32 0.0, %v2122
      %v2124 = vpop.f32.mrb[0].mxu0
      %v2125 = vadd.f32 0.0, %v2124
      %2126 = vmatprep.mubr.bf16.mxu0 %v1245
      %2127 = vmatmul.mubr.bf16.gmra.mrb[0].mxu0 %v792
      %v2128 = vpop.f32.mrb[0].mxu0
      %v2129 = vadd.f32 0.0, %v2128
      %v2130 = vpop.f32.mrb[0].mxu0
      %v2131 = vadd.f32 0.0, %v2130
      %v2132 = vpop.f32.mrb[0].mxu0
      %v2133 = vadd.f32 0.0, %v2132
      %v2134 = vpop.f32.mrb[0].mxu0
      %v2135 = vadd.f32 0.0, %v2134
      %2136 = vmatprep.mubr.bf16.mxu0 %v1248
      %2137 = vmatmul.mubr.bf16.gmra.mrb[0].mxu0 %v794
      %v2138 = vpop.f32.mrb[0].mxu0
      %v2139 = vadd.f32 0.0, %v2138
      %v2140 = vpop.f32.mrb[0].mxu0
      %v2141 = vadd.f32 0.0, %v2140
      %v2142 = vpop.f32.mrb[0].mxu0
      %v2143 = vadd.f32 0.0, %v2142
      %v2144 = vpop.f32.mrb[0].mxu0
      %v2145 = vadd.f32 0.0, %v2144
      %2146 = vmatprep.mubr.bf16.mxu0 %v1251
      %2147 = vmatmul.mubr.bf16.gmra.mrb[0].mxu0 %v796
      %v2148 = vpop.f32.mrb[0].mxu0
      %v2149 = vadd.f32 0.0, %v2148
      %v2150 = vpop.f32.mrb[0].mxu0
      %v2151 = vadd.f32 0.0, %v2150
      %v2152 = vpop.f32.mrb[0].mxu0
      %v2153 = vadd.f32 0.0, %v2152
      %v2154 = vpop.f32.mrb[0].mxu0
      %v2155 = vadd.f32 0.0, %v2154
      %2156 = vmatprep.mubr.bf16.mxu0 %v1254
      %2157 = vmatmul.mubr.bf16.gmra.mrb[0].mxu0 %v798
      %v2158 = vpop.f32.mrb[0].mxu0
      %v2159 = vadd.f32 0.0, %v2158
      %v2160 = vpop.f32.mrb[0].mxu0
      %v2161 = vadd.f32 0.0, %v2160
      %v2162 = vpop.f32.mrb[0].mxu0
      %v2163 = vadd.f32 0.0, %v2162
      %v2164 = vpop.f32.mrb[0].mxu0
      %v2165 = vadd.f32 0.0, %v2164
      %2166 = vmatprep.mubr.bf16.mxu0 %v1257
      %2167 = vmatmul.mubr.bf16.gmra.mrb[0].mxu0 %v800
      %v2168 = vpop.f32.mrb[0].mxu0
      %v2169 = vadd.f32 0.0, %v2168
      %v2170 = vpop.f32.mrb[0].mxu0
      %v2171 = vadd.f32 0.0, %v2170
      %v2172 = vpop.f32.mrb[0].mxu0
      %v2173 = vadd.f32 0.0, %v2172
      %v2174 = vpop.f32.mrb[0].mxu0
      %v2175 = vadd.f32 0.0, %v2174
      %2176 = vmatprep.mubr.bf16.mxu0 %v1260
      %2177 = vmatmul.mubr.bf16.gmra.mrb[0].mxu0 %v802
      %v2178 = vpop.f32.mrb[0].mxu0
      %v2179 = vadd.f32 0.0, %v2178
      %v2180 = vpop.f32.mrb[0].mxu0
      %v2181 = vadd.f32 0.0, %v2180
      %v2182 = vpop.f32.mrb[0].mxu0
      %v2183 = vadd.f32 0.0, %v2182
      %v2184 = vpop.f32.mrb[0].mxu0
      %v2185 = vadd.f32 0.0, %v2184
      %2186 = vmatprep.mubr.bf16.mxu0 %v1263
      %2187 = vmatmul.mubr.bf16.gmra.mrb[0].mxu0 %v804
      %v2188 = vpop.f32.mrb[0].mxu0
      %v2189 = vadd.f32 0.0, %v2188
      %v2190 = vpop.f32.mrb[0].mxu0
      %v2191 = vadd.f32 0.0, %v2190
      %v2192 = vpop.f32.mrb[0].mxu0
      %v2193 = vadd.f32 0.0, %v2192
      %v2194 = vpop.f32.mrb[0].mxu0
      %v2195 = vadd.f32 0.0, %v2194
      %2196 = vmatprep.mubr.bf16.mxu0 %v1266
      %2197 = vmatmul.mubr.bf16.gmra.mrb[0].mxu0 %v806
      %v2198 = vpop.f32.mrb[0].mxu0
      %v2199 = vadd.f32 0.0, %v2198
      %v2200 = vpop.f32.mrb[0].mxu0
      %v2201 = vadd.f32 0.0, %v2200
      %v2202 = vpop.f32.mrb[0].mxu0
      %v2203 = vadd.f32 0.0, %v2202
      %v2204 = vpop.f32.mrb[0].mxu0
      %v2205 = vadd.f32 0.0, %v2204
      %2206 = vmatprep.mubr.bf16.mxu0 %v1269
      %2207 = vmatmul.mubr.bf16.gmra.mrb[0].mxu0 %v808
      %v2208 = vpop.f32.mrb[0].mxu0
      %v2209 = vadd.f32 0.0, %v2208
      %v2210 = vpop.f32.mrb[0].mxu0
      %v2211 = vadd.f32 0.0, %v2210
      %v2212 = vpop.f32.mrb[0].mxu0
      %v2213 = vadd.f32 0.0, %v2212
      %v2214 = vpop.f32.mrb[0].mxu0
      %v2215 = vadd.f32 0.0, %v2214
      %2216 = vmatprep.mubr.bf16.mxu0 %v1272
      %2217 = vmatmul.mubr.bf16.gmra.mrb[0].mxu0 %v810
      %v2218 = vpop.f32.mrb[0].mxu0
      %v2219 = vadd.f32 0.0, %v2218
      %v2220 = vpop.f32.mrb[0].mxu0
      %v2221 = vadd.f32 0.0, %v2220
      %v2222 = vpop.f32.mrb[0].mxu0
      %v2223 = vadd.f32 0.0, %v2222
      %v2224 = vpop.f32.mrb[0].mxu0
      %v2225 = vadd.f32 0.0, %v2224
      %2226 = vmatprep.mubr.bf16.mxu0 %v1275
      %2227 = vmatmul.mubr.bf16.gmra.mrb[0].mxu0 %v812
      %v2228 = vpop.f32.mrb[0].mxu0
      %v2229 = vadd.f32 0.0, %v2228
      %v2230 = vpop.f32.mrb[0].mxu0
      %v2231 = vadd.f32 0.0, %v2230
      %v2232 = vpop.f32.mrb[0].mxu0
      %v2233 = vadd.f32 0.0, %v2232
      %v2234 = vpop.f32.mrb[0].mxu0
      %v2235 = vadd.f32 0.0, %v2234
      %2236 = vmatprep.mubr.bf16.mxu0 %v1278
      %2237 = vmatmul.mubr.bf16.gmra.mrb[0].mxu0 %v814
      %v2238 = vpop.f32.mrb[0].mxu0
      %v2239 = vadd.f32 0.0, %v2238
      %v2240 = vpop.f32.mrb[0].mxu0
      %v2241 = vadd.f32 0.0, %v2240
      %v2242 = vpop.f32.mrb[0].mxu0
      %v2243 = vadd.f32 0.0, %v2242
      %v2244 = vpop.f32.mrb[0].mxu0
      %v2245 = vadd.f32 0.0, %v2244
      %2246 = vmatprep.mubr.bf16.mxu0 %v1281
      %2247 = vmatmul.mubr.bf16.gmra.mrb[0].mxu0 %v816
      %v2248 = vpop.f32.mrb[0].mxu0
      %v2249 = vadd.f32 0.0, %v2248
      %v2250 = vpop.f32.mrb[0].mxu0
      %v2251 = vadd.f32 0.0, %v2250
      %v2252 = vpop.f32.mrb[0].mxu0
      %v2253 = vadd.f32 0.0, %v2252
      %v2254 = vpop.f32.mrb[0].mxu0
      %v2255 = vadd.f32 0.0, %v2254
      %2256 = vmatprep.mubr.bf16.mxu0 %v1284
      %2257 = vmatmul.mubr.bf16.gmra.mrb[0].mxu0 %v818
      %v2258 = vpop.f32.mrb[0].mxu0
      %v2259 = vadd.f32 0.0, %v2258
      %v2260 = vpop.f32.mrb[0].mxu0
      %v2261 = vadd.f32 0.0, %v2260
      %v2262 = vpop.f32.mrb[0].mxu0
      %v2263 = vadd.f32 0.0, %v2262
      %v2264 = vpop.f32.mrb[0].mxu0
      %v2265 = vadd.f32 0.0, %v2264
      %2266 = vmatprep.mubr.bf16.mxu0 %v1287
      %2267 = vmatmul.mubr.bf16.gmra.mrb[0].mxu0 %v820
      %v2268 = vpop.f32.mrb[0].mxu0
      %v2269 = vadd.f32 0.0, %v2268
      %v2270 = vpop.f32.mrb[0].mxu0
      %v2271 = vadd.f32 0.0, %v2270
      %v2272 = vpop.f32.mrb[0].mxu0
      %v2273 = vadd.f32 0.0, %v2272
      %v2274 = vpop.f32.mrb[0].mxu0
      %v2275 = vadd.f32 0.0, %v2274
      %2276 = vmatprep.mubr.bf16.mxu0 %v1290
      %2277 = vmatmul.mubr.bf16.gmra.mrb[0].mxu0 %v822
      %v2278 = vpop.f32.mrb[0].mxu0
      %v2279 = vadd.f32 0.0, %v2278
      %v2280 = vpop.f32.mrb[0].mxu0
      %v2281 = vadd.f32 0.0, %v2280
      %v2282 = vpop.f32.mrb[0].mxu0
      %v2283 = vadd.f32 0.0, %v2282
      %v2284 = vpop.f32.mrb[0].mxu0
      %v2285 = vadd.f32 0.0, %v2284
      %2286 = vmatprep.mubr.bf16.mxu0 %v1293
      %2287 = vmatmul.mubr.bf16.gmra.mrb[0].mxu0 %v824
      %v2288 = vpop.f32.mrb[0].mxu0
      %v2289 = vadd.f32 0.0, %v2288
      %v2290 = vpop.f32.mrb[0].mxu0
      %v2291 = vadd.f32 0.0, %v2290
      %v2292 = vpop.f32.mrb[0].mxu0
      %v2293 = vadd.f32 0.0, %v2292
      %v2294 = vpop.f32.mrb[0].mxu0
      %v2295 = vadd.f32 0.0, %v2294
      %2296 = vmatprep.mubr.bf16.mxu0 %v1296
      %2297 = vmatmul.mubr.bf16.gmra.mrb[0].mxu0 %v826
      %v2298 = vpop.f32.mrb[0].mxu0
      %v2299 = vadd.f32 0.0, %v2298
      %v2300 = vpop.f32.mrb[0].mxu0
      %v2301 = vadd.f32 0.0, %v2300
      %v2302 = vpop.f32.mrb[0].mxu0
      %v2303 = vadd.f32 0.0, %v2302
      %v2304 = vpop.f32.mrb[0].mxu0
      %v2305 = vadd.f32 0.0, %v2304
      %2306 = vmatprep.mubr.bf16.mxu0 %v1299
      %2307 = vmatmul.mubr.bf16.gmra.mrb[0].mxu0 %v828
      %v2308 = vpop.f32.mrb[0].mxu0
      %v2309 = vadd.f32 0.0, %v2308
      %v2310 = vpop.f32.mrb[0].mxu0
      %v2311 = vadd.f32 0.0, %v2310
      %v2312 = vpop.f32.mrb[0].mxu0
      %v2313 = vadd.f32 0.0, %v2312
      %v2314 = vpop.f32.mrb[0].mxu0
      %v2315 = vadd.f32 0.0, %v2314
      %2316 = vmatprep.mubr.bf16.mxu0 %v1302
      %2317 = vmatmul.mubr.bf16.gmra.mrb[0].mxu0 %v830
      %v2318 = vpop.f32.mrb[0].mxu0
      %v2319 = vadd.f32 0.0, %v2318
      %v2320 = vpop.f32.mrb[0].mxu0
      %v2321 = vadd.f32 0.0, %v2320
      %v2322 = vpop.f32.mrb[0].mxu0
      %v2323 = vadd.f32 0.0, %v2322
      %v2324 = vpop.f32.mrb[0].mxu0
      %v2325 = vadd.f32 0.0, %v2324
      %2326 = vmatprep.mubr.bf16.mxu0 %v1305
      %2327 = vmatmul.mubr.bf16.gmra.mrb[0].mxu0 %v832
      %v2328 = vpop.f32.mrb[0].mxu0
      %v2329 = vadd.f32 0.0, %v2328
      %v2330 = vpop.f32.mrb[0].mxu0
      %v2331 = vadd.f32 0.0, %v2330
      %v2332 = vpop.f32.mrb[0].mxu0
      %v2333 = vadd.f32 0.0, %v2332
      %v2334 = vpop.f32.mrb[0].mxu0
      %v2335 = vadd.f32 0.0, %v2334
      %2336 = vmatprep.mubr.bf16.mxu0 %v1308
      %2337 = vmatmul.mubr.bf16.gmra.mrb[0].mxu0 %v834
      %v2338 = vpop.f32.mrb[0].mxu0
      %v2339 = vadd.f32 0.0, %v2338
      %v2340 = vpop.f32.mrb[0].mxu0
      %v2341 = vadd.f32 0.0, %v2340
      %v2342 = vpop.f32.mrb[0].mxu0
      %v2343 = vadd.f32 0.0, %v2342
      %v2344 = vpop.f32.mrb[0].mxu0
      %v2345 = vadd.f32 0.0, %v2344
      %2346 = vmatprep.mubr.bf16.mxu0 %v1311
      %2347 = vmatmul.mubr.bf16.gmra.mrb[0].mxu0 %v836
      %v2348 = vpop.f32.mrb[0].mxu0
      %v2349 = vadd.f32 0.0, %v2348
      %v2350 = vpop.f32.mrb[0].mxu0
      %v2351 = vadd.f32 0.0, %v2350
      %v2352 = vpop.f32.mrb[0].mxu0
      %v2353 = vadd.f32 0.0, %v2352
      %v2354 = vpop.f32.mrb[0].mxu0
      %v2355 = vadd.f32 0.0, %v2354
      %2356 = vmatprep.mubr.bf16.mxu0 %v1314
      %2357 = vmatmul.mubr.bf16.gmra.mrb[0].mxu0 %v838
      %v2358 = vpop.f32.mrb[0].mxu0
      %v2359 = vadd.f32 0.0, %v2358
      %v2360 = vpop.f32.mrb[0].mxu0
      %v2361 = vadd.f32 0.0, %v2360
      %v2362 = vpop.f32.mrb[0].mxu0
      %v2363 = vadd.f32 0.0, %v2362
      %v2364 = vpop.f32.mrb[0].mxu0
      %v2365 = vadd.f32 0.0, %v2364
      %2366 = vmatprep.mubr.bf16.mxu0 %v1317
      %2367 = vmatmul.mubr.bf16.gmra.mrb[0].mxu0 %v840
      %v2368 = vpop.f32.mrb[0].mxu0
      %v2369 = vadd.f32 0.0, %v2368
      %v2370 = vpop.f32.mrb[0].mxu0
      %v2371 = vadd.f32 0.0, %v2370
      %v2372 = vpop.f32.mrb[0].mxu0
      %v2373 = vadd.f32 0.0, %v2372
      %v2374 = vpop.f32.mrb[0].mxu0
      %v2375 = vadd.f32 0.0, %v2374
      %2376 = vmatprep.mubr.bf16.mxu0 %v1320
      %2377 = vmatmul.mubr.bf16.gmra.mrb[0].mxu0 %v842
      %v2378 = vpop.f32.mrb[0].mxu0
      %v2379 = vadd.f32 0.0, %v2378
      %v2380 = vpop.f32.mrb[0].mxu0
      %v2381 = vadd.f32 0.0, %v2380
      %v2382 = vpop.f32.mrb[0].mxu0
      %v2383 = vadd.f32 0.0, %v2382
      %v2384 = vpop.f32.mrb[0].mxu0
      %v2385 = vadd.f32 0.0, %v2384
      %2386 = vdwg.mxu0
      %2387 = vmatprep.subr.bf16.mxu0 0
      %2388 = vmatpush1.bf16.msra.mxu0 %v1073
      %2389 = vmatprep.subr.bf16.mxu0 0
      %2390 = vmatpush1.bf16.msra.mxu0 %v1078
      %2391 = vmatprep.subr.bf16.mxu0 0
      %2392 = vmatpush1.bf16.msra.mxu0 %v1083
      %2393 = vmatprep.subr.bf16.mxu0 0
      %2394 = vmatpush1.bf16.msra.mxu0 %v1088
      %2395 = vmatprep.subr.bf16.mxu0 0
      %2396 = vmatpush1.bf16.msra.mxu0 %v1093
      %2397 = vmatprep.subr.bf16.mxu0 0
      %2398 = vmatpush1.bf16.msra.mxu0 %v1098
      %2399 = vmatprep.subr.bf16.mxu0 0
      %2400 = vmatpush1.bf16.msra.mxu0 %v1103
      %2401 = vmatprep.subr.bf16.mxu0 0
      %2402 = vmatpush1.bf16.msra.mxu0 %v1108
      %2403 = vmatprep.subr.bf16.mxu0 0
      %2404 = vmatpush1.bf16.msra.mxu0 %v1113
      %2405 = vmatprep.subr.bf16.mxu0 0
      %2406 = vmatpush1.bf16.msra.mxu0 %v1118
      %2407 = vmatprep.subr.bf16.mxu0 0
      %2408 = vmatpush1.bf16.msra.mxu0 %v1339
      %2409 = vmatprep.subr.bf16.mxu0 0
      %2410 = vmatpush1.bf16.msra.mxu0 0
      %2411 = vmatprep.subr.bf16.mxu0 0
      %2412 = vmatpush1.bf16.msra.mxu0 0
      %2413 = vmatprep.subr.bf16.mxu0 0
      %2414 = vmatpush1.bf16.msra.mxu0 0
      %2415 = vmatprep.subr.bf16.mxu0 0
      %2416 = vmatpush1.bf16.msra.mxu0 0
      %2417 = vmatprep.subr.bf16.mxu0 0
      %2418 = vmatpush1.bf16.msra.mxu0 0
      %2419 = vmatprep.mubr.bf16.mxu0 %v1176
      %2420 = vmatmul.mubr.bf16.gmra.mrb[0].mxu0 %v746
      %v2421 = vpop.f32.mrb[0].mxu0
      %v2422 = vadd.f32 0.0, %v2421
      %v2423 = vpop.f32.mrb[0].mxu0
      %v2424 = vpop.f32.mrb[0].mxu0
      %v2425 = vadd.f32 0.0, %v2424
      %v2426 = vpop.f32.mrb[0].mxu0
      %2427 = vmatprep.mubr.bf16.mxu0 %v1179
      %2428 = vmatmul.mubr.bf16.gmra.mrb[0].mxu0 %v748
      %v2429 = vpop.f32.mrb[0].mxu0
      %v2430 = vadd.f32 0.0, %v2429
      %v2431 = vpop.f32.mrb[0].mxu0
      %v2432 = vpop.f32.mrb[0].mxu0
      %v2433 = vadd.f32 0.0, %v2432
      %v2434 = vpop.f32.mrb[0].mxu0
      %2435 = vmatprep.mubr.bf16.mxu0 %v1182
      %2436 = vmatmul.mubr.bf16.gmra.mrb[0].mxu0 %v750
      %v2437 = vpop.f32.mrb[0].mxu0
      %v2438 = vadd.f32 0.0, %v2437
      %v2439 = vpop.f32.mrb[0].mxu0
      %v2440 = vpop.f32.mrb[0].mxu0
      %v2441 = vadd.f32 0.0, %v2440
      %v2442 = vpop.f32.mrb[0].mxu0
      %2443 = vmatprep.mubr.bf16.mxu0 %v1185
      %2444 = vmatmul.mubr.bf16.gmra.mrb[0].mxu0 %v752
      %v2445 = vpop.f32.mrb[0].mxu0
      %v2446 = vadd.f32 0.0, %v2445
      %v2447 = vpop.f32.mrb[0].mxu0
      %v2448 = vpop.f32.mrb[0].mxu0
      %v2449 = vadd.f32 0.0, %v2448
      %v2450 = vpop.f32.mrb[0].mxu0
      %2451 = vmatprep.mubr.bf16.mxu0 %v1188
      %2452 = vmatmul.mubr.bf16.gmra.mrb[0].mxu0 %v754
      %v2453 = vpop.f32.mrb[0].mxu0
      %v2454 = vadd.f32 0.0, %v2453
      %v2455 = vpop.f32.mrb[0].mxu0
      %v2456 = vpop.f32.mrb[0].mxu0
      %v2457 = vadd.f32 0.0, %v2456
      %v2458 = vpop.f32.mrb[0].mxu0
      %2459 = vmatprep.mubr.bf16.mxu0 %v1191
      %2460 = vmatmul.mubr.bf16.gmra.mrb[0].mxu0 %v756
      %v2461 = vpop.f32.mrb[0].mxu0
      %v2462 = vadd.f32 0.0, %v2461
      %v2463 = vpop.f32.mrb[0].mxu0
      %v2464 = vpop.f32.mrb[0].mxu0
      %v2465 = vadd.f32 0.0, %v2464
      %v2466 = vpop.f32.mrb[0].mxu0
      %2467 = vmatprep.mubr.bf16.mxu0 %v1194
      %2468 = vmatmul.mubr.bf16.gmra.mrb[0].mxu0 %v758
      %v2469 = vpop.f32.mrb[0].mxu0
      %v2470 = vadd.f32 0.0, %v2469
      %v2471 = vpop.f32.mrb[0].mxu0
      %v2472 = vpop.f32.mrb[0].mxu0
      %v2473 = vadd.f32 0.0, %v2472
      %v2474 = vpop.f32.mrb[0].mxu0
      %2475 = vmatprep.mubr.bf16.mxu0 %v1197
      %2476 = vmatmul.mubr.bf16.gmra.mrb[0].mxu0 %v760
      %v2477 = vpop.f32.mrb[0].mxu0
      %v2478 = vadd.f32 0.0, %v2477
      %v2479 = vpop.f32.mrb[0].mxu0
      %v2480 = vpop.f32.mrb[0].mxu0
      %v2481 = vadd.f32 0.0, %v2480
      %v2482 = vpop.f32.mrb[0].mxu0
      %2483 = vmatprep.mubr.bf16.mxu0 %v1200
      %2484 = vmatmul.mubr.bf16.gmra.mrb[0].mxu0 %v762
      %v2485 = vpop.f32.mrb[0].mxu0
      %v2486 = vadd.f32 0.0, %v2485
      %v2487 = vpop.f32.mrb[0].mxu0
      %v2488 = vpop.f32.mrb[0].mxu0
      %v2489 = vadd.f32 0.0, %v2488
      %v2490 = vpop.f32.mrb[0].mxu0
      %2491 = vmatprep.mubr.bf16.mxu0 %v1203
      %2492 = vmatmul.mubr.bf16.gmra.mrb[0].mxu0 %v764
      %v2493 = vpop.f32.mrb[0].mxu0
      %v2494 = vadd.f32 0.0, %v2493
      %v2495 = vpop.f32.mrb[0].mxu0
      %v2496 = vpop.f32.mrb[0].mxu0
      %v2497 = vadd.f32 0.0, %v2496
      %v2498 = vpop.f32.mrb[0].mxu0
      %2499 = vmatprep.mubr.bf16.mxu0 %v1206
      %2500 = vmatmul.mubr.bf16.gmra.mrb[0].mxu0 %v766
      %v2501 = vpop.f32.mrb[0].mxu0
      %v2502 = vadd.f32 0.0, %v2501
      %v2503 = vpop.f32.mrb[0].mxu0
      %v2504 = vpop.f32.mrb[0].mxu0
      %v2505 = vadd.f32 0.0, %v2504
      %v2506 = vpop.f32.mrb[0].mxu0
      %2507 = vmatprep.mubr.bf16.mxu0 %v1209
      %2508 = vmatmul.mubr.bf16.gmra.mrb[0].mxu0 %v768
      %v2509 = vpop.f32.mrb[0].mxu0
      %v2510 = vadd.f32 0.0, %v2509
      %v2511 = vpop.f32.mrb[0].mxu0
      %v2512 = vpop.f32.mrb[0].mxu0
      %v2513 = vadd.f32 0.0, %v2512
      %v2514 = vpop.f32.mrb[0].mxu0
      %2515 = vmatprep.mubr.bf16.mxu0 %v1212
      %2516 = vmatmul.mubr.bf16.gmra.mrb[0].mxu0 %v770
      %v2517 = vpop.f32.mrb[0].mxu0
      %v2518 = vadd.f32 0.0, %v2517
      %v2519 = vpop.f32.mrb[0].mxu0
      %v2520 = vpop.f32.mrb[0].mxu0
      %v2521 = vadd.f32 0.0, %v2520
      %v2522 = vpop.f32.mrb[0].mxu0
      %2523 = vmatprep.mubr.bf16.mxu0 %v1215
      %2524 = vmatmul.mubr.bf16.gmra.mrb[0].mxu0 %v772
      %v2525 = vpop.f32.mrb[0].mxu0
      %v2526 = vadd.f32 0.0, %v2525
      %v2527 = vpop.f32.mrb[0].mxu0
      %v2528 = vpop.f32.mrb[0].mxu0
      %v2529 = vadd.f32 0.0, %v2528
      %v2530 = vpop.f32.mrb[0].mxu0
      %2531 = vmatprep.mubr.bf16.mxu0 %v1218
      %2532 = vmatmul.mubr.bf16.gmra.mrb[0].mxu0 %v774
      %v2533 = vpop.f32.mrb[0].mxu0
      %v2534 = vadd.f32 0.0, %v2533
      %v2535 = vpop.f32.mrb[0].mxu0
      %v2536 = vpop.f32.mrb[0].mxu0
      %v2537 = vadd.f32 0.0, %v2536
      %v2538 = vpop.f32.mrb[0].mxu0
      %2539 = vmatprep.mubr.bf16.mxu0 %v1221
      %2540 = vmatmul.mubr.bf16.gmra.mrb[0].mxu0 %v776
      %v2541 = vpop.f32.mrb[0].mxu0
      %v2542 = vadd.f32 0.0, %v2541
      %v2543 = vpop.f32.mrb[0].mxu0
      %v2544 = vpop.f32.mrb[0].mxu0
      %v2545 = vadd.f32 0.0, %v2544
      %v2546 = vpop.f32.mrb[0].mxu0
      %2547 = vmatprep.mubr.bf16.mxu0 %v1224
      %2548 = vmatmul.mubr.bf16.gmra.mrb[0].mxu0 %v778
      %v2549 = vpop.f32.mrb[0].mxu0
      %v2550 = vadd.f32 0.0, %v2549
      %v2551 = vpop.f32.mrb[0].mxu0
      %v2552 = vpop.f32.mrb[0].mxu0
      %v2553 = vadd.f32 0.0, %v2552
      %v2554 = vpop.f32.mrb[0].mxu0
      %2555 = vmatprep.mubr.bf16.mxu0 %v1227
      %2556 = vmatmul.mubr.bf16.gmra.mrb[0].mxu0 %v780
      %v2557 = vpop.f32.mrb[0].mxu0
      %v2558 = vadd.f32 0.0, %v2557
      %v2559 = vpop.f32.mrb[0].mxu0
      %v2560 = vpop.f32.mrb[0].mxu0
      %v2561 = vadd.f32 0.0, %v2560
      %v2562 = vpop.f32.mrb[0].mxu0
      %2563 = vmatprep.mubr.bf16.mxu0 %v1230
      %2564 = vmatmul.mubr.bf16.gmra.mrb[0].mxu0 %v782
      %v2565 = vpop.f32.mrb[0].mxu0
      %v2566 = vadd.f32 0.0, %v2565
      %v2567 = vpop.f32.mrb[0].mxu0
      %v2568 = vpop.f32.mrb[0].mxu0
      %v2569 = vadd.f32 0.0, %v2568
      %v2570 = vpop.f32.mrb[0].mxu0
      %2571 = vmatprep.mubr.bf16.mxu0 %v1233
      %2572 = vmatmul.mubr.bf16.gmra.mrb[0].mxu0 %v784
      %v2573 = vpop.f32.mrb[0].mxu0
      %v2574 = vadd.f32 0.0, %v2573
      %v2575 = vpop.f32.mrb[0].mxu0
      %v2576 = vpop.f32.mrb[0].mxu0
      %v2577 = vadd.f32 0.0, %v2576
      %v2578 = vpop.f32.mrb[0].mxu0
      %2579 = vmatprep.mubr.bf16.mxu0 %v1236
      %2580 = vmatmul.mubr.bf16.gmra.mrb[0].mxu0 %v786
      %v2581 = vpop.f32.mrb[0].mxu0
      %v2582 = vadd.f32 0.0, %v2581
      %v2583 = vpop.f32.mrb[0].mxu0
      %v2584 = vpop.f32.mrb[0].mxu0
      %v2585 = vadd.f32 0.0, %v2584
      %v2586 = vpop.f32.mrb[0].mxu0
      %2587 = vmatprep.mubr.bf16.mxu0 %v1239
      %2588 = vmatmul.mubr.bf16.gmra.mrb[0].mxu0 %v788
      %v2589 = vpop.f32.mrb[0].mxu0
      %v2590 = vadd.f32 0.0, %v2589
      %v2591 = vpop.f32.mrb[0].mxu0
      %v2592 = vpop.f32.mrb[0].mxu0
      %v2593 = vadd.f32 0.0, %v2592
      %v2594 = vpop.f32.mrb[0].mxu0
      %2595 = vmatprep.mubr.bf16.mxu0 %v1242
      %2596 = vmatmul.mubr.bf16.gmra.mrb[0].mxu0 %v790
      %v2597 = vpop.f32.mrb[0].mxu0
      %v2598 = vadd.f32 0.0, %v2597
      %v2599 = vpop.f32.mrb[0].mxu0
      %v2600 = vpop.f32.mrb[0].mxu0
      %v2601 = vadd.f32 0.0, %v2600
      %v2602 = vpop.f32.mrb[0].mxu0
      %2603 = vmatprep.mubr.bf16.mxu0 %v1245
      %2604 = vmatmul.mubr.bf16.gmra.mrb[0].mxu0 %v792
      %v2605 = vpop.f32.mrb[0].mxu0
      %v2606 = vadd.f32 0.0, %v2605
      %v2607 = vpop.f32.mrb[0].mxu0
      %v2608 = vpop.f32.mrb[0].mxu0
      %v2609 = vadd.f32 0.0, %v2608
      %v2610 = vpop.f32.mrb[0].mxu0
      %2611 = vmatprep.mubr.bf16.mxu0 %v1248
      %2612 = vmatmul.mubr.bf16.gmra.mrb[0].mxu0 %v794
      %v2613 = vpop.f32.mrb[0].mxu0
      %v2614 = vadd.f32 0.0, %v2613
      %v2615 = vpop.f32.mrb[0].mxu0
      %v2616 = vpop.f32.mrb[0].mxu0
      %v2617 = vadd.f32 0.0, %v2616
      %v2618 = vpop.f32.mrb[0].mxu0
      %2619 = vmatprep.mubr.bf16.mxu0 %v1251
      %2620 = vmatmul.mubr.bf16.gmra.mrb[0].mxu0 %v796
      %v2621 = vpop.f32.mrb[0].mxu0
      %v2622 = vadd.f32 0.0, %v2621
      %v2623 = vpop.f32.mrb[0].mxu0
      %v2624 = vpop.f32.mrb[0].mxu0
      %v2625 = vadd.f32 0.0, %v2624
      %v2626 = vpop.f32.mrb[0].mxu0
      %2627 = vmatprep.mubr.bf16.mxu0 %v1254
      %2628 = vmatmul.mubr.bf16.gmra.mrb[0].mxu0 %v798
      %v2629 = vpop.f32.mrb[0].mxu0
      %v2630 = vadd.f32 0.0, %v2629
      %v2631 = vpop.f32.mrb[0].mxu0
      %v2632 = vpop.f32.mrb[0].mxu0
      %v2633 = vadd.f32 0.0, %v2632
      %v2634 = vpop.f32.mrb[0].mxu0
      %2635 = vmatprep.mubr.bf16.mxu0 %v1257
      %2636 = vmatmul.mubr.bf16.gmra.mrb[0].mxu0 %v800
      %v2637 = vpop.f32.mrb[0].mxu0
      %v2638 = vadd.f32 0.0, %v2637
      %v2639 = vpop.f32.mrb[0].mxu0
      %v2640 = vpop.f32.mrb[0].mxu0
      %v2641 = vadd.f32 0.0, %v2640
      %v2642 = vpop.f32.mrb[0].mxu0
      %2643 = vmatprep.mubr.bf16.mxu0 %v1260
      %2644 = vmatmul.mubr.bf16.gmra.mrb[0].mxu0 %v802
      %v2645 = vpop.f32.mrb[0].mxu0
      %v2646 = vadd.f32 0.0, %v2645
      %v2647 = vpop.f32.mrb[0].mxu0
      %v2648 = vpop.f32.mrb[0].mxu0
      %v2649 = vadd.f32 0.0, %v2648
      %v2650 = vpop.f32.mrb[0].mxu0
      %2651 = vmatprep.mubr.bf16.mxu0 %v1263
      %2652 = vmatmul.mubr.bf16.gmra.mrb[0].mxu0 %v804
      %v2653 = vpop.f32.mrb[0].mxu0
      %v2654 = vadd.f32 0.0, %v2653
      %v2655 = vpop.f32.mrb[0].mxu0
      %v2656 = vpop.f32.mrb[0].mxu0
      %v2657 = vadd.f32 0.0, %v2656
      %v2658 = vpop.f32.mrb[0].mxu0
      %2659 = vmatprep.mubr.bf16.mxu0 %v1266
      %2660 = vmatmul.mubr.bf16.gmra.mrb[0].mxu0 %v806
      %v2661 = vpop.f32.mrb[0].mxu0
      %v2662 = vadd.f32 0.0, %v2661
      %v2663 = vpop.f32.mrb[0].mxu0
      %v2664 = vpop.f32.mrb[0].mxu0
      %v2665 = vadd.f32 0.0, %v2664
      %v2666 = vpop.f32.mrb[0].mxu0
      %2667 = vmatprep.mubr.bf16.mxu0 %v1269
      %2668 = vmatmul.mubr.bf16.gmra.mrb[0].mxu0 %v808
      %v2669 = vpop.f32.mrb[0].mxu0
      %v2670 = vadd.f32 0.0, %v2669
      %v2671 = vpop.f32.mrb[0].mxu0
      %v2672 = vpop.f32.mrb[0].mxu0
      %v2673 = vadd.f32 0.0, %v2672
      %v2674 = vpop.f32.mrb[0].mxu0
      %2675 = vmatprep.mubr.bf16.mxu0 %v1272
      %2676 = vmatmul.mubr.bf16.gmra.mrb[0].mxu0 %v810
      %v2677 = vpop.f32.mrb[0].mxu0
      %v2678 = vadd.f32 0.0, %v2677
      %v2679 = vpop.f32.mrb[0].mxu0
      %v2680 = vpop.f32.mrb[0].mxu0
      %v2681 = vadd.f32 0.0, %v2680
      %v2682 = vpop.f32.mrb[0].mxu0
      %2683 = vmatprep.mubr.bf16.mxu0 %v1275
      %2684 = vmatmul.mubr.bf16.gmra.mrb[0].mxu0 %v812
      %v2685 = vpop.f32.mrb[0].mxu0
      %v2686 = vadd.f32 0.0, %v2685
      %v2687 = vpop.f32.mrb[0].mxu0
      %v2688 = vpop.f32.mrb[0].mxu0
      %v2689 = vadd.f32 0.0, %v2688
      %v2690 = vpop.f32.mrb[0].mxu0
      %2691 = vmatprep.mubr.bf16.mxu0 %v1278
      %2692 = vmatmul.mubr.bf16.gmra.mrb[0].mxu0 %v814
      %v2693 = vpop.f32.mrb[0].mxu0
      %v2694 = vadd.f32 0.0, %v2693
      %v2695 = vpop.f32.mrb[0].mxu0
      %v2696 = vpop.f32.mrb[0].mxu0
      %v2697 = vadd.f32 0.0, %v2696
      %v2698 = vpop.f32.mrb[0].mxu0
      %2699 = vmatprep.mubr.bf16.mxu0 %v1281
      %2700 = vmatmul.mubr.bf16.gmra.mrb[0].mxu0 %v816
      %v2701 = vpop.f32.mrb[0].mxu0
      %v2702 = vadd.f32 0.0, %v2701
      %v2703 = vpop.f32.mrb[0].mxu0
      %v2704 = vpop.f32.mrb[0].mxu0
      %v2705 = vadd.f32 0.0, %v2704
      %v2706 = vpop.f32.mrb[0].mxu0
      %2707 = vmatprep.mubr.bf16.mxu0 %v1284
      %2708 = vmatmul.mubr.bf16.gmra.mrb[0].mxu0 %v818
      %v2709 = vpop.f32.mrb[0].mxu0
      %v2710 = vadd.f32 0.0, %v2709
      %v2711 = vpop.f32.mrb[0].mxu0
      %v2712 = vpop.f32.mrb[0].mxu0
      %v2713 = vadd.f32 0.0, %v2712
      %v2714 = vpop.f32.mrb[0].mxu0
      %2715 = vmatprep.mubr.bf16.mxu0 %v1287
      %2716 = vmatmul.mubr.bf16.gmra.mrb[0].mxu0 %v820
      %v2717 = vpop.f32.mrb[0].mxu0
      %v2718 = vadd.f32 0.0, %v2717
      %v2719 = vpop.f32.mrb[0].mxu0
      %v2720 = vpop.f32.mrb[0].mxu0
      %v2721 = vadd.f32 0.0, %v2720
      %v2722 = vpop.f32.mrb[0].mxu0
      %2723 = vmatprep.mubr.bf16.mxu0 %v1290
      %2724 = vmatmul.mubr.bf16.gmra.mrb[0].mxu0 %v822
      %v2725 = vpop.f32.mrb[0].mxu0
      %v2726 = vadd.f32 0.0, %v2725
      %v2727 = vpop.f32.mrb[0].mxu0
      %v2728 = vpop.f32.mrb[0].mxu0
      %v2729 = vadd.f32 0.0, %v2728
      %v2730 = vpop.f32.mrb[0].mxu0
      %2731 = vmatprep.mubr.bf16.mxu0 %v1293
      %2732 = vmatmul.mubr.bf16.gmra.mrb[0].mxu0 %v824
      %v2733 = vpop.f32.mrb[0].mxu0
      %v2734 = vadd.f32 0.0, %v2733
      %v2735 = vpop.f32.mrb[0].mxu0
      %v2736 = vpop.f32.mrb[0].mxu0
      %v2737 = vadd.f32 0.0, %v2736
      %v2738 = vpop.f32.mrb[0].mxu0
      %2739 = vmatprep.mubr.bf16.mxu0 %v1296
      %2740 = vmatmul.mubr.bf16.gmra.mrb[0].mxu0 %v826
      %v2741 = vpop.f32.mrb[0].mxu0
      %v2742 = vadd.f32 0.0, %v2741
      %v2743 = vpop.f32.mrb[0].mxu0
      %v2744 = vpop.f32.mrb[0].mxu0
      %v2745 = vadd.f32 0.0, %v2744
      %v2746 = vpop.f32.mrb[0].mxu0
      %2747 = vmatprep.mubr.bf16.mxu0 %v1299
      %2748 = vmatmul.mubr.bf16.gmra.mrb[0].mxu0 %v828
      %v2749 = vpop.f32.mrb[0].mxu0
      %v2750 = vadd.f32 0.0, %v2749
      %v2751 = vpop.f32.mrb[0].mxu0
      %v2752 = vpop.f32.mrb[0].mxu0
      %v2753 = vadd.f32 0.0, %v2752
      %v2754 = vpop.f32.mrb[0].mxu0
      %2755 = vmatprep.mubr.bf16.mxu0 %v1302
      %2756 = vmatmul.mubr.bf16.gmra.mrb[0].mxu0 %v830
      %v2757 = vpop.f32.mrb[0].mxu0
      %v2758 = vadd.f32 0.0, %v2757
      %v2759 = vpop.f32.mrb[0].mxu0
      %v2760 = vpop.f32.mrb[0].mxu0
      %v2761 = vadd.f32 0.0, %v2760
      %v2762 = vpop.f32.mrb[0].mxu0
      %2763 = vmatprep.mubr.bf16.mxu0 %v1305
      %2764 = vmatmul.mubr.bf16.gmra.mrb[0].mxu0 %v832
      %v2765 = vpop.f32.mrb[0].mxu0
      %v2766 = vadd.f32 0.0, %v2765
      %v2767 = vpop.f32.mrb[0].mxu0
      %v2768 = vpop.f32.mrb[0].mxu0
      %v2769 = vadd.f32 0.0, %v2768
      %v2770 = vpop.f32.mrb[0].mxu0
      %2771 = vmatprep.mubr.bf16.mxu0 %v1308
      %2772 = vmatmul.mubr.bf16.gmra.mrb[0].mxu0 %v834
      %v2773 = vpop.f32.mrb[0].mxu0
      %v2774 = vadd.f32 0.0, %v2773
      %v2775 = vpop.f32.mrb[0].mxu0
      %v2776 = vpop.f32.mrb[0].mxu0
      %v2777 = vadd.f32 0.0, %v2776
      %v2778 = vpop.f32.mrb[0].mxu0
      %2779 = vmatprep.mubr.bf16.mxu0 %v1311
      %2780 = vmatmul.mubr.bf16.gmra.mrb[0].mxu0 %v836
      %v2781 = vpop.f32.mrb[0].mxu0
      %v2782 = vadd.f32 0.0, %v2781
      %v2783 = vpop.f32.mrb[0].mxu0
      %v2784 = vpop.f32.mrb[0].mxu0
      %v2785 = vadd.f32 0.0, %v2784
      %v2786 = vpop.f32.mrb[0].mxu0
      %2787 = vmatprep.mubr.bf16.mxu0 %v1314
      %2788 = vmatmul.mubr.bf16.gmra.mrb[0].mxu0 %v838
      %v2789 = vpop.f32.mrb[0].mxu0
      %v2790 = vadd.f32 0.0, %v2789
      %v2791 = vpop.f32.mrb[0].mxu0
      %v2792 = vpop.f32.mrb[0].mxu0
      %v2793 = vadd.f32 0.0, %v2792
      %v2794 = vpop.f32.mrb[0].mxu0
      %2795 = vmatprep.mubr.bf16.mxu0 %v1317
      %2796 = vmatmul.mubr.bf16.gmra.mrb[0].mxu0 %v840
      %v2797 = vpop.f32.mrb[0].mxu0
      %v2798 = vadd.f32 0.0, %v2797
      %v2799 = vpop.f32.mrb[0].mxu0
      %v2800 = vpop.f32.mrb[0].mxu0
      %v2801 = vadd.f32 0.0, %v2800
      %v2802 = vpop.f32.mrb[0].mxu0
      %2803 = vmatprep.mubr.bf16.mxu0 %v1320
      %2804 = vmatmul.mubr.bf16.gmra.mrb[0].mxu0 %v842
      %v2805 = vpop.f32.mrb[0].mxu0
      %v2806 = vadd.f32 0.0, %v2805
      %v2807 = vpop.f32.mrb[0].mxu0
      %v2808 = vpop.f32.mrb[0].mxu0
      %v2809 = vadd.f32 0.0, %v2808
      %v2810 = vpop.f32.mrb[0].mxu0
      %2811 = vdwg.mxu0
      %vm2812 = vcmp.gt.f32.partialorder %v1376, 0.0
      %vm2813 = vcmp.gt.f32.partialorder %v1378, 0.0
      %vm2814 = vcmp.gt.f32.partialorder %v1899, 0.0
      %vm2815 = vcmp.gt.f32.partialorder %v1901, 0.0
      %vm2816 = vcmp.gt.f32.partialorder %v2422, 0.0
      %vm2817 = vcmp.gt.f32.partialorder %v1380, 0.0
      %vm2818 = vcmp.gt.f32.partialorder %v1382, 0.0
      %vm2819 = vcmp.gt.f32.partialorder %v1903, 0.0
      %vm2820 = vcmp.gt.f32.partialorder %v1905, 0.0
      %vm2821 = vcmp.gt.f32.partialorder %v2425, 0.0
      %vm2822 = vcmp.gt.f32.partialorder %v1386, 0.0
      %vm2823 = vcmp.gt.f32.partialorder %v1388, 0.0
      %vm2824 = vcmp.gt.f32.partialorder %v1909, 0.0
      %vm2825 = vcmp.gt.f32.partialorder %v1911, 0.0
      %vm2826 = vcmp.gt.f32.partialorder %v2430, 0.0
      %vm2827 = vcmp.gt.f32.partialorder %v1390, 0.0
      %vm2828 = vcmp.gt.f32.partialorder %v1392, 0.0
      %vm2829 = vcmp.gt.f32.partialorder %v1913, 0.0
      %vm2830 = vcmp.gt.f32.partialorder %v1915, 0.0
      %vm2831 = vcmp.gt.f32.partialorder %v2433, 0.0
      %vm2832 = vcmp.gt.f32.partialorder %v1396, 0.0
      %vm2833 = vcmp.gt.f32.partialorder %v1398, 0.0
      %vm2834 = vcmp.gt.f32.partialorder %v1919, 0.0
      %vm2835 = vcmp.gt.f32.partialorder %v1921, 0.0
      %vm2836 = vcmp.gt.f32.partialorder %v2438, 0.0
      %vm2837 = vcmp.gt.f32.partialorder %v1400, 0.0
      %vm2838 = vcmp.gt.f32.partialorder %v1402, 0.0
      %vm2839 = vcmp.gt.f32.partialorder %v1923, 0.0
      %vm2840 = vcmp.gt.f32.partialorder %v1925, 0.0
      %vm2841 = vcmp.gt.f32.partialorder %v2441, 0.0
      %vm2842 = vcmp.gt.f32.partialorder %v1406, 0.0
      %vm2843 = vcmp.gt.f32.partialorder %v1408, 0.0
      %vm2844 = vcmp.gt.f32.partialorder %v1929, 0.0
      %vm2845 = vcmp.gt.f32.partialorder %v1931, 0.0
      %vm2846 = vcmp.gt.f32.partialorder %v2446, 0.0
      %vm2847 = vcmp.gt.f32.partialorder %v1410, 0.0
      %vm2848 = vcmp.gt.f32.partialorder %v1412, 0.0
      %vm2849 = vcmp.gt.f32.partialorder %v1933, 0.0
      %vm2850 = vcmp.gt.f32.partialorder %v1935, 0.0
      %vm2851 = vcmp.gt.f32.partialorder %v2449, 0.0
      %vm2852 = vcmp.gt.f32.partialorder %v1416, 0.0
      %vm2853 = vcmp.gt.f32.partialorder %v1418, 0.0
      %vm2854 = vcmp.gt.f32.partialorder %v1939, 0.0
      %vm2855 = vcmp.gt.f32.partialorder %v1941, 0.0
      %vm2856 = vcmp.gt.f32.partialorder %v2454, 0.0
      %vm2857 = vcmp.gt.f32.partialorder %v1420, 0.0
      %vm2858 = vcmp.gt.f32.partialorder %v1422, 0.0
      %vm2859 = vcmp.gt.f32.partialorder %v1943, 0.0
      %vm2860 = vcmp.gt.f32.partialorder %v1945, 0.0
      %vm2861 = vcmp.gt.f32.partialorder %v2457, 0.0
      %vm2862 = vcmp.gt.f32.partialorder %v1426, 0.0
      %vm2863 = vcmp.gt.f32.partialorder %v1428, 0.0
      %vm2864 = vcmp.gt.f32.partialorder %v1949, 0.0
      %vm2865 = vcmp.gt.f32.partialorder %v1951, 0.0
      %vm2866 = vcmp.gt.f32.partialorder %v2462, 0.0
      %vm2867 = vcmp.gt.f32.partialorder %v1430, 0.0
      %vm2868 = vcmp.gt.f32.partialorder %v1432, 0.0
      %vm2869 = vcmp.gt.f32.partialorder %v1953, 0.0
      %vm2870 = vcmp.gt.f32.partialorder %v1955, 0.0
      %vm2871 = vcmp.gt.f32.partialorder %v2465, 0.0
      %vm2872 = vcmp.gt.f32.partialorder %v1436, 0.0
      %vm2873 = vcmp.gt.f32.partialorder %v1438, 0.0
      %vm2874 = vcmp.gt.f32.partialorder %v1959, 0.0
      %vm2875 = vcmp.gt.f32.partialorder %v1961, 0.0
      %vm2876 = vcmp.gt.f32.partialorder %v2470, 0.0
      %vm2877 = vcmp.gt.f32.partialorder %v1440, 0.0
      %vm2878 = vcmp.gt.f32.partialorder %v1442, 0.0
      %vm2879 = vcmp.gt.f32.partialorder %v1963, 0.0
      %vm2880 = vcmp.gt.f32.partialorder %v1965, 0.0
      %vm2881 = vcmp.gt.f32.partialorder %v2473, 0.0
      %vm2882 = vcmp.gt.f32.partialorder %v1446, 0.0
      %vm2883 = vcmp.gt.f32.partialorder %v1448, 0.0
      %vm2884 = vcmp.gt.f32.partialorder %v1969, 0.0
      %vm2885 = vcmp.gt.f32.partialorder %v1971, 0.0
      %vm2886 = vcmp.gt.f32.partialorder %v2478, 0.0
      %vm2887 = vcmp.gt.f32.partialorder %v1450, 0.0
      %vm2888 = vcmp.gt.f32.partialorder %v1452, 0.0
      %vm2889 = vcmp.gt.f32.partialorder %v1973, 0.0
      %vm2890 = vcmp.gt.f32.partialorder %v1975, 0.0
      %vm2891 = vcmp.gt.f32.partialorder %v2481, 0.0
      %vm2892 = vcmp.gt.f32.partialorder %v1456, 0.0
      %vm2893 = vcmp.gt.f32.partialorder %v1458, 0.0
      %vm2894 = vcmp.gt.f32.partialorder %v1979, 0.0
      %vm2895 = vcmp.gt.f32.partialorder %v1981, 0.0
      %vm2896 = vcmp.gt.f32.partialorder %v2486, 0.0
      %vm2897 = vcmp.gt.f32.partialorder %v1460, 0.0
      %vm2898 = vcmp.gt.f32.partialorder %v1462, 0.0
      %vm2899 = vcmp.gt.f32.partialorder %v1983, 0.0
      %vm2900 = vcmp.gt.f32.partialorder %v1985, 0.0
      %vm2901 = vcmp.gt.f32.partialorder %v2489, 0.0
      %vm2902 = vcmp.gt.f32.partialorder %v1466, 0.0
      %vm2903 = vcmp.gt.f32.partialorder %v1468, 0.0
      %vm2904 = vcmp.gt.f32.partialorder %v1989, 0.0
      %vm2905 = vcmp.gt.f32.partialorder %v1991, 0.0
      %vm2906 = vcmp.gt.f32.partialorder %v2494, 0.0
      %vm2907 = vcmp.gt.f32.partialorder %v1470, 0.0
      %vm2908 = vcmp.gt.f32.partialorder %v1472, 0.0
      %vm2909 = vcmp.gt.f32.partialorder %v1993, 0.0
      %vm2910 = vcmp.gt.f32.partialorder %v1995, 0.0
      %vm2911 = vcmp.gt.f32.partialorder %v2497, 0.0
      %vm2912 = vcmp.gt.f32.partialorder %v1476, 0.0
      %vm2913 = vcmp.gt.f32.partialorder %v1478, 0.0
      %vm2914 = vcmp.gt.f32.partialorder %v1999, 0.0
      %vm2915 = vcmp.gt.f32.partialorder %v2001, 0.0
      %vm2916 = vcmp.gt.f32.partialorder %v2502, 0.0
      %vm2917 = vcmp.gt.f32.partialorder %v1480, 0.0
      %vm2918 = vcmp.gt.f32.partialorder %v1482, 0.0
      %vm2919 = vcmp.gt.f32.partialorder %v2003, 0.0
      %vm2920 = vcmp.gt.f32.partialorder %v2005, 0.0
      %vm2921 = vcmp.gt.f32.partialorder %v2505, 0.0
      %vm2922 = vcmp.gt.f32.partialorder %v1486, 0.0
      %vm2923 = vcmp.gt.f32.partialorder %v1488, 0.0
      %vm2924 = vcmp.gt.f32.partialorder %v2009, 0.0
      %vm2925 = vcmp.gt.f32.partialorder %v2011, 0.0
      %vm2926 = vcmp.gt.f32.partialorder %v2510, 0.0
      %vm2927 = vcmp.gt.f32.partialorder %v1490, 0.0
      %vm2928 = vcmp.gt.f32.partialorder %v1492, 0.0
      %vm2929 = vcmp.gt.f32.partialorder %v2013, 0.0
      %vm2930 = vcmp.gt.f32.partialorder %v2015, 0.0
      %vm2931 = vcmp.gt.f32.partialorder %v2513, 0.0
      %vm2932 = vcmp.gt.f32.partialorder %v1496, 0.0
      %vm2933 = vcmp.gt.f32.partialorder %v1498, 0.0
      %vm2934 = vcmp.gt.f32.partialorder %v2019, 0.0
      %vm2935 = vcmp.gt.f32.partialorder %v2021, 0.0
      %vm2936 = vcmp.gt.f32.partialorder %v2518, 0.0
      %vm2937 = vcmp.gt.f32.partialorder %v1500, 0.0
      %vm2938 = vcmp.gt.f32.partialorder %v1502, 0.0
      %vm2939 = vcmp.gt.f32.partialorder %v2023, 0.0
      %vm2940 = vcmp.gt.f32.partialorder %v2025, 0.0
      %vm2941 = vcmp.gt.f32.partialorder %v2521, 0.0
      %vm2942 = vcmp.gt.f32.partialorder %v1506, 0.0
      %vm2943 = vcmp.gt.f32.partialorder %v1508, 0.0
      %vm2944 = vcmp.gt.f32.partialorder %v2029, 0.0
      %vm2945 = vcmp.gt.f32.partialorder %v2031, 0.0
      %vm2946 = vcmp.gt.f32.partialorder %v2526, 0.0
      %vm2947 = vcmp.gt.f32.partialorder %v1510, 0.0
      %vm2948 = vcmp.gt.f32.partialorder %v1512, 0.0
      %vm2949 = vcmp.gt.f32.partialorder %v2033, 0.0
      %vm2950 = vcmp.gt.f32.partialorder %v2035, 0.0
      %vm2951 = vcmp.gt.f32.partialorder %v2529, 0.0
      %vm2952 = vcmp.gt.f32.partialorder %v1516, 0.0
      %vm2953 = vcmp.gt.f32.partialorder %v1518, 0.0
      %vm2954 = vcmp.gt.f32.partialorder %v2039, 0.0
      %vm2955 = vcmp.gt.f32.partialorder %v2041, 0.0
      %vm2956 = vcmp.gt.f32.partialorder %v2534, 0.0
      %vm2957 = vcmp.gt.f32.partialorder %v1520, 0.0
      %vm2958 = vcmp.gt.f32.partialorder %v1522, 0.0
      %vm2959 = vcmp.gt.f32.partialorder %v2043, 0.0
      %vm2960 = vcmp.gt.f32.partialorder %v2045, 0.0
      %vm2961 = vcmp.gt.f32.partialorder %v2537, 0.0
      %vm2962 = vcmp.gt.f32.partialorder %v1526, 0.0
      %vm2963 = vcmp.gt.f32.partialorder %v1528, 0.0
      %vm2964 = vcmp.gt.f32.partialorder %v2049, 0.0
      %vm2965 = vcmp.gt.f32.partialorder %v2051, 0.0
      %vm2966 = vcmp.gt.f32.partialorder %v2542, 0.0
      %vm2967 = vcmp.gt.f32.partialorder %v1530, 0.0
      %vm2968 = vcmp.gt.f32.partialorder %v1532, 0.0
      %vm2969 = vcmp.gt.f32.partialorder %v2053, 0.0
      %vm2970 = vcmp.gt.f32.partialorder %v2055, 0.0
      %vm2971 = vcmp.gt.f32.partialorder %v2545, 0.0
      %vm2972 = vcmp.gt.f32.partialorder %v1536, 0.0
      %vm2973 = vcmp.gt.f32.partialorder %v1538, 0.0
      %vm2974 = vcmp.gt.f32.partialorder %v2059, 0.0
      %vm2975 = vcmp.gt.f32.partialorder %v2061, 0.0
      %vm2976 = vcmp.gt.f32.partialorder %v2550, 0.0
      %vm2977 = vcmp.gt.f32.partialorder %v1540, 0.0
      %vm2978 = vcmp.gt.f32.partialorder %v1542, 0.0
      %vm2979 = vcmp.gt.f32.partialorder %v2063, 0.0
      %vm2980 = vcmp.gt.f32.partialorder %v2065, 0.0
      %vm2981 = vcmp.gt.f32.partialorder %v2553, 0.0
      %vm2982 = vcmp.gt.f32.partialorder %v1546, 0.0
      %vm2983 = vcmp.gt.f32.partialorder %v1548, 0.0
      %vm2984 = vcmp.gt.f32.partialorder %v2069, 0.0
      %vm2985 = vcmp.gt.f32.partialorder %v2071, 0.0
      %vm2986 = vcmp.gt.f32.partialorder %v2558, 0.0
      %vm2987 = vcmp.gt.f32.partialorder %v1550, 0.0
      %vm2988 = vcmp.gt.f32.partialorder %v1552, 0.0
      %vm2989 = vcmp.gt.f32.partialorder %v2073, 0.0
      %vm2990 = vcmp.gt.f32.partialorder %v2075, 0.0
      %vm2991 = vcmp.gt.f32.partialorder %v2561, 0.0
      %vm2992 = vcmp.gt.f32.partialorder %v1556, 0.0
      %vm2993 = vcmp.gt.f32.partialorder %v1558, 0.0
      %vm2994 = vcmp.gt.f32.partialorder %v2079, 0.0
      %vm2995 = vcmp.gt.f32.partialorder %v2081, 0.0
      %vm2996 = vcmp.gt.f32.partialorder %v2566, 0.0
      %vm2997 = vcmp.gt.f32.partialorder %v1560, 0.0
      %vm2998 = vcmp.gt.f32.partialorder %v1562, 0.0
      %vm2999 = vcmp.gt.f32.partialorder %v2083, 0.0
      %vm3000 = vcmp.gt.f32.partialorder %v2085, 0.0
      %vm3001 = vcmp.gt.f32.partialorder %v2569, 0.0
      %vm3002 = vcmp.gt.f32.partialorder %v1566, 0.0
      %vm3003 = vcmp.gt.f32.partialorder %v1568, 0.0
      %vm3004 = vcmp.gt.f32.partialorder %v2089, 0.0
      %vm3005 = vcmp.gt.f32.partialorder %v2091, 0.0
      %vm3006 = vcmp.gt.f32.partialorder %v2574, 0.0
      %vm3007 = vcmp.gt.f32.partialorder %v1570, 0.0
      %vm3008 = vcmp.gt.f32.partialorder %v1572, 0.0
      %vm3009 = vcmp.gt.f32.partialorder %v2093, 0.0
      %vm3010 = vcmp.gt.f32.partialorder %v2095, 0.0
      %vm3011 = vcmp.gt.f32.partialorder %v2577, 0.0
      %vm3012 = vcmp.gt.f32.partialorder %v1576, 0.0
      %vm3013 = vcmp.gt.f32.partialorder %v1578, 0.0
      %vm3014 = vcmp.gt.f32.partialorder %v2099, 0.0
      %vm3015 = vcmp.gt.f32.partialorder %v2101, 0.0
      %vm3016 = vcmp.gt.f32.partialorder %v2582, 0.0
      %vm3017 = vcmp.gt.f32.partialorder %v1580, 0.0
      %vm3018 = vcmp.gt.f32.partialorder %v1582, 0.0
      %vm3019 = vcmp.gt.f32.partialorder %v2103, 0.0
      %vm3020 = vcmp.gt.f32.partialorder %v2105, 0.0
      %vm3021 = vcmp.gt.f32.partialorder %v2585, 0.0
      %vm3022 = vcmp.gt.f32.partialorder %v1586, 0.0
      %vm3023 = vcmp.gt.f32.partialorder %v1588, 0.0
      %vm3024 = vcmp.gt.f32.partialorder %v2109, 0.0
      %vm3025 = vcmp.gt.f32.partialorder %v2111, 0.0
      %vm3026 = vcmp.gt.f32.partialorder %v2590, 0.0
      %vm3027 = vcmp.gt.f32.partialorder %v1590, 0.0
      %vm3028 = vcmp.gt.f32.partialorder %v1592, 0.0
      %vm3029 = vcmp.gt.f32.partialorder %v2113, 0.0
      %vm3030 = vcmp.gt.f32.partialorder %v2115, 0.0
      %vm3031 = vcmp.gt.f32.partialorder %v2593, 0.0
      %vm3032 = vcmp.gt.f32.partialorder %v1596, 0.0
      %vm3033 = vcmp.gt.f32.partialorder %v1598, 0.0
      %vm3034 = vcmp.gt.f32.partialorder %v2119, 0.0
      %vm3035 = vcmp.gt.f32.partialorder %v2121, 0.0
      %vm3036 = vcmp.gt.f32.partialorder %v2598, 0.0
      %vm3037 = vcmp.gt.f32.partialorder %v1600, 0.0
      %vm3038 = vcmp.gt.f32.partialorder %v1602, 0.0
      %vm3039 = vcmp.gt.f32.partialorder %v2123, 0.0
      %vm3040 = vcmp.gt.f32.partialorder %v2125, 0.0
      %vm3041 = vcmp.gt.f32.partialorder %v2601, 0.0
      %vm3042 = vcmp.gt.f32.partialorder %v1606, 0.0
      %vm3043 = vcmp.gt.f32.partialorder %v1608, 0.0
      %vm3044 = vcmp.gt.f32.partialorder %v2129, 0.0
      %vm3045 = vcmp.gt.f32.partialorder %v2131, 0.0
      %vm3046 = vcmp.gt.f32.partialorder %v2606, 0.0
      %vm3047 = vcmp.gt.f32.partialorder %v1610, 0.0
      %vm3048 = vcmp.gt.f32.partialorder %v1612, 0.0
      %vm3049 = vcmp.gt.f32.partialorder %v2133, 0.0
      %vm3050 = vcmp.gt.f32.partialorder %v2135, 0.0
      %vm3051 = vcmp.gt.f32.partialorder %v2609, 0.0
      %vm3052 = vcmp.gt.f32.partialorder %v1616, 0.0
      %vm3053 = vcmp.gt.f32.partialorder %v1618, 0.0
      %vm3054 = vcmp.gt.f32.partialorder %v2139, 0.0
      %vm3055 = vcmp.gt.f32.partialorder %v2141, 0.0
      %vm3056 = vcmp.gt.f32.partialorder %v2614, 0.0
      %vm3057 = vcmp.gt.f32.partialorder %v1620, 0.0
      %vm3058 = vcmp.gt.f32.partialorder %v1622, 0.0
      %vm3059 = vcmp.gt.f32.partialorder %v2143, 0.0
      %vm3060 = vcmp.gt.f32.partialorder %v2145, 0.0
      %vm3061 = vcmp.gt.f32.partialorder %v2617, 0.0
      %vm3062 = vcmp.gt.f32.partialorder %v1626, 0.0
      %vm3063 = vcmp.gt.f32.partialorder %v1628, 0.0
      %vm3064 = vcmp.gt.f32.partialorder %v2149, 0.0
      %vm3065 = vcmp.gt.f32.partialorder %v2151, 0.0
      %vm3066 = vcmp.gt.f32.partialorder %v2622, 0.0
      %vm3067 = vcmp.gt.f32.partialorder %v1630, 0.0
      %vm3068 = vcmp.gt.f32.partialorder %v1632, 0.0
      %vm3069 = vcmp.gt.f32.partialorder %v2153, 0.0
      %vm3070 = vcmp.gt.f32.partialorder %v2155, 0.0
      %vm3071 = vcmp.gt.f32.partialorder %v2625, 0.0
      %vm3072 = vcmp.gt.f32.partialorder %v1636, 0.0
      %vm3073 = vcmp.gt.f32.partialorder %v1638, 0.0
      %vm3074 = vcmp.gt.f32.partialorder %v2159, 0.0
      %vm3075 = vcmp.gt.f32.partialorder %v2161, 0.0
      %vm3076 = vcmp.gt.f32.partialorder %v2630, 0.0
      %vm3077 = vcmp.gt.f32.partialorder %v1640, 0.0
      %vm3078 = vcmp.gt.f32.partialorder %v1642, 0.0
      %vm3079 = vcmp.gt.f32.partialorder %v2163, 0.0
      %vm3080 = vcmp.gt.f32.partialorder %v2165, 0.0
      %vm3081 = vcmp.gt.f32.partialorder %v2633, 0.0
      %vm3082 = vcmp.gt.f32.partialorder %v1646, 0.0
      %vm3083 = vcmp.gt.f32.partialorder %v1648, 0.0
      %vm3084 = vcmp.gt.f32.partialorder %v2169, 0.0
      %vm3085 = vcmp.gt.f32.partialorder %v2171, 0.0
      %vm3086 = vcmp.gt.f32.partialorder %v2638, 0.0
      %vm3087 = vcmp.gt.f32.partialorder %v1650, 0.0
      %vm3088 = vcmp.gt.f32.partialorder %v1652, 0.0
      %vm3089 = vcmp.gt.f32.partialorder %v2173, 0.0
      %vm3090 = vcmp.gt.f32.partialorder %v2175, 0.0
      %vm3091 = vcmp.gt.f32.partialorder %v2641, 0.0
      %vm3092 = vcmp.gt.f32.partialorder %v1656, 0.0
      %vm3093 = vcmp.gt.f32.partialorder %v1658, 0.0
      %vm3094 = vcmp.gt.f32.partialorder %v2179, 0.0
      %vm3095 = vcmp.gt.f32.partialorder %v2181, 0.0
      %vm3096 = vcmp.gt.f32.partialorder %v2646, 0.0
      %vm3097 = vcmp.gt.f32.partialorder %v1660, 0.0
      %vm3098 = vcmp.gt.f32.partialorder %v1662, 0.0
      %vm3099 = vcmp.gt.f32.partialorder %v2183, 0.0
      %vm3100 = vcmp.gt.f32.partialorder %v2185, 0.0
      %vm3101 = vcmp.gt.f32.partialorder %v2649, 0.0
      %vm3102 = vcmp.gt.f32.partialorder %v1666, 0.0
      %vm3103 = vcmp.gt.f32.partialorder %v1668, 0.0
      %vm3104 = vcmp.gt.f32.partialorder %v2189, 0.0
      %vm3105 = vcmp.gt.f32.partialorder %v2191, 0.0
      %vm3106 = vcmp.gt.f32.partialorder %v2654, 0.0
      %vm3107 = vcmp.gt.f32.partialorder %v1670, 0.0
      %vm3108 = vcmp.gt.f32.partialorder %v1672, 0.0
      %vm3109 = vcmp.gt.f32.partialorder %v2193, 0.0
      %vm3110 = vcmp.gt.f32.partialorder %v2195, 0.0
      %vm3111 = vcmp.gt.f32.partialorder %v2657, 0.0
      %vm3112 = vcmp.gt.f32.partialorder %v1676, 0.0
      %vm3113 = vcmp.gt.f32.partialorder %v1678, 0.0
      %vm3114 = vcmp.gt.f32.partialorder %v2199, 0.0
      %vm3115 = vcmp.gt.f32.partialorder %v2201, 0.0
      %vm3116 = vcmp.gt.f32.partialorder %v2662, 0.0
      %vm3117 = vcmp.gt.f32.partialorder %v1680, 0.0
      %vm3118 = vcmp.gt.f32.partialorder %v1682, 0.0
      %vm3119 = vcmp.gt.f32.partialorder %v2203, 0.0
      %vm3120 = vcmp.gt.f32.partialorder %v2205, 0.0
      %vm3121 = vcmp.gt.f32.partialorder %v2665, 0.0
      %vm3122 = vcmp.gt.f32.partialorder %v1686, 0.0
      %vm3123 = vcmp.gt.f32.partialorder %v1688, 0.0
      %vm3124 = vcmp.gt.f32.partialorder %v2209, 0.0
      %vm3125 = vcmp.gt.f32.partialorder %v2211, 0.0
      %vm3126 = vcmp.gt.f32.partialorder %v2670, 0.0
      %vm3127 = vcmp.gt.f32.partialorder %v1690, 0.0
      %vm3128 = vcmp.gt.f32.partialorder %v1692, 0.0
      %vm3129 = vcmp.gt.f32.partialorder %v2213, 0.0
      %vm3130 = vcmp.gt.f32.partialorder %v2215, 0.0
      %vm3131 = vcmp.gt.f32.partialorder %v2673, 0.0
      %vm3132 = vcmp.gt.f32.partialorder %v1696, 0.0
      %vm3133 = vcmp.gt.f32.partialorder %v1698, 0.0
      %vm3134 = vcmp.gt.f32.partialorder %v2219, 0.0
      %vm3135 = vcmp.gt.f32.partialorder %v2221, 0.0
      %vm3136 = vcmp.gt.f32.partialorder %v2678, 0.0
      %vm3137 = vcmp.gt.f32.partialorder %v1700, 0.0
      %vm3138 = vcmp.gt.f32.partialorder %v1702, 0.0
      %vm3139 = vcmp.gt.f32.partialorder %v2223, 0.0
      %vm3140 = vcmp.gt.f32.partialorder %v2225, 0.0
      %vm3141 = vcmp.gt.f32.partialorder %v2681, 0.0
      %vm3142 = vcmp.gt.f32.partialorder %v1706, 0.0
      %vm3143 = vcmp.gt.f32.partialorder %v1708, 0.0
      %vm3144 = vcmp.gt.f32.partialorder %v2229, 0.0
      %vm3145 = vcmp.gt.f32.partialorder %v2231, 0.0
      %vm3146 = vcmp.gt.f32.partialorder %v2686, 0.0
      %vm3147 = vcmp.gt.f32.partialorder %v1710, 0.0
      %vm3148 = vcmp.gt.f32.partialorder %v1712, 0.0
      %vm3149 = vcmp.gt.f32.partialorder %v2233, 0.0
      %vm3150 = vcmp.gt.f32.partialorder %v2235, 0.0
      %vm3151 = vcmp.gt.f32.partialorder %v2689, 0.0
      %vm3152 = vcmp.gt.f32.partialorder %v1716, 0.0
      %vm3153 = vcmp.gt.f32.partialorder %v1718, 0.0
      %vm3154 = vcmp.gt.f32.partialorder %v2239, 0.0
      %vm3155 = vcmp.gt.f32.partialorder %v2241, 0.0
      %vm3156 = vcmp.gt.f32.partialorder %v2694, 0.0
      %vm3157 = vcmp.gt.f32.partialorder %v1720, 0.0
      %vm3158 = vcmp.gt.f32.partialorder %v1722, 0.0
      %vm3159 = vcmp.gt.f32.partialorder %v2243, 0.0
      %vm3160 = vcmp.gt.f32.partialorder %v2245, 0.0
      %vm3161 = vcmp.gt.f32.partialorder %v2697, 0.0
      %vm3162 = vcmp.gt.f32.partialorder %v1726, 0.0
      %vm3163 = vcmp.gt.f32.partialorder %v1728, 0.0
      %vm3164 = vcmp.gt.f32.partialorder %v2249, 0.0
      %vm3165 = vcmp.gt.f32.partialorder %v2251, 0.0
      %vm3166 = vcmp.gt.f32.partialorder %v2702, 0.0
      %vm3167 = vcmp.gt.f32.partialorder %v1730, 0.0
      %vm3168 = vcmp.gt.f32.partialorder %v1732, 0.0
      %vm3169 = vcmp.gt.f32.partialorder %v2253, 0.0
      %vm3170 = vcmp.gt.f32.partialorder %v2255, 0.0
      %vm3171 = vcmp.gt.f32.partialorder %v2705, 0.0
      %vm3172 = vcmp.gt.f32.partialorder %v1736, 0.0
      %vm3173 = vcmp.gt.f32.partialorder %v1738, 0.0
      %vm3174 = vcmp.gt.f32.partialorder %v2259, 0.0
      %vm3175 = vcmp.gt.f32.partialorder %v2261, 0.0
      %vm3176 = vcmp.gt.f32.partialorder %v2710, 0.0
      %vm3177 = vcmp.gt.f32.partialorder %v1740, 0.0
      %vm3178 = vcmp.gt.f32.partialorder %v1742, 0.0
      %vm3179 = vcmp.gt.f32.partialorder %v2263, 0.0
      %vm3180 = vcmp.gt.f32.partialorder %v2265, 0.0
      %vm3181 = vcmp.gt.f32.partialorder %v2713, 0.0
      %vm3182 = vcmp.gt.f32.partialorder %v1746, 0.0
      %vm3183 = vcmp.gt.f32.partialorder %v1748, 0.0
      %vm3184 = vcmp.gt.f32.partialorder %v2269, 0.0
      %vm3185 = vcmp.gt.f32.partialorder %v2271, 0.0
      %vm3186 = vcmp.gt.f32.partialorder %v2718, 0.0
      %vm3187 = vcmp.gt.f32.partialorder %v1750, 0.0
      %vm3188 = vcmp.gt.f32.partialorder %v1752, 0.0
      %vm3189 = vcmp.gt.f32.partialorder %v2273, 0.0
      %vm3190 = vcmp.gt.f32.partialorder %v2275, 0.0
      %vm3191 = vcmp.gt.f32.partialorder %v2721, 0.0
      %vm3192 = vcmp.gt.f32.partialorder %v1756, 0.0
      %vm3193 = vcmp.gt.f32.partialorder %v1758, 0.0
      %vm3194 = vcmp.gt.f32.partialorder %v2279, 0.0
      %vm3195 = vcmp.gt.f32.partialorder %v2281, 0.0
      %vm3196 = vcmp.gt.f32.partialorder %v2726, 0.0
      %vm3197 = vcmp.gt.f32.partialorder %v1760, 0.0
      %vm3198 = vcmp.gt.f32.partialorder %v1762, 0.0
      %vm3199 = vcmp.gt.f32.partialorder %v2283, 0.0
      %vm3200 = vcmp.gt.f32.partialorder %v2285, 0.0
      %vm3201 = vcmp.gt.f32.partialorder %v2729, 0.0
      %vm3202 = vcmp.gt.f32.partialorder %v1766, 0.0
      %vm3203 = vcmp.gt.f32.partialorder %v1768, 0.0
      %vm3204 = vcmp.gt.f32.partialorder %v2289, 0.0
      %vm3205 = vcmp.gt.f32.partialorder %v2291, 0.0
      %vm3206 = vcmp.gt.f32.partialorder %v2734, 0.0
      %vm3207 = vcmp.gt.f32.partialorder %v1770, 0.0
      %vm3208 = vcmp.gt.f32.partialorder %v1772, 0.0
      %vm3209 = vcmp.gt.f32.partialorder %v2293, 0.0
      %vm3210 = vcmp.gt.f32.partialorder %v2295, 0.0
      %vm3211 = vcmp.gt.f32.partialorder %v2737, 0.0
      %vm3212 = vcmp.gt.f32.partialorder %v1776, 0.0
      %vm3213 = vcmp.gt.f32.partialorder %v1778, 0.0
      %vm3214 = vcmp.gt.f32.partialorder %v2299, 0.0
      %vm3215 = vcmp.gt.f32.partialorder %v2301, 0.0
      %vm3216 = vcmp.gt.f32.partialorder %v2742, 0.0
      %vm3217 = vcmp.gt.f32.partialorder %v1780, 0.0
      %vm3218 = vcmp.gt.f32.partialorder %v1782, 0.0
      %vm3219 = vcmp.gt.f32.partialorder %v2303, 0.0
      %vm3220 = vcmp.gt.f32.partialorder %v2305, 0.0
      %vm3221 = vcmp.gt.f32.partialorder %v2745, 0.0
      %vm3222 = vcmp.gt.f32.partialorder %v1786, 0.0
      %vm3223 = vcmp.gt.f32.partialorder %v1788, 0.0
      %vm3224 = vcmp.gt.f32.partialorder %v2309, 0.0
      %vm3225 = vcmp.gt.f32.partialorder %v2311, 0.0
      %vm3226 = vcmp.gt.f32.partialorder %v2750, 0.0
      %vm3227 = vcmp.gt.f32.partialorder %v1790, 0.0
      %vm3228 = vcmp.gt.f32.partialorder %v1792, 0.0
      %vm3229 = vcmp.gt.f32.partialorder %v2313, 0.0
      %vm3230 = vcmp.gt.f32.partialorder %v2315, 0.0
      %vm3231 = vcmp.gt.f32.partialorder %v2753, 0.0
      %vm3232 = vcmp.gt.f32.partialorder %v1796, 0.0
      %vm3233 = vcmp.gt.f32.partialorder %v1798, 0.0
      %vm3234 = vcmp.gt.f32.partialorder %v2319, 0.0
      %vm3235 = vcmp.gt.f32.partialorder %v2321, 0.0
      %vm3236 = vcmp.gt.f32.partialorder %v2758, 0.0
      %vm3237 = vcmp.gt.f32.partialorder %v1800, 0.0
      %vm3238 = vcmp.gt.f32.partialorder %v1802, 0.0
      %vm3239 = vcmp.gt.f32.partialorder %v2323, 0.0
      %vm3240 = vcmp.gt.f32.partialorder %v2325, 0.0
      %vm3241 = vcmp.gt.f32.partialorder %v2761, 0.0
      %vm3242 = vcmp.gt.f32.partialorder %v1806, 0.0
      %vm3243 = vcmp.gt.f32.partialorder %v1808, 0.0
      %vm3244 = vcmp.gt.f32.partialorder %v2329, 0.0
      %vm3245 = vcmp.gt.f32.partialorder %v2331, 0.0
      %vm3246 = vcmp.gt.f32.partialorder %v2766, 0.0
      %vm3247 = vcmp.gt.f32.partialorder %v1810, 0.0
      %vm3248 = vcmp.gt.f32.partialorder %v1812, 0.0
      %vm3249 = vcmp.gt.f32.partialorder %v2333, 0.0
      %vm3250 = vcmp.gt.f32.partialorder %v2335, 0.0
      %vm3251 = vcmp.gt.f32.partialorder %v2769, 0.0
      %vm3252 = vcmp.gt.f32.partialorder %v1816, 0.0
      %vm3253 = vcmp.gt.f32.partialorder %v1818, 0.0
      %vm3254 = vcmp.gt.f32.partialorder %v2339, 0.0
      %vm3255 = vcmp.gt.f32.partialorder %v2341, 0.0
      %vm3256 = vcmp.gt.f32.partialorder %v2774, 0.0
      %vm3257 = vcmp.gt.f32.partialorder %v1820, 0.0
      %vm3258 = vcmp.gt.f32.partialorder %v1822, 0.0
      %vm3259 = vcmp.gt.f32.partialorder %v2343, 0.0
      %vm3260 = vcmp.gt.f32.partialorder %v2345, 0.0
      %vm3261 = vcmp.gt.f32.partialorder %v2777, 0.0
      %vm3262 = vcmp.gt.f32.partialorder %v1826, 0.0
      %vm3263 = vcmp.gt.f32.partialorder %v1828, 0.0
      %vm3264 = vcmp.gt.f32.partialorder %v2349, 0.0
      %vm3265 = vcmp.gt.f32.partialorder %v2351, 0.0
      %vm3266 = vcmp.gt.f32.partialorder %v2782, 0.0
      %vm3267 = vcmp.gt.f32.partialorder %v1830, 0.0
      %vm3268 = vcmp.gt.f32.partialorder %v1832, 0.0
      %vm3269 = vcmp.gt.f32.partialorder %v2353, 0.0
      %vm3270 = vcmp.gt.f32.partialorder %v2355, 0.0
      %vm3271 = vcmp.gt.f32.partialorder %v2785, 0.0
      %vm3272 = vcmp.gt.f32.partialorder %v1836, 0.0
      %vm3273 = vcmp.gt.f32.partialorder %v1838, 0.0
      %vm3274 = vcmp.gt.f32.partialorder %v2359, 0.0
      %vm3275 = vcmp.gt.f32.partialorder %v2361, 0.0
      %vm3276 = vcmp.gt.f32.partialorder %v2790, 0.0
      %vm3277 = vcmp.gt.f32.partialorder %v1840, 0.0
      %vm3278 = vcmp.gt.f32.partialorder %v1842, 0.0
      %vm3279 = vcmp.gt.f32.partialorder %v2363, 0.0
      %vm3280 = vcmp.gt.f32.partialorder %v2365, 0.0
      %vm3281 = vcmp.gt.f32.partialorder %v2793, 0.0
      %vm3282 = vcmp.gt.f32.partialorder %v1846, 0.0
      %vm3283 = vcmp.gt.f32.partialorder %v1848, 0.0
      %vm3284 = vcmp.gt.f32.partialorder %v2369, 0.0
      %vm3285 = vcmp.gt.f32.partialorder %v2371, 0.0
      %vm3286 = vcmp.gt.f32.partialorder %v2798, 0.0
      %vm3287 = vcmp.gt.f32.partialorder %v1850, 0.0
      %vm3288 = vcmp.gt.f32.partialorder %v1852, 0.0
      %vm3289 = vcmp.gt.f32.partialorder %v2373, 0.0
      %vm3290 = vcmp.gt.f32.partialorder %v2375, 0.0
      %vm3291 = vcmp.gt.f32.partialorder %v2801, 0.0
      %vm3292 = vcmp.gt.f32.partialorder %v1856, 0.0
      %vm3293 = vcmp.gt.f32.partialorder %v1858, 0.0
      %vm3294 = vcmp.gt.f32.partialorder %v2379, 0.0
      %vm3295 = vcmp.gt.f32.partialorder %v2381, 0.0
      %vm3296 = vcmp.gt.f32.partialorder %v2806, 0.0
      %vm3297 = vcmp.gt.f32.partialorder %v1860, 0.0
      %vm3298 = vcmp.gt.f32.partialorder %v1862, 0.0
      %vm3299 = vcmp.gt.f32.partialorder %v2383, 0.0
      %vm3300 = vcmp.gt.f32.partialorder %v2385, 0.0
      %vm3301 = vcmp.gt.f32.partialorder %v2809, 0.0
      %v3302 = vmul.f32 %v1376, 0.2
      %v3303 = vmul.f32 %v1378, 0.2
      %v3304 = vmul.f32 %v1899, 0.2
      %v3305 = vmul.f32 %v1901, 0.2
      %v3306 = vmul.f32 %v2422, 0.2
      %v3307 = vmul.f32 %v1380, 0.2
      %v3308 = vmul.f32 %v1382, 0.2
      %v3309 = vmul.f32 %v1903, 0.2
      %v3310 = vmul.f32 %v1905, 0.2
      %v3311 = vmul.f32 %v2425, 0.2
      %v3312 = vmul.f32 %v1386, 0.2
      %v3313 = vmul.f32 %v1388, 0.2
      %v3314 = vmul.f32 %v1909, 0.2
      %v3315 = vmul.f32 %v1911, 0.2
      %v3316 = vmul.f32 %v2430, 0.2
      %v3317 = vmul.f32 %v1390, 0.2
      %v3318 = vmul.f32 %v1392, 0.2
      %v3319 = vmul.f32 %v1913, 0.2
      %v3320 = vmul.f32 %v1915, 0.2
      %v3321 = vmul.f32 %v2433, 0.2
      %v3322 = vmul.f32 %v1396, 0.2
      %v3323 = vmul.f32 %v1398, 0.2
      %v3324 = vmul.f32 %v1919, 0.2
      %v3325 = vmul.f32 %v1921, 0.2
      %v3326 = vmul.f32 %v2438, 0.2
      %v3327 = vmul.f32 %v1400, 0.2
      %v3328 = vmul.f32 %v1402, 0.2
      %v3329 = vmul.f32 %v1923, 0.2
      %v3330 = vmul.f32 %v1925, 0.2
      %v3331 = vmul.f32 %v2441, 0.2
      %v3332 = vmul.f32 %v1406, 0.2
      %v3333 = vmul.f32 %v1408, 0.2
      %v3334 = vmul.f32 %v1929, 0.2
      %v3335 = vmul.f32 %v1931, 0.2
      %v3336 = vmul.f32 %v2446, 0.2
      %v3337 = vmul.f32 %v1410, 0.2
      %v3338 = vmul.f32 %v1412, 0.2
      %v3339 = vmul.f32 %v1933, 0.2
      %v3340 = vmul.f32 %v1935, 0.2
      %v3341 = vmul.f32 %v2449, 0.2
      %v3342 = vmul.f32 %v1416, 0.2
      %v3343 = vmul.f32 %v1418, 0.2
      %v3344 = vmul.f32 %v1939, 0.2
      %v3345 = vmul.f32 %v1941, 0.2
      %v3346 = vmul.f32 %v2454, 0.2
      %v3347 = vmul.f32 %v1420, 0.2
      %v3348 = vmul.f32 %v1422, 0.2
      %v3349 = vmul.f32 %v1943, 0.2
      %v3350 = vmul.f32 %v1945, 0.2
      %v3351 = vmul.f32 %v2457, 0.2
      %v3352 = vmul.f32 %v1426, 0.2
      %v3353 = vmul.f32 %v1428, 0.2
      %v3354 = vmul.f32 %v1949, 0.2
      %v3355 = vmul.f32 %v1951, 0.2
      %v3356 = vmul.f32 %v2462, 0.2
      %v3357 = vmul.f32 %v1430, 0.2
      %v3358 = vmul.f32 %v1432, 0.2
      %v3359 = vmul.f32 %v1953, 0.2
      %v3360 = vmul.f32 %v1955, 0.2
      %v3361 = vmul.f32 %v2465, 0.2
      %v3362 = vmul.f32 %v1436, 0.2
      %v3363 = vmul.f32 %v1438, 0.2
      %v3364 = vmul.f32 %v1959, 0.2
      %v3365 = vmul.f32 %v1961, 0.2
      %v3366 = vmul.f32 %v2470, 0.2
      %v3367 = vmul.f32 %v1440, 0.2
      %v3368 = vmul.f32 %v1442, 0.2
      %v3369 = vmul.f32 %v1963, 0.2
      %v3370 = vmul.f32 %v1965, 0.2
      %v3371 = vmul.f32 %v2473, 0.2
      %v3372 = vmul.f32 %v1446, 0.2
      %v3373 = vmul.f32 %v1448, 0.2
      %v3374 = vmul.f32 %v1969, 0.2
      %v3375 = vmul.f32 %v1971, 0.2
      %v3376 = vmul.f32 %v2478, 0.2
      %v3377 = vmul.f32 %v1450, 0.2
      %v3378 = vmul.f32 %v1452, 0.2
      %v3379 = vmul.f32 %v1973, 0.2
      %v3380 = vmul.f32 %v1975, 0.2
      %v3381 = vmul.f32 %v2481, 0.2
      %v3382 = vmul.f32 %v1456, 0.2
      %v3383 = vmul.f32 %v1458, 0.2
      %v3384 = vmul.f32 %v1979, 0.2
      %v3385 = vmul.f32 %v1981, 0.2
      %v3386 = vmul.f32 %v2486, 0.2
      %v3387 = vmul.f32 %v1460, 0.2
      %v3388 = vmul.f32 %v1462, 0.2
      %v3389 = vmul.f32 %v1983, 0.2
      %v3390 = vmul.f32 %v1985, 0.2
      %v3391 = vmul.f32 %v2489, 0.2
      %v3392 = vmul.f32 %v1466, 0.2
      %v3393 = vmul.f32 %v1468, 0.2
      %v3394 = vmul.f32 %v1989, 0.2
      %v3395 = vmul.f32 %v1991, 0.2
      %v3396 = vmul.f32 %v2494, 0.2
      %v3397 = vmul.f32 %v1470, 0.2
      %v3398 = vmul.f32 %v1472, 0.2
      %v3399 = vmul.f32 %v1993, 0.2
      %v3400 = vmul.f32 %v1995, 0.2
      %v3401 = vmul.f32 %v2497, 0.2
      %v3402 = vmul.f32 %v1476, 0.2
      %v3403 = vmul.f32 %v1478, 0.2
      %v3404 = vmul.f32 %v1999, 0.2
      %v3405 = vmul.f32 %v2001, 0.2
      %v3406 = vmul.f32 %v2502, 0.2
      %v3407 = vmul.f32 %v1480, 0.2
      %v3408 = vmul.f32 %v1482, 0.2
      %v3409 = vmul.f32 %v2003, 0.2
      %v3410 = vmul.f32 %v2005, 0.2
      %v3411 = vmul.f32 %v2505, 0.2
      %v3412 = vmul.f32 %v1486, 0.2
      %v3413 = vmul.f32 %v1488, 0.2
      %v3414 = vmul.f32 %v2009, 0.2
      %v3415 = vmul.f32 %v2011, 0.2
      %v3416 = vmul.f32 %v2510, 0.2
      %v3417 = vmul.f32 %v1490, 0.2
      %v3418 = vmul.f32 %v1492, 0.2
      %v3419 = vmul.f32 %v2013, 0.2
      %v3420 = vmul.f32 %v2015, 0.2
      %v3421 = vmul.f32 %v2513, 0.2
      %v3422 = vmul.f32 %v1496, 0.2
      %v3423 = vmul.f32 %v1498, 0.2
      %v3424 = vmul.f32 %v2019, 0.2
      %v3425 = vmul.f32 %v2021, 0.2
      %v3426 = vmul.f32 %v2518, 0.2
      %v3427 = vmul.f32 %v1500, 0.2
      %v3428 = vmul.f32 %v1502, 0.2
      %v3429 = vmul.f32 %v2023, 0.2
      %v3430 = vmul.f32 %v2025, 0.2
      %v3431 = vmul.f32 %v2521, 0.2
      %v3432 = vmul.f32 %v1506, 0.2
      %v3433 = vmul.f32 %v1508, 0.2
      %v3434 = vmul.f32 %v2029, 0.2
      %v3435 = vmul.f32 %v2031, 0.2
      %v3436 = vmul.f32 %v2526, 0.2
      %v3437 = vmul.f32 %v1510, 0.2
      %v3438 = vmul.f32 %v1512, 0.2
      %v3439 = vmul.f32 %v2033, 0.2
      %v3440 = vmul.f32 %v2035, 0.2
      %v3441 = vmul.f32 %v2529, 0.2
      %v3442 = vmul.f32 %v1516, 0.2
      %v3443 = vmul.f32 %v1518, 0.2
      %v3444 = vmul.f32 %v2039, 0.2
      %v3445 = vmul.f32 %v2041, 0.2
      %v3446 = vmul.f32 %v2534, 0.2
      %v3447 = vmul.f32 %v1520, 0.2
      %v3448 = vmul.f32 %v1522, 0.2
      %v3449 = vmul.f32 %v2043, 0.2
      %v3450 = vmul.f32 %v2045, 0.2
      %v3451 = vmul.f32 %v2537, 0.2
      %v3452 = vmul.f32 %v1526, 0.2
      %v3453 = vmul.f32 %v1528, 0.2
      %v3454 = vmul.f32 %v2049, 0.2
      %v3455 = vmul.f32 %v2051, 0.2
      %v3456 = vmul.f32 %v2542, 0.2
      %v3457 = vmul.f32 %v1530, 0.2
      %v3458 = vmul.f32 %v1532, 0.2
      %v3459 = vmul.f32 %v2053, 0.2
      %v3460 = vmul.f32 %v2055, 0.2
      %v3461 = vmul.f32 %v2545, 0.2
      %v3462 = vmul.f32 %v1536, 0.2
      %v3463 = vmul.f32 %v1538, 0.2
      %v3464 = vmul.f32 %v2059, 0.2
      %v3465 = vmul.f32 %v2061, 0.2
      %v3466 = vmul.f32 %v2550, 0.2
      %v3467 = vmul.f32 %v1540, 0.2
      %v3468 = vmul.f32 %v1542, 0.2
      %v3469 = vmul.f32 %v2063, 0.2
      %v3470 = vmul.f32 %v2065, 0.2
      %v3471 = vmul.f32 %v2553, 0.2
      %v3472 = vmul.f32 %v1546, 0.2
      %v3473 = vmul.f32 %v1548, 0.2
      %v3474 = vmul.f32 %v2069, 0.2
      %v3475 = vmul.f32 %v2071, 0.2
      %v3476 = vmul.f32 %v2558, 0.2
      %v3477 = vmul.f32 %v1550, 0.2
      %v3478 = vmul.f32 %v1552, 0.2
      %v3479 = vmul.f32 %v2073, 0.2
      %v3480 = vmul.f32 %v2075, 0.2
      %v3481 = vmul.f32 %v2561, 0.2
      %v3482 = vmul.f32 %v1556, 0.2
      %v3483 = vmul.f32 %v1558, 0.2
      %v3484 = vmul.f32 %v2079, 0.2
      %v3485 = vmul.f32 %v2081, 0.2
      %v3486 = vmul.f32 %v2566, 0.2
      %v3487 = vmul.f32 %v1560, 0.2
      %v3488 = vmul.f32 %v1562, 0.2
      %v3489 = vmul.f32 %v2083, 0.2
      %v3490 = vmul.f32 %v2085, 0.2
      %v3491 = vmul.f32 %v2569, 0.2
      %v3492 = vmul.f32 %v1566, 0.2
      %v3493 = vmul.f32 %v1568, 0.2
      %v3494 = vmul.f32 %v2089, 0.2
      %v3495 = vmul.f32 %v2091, 0.2
      %v3496 = vmul.f32 %v2574, 0.2
      %v3497 = vmul.f32 %v1570, 0.2
      %v3498 = vmul.f32 %v1572, 0.2
      %v3499 = vmul.f32 %v2093, 0.2
      %v3500 = vmul.f32 %v2095, 0.2
      %v3501 = vmul.f32 %v2577, 0.2
      %v3502 = vmul.f32 %v1576, 0.2
      %v3503 = vmul.f32 %v1578, 0.2
      %v3504 = vmul.f32 %v2099, 0.2
      %v3505 = vmul.f32 %v2101, 0.2
      %v3506 = vmul.f32 %v2582, 0.2
      %v3507 = vmul.f32 %v1580, 0.2
      %v3508 = vmul.f32 %v1582, 0.2
      %v3509 = vmul.f32 %v2103, 0.2
      %v3510 = vmul.f32 %v2105, 0.2
      %v3511 = vmul.f32 %v2585, 0.2
      %v3512 = vmul.f32 %v1586, 0.2
      %v3513 = vmul.f32 %v1588, 0.2
      %v3514 = vmul.f32 %v2109, 0.2
      %v3515 = vmul.f32 %v2111, 0.2
      %v3516 = vmul.f32 %v2590, 0.2
      %v3517 = vmul.f32 %v1590, 0.2
      %v3518 = vmul.f32 %v1592, 0.2
      %v3519 = vmul.f32 %v2113, 0.2
      %v3520 = vmul.f32 %v2115, 0.2
      %v3521 = vmul.f32 %v2593, 0.2
      %v3522 = vmul.f32 %v1596, 0.2
      %v3523 = vmul.f32 %v1598, 0.2
      %v3524 = vmul.f32 %v2119, 0.2
      %v3525 = vmul.f32 %v2121, 0.2
      %v3526 = vmul.f32 %v2598, 0.2
      %v3527 = vmul.f32 %v1600, 0.2
      %v3528 = vmul.f32 %v1602, 0.2
      %v3529 = vmul.f32 %v2123, 0.2
      %v3530 = vmul.f32 %v2125, 0.2
      %v3531 = vmul.f32 %v2601, 0.2
      %v3532 = vmul.f32 %v1606, 0.2
      %v3533 = vmul.f32 %v1608, 0.2
      %v3534 = vmul.f32 %v2129, 0.2
      %v3535 = vmul.f32 %v2131, 0.2
      %v3536 = vmul.f32 %v2606, 0.2
      %v3537 = vmul.f32 %v1610, 0.2
      %v3538 = vmul.f32 %v1612, 0.2
      %v3539 = vmul.f32 %v2133, 0.2
      %v3540 = vmul.f32 %v2135, 0.2
      %v3541 = vmul.f32 %v2609, 0.2
      %v3542 = vmul.f32 %v1616, 0.2
      %v3543 = vmul.f32 %v1618, 0.2
      %v3544 = vmul.f32 %v2139, 0.2
      %v3545 = vmul.f32 %v2141, 0.2
      %v3546 = vmul.f32 %v2614, 0.2
      %v3547 = vmul.f32 %v1620, 0.2
      %v3548 = vmul.f32 %v1622, 0.2
      %v3549 = vmul.f32 %v2143, 0.2
      %v3550 = vmul.f32 %v2145, 0.2
      %v3551 = vmul.f32 %v2617, 0.2
      %v3552 = vmul.f32 %v1626, 0.2
      %v3553 = vmul.f32 %v1628, 0.2
      %v3554 = vmul.f32 %v2149, 0.2
      %v3555 = vmul.f32 %v2151, 0.2
      %v3556 = vmul.f32 %v2622, 0.2
      %v3557 = vmul.f32 %v1630, 0.2
      %v3558 = vmul.f32 %v1632, 0.2
      %v3559 = vmul.f32 %v2153, 0.2
      %v3560 = vmul.f32 %v2155, 0.2
      %v3561 = vmul.f32 %v2625, 0.2
      %v3562 = vmul.f32 %v1636, 0.2
      %v3563 = vmul.f32 %v1638, 0.2
      %v3564 = vmul.f32 %v2159, 0.2
      %v3565 = vmul.f32 %v2161, 0.2
      %v3566 = vmul.f32 %v2630, 0.2
      %v3567 = vmul.f32 %v1640, 0.2
      %v3568 = vmul.f32 %v1642, 0.2
      %v3569 = vmul.f32 %v2163, 0.2
      %v3570 = vmul.f32 %v2165, 0.2
      %v3571 = vmul.f32 %v2633, 0.2
      %v3572 = vmul.f32 %v1646, 0.2
      %v3573 = vmul.f32 %v1648, 0.2
      %v3574 = vmul.f32 %v2169, 0.2
      %v3575 = vmul.f32 %v2171, 0.2
      %v3576 = vmul.f32 %v2638, 0.2
      %v3577 = vmul.f32 %v1650, 0.2
      %v3578 = vmul.f32 %v1652, 0.2
      %v3579 = vmul.f32 %v2173, 0.2
      %v3580 = vmul.f32 %v2175, 0.2
      %v3581 = vmul.f32 %v2641, 0.2
      %v3582 = vmul.f32 %v1656, 0.2
      %v3583 = vmul.f32 %v1658, 0.2
      %v3584 = vmul.f32 %v2179, 0.2
      %v3585 = vmul.f32 %v2181, 0.2
      %v3586 = vmul.f32 %v2646, 0.2
      %v3587 = vmul.f32 %v1660, 0.2
      %v3588 = vmul.f32 %v1662, 0.2
      %v3589 = vmul.f32 %v2183, 0.2
      %v3590 = vmul.f32 %v2185, 0.2
      %v3591 = vmul.f32 %v2649, 0.2
      %v3592 = vmul.f32 %v1666, 0.2
      %v3593 = vmul.f32 %v1668, 0.2
      %v3594 = vmul.f32 %v2189, 0.2
      %v3595 = vmul.f32 %v2191, 0.2
      %v3596 = vmul.f32 %v2654, 0.2
      %v3597 = vmul.f32 %v1670, 0.2
      %v3598 = vmul.f32 %v1672, 0.2
      %v3599 = vmul.f32 %v2193, 0.2
      %v3600 = vmul.f32 %v2195, 0.2
      %v3601 = vmul.f32 %v2657, 0.2
      %v3602 = vmul.f32 %v1676, 0.2
      %v3603 = vmul.f32 %v1678, 0.2
      %v3604 = vmul.f32 %v2199, 0.2
      %v3605 = vmul.f32 %v2201, 0.2
      %v3606 = vmul.f32 %v2662, 0.2
      %v3607 = vmul.f32 %v1680, 0.2
      %v3608 = vmul.f32 %v1682, 0.2
      %v3609 = vmul.f32 %v2203, 0.2
      %v3610 = vmul.f32 %v2205, 0.2
      %v3611 = vmul.f32 %v2665, 0.2
      %v3612 = vmul.f32 %v1686, 0.2
      %v3613 = vmul.f32 %v1688, 0.2
      %v3614 = vmul.f32 %v2209, 0.2
      %v3615 = vmul.f32 %v2211, 0.2
      %v3616 = vmul.f32 %v2670, 0.2
      %v3617 = vmul.f32 %v1690, 0.2
      %v3618 = vmul.f32 %v1692, 0.2
      %v3619 = vmul.f32 %v2213, 0.2
      %v3620 = vmul.f32 %v2215, 0.2
      %v3621 = vmul.f32 %v2673, 0.2
      %v3622 = vmul.f32 %v1696, 0.2
      %v3623 = vmul.f32 %v1698, 0.2
      %v3624 = vmul.f32 %v2219, 0.2
      %v3625 = vmul.f32 %v2221, 0.2
      %v3626 = vmul.f32 %v2678, 0.2
      %v3627 = vmul.f32 %v1700, 0.2
      %v3628 = vmul.f32 %v1702, 0.2
      %v3629 = vmul.f32 %v2223, 0.2
      %v3630 = vmul.f32 %v2225, 0.2
      %v3631 = vmul.f32 %v2681, 0.2
      %v3632 = vmul.f32 %v1706, 0.2
      %v3633 = vmul.f32 %v1708, 0.2
      %v3634 = vmul.f32 %v2229, 0.2
      %v3635 = vmul.f32 %v2231, 0.2
      %v3636 = vmul.f32 %v2686, 0.2
      %v3637 = vmul.f32 %v1710, 0.2
      %v3638 = vmul.f32 %v1712, 0.2
      %v3639 = vmul.f32 %v2233, 0.2
      %v3640 = vmul.f32 %v2235, 0.2
      %v3641 = vmul.f32 %v2689, 0.2
      %v3642 = vmul.f32 %v1716, 0.2
      %v3643 = vmul.f32 %v1718, 0.2
      %v3644 = vmul.f32 %v2239, 0.2
      %v3645 = vmul.f32 %v2241, 0.2
      %v3646 = vmul.f32 %v2694, 0.2
      %v3647 = vmul.f32 %v1720, 0.2
      %v3648 = vmul.f32 %v1722, 0.2
      %v3649 = vmul.f32 %v2243, 0.2
      %v3650 = vmul.f32 %v2245, 0.2
      %v3651 = vmul.f32 %v2697, 0.2
      %v3652 = vmul.f32 %v1726, 0.2
      %v3653 = vmul.f32 %v1728, 0.2
      %v3654 = vmul.f32 %v2249, 0.2
      %v3655 = vmul.f32 %v2251, 0.2
      %v3656 = vmul.f32 %v2702, 0.2
      %v3657 = vmul.f32 %v1730, 0.2
      %v3658 = vmul.f32 %v1732, 0.2
      %v3659 = vmul.f32 %v2253, 0.2
      %v3660 = vmul.f32 %v2255, 0.2
      %v3661 = vmul.f32 %v2705, 0.2
      %v3662 = vmul.f32 %v1736, 0.2
      %v3663 = vmul.f32 %v1738, 0.2
      %v3664 = vmul.f32 %v2259, 0.2
      %v3665 = vmul.f32 %v2261, 0.2
      %v3666 = vmul.f32 %v2710, 0.2
      %v3667 = vmul.f32 %v1740, 0.2
      %v3668 = vmul.f32 %v1742, 0.2
      %v3669 = vmul.f32 %v2263, 0.2
      %v3670 = vmul.f32 %v2265, 0.2
      %v3671 = vmul.f32 %v2713, 0.2
      %v3672 = vmul.f32 %v1746, 0.2
      %v3673 = vmul.f32 %v1748, 0.2
      %v3674 = vmul.f32 %v2269, 0.2
      %v3675 = vmul.f32 %v2271, 0.2
      %v3676 = vmul.f32 %v2718, 0.2
      %v3677 = vmul.f32 %v1750, 0.2
      %v3678 = vmul.f32 %v1752, 0.2
      %v3679 = vmul.f32 %v2273, 0.2
      %v3680 = vmul.f32 %v2275, 0.2
      %v3681 = vmul.f32 %v2721, 0.2
      %v3682 = vmul.f32 %v1756, 0.2
      %v3683 = vmul.f32 %v1758, 0.2
      %v3684 = vmul.f32 %v2279, 0.2
      %v3685 = vmul.f32 %v2281, 0.2
      %v3686 = vmul.f32 %v2726, 0.2
      %v3687 = vmul.f32 %v1760, 0.2
      %v3688 = vmul.f32 %v1762, 0.2
      %v3689 = vmul.f32 %v2283, 0.2
      %v3690 = vmul.f32 %v2285, 0.2
      %v3691 = vmul.f32 %v2729, 0.2
      %v3692 = vmul.f32 %v1766, 0.2
      %v3693 = vmul.f32 %v1768, 0.2
      %v3694 = vmul.f32 %v2289, 0.2
      %v3695 = vmul.f32 %v2291, 0.2
      %v3696 = vmul.f32 %v2734, 0.2
      %v3697 = vmul.f32 %v1770, 0.2
      %v3698 = vmul.f32 %v1772, 0.2
      %v3699 = vmul.f32 %v2293, 0.2
      %v3700 = vmul.f32 %v2295, 0.2
      %v3701 = vmul.f32 %v2737, 0.2
      %v3702 = vmul.f32 %v1776, 0.2
      %v3703 = vmul.f32 %v1778, 0.2
      %v3704 = vmul.f32 %v2299, 0.2
      %v3705 = vmul.f32 %v2301, 0.2
      %v3706 = vmul.f32 %v2742, 0.2
      %v3707 = vmul.f32 %v1780, 0.2
      %v3708 = vmul.f32 %v1782, 0.2
      %v3709 = vmul.f32 %v2303, 0.2
      %v3710 = vmul.f32 %v2305, 0.2
      %v3711 = vmul.f32 %v2745, 0.2
      %v3712 = vmul.f32 %v1786, 0.2
      %v3713 = vmul.f32 %v1788, 0.2
      %v3714 = vmul.f32 %v2309, 0.2
      %v3715 = vmul.f32 %v2311, 0.2
      %v3716 = vmul.f32 %v2750, 0.2
      %v3717 = vmul.f32 %v1790, 0.2
      %v3718 = vmul.f32 %v1792, 0.2
      %v3719 = vmul.f32 %v2313, 0.2
      %v3720 = vmul.f32 %v2315, 0.2
      %v3721 = vmul.f32 %v2753, 0.2
      %v3722 = vmul.f32 %v1796, 0.2
      %v3723 = vmul.f32 %v1798, 0.2
      %v3724 = vmul.f32 %v2319, 0.2
      %v3725 = vmul.f32 %v2321, 0.2
      %v3726 = vmul.f32 %v2758, 0.2
      %v3727 = vmul.f32 %v1800, 0.2
      %v3728 = vmul.f32 %v1802, 0.2
      %v3729 = vmul.f32 %v2323, 0.2
      %v3730 = vmul.f32 %v2325, 0.2
      %v3731 = vmul.f32 %v2761, 0.2
      %v3732 = vmul.f32 %v1806, 0.2
      %v3733 = vmul.f32 %v1808, 0.2
      %v3734 = vmul.f32 %v2329, 0.2
      %v3735 = vmul.f32 %v2331, 0.2
      %v3736 = vmul.f32 %v2766, 0.2
      %v3737 = vmul.f32 %v1810, 0.2
      %v3738 = vmul.f32 %v1812, 0.2
      %v3739 = vmul.f32 %v2333, 0.2
      %v3740 = vmul.f32 %v2335, 0.2
      %v3741 = vmul.f32 %v2769, 0.2
      %v3742 = vmul.f32 %v1816, 0.2
      %v3743 = vmul.f32 %v1818, 0.2
      %v3744 = vmul.f32 %v2339, 0.2
      %v3745 = vmul.f32 %v2341, 0.2
      %v3746 = vmul.f32 %v2774, 0.2
      %v3747 = vmul.f32 %v1820, 0.2
      %v3748 = vmul.f32 %v1822, 0.2
      %v3749 = vmul.f32 %v2343, 0.2
      %v3750 = vmul.f32 %v2345, 0.2
      %v3751 = vmul.f32 %v2777, 0.2
      %v3752 = vmul.f32 %v1826, 0.2
      %v3753 = vmul.f32 %v1828, 0.2
      %v3754 = vmul.f32 %v2349, 0.2
      %v3755 = vmul.f32 %v2351, 0.2
      %v3756 = vmul.f32 %v2782, 0.2
      %v3757 = vmul.f32 %v1830, 0.2
      %v3758 = vmul.f32 %v1832, 0.2
      %v3759 = vmul.f32 %v2353, 0.2
      %v3760 = vmul.f32 %v2355, 0.2
      %v3761 = vmul.f32 %v2785, 0.2
      %v3762 = vmul.f32 %v1836, 0.2
      %v3763 = vmul.f32 %v1838, 0.2
      %v3764 = vmul.f32 %v2359, 0.2
      %v3765 = vmul.f32 %v2361, 0.2
      %v3766 = vmul.f32 %v2790, 0.2
      %v3767 = vmul.f32 %v1840, 0.2
      %v3768 = vmul.f32 %v1842, 0.2
      %v3769 = vmul.f32 %v2363, 0.2
      %v3770 = vmul.f32 %v2365, 0.2
      %v3771 = vmul.f32 %v2793, 0.2
      %v3772 = vmul.f32 %v1846, 0.2
      %v3773 = vmul.f32 %v1848, 0.2
      %v3774 = vmul.f32 %v2369, 0.2
      %v3775 = vmul.f32 %v2371, 0.2
      %v3776 = vmul.f32 %v2798, 0.2
      %v3777 = vmul.f32 %v1850, 0.2
      %v3778 = vmul.f32 %v1852, 0.2
      %v3779 = vmul.f32 %v2373, 0.2
      %v3780 = vmul.f32 %v2375, 0.2
      %v3781 = vmul.f32 %v2801, 0.2
      %v3782 = vmul.f32 %v1856, 0.2
      %v3783 = vmul.f32 %v1858, 0.2
      %v3784 = vmul.f32 %v2379, 0.2
      %v3785 = vmul.f32 %v2381, 0.2
      %v3786 = vmul.f32 %v2806, 0.2
      %v3787 = vmul.f32 %v1860, 0.2
      %v3788 = vmul.f32 %v1862, 0.2
      %v3789 = vmul.f32 %v2383, 0.2
      %v3790 = vmul.f32 %v2385, 0.2
      %v3791 = vmul.f32 %v2809, 0.2
      %v3792 = vsel %vm2812, %v1376, %v3302
      %v3793 = vsel %vm2813, %v1378, %v3303
      %v3794 = vsel %vm2814, %v1899, %v3304
      %v3795 = vsel %vm2815, %v1901, %v3305
      %v3796 = vsel %vm2816, %v2422, %v3306
      %v3797 = vsel %vm2817, %v1380, %v3307
      %v3798 = vsel %vm2818, %v1382, %v3308
      %v3799 = vsel %vm2819, %v1903, %v3309
      %v3800 = vsel %vm2820, %v1905, %v3310
      %v3801 = vsel %vm2821, %v2425, %v3311
      %v3802 = vsel %vm2822, %v1386, %v3312
      %v3803 = vsel %vm2823, %v1388, %v3313
      %v3804 = vsel %vm2824, %v1909, %v3314
      %v3805 = vsel %vm2825, %v1911, %v3315
      %v3806 = vsel %vm2826, %v2430, %v3316
      %v3807 = vsel %vm2827, %v1390, %v3317
      %v3808 = vsel %vm2828, %v1392, %v3318
      %v3809 = vsel %vm2829, %v1913, %v3319
      %v3810 = vsel %vm2830, %v1915, %v3320
      %v3811 = vsel %vm2831, %v2433, %v3321
      %v3812 = vsel %vm2832, %v1396, %v3322
      %v3813 = vsel %vm2833, %v1398, %v3323
      %v3814 = vsel %vm2834, %v1919, %v3324
      %v3815 = vsel %vm2835, %v1921, %v3325
      %v3816 = vsel %vm2836, %v2438, %v3326
      %v3817 = vsel %vm2837, %v1400, %v3327
      %v3818 = vsel %vm2838, %v1402, %v3328
      %v3819 = vsel %vm2839, %v1923, %v3329
      %v3820 = vsel %vm2840, %v1925, %v3330
      %v3821 = vsel %vm2841, %v2441, %v3331
      %v3822 = vsel %vm2842, %v1406, %v3332
      %v3823 = vsel %vm2843, %v1408, %v3333
      %v3824 = vsel %vm2844, %v1929, %v3334
      %v3825 = vsel %vm2845, %v1931, %v3335
      %v3826 = vsel %vm2846, %v2446, %v3336
      %v3827 = vsel %vm2847, %v1410, %v3337
      %v3828 = vsel %vm2848, %v1412, %v3338
      %v3829 = vsel %vm2849, %v1933, %v3339
      %v3830 = vsel %vm2850, %v1935, %v3340
      %v3831 = vsel %vm2851, %v2449, %v3341
      %v3832 = vsel %vm2852, %v1416, %v3342
      %v3833 = vsel %vm2853, %v1418, %v3343
      %v3834 = vsel %vm2854, %v1939, %v3344
      %v3835 = vsel %vm2855, %v1941, %v3345
      %v3836 = vsel %vm2856, %v2454, %v3346
      %v3837 = vsel %vm2857, %v1420, %v3347
      %v3838 = vsel %vm2858, %v1422, %v3348
      %v3839 = vsel %vm2859, %v1943, %v3349
      %v3840 = vsel %vm2860, %v1945, %v3350
      %v3841 = vsel %vm2861, %v2457, %v3351
      %v3842 = vsel %vm2862, %v1426, %v3352
      %v3843 = vsel %vm2863, %v1428, %v3353
      %v3844 = vsel %vm2864, %v1949, %v3354
      %v3845 = vsel %vm2865, %v1951, %v3355
      %v3846 = vsel %vm2866, %v2462, %v3356
      %v3847 = vsel %vm2867, %v1430, %v3357
      %v3848 = vsel %vm2868, %v1432, %v3358
      %v3849 = vsel %vm2869, %v1953, %v3359
      %v3850 = vsel %vm2870, %v1955, %v3360
      %v3851 = vsel %vm2871, %v2465, %v3361
      %v3852 = vsel %vm2872, %v1436, %v3362
      %v3853 = vsel %vm2873, %v1438, %v3363
      %v3854 = vsel %vm2874, %v1959, %v3364
      %v3855 = vsel %vm2875, %v1961, %v3365
      %v3856 = vsel %vm2876, %v2470, %v3366
      %v3857 = vsel %vm2877, %v1440, %v3367
      %v3858 = vsel %vm2878, %v1442, %v3368
      %v3859 = vsel %vm2879, %v1963, %v3369
      %v3860 = vsel %vm2880, %v1965, %v3370
      %v3861 = vsel %vm2881, %v2473, %v3371
      %v3862 = vsel %vm2882, %v1446, %v3372
      %v3863 = vsel %vm2883, %v1448, %v3373
      %v3864 = vsel %vm2884, %v1969, %v3374
      %v3865 = vsel %vm2885, %v1971, %v3375
      %v3866 = vsel %vm2886, %v2478, %v3376
      %v3867 = vsel %vm2887, %v1450, %v3377
      %v3868 = vsel %vm2888, %v1452, %v3378
      %v3869 = vsel %vm2889, %v1973, %v3379
      %v3870 = vsel %vm2890, %v1975, %v3380
      %v3871 = vsel %vm2891, %v2481, %v3381
      %v3872 = vsel %vm2892, %v1456, %v3382
      %v3873 = vsel %vm2893, %v1458, %v3383
      %v3874 = vsel %vm2894, %v1979, %v3384
      %v3875 = vsel %vm2895, %v1981, %v3385
      %v3876 = vsel %vm2896, %v2486, %v3386
      %v3877 = vsel %vm2897, %v1460, %v3387
      %v3878 = vsel %vm2898, %v1462, %v3388
      %v3879 = vsel %vm2899, %v1983, %v3389
      %v3880 = vsel %vm2900, %v1985, %v3390
      %v3881 = vsel %vm2901, %v2489, %v3391
      %v3882 = vsel %vm2902, %v1466, %v3392
      %v3883 = vsel %vm2903, %v1468, %v3393
      %v3884 = vsel %vm2904, %v1989, %v3394
      %v3885 = vsel %vm2905, %v1991, %v3395
      %v3886 = vsel %vm2906, %v2494, %v3396
      %v3887 = vsel %vm2907, %v1470, %v3397
      %v3888 = vsel %vm2908, %v1472, %v3398
      %v3889 = vsel %vm2909, %v1993, %v3399
      %v3890 = vsel %vm2910, %v1995, %v3400
      %v3891 = vsel %vm2911, %v2497, %v3401
      %v3892 = vsel %vm2912, %v1476, %v3402
      %v3893 = vsel %vm2913, %v1478, %v3403
      %v3894 = vsel %vm2914, %v1999, %v3404
      %v3895 = vsel %vm2915, %v2001, %v3405
      %v3896 = vsel %vm2916, %v2502, %v3406
      %v3897 = vsel %vm2917, %v1480, %v3407
      %v3898 = vsel %vm2918, %v1482, %v3408
      %v3899 = vsel %vm2919, %v2003, %v3409
      %v3900 = vsel %vm2920, %v2005, %v3410
      %v3901 = vsel %vm2921, %v2505, %v3411
      %v3902 = vsel %vm2922, %v1486, %v3412
      %v3903 = vsel %vm2923, %v1488, %v3413
      %v3904 = vsel %vm2924, %v2009, %v3414
      %v3905 = vsel %vm2925, %v2011, %v3415
      %v3906 = vsel %vm2926, %v2510, %v3416
      %v3907 = vsel %vm2927, %v1490, %v3417
      %v3908 = vsel %vm2928, %v1492, %v3418
      %v3909 = vsel %vm2929, %v2013, %v3419
      %v3910 = vsel %vm2930, %v2015, %v3420
      %v3911 = vsel %vm2931, %v2513, %v3421
      %v3912 = vsel %vm2932, %v1496, %v3422
      %v3913 = vsel %vm2933, %v1498, %v3423
      %v3914 = vsel %vm2934, %v2019, %v3424
      %v3915 = vsel %vm2935, %v2021, %v3425
      %v3916 = vsel %vm2936, %v2518, %v3426
      %v3917 = vsel %vm2937, %v1500, %v3427
      %v3918 = vsel %vm2938, %v1502, %v3428
      %v3919 = vsel %vm2939, %v2023, %v3429
      %v3920 = vsel %vm2940, %v2025, %v3430
      %v3921 = vsel %vm2941, %v2521, %v3431
      %v3922 = vsel %vm2942, %v1506, %v3432
      %v3923 = vsel %vm2943, %v1508, %v3433
      %v3924 = vsel %vm2944, %v2029, %v3434
      %v3925 = vsel %vm2945, %v2031, %v3435
      %v3926 = vsel %vm2946, %v2526, %v3436
      %v3927 = vsel %vm2947, %v1510, %v3437
      %v3928 = vsel %vm2948, %v1512, %v3438
      %v3929 = vsel %vm2949, %v2033, %v3439
      %v3930 = vsel %vm2950, %v2035, %v3440
      %v3931 = vsel %vm2951, %v2529, %v3441
      %v3932 = vsel %vm2952, %v1516, %v3442
      %v3933 = vsel %vm2953, %v1518, %v3443
      %v3934 = vsel %vm2954, %v2039, %v3444
      %v3935 = vsel %vm2955, %v2041, %v3445
      %v3936 = vsel %vm2956, %v2534, %v3446
      %v3937 = vsel %vm2957, %v1520, %v3447
      %v3938 = vsel %vm2958, %v1522, %v3448
      %v3939 = vsel %vm2959, %v2043, %v3449
      %v3940 = vsel %vm2960, %v2045, %v3450
      %v3941 = vsel %vm2961, %v2537, %v3451
      %v3942 = vsel %vm2962, %v1526, %v3452
      %v3943 = vsel %vm2963, %v1528, %v3453
      %v3944 = vsel %vm2964, %v2049, %v3454
      %v3945 = vsel %vm2965, %v2051, %v3455
      %v3946 = vsel %vm2966, %v2542, %v3456
      %v3947 = vsel %vm2967, %v1530, %v3457
      %v3948 = vsel %vm2968, %v1532, %v3458
      %v3949 = vsel %vm2969, %v2053, %v3459
      %v3950 = vsel %vm2970, %v2055, %v3460
      %v3951 = vsel %vm2971, %v2545, %v3461
      %v3952 = vsel %vm2972, %v1536, %v3462
      %v3953 = vsel %vm2973, %v1538, %v3463
      %v3954 = vsel %vm2974, %v2059, %v3464
      %v3955 = vsel %vm2975, %v2061, %v3465
      %v3956 = vsel %vm2976, %v2550, %v3466
      %v3957 = vsel %vm2977, %v1540, %v3467
      %v3958 = vsel %vm2978, %v1542, %v3468
      %v3959 = vsel %vm2979, %v2063, %v3469
      %v3960 = vsel %vm2980, %v2065, %v3470
      %v3961 = vsel %vm2981, %v2553, %v3471
      %v3962 = vsel %vm2982, %v1546, %v3472
      %v3963 = vsel %vm2983, %v1548, %v3473
      %v3964 = vsel %vm2984, %v2069, %v3474
      %v3965 = vsel %vm2985, %v2071, %v3475
      %v3966 = vsel %vm2986, %v2558, %v3476
      %v3967 = vsel %vm2987, %v1550, %v3477
      %v3968 = vsel %vm2988, %v1552, %v3478
      %v3969 = vsel %vm2989, %v2073, %v3479
      %v3970 = vsel %vm2990, %v2075, %v3480
      %v3971 = vsel %vm2991, %v2561, %v3481
      %v3972 = vsel %vm2992, %v1556, %v3482
      %v3973 = vsel %vm2993, %v1558, %v3483
      %v3974 = vsel %vm2994, %v2079, %v3484
      %v3975 = vsel %vm2995, %v2081, %v3485
      %v3976 = vsel %vm2996, %v2566, %v3486
      %v3977 = vsel %vm2997, %v1560, %v3487
      %v3978 = vsel %vm2998, %v1562, %v3488
      %v3979 = vsel %vm2999, %v2083, %v3489
      %v3980 = vsel %vm3000, %v2085, %v3490
      %v3981 = vsel %vm3001, %v2569, %v3491
      %v3982 = vsel %vm3002, %v1566, %v3492
      %v3983 = vsel %vm3003, %v1568, %v3493
      %v3984 = vsel %vm3004, %v2089, %v3494
      %v3985 = vsel %vm3005, %v2091, %v3495
      %v3986 = vsel %vm3006, %v2574, %v3496
      %v3987 = vsel %vm3007, %v1570, %v3497
      %v3988 = vsel %vm3008, %v1572, %v3498
      %v3989 = vsel %vm3009, %v2093, %v3499
      %v3990 = vsel %vm3010, %v2095, %v3500
      %v3991 = vsel %vm3011, %v2577, %v3501
      %v3992 = vsel %vm3012, %v1576, %v3502
      %v3993 = vsel %vm3013, %v1578, %v3503
      %v3994 = vsel %vm3014, %v2099, %v3504
      %v3995 = vsel %vm3015, %v2101, %v3505
      %v3996 = vsel %vm3016, %v2582, %v3506
      %v3997 = vsel %vm3017, %v1580, %v3507
      %v3998 = vsel %vm3018, %v1582, %v3508
      %v3999 = vsel %vm3019, %v2103, %v3509
      %v4000 = vsel %vm3020, %v2105, %v3510
      %v4001 = vsel %vm3021, %v2585, %v3511
      %v4002 = vsel %vm3022, %v1586, %v3512
      %v4003 = vsel %vm3023, %v1588, %v3513
      %v4004 = vsel %vm3024, %v2109, %v3514
      %v4005 = vsel %vm3025, %v2111, %v3515
      %v4006 = vsel %vm3026, %v2590, %v3516
      %v4007 = vsel %vm3027, %v1590, %v3517
      %v4008 = vsel %vm3028, %v1592, %v3518
      %v4009 = vsel %vm3029, %v2113, %v3519
      %v4010 = vsel %vm3030, %v2115, %v3520
      %v4011 = vsel %vm3031, %v2593, %v3521
      %v4012 = vsel %vm3032, %v1596, %v3522
      %v4013 = vsel %vm3033, %v1598, %v3523
      %v4014 = vsel %vm3034, %v2119, %v3524
      %v4015 = vsel %vm3035, %v2121, %v3525
      %v4016 = vsel %vm3036, %v2598, %v3526
      %v4017 = vsel %vm3037, %v1600, %v3527
      %v4018 = vsel %vm3038, %v1602, %v3528
      %v4019 = vsel %vm3039, %v2123, %v3529
      %v4020 = vsel %vm3040, %v2125, %v3530
      %v4021 = vsel %vm3041, %v2601, %v3531
      %v4022 = vsel %vm3042, %v1606, %v3532
      %v4023 = vsel %vm3043, %v1608, %v3533
      %v4024 = vsel %vm3044, %v2129, %v3534
      %v4025 = vsel %vm3045, %v2131, %v3535
      %v4026 = vsel %vm3046, %v2606, %v3536
      %v4027 = vsel %vm3047, %v1610, %v3537
      %v4028 = vsel %vm3048, %v1612, %v3538
      %v4029 = vsel %vm3049, %v2133, %v3539
      %v4030 = vsel %vm3050, %v2135, %v3540
      %v4031 = vsel %vm3051, %v2609, %v3541
      %v4032 = vsel %vm3052, %v1616, %v3542
      %v4033 = vsel %vm3053, %v1618, %v3543
      %v4034 = vsel %vm3054, %v2139, %v3544
      %v4035 = vsel %vm3055, %v2141, %v3545
      %v4036 = vsel %vm3056, %v2614, %v3546
      %v4037 = vsel %vm3057, %v1620, %v3547
      %v4038 = vsel %vm3058, %v1622, %v3548
      %v4039 = vsel %vm3059, %v2143, %v3549
      %v4040 = vsel %vm3060, %v2145, %v3550
      %v4041 = vsel %vm3061, %v2617, %v3551
      %v4042 = vsel %vm3062, %v1626, %v3552
      %v4043 = vsel %vm3063, %v1628, %v3553
      %v4044 = vsel %vm3064, %v2149, %v3554
      %v4045 = vsel %vm3065, %v2151, %v3555
      %v4046 = vsel %vm3066, %v2622, %v3556
      %v4047 = vsel %vm3067, %v1630, %v3557
      %v4048 = vsel %vm3068, %v1632, %v3558
      %v4049 = vsel %vm3069, %v2153, %v3559
      %v4050 = vsel %vm3070, %v2155, %v3560
      %v4051 = vsel %vm3071, %v2625, %v3561
      %v4052 = vsel %vm3072, %v1636, %v3562
      %v4053 = vsel %vm3073, %v1638, %v3563
      %v4054 = vsel %vm3074, %v2159, %v3564
      %v4055 = vsel %vm3075, %v2161, %v3565
      %v4056 = vsel %vm3076, %v2630, %v3566
      %v4057 = vsel %vm3077, %v1640, %v3567
      %v4058 = vsel %vm3078, %v1642, %v3568
      %v4059 = vsel %vm3079, %v2163, %v3569
      %v4060 = vsel %vm3080, %v2165, %v3570
      %v4061 = vsel %vm3081, %v2633, %v3571
      %v4062 = vsel %vm3082, %v1646, %v3572
      %v4063 = vsel %vm3083, %v1648, %v3573
      %v4064 = vsel %vm3084, %v2169, %v3574
      %v4065 = vsel %vm3085, %v2171, %v3575
      %v4066 = vsel %vm3086, %v2638, %v3576
      %v4067 = vsel %vm3087, %v1650, %v3577
      %v4068 = vsel %vm3088, %v1652, %v3578
      %v4069 = vsel %vm3089, %v2173, %v3579
      %v4070 = vsel %vm3090, %v2175, %v3580
      %v4071 = vsel %vm3091, %v2641, %v3581
      %v4072 = vsel %vm3092, %v1656, %v3582
      %v4073 = vsel %vm3093, %v1658, %v3583
      %v4074 = vsel %vm3094, %v2179, %v3584
      %v4075 = vsel %vm3095, %v2181, %v3585
      %v4076 = vsel %vm3096, %v2646, %v3586
      %v4077 = vsel %vm3097, %v1660, %v3587
      %v4078 = vsel %vm3098, %v1662, %v3588
      %v4079 = vsel %vm3099, %v2183, %v3589
      %v4080 = vsel %vm3100, %v2185, %v3590
      %v4081 = vsel %vm3101, %v2649, %v3591
      %v4082 = vsel %vm3102, %v1666, %v3592
      %v4083 = vsel %vm3103, %v1668, %v3593
      %v4084 = vsel %vm3104, %v2189, %v3594
      %v4085 = vsel %vm3105, %v2191, %v3595
      %v4086 = vsel %vm3106, %v2654, %v3596
      %v4087 = vsel %vm3107, %v1670, %v3597
      %v4088 = vsel %vm3108, %v1672, %v3598
      %v4089 = vsel %vm3109, %v2193, %v3599
      %v4090 = vsel %vm3110, %v2195, %v3600
      %v4091 = vsel %vm3111, %v2657, %v3601
      %v4092 = vsel %vm3112, %v1676, %v3602
      %v4093 = vsel %vm3113, %v1678, %v3603
      %v4094 = vsel %vm3114, %v2199, %v3604
      %v4095 = vsel %vm3115, %v2201, %v3605
      %v4096 = vsel %vm3116, %v2662, %v3606
      %v4097 = vsel %vm3117, %v1680, %v3607
      %v4098 = vsel %vm3118, %v1682, %v3608
      %v4099 = vsel %vm3119, %v2203, %v3609
      %v4100 = vsel %vm3120, %v2205, %v3610
      %v4101 = vsel %vm3121, %v2665, %v3611
      %v4102 = vsel %vm3122, %v1686, %v3612
      %v4103 = vsel %vm3123, %v1688, %v3613
      %v4104 = vsel %vm3124, %v2209, %v3614
      %v4105 = vsel %vm3125, %v2211, %v3615
      %v4106 = vsel %vm3126, %v2670, %v3616
      %v4107 = vsel %vm3127, %v1690, %v3617
      %v4108 = vsel %vm3128, %v1692, %v3618
      %v4109 = vsel %vm3129, %v2213, %v3619
      %v4110 = vsel %vm3130, %v2215, %v3620
      %v4111 = vsel %vm3131, %v2673, %v3621
      %v4112 = vsel %vm3132, %v1696, %v3622
      %v4113 = vsel %vm3133, %v1698, %v3623
      %v4114 = vsel %vm3134, %v2219, %v3624
      %v4115 = vsel %vm3135, %v2221, %v3625
      %v4116 = vsel %vm3136, %v2678, %v3626
      %v4117 = vsel %vm3137, %v1700, %v3627
      %v4118 = vsel %vm3138, %v1702, %v3628
      %v4119 = vsel %vm3139, %v2223, %v3629
      %v4120 = vsel %vm3140, %v2225, %v3630
      %v4121 = vsel %vm3141, %v2681, %v3631
      %v4122 = vsel %vm3142, %v1706, %v3632
      %v4123 = vsel %vm3143, %v1708, %v3633
      %v4124 = vsel %vm3144, %v2229, %v3634
      %v4125 = vsel %vm3145, %v2231, %v3635
      %v4126 = vsel %vm3146, %v2686, %v3636
      %v4127 = vsel %vm3147, %v1710, %v3637
      %v4128 = vsel %vm3148, %v1712, %v3638
      %v4129 = vsel %vm3149, %v2233, %v3639
      %v4130 = vsel %vm3150, %v2235, %v3640
      %v4131 = vsel %vm3151, %v2689, %v3641
      %v4132 = vsel %vm3152, %v1716, %v3642
      %v4133 = vsel %vm3153, %v1718, %v3643
      %v4134 = vsel %vm3154, %v2239, %v3644
      %v4135 = vsel %vm3155, %v2241, %v3645
      %v4136 = vsel %vm3156, %v2694, %v3646
      %v4137 = vsel %vm3157, %v1720, %v3647
      %v4138 = vsel %vm3158, %v1722, %v3648
      %v4139 = vsel %vm3159, %v2243, %v3649
      %v4140 = vsel %vm3160, %v2245, %v3650
      %v4141 = vsel %vm3161, %v2697, %v3651
      %v4142 = vsel %vm3162, %v1726, %v3652
      %v4143 = vsel %vm3163, %v1728, %v3653
      %v4144 = vsel %vm3164, %v2249, %v3654
      %v4145 = vsel %vm3165, %v2251, %v3655
      %v4146 = vsel %vm3166, %v2702, %v3656
      %v4147 = vsel %vm3167, %v1730, %v3657
      %v4148 = vsel %vm3168, %v1732, %v3658
      %v4149 = vsel %vm3169, %v2253, %v3659
      %v4150 = vsel %vm3170, %v2255, %v3660
      %v4151 = vsel %vm3171, %v2705, %v3661
      %v4152 = vsel %vm3172, %v1736, %v3662
      %v4153 = vsel %vm3173, %v1738, %v3663
      %v4154 = vsel %vm3174, %v2259, %v3664
      %v4155 = vsel %vm3175, %v2261, %v3665
      %v4156 = vsel %vm3176, %v2710, %v3666
      %v4157 = vsel %vm3177, %v1740, %v3667
      %v4158 = vsel %vm3178, %v1742, %v3668
      %v4159 = vsel %vm3179, %v2263, %v3669
      %v4160 = vsel %vm3180, %v2265, %v3670
      %v4161 = vsel %vm3181, %v2713, %v3671
      %v4162 = vsel %vm3182, %v1746, %v3672
      %v4163 = vsel %vm3183, %v1748, %v3673
      %v4164 = vsel %vm3184, %v2269, %v3674
      %v4165 = vsel %vm3185, %v2271, %v3675
      %v4166 = vsel %vm3186, %v2718, %v3676
      %v4167 = vsel %vm3187, %v1750, %v3677
      %v4168 = vsel %vm3188, %v1752, %v3678
      %v4169 = vsel %vm3189, %v2273, %v3679
      %v4170 = vsel %vm3190, %v2275, %v3680
      %v4171 = vsel %vm3191, %v2721, %v3681
      %v4172 = vsel %vm3192, %v1756, %v3682
      %v4173 = vsel %vm3193, %v1758, %v3683
      %v4174 = vsel %vm3194, %v2279, %v3684
      %v4175 = vsel %vm3195, %v2281, %v3685
      %v4176 = vsel %vm3196, %v2726, %v3686
      %v4177 = vsel %vm3197, %v1760, %v3687
      %v4178 = vsel %vm3198, %v1762, %v3688
      %v4179 = vsel %vm3199, %v2283, %v3689
      %v4180 = vsel %vm3200, %v2285, %v3690
      %v4181 = vsel %vm3201, %v2729, %v3691
      %v4182 = vsel %vm3202, %v1766, %v3692
      %v4183 = vsel %vm3203, %v1768, %v3693
      %v4184 = vsel %vm3204, %v2289, %v3694
      %v4185 = vsel %vm3205, %v2291, %v3695
      %v4186 = vsel %vm3206, %v2734, %v3696
      %v4187 = vsel %vm3207, %v1770, %v3697
      %v4188 = vsel %vm3208, %v1772, %v3698
      %v4189 = vsel %vm3209, %v2293, %v3699
      %v4190 = vsel %vm3210, %v2295, %v3700
      %v4191 = vsel %vm3211, %v2737, %v3701
      %v4192 = vsel %vm3212, %v1776, %v3702
      %v4193 = vsel %vm3213, %v1778, %v3703
      %v4194 = vsel %vm3214, %v2299, %v3704
      %v4195 = vsel %vm3215, %v2301, %v3705
      %v4196 = vsel %vm3216, %v2742, %v3706
      %v4197 = vsel %vm3217, %v1780, %v3707
      %v4198 = vsel %vm3218, %v1782, %v3708
      %v4199 = vsel %vm3219, %v2303, %v3709
      %v4200 = vsel %vm3220, %v2305, %v3710
      %v4201 = vsel %vm3221, %v2745, %v3711
      %v4202 = vsel %vm3222, %v1786, %v3712
      %v4203 = vsel %vm3223, %v1788, %v3713
      %v4204 = vsel %vm3224, %v2309, %v3714
      %v4205 = vsel %vm3225, %v2311, %v3715
      %v4206 = vsel %vm3226, %v2750, %v3716
      %v4207 = vsel %vm3227, %v1790, %v3717
      %v4208 = vsel %vm3228, %v1792, %v3718
      %v4209 = vsel %vm3229, %v2313, %v3719
      %v4210 = vsel %vm3230, %v2315, %v3720
      %v4211 = vsel %vm3231, %v2753, %v3721
      %v4212 = vsel %vm3232, %v1796, %v3722
      %v4213 = vsel %vm3233, %v1798, %v3723
      %v4214 = vsel %vm3234, %v2319, %v3724
      %v4215 = vsel %vm3235, %v2321, %v3725
      %v4216 = vsel %vm3236, %v2758, %v3726
      %v4217 = vsel %vm3237, %v1800, %v3727
      %v4218 = vsel %vm3238, %v1802, %v3728
      %v4219 = vsel %vm3239, %v2323, %v3729
      %v4220 = vsel %vm3240, %v2325, %v3730
      %v4221 = vsel %vm3241, %v2761, %v3731
      %v4222 = vsel %vm3242, %v1806, %v3732
      %v4223 = vsel %vm3243, %v1808, %v3733
      %v4224 = vsel %vm3244, %v2329, %v3734
      %v4225 = vsel %vm3245, %v2331, %v3735
      %v4226 = vsel %vm3246, %v2766, %v3736
      %v4227 = vsel %vm3247, %v1810, %v3737
      %v4228 = vsel %vm3248, %v1812, %v3738
      %v4229 = vsel %vm3249, %v2333, %v3739
      %v4230 = vsel %vm3250, %v2335, %v3740
      %v4231 = vsel %vm3251, %v2769, %v3741
      %v4232 = vsel %vm3252, %v1816, %v3742
      %v4233 = vsel %vm3253, %v1818, %v3743
      %v4234 = vsel %vm3254, %v2339, %v3744
      %v4235 = vsel %vm3255, %v2341, %v3745
      %v4236 = vsel %vm3256, %v2774, %v3746
      %v4237 = vsel %vm3257, %v1820, %v3747
      %v4238 = vsel %vm3258, %v1822, %v3748
      %v4239 = vsel %vm3259, %v2343, %v3749
      %v4240 = vsel %vm3260, %v2345, %v3750
      %v4241 = vsel %vm3261, %v2777, %v3751
      %v4242 = vsel %vm3262, %v1826, %v3752
      %v4243 = vsel %vm3263, %v1828, %v3753
      %v4244 = vsel %vm3264, %v2349, %v3754
      %v4245 = vsel %vm3265, %v2351, %v3755
      %v4246 = vsel %vm3266, %v2782, %v3756
      %v4247 = vsel %vm3267, %v1830, %v3757
      %v4248 = vsel %vm3268, %v1832, %v3758
      %v4249 = vsel %vm3269, %v2353, %v3759
      %v4250 = vsel %vm3270, %v2355, %v3760
      %v4251 = vsel %vm3271, %v2785, %v3761
      %v4252 = vsel %vm3272, %v1836, %v3762
      %v4253 = vsel %vm3273, %v1838, %v3763
      %v4254 = vsel %vm3274, %v2359, %v3764
      %v4255 = vsel %vm3275, %v2361, %v3765
      %v4256 = vsel %vm3276, %v2790, %v3766
      %v4257 = vsel %vm3277, %v1840, %v3767
      %v4258 = vsel %vm3278, %v1842, %v3768
      %v4259 = vsel %vm3279, %v2363, %v3769
      %v4260 = vsel %vm3280, %v2365, %v3770
      %v4261 = vsel %vm3281, %v2793, %v3771
      %v4262 = vsel %vm3282, %v1846, %v3772
      %v4263 = vsel %vm3283, %v1848, %v3773
      %v4264 = vsel %vm3284, %v2369, %v3774
      %v4265 = vsel %vm3285, %v2371, %v3775
      %v4266 = vsel %vm3286, %v2798, %v3776
      %v4267 = vsel %vm3287, %v1850, %v3777
      %v4268 = vsel %vm3288, %v1852, %v3778
      %v4269 = vsel %vm3289, %v2373, %v3779
      %v4270 = vsel %vm3290, %v2375, %v3780
      %v4271 = vsel %vm3291, %v2801, %v3781
      %v4272 = vsel %vm3292, %v1856, %v3782
      %v4273 = vsel %vm3293, %v1858, %v3783
      %v4274 = vsel %vm3294, %v2379, %v3784
      %v4275 = vsel %vm3295, %v2381, %v3785
      %v4276 = vsel %vm3296, %v2806, %v3786
      %v4277 = vsel %vm3297, %v1860, %v3787
      %v4278 = vsel %vm3298, %v1862, %v3788
      %v4279 = vsel %vm3299, %v2383, %v3789
      %v4280 = vsel %vm3300, %v2385, %v3790
      %v4281 = vsel %vm3301, %v2809, %v3791
      %v4282 = vpack.c.bf16 %v3797, %v3792
      %v4283 = vpack.c.bf16 %v3798, %v3793
      %v4284 = vpack.c.bf16 %v3799, %v3794
      %v4285 = vpack.c.bf16 %v3800, %v3795
      %v4286 = vpack.c.bf16 %v3801, %v3796
      %v4287 = vpack.c.bf16 %v3807, %v3802
      %v4288 = vpack.c.bf16 %v3808, %v3803
      %v4289 = vpack.c.bf16 %v3809, %v3804
      %v4290 = vpack.c.bf16 %v3810, %v3805
      %v4291 = vpack.c.bf16 %v3811, %v3806
      %v4292 = vpack.c.bf16 %v3817, %v3812
      %v4293 = vpack.c.bf16 %v3818, %v3813
      %v4294 = vpack.c.bf16 %v3819, %v3814
      %v4295 = vpack.c.bf16 %v3820, %v3815
      %v4296 = vpack.c.bf16 %v3821, %v3816
      %v4297 = vpack.c.bf16 %v3827, %v3822
      %v4298 = vpack.c.bf16 %v3828, %v3823
      %v4299 = vpack.c.bf16 %v3829, %v3824
      %v4300 = vpack.c.bf16 %v3830, %v3825
      %v4301 = vpack.c.bf16 %v3831, %v3826
      %v4302 = vpack.c.bf16 %v3837, %v3832
      %v4303 = vpack.c.bf16 %v3838, %v3833
      %v4304 = vpack.c.bf16 %v3839, %v3834
      %v4305 = vpack.c.bf16 %v3840, %v3835
      %v4306 = vpack.c.bf16 %v3841, %v3836
      %v4307 = vpack.c.bf16 %v3847, %v3842
      %v4308 = vpack.c.bf16 %v3848, %v3843
      %v4309 = vpack.c.bf16 %v3849, %v3844
      %v4310 = vpack.c.bf16 %v3850, %v3845
      %v4311 = vpack.c.bf16 %v3851, %v3846
      %v4312 = vpack.c.bf16 %v3857, %v3852
      %v4313 = vpack.c.bf16 %v3858, %v3853
      %v4314 = vpack.c.bf16 %v3859, %v3854
      %v4315 = vpack.c.bf16 %v3860, %v3855
      %v4316 = vpack.c.bf16 %v3861, %v3856
      %v4317 = vpack.c.bf16 %v3867, %v3862
      %v4318 = vpack.c.bf16 %v3868, %v3863
      %v4319 = vpack.c.bf16 %v3869, %v3864
      %v4320 = vpack.c.bf16 %v3870, %v3865
      %v4321 = vpack.c.bf16 %v3871, %v3866
      %v4322 = vpack.c.bf16 %v3877, %v3872
      %v4323 = vpack.c.bf16 %v3878, %v3873
      %v4324 = vpack.c.bf16 %v3879, %v3874
      %v4325 = vpack.c.bf16 %v3880, %v3875
      %v4326 = vpack.c.bf16 %v3881, %v3876
      %v4327 = vpack.c.bf16 %v3887, %v3882
      %v4328 = vpack.c.bf16 %v3888, %v3883
      %v4329 = vpack.c.bf16 %v3889, %v3884
      %v4330 = vpack.c.bf16 %v3890, %v3885
      %v4331 = vpack.c.bf16 %v3891, %v3886
      %v4332 = vpack.c.bf16 %v3897, %v3892
      %v4333 = vpack.c.bf16 %v3898, %v3893
      %v4334 = vpack.c.bf16 %v3899, %v3894
      %v4335 = vpack.c.bf16 %v3900, %v3895
      %v4336 = vpack.c.bf16 %v3901, %v3896
      %v4337 = vpack.c.bf16 %v3907, %v3902
      %v4338 = vpack.c.bf16 %v3908, %v3903
      %v4339 = vpack.c.bf16 %v3909, %v3904
      %v4340 = vpack.c.bf16 %v3910, %v3905
      %v4341 = vpack.c.bf16 %v3911, %v3906
      %v4342 = vpack.c.bf16 %v3917, %v3912
      %v4343 = vpack.c.bf16 %v3918, %v3913
      %v4344 = vpack.c.bf16 %v3919, %v3914
      %v4345 = vpack.c.bf16 %v3920, %v3915
      %v4346 = vpack.c.bf16 %v3921, %v3916
      %v4347 = vpack.c.bf16 %v3927, %v3922
      %v4348 = vpack.c.bf16 %v3928, %v3923
      %v4349 = vpack.c.bf16 %v3929, %v3924
      %v4350 = vpack.c.bf16 %v3930, %v3925
      %v4351 = vpack.c.bf16 %v3931, %v3926
      %v4352 = vpack.c.bf16 %v3937, %v3932
      %v4353 = vpack.c.bf16 %v3938, %v3933
      %v4354 = vpack.c.bf16 %v3939, %v3934
      %v4355 = vpack.c.bf16 %v3940, %v3935
      %v4356 = vpack.c.bf16 %v3941, %v3936
      %v4357 = vpack.c.bf16 %v3947, %v3942
      %v4358 = vpack.c.bf16 %v3948, %v3943
      %v4359 = vpack.c.bf16 %v3949, %v3944
      %v4360 = vpack.c.bf16 %v3950, %v3945
      %v4361 = vpack.c.bf16 %v3951, %v3946
      %v4362 = vpack.c.bf16 %v3957, %v3952
      %v4363 = vpack.c.bf16 %v3958, %v3953
      %v4364 = vpack.c.bf16 %v3959, %v3954
      %v4365 = vpack.c.bf16 %v3960, %v3955
      %v4366 = vpack.c.bf16 %v3961, %v3956
      %v4367 = vpack.c.bf16 %v3967, %v3962
      %v4368 = vpack.c.bf16 %v3968, %v3963
      %v4369 = vpack.c.bf16 %v3969, %v3964
      %v4370 = vpack.c.bf16 %v3970, %v3965
      %v4371 = vpack.c.bf16 %v3971, %v3966
      %v4372 = vpack.c.bf16 %v3977, %v3972
      %v4373 = vpack.c.bf16 %v3978, %v3973
      %v4374 = vpack.c.bf16 %v3979, %v3974
      %v4375 = vpack.c.bf16 %v3980, %v3975
      %v4376 = vpack.c.bf16 %v3981, %v3976
      %v4377 = vpack.c.bf16 %v3987, %v3982
      %v4378 = vpack.c.bf16 %v3988, %v3983
      %v4379 = vpack.c.bf16 %v3989, %v3984
      %v4380 = vpack.c.bf16 %v3990, %v3985
      %v4381 = vpack.c.bf16 %v3991, %v3986
      %v4382 = vpack.c.bf16 %v3997, %v3992
      %v4383 = vpack.c.bf16 %v3998, %v3993
      %v4384 = vpack.c.bf16 %v3999, %v3994
      %v4385 = vpack.c.bf16 %v4000, %v3995
      %v4386 = vpack.c.bf16 %v4001, %v3996
      %v4387 = vpack.c.bf16 %v4007, %v4002
      %v4388 = vpack.c.bf16 %v4008, %v4003
      %v4389 = vpack.c.bf16 %v4009, %v4004
      %v4390 = vpack.c.bf16 %v4010, %v4005
      %v4391 = vpack.c.bf16 %v4011, %v4006
      %v4392 = vpack.c.bf16 %v4017, %v4012
      %v4393 = vpack.c.bf16 %v4018, %v4013
      %v4394 = vpack.c.bf16 %v4019, %v4014
      %v4395 = vpack.c.bf16 %v4020, %v4015
      %v4396 = vpack.c.bf16 %v4021, %v4016
      %v4397 = vpack.c.bf16 %v4027, %v4022
      %v4398 = vpack.c.bf16 %v4028, %v4023
      %v4399 = vpack.c.bf16 %v4029, %v4024
      %v4400 = vpack.c.bf16 %v4030, %v4025
      %v4401 = vpack.c.bf16 %v4031, %v4026
      %v4402 = vpack.c.bf16 %v4037, %v4032
      %v4403 = vpack.c.bf16 %v4038, %v4033
      %v4404 = vpack.c.bf16 %v4039, %v4034
      %v4405 = vpack.c.bf16 %v4040, %v4035
      %v4406 = vpack.c.bf16 %v4041, %v4036
      %v4407 = vpack.c.bf16 %v4047, %v4042
      %v4408 = vpack.c.bf16 %v4048, %v4043
      %v4409 = vpack.c.bf16 %v4049, %v4044
      %v4410 = vpack.c.bf16 %v4050, %v4045
      %v4411 = vpack.c.bf16 %v4051, %v4046
      %v4412 = vpack.c.bf16 %v4057, %v4052
      %v4413 = vpack.c.bf16 %v4058, %v4053
      %v4414 = vpack.c.bf16 %v4059, %v4054
      %v4415 = vpack.c.bf16 %v4060, %v4055
      %v4416 = vpack.c.bf16 %v4061, %v4056
      %v4417 = vpack.c.bf16 %v4067, %v4062
      %v4418 = vpack.c.bf16 %v4068, %v4063
      %v4419 = vpack.c.bf16 %v4069, %v4064
      %v4420 = vpack.c.bf16 %v4070, %v4065
      %v4421 = vpack.c.bf16 %v4071, %v4066
      %v4422 = vpack.c.bf16 %v4077, %v4072
      %v4423 = vpack.c.bf16 %v4078, %v4073
      %v4424 = vpack.c.bf16 %v4079, %v4074
      %v4425 = vpack.c.bf16 %v4080, %v4075
      %v4426 = vpack.c.bf16 %v4081, %v4076
      %v4427 = vpack.c.bf16 %v4087, %v4082
      %v4428 = vpack.c.bf16 %v4088, %v4083
      %v4429 = vpack.c.bf16 %v4089, %v4084
      %v4430 = vpack.c.bf16 %v4090, %v4085
      %v4431 = vpack.c.bf16 %v4091, %v4086
      %v4432 = vpack.c.bf16 %v4097, %v4092
      %v4433 = vpack.c.bf16 %v4098, %v4093
      %v4434 = vpack.c.bf16 %v4099, %v4094
      %v4435 = vpack.c.bf16 %v4100, %v4095
      %v4436 = vpack.c.bf16 %v4101, %v4096
      %v4437 = vpack.c.bf16 %v4107, %v4102
      %v4438 = vpack.c.bf16 %v4108, %v4103
      %v4439 = vpack.c.bf16 %v4109, %v4104
      %v4440 = vpack.c.bf16 %v4110, %v4105
      %v4441 = vpack.c.bf16 %v4111, %v4106
      %v4442 = vpack.c.bf16 %v4117, %v4112
      %v4443 = vpack.c.bf16 %v4118, %v4113
      %v4444 = vpack.c.bf16 %v4119, %v4114
      %v4445 = vpack.c.bf16 %v4120, %v4115
      %v4446 = vpack.c.bf16 %v4121, %v4116
      %v4447 = vpack.c.bf16 %v4127, %v4122
      %v4448 = vpack.c.bf16 %v4128, %v4123
      %v4449 = vpack.c.bf16 %v4129, %v4124
      %v4450 = vpack.c.bf16 %v4130, %v4125
      %v4451 = vpack.c.bf16 %v4131, %v4126
      %v4452 = vpack.c.bf16 %v4137, %v4132
      %v4453 = vpack.c.bf16 %v4138, %v4133
      %v4454 = vpack.c.bf16 %v4139, %v4134
      %v4455 = vpack.c.bf16 %v4140, %v4135
      %v4456 = vpack.c.bf16 %v4141, %v4136
      %v4457 = vpack.c.bf16 %v4147, %v4142
      %v4458 = vpack.c.bf16 %v4148, %v4143
      %v4459 = vpack.c.bf16 %v4149, %v4144
      %v4460 = vpack.c.bf16 %v4150, %v4145
      %v4461 = vpack.c.bf16 %v4151, %v4146
      %v4462 = vpack.c.bf16 %v4157, %v4152
      %v4463 = vpack.c.bf16 %v4158, %v4153
      %v4464 = vpack.c.bf16 %v4159, %v4154
      %v4465 = vpack.c.bf16 %v4160, %v4155
      %v4466 = vpack.c.bf16 %v4161, %v4156
      %v4467 = vpack.c.bf16 %v4167, %v4162
      %v4468 = vpack.c.bf16 %v4168, %v4163
      %v4469 = vpack.c.bf16 %v4169, %v4164
      %v4470 = vpack.c.bf16 %v4170, %v4165
      %v4471 = vpack.c.bf16 %v4171, %v4166
      %v4472 = vpack.c.bf16 %v4177, %v4172
      %v4473 = vpack.c.bf16 %v4178, %v4173
      %v4474 = vpack.c.bf16 %v4179, %v4174
      %v4475 = vpack.c.bf16 %v4180, %v4175
      %v4476 = vpack.c.bf16 %v4181, %v4176
      %v4477 = vpack.c.bf16 %v4187, %v4182
      %v4478 = vpack.c.bf16 %v4188, %v4183
      %v4479 = vpack.c.bf16 %v4189, %v4184
      %v4480 = vpack.c.bf16 %v4190, %v4185
      %v4481 = vpack.c.bf16 %v4191, %v4186
      %v4482 = vpack.c.bf16 %v4197, %v4192
      %v4483 = vpack.c.bf16 %v4198, %v4193
      %v4484 = vpack.c.bf16 %v4199, %v4194
      %v4485 = vpack.c.bf16 %v4200, %v4195
      %v4486 = vpack.c.bf16 %v4201, %v4196
      %v4487 = vpack.c.bf16 %v4207, %v4202
      %v4488 = vpack.c.bf16 %v4208, %v4203
      %v4489 = vpack.c.bf16 %v4209, %v4204
      %v4490 = vpack.c.bf16 %v4210, %v4205
      %v4491 = vpack.c.bf16 %v4211, %v4206
      %v4492 = vpack.c.bf16 %v4217, %v4212
      %v4493 = vpack.c.bf16 %v4218, %v4213
      %v4494 = vpack.c.bf16 %v4219, %v4214
      %v4495 = vpack.c.bf16 %v4220, %v4215
      %v4496 = vpack.c.bf16 %v4221, %v4216
      %v4497 = vpack.c.bf16 %v4227, %v4222
      %v4498 = vpack.c.bf16 %v4228, %v4223
      %v4499 = vpack.c.bf16 %v4229, %v4224
      %v4500 = vpack.c.bf16 %v4230, %v4225
      %v4501 = vpack.c.bf16 %v4231, %v4226
      %v4502 = vpack.c.bf16 %v4237, %v4232
      %v4503 = vpack.c.bf16 %v4238, %v4233
      %v4504 = vpack.c.bf16 %v4239, %v4234
      %v4505 = vpack.c.bf16 %v4240, %v4235
      %v4506 = vpack.c.bf16 %v4241, %v4236
      %v4507 = vpack.c.bf16 %v4247, %v4242
      %v4508 = vpack.c.bf16 %v4248, %v4243
      %v4509 = vpack.c.bf16 %v4249, %v4244
      %v4510 = vpack.c.bf16 %v4250, %v4245
      %v4511 = vpack.c.bf16 %v4251, %v4246
      %v4512 = vpack.c.bf16 %v4257, %v4252
      %v4513 = vpack.c.bf16 %v4258, %v4253
      %v4514 = vpack.c.bf16 %v4259, %v4254
      %v4515 = vpack.c.bf16 %v4260, %v4255
      %v4516 = vpack.c.bf16 %v4261, %v4256
      %v4517 = vpack.c.bf16 %v4267, %v4262
      %v4518 = vpack.c.bf16 %v4268, %v4263
      %v4519 = vpack.c.bf16 %v4269, %v4264
      %v4520 = vpack.c.bf16 %v4270, %v4265
      %v4521 = vpack.c.bf16 %v4271, %v4266
      %v4522 = vpack.c.bf16 %v4277, %v4272
      %v4523 = vpack.c.bf16 %v4278, %v4273
      %v4524 = vpack.c.bf16 %v4279, %v4274
      %v4525 = vpack.c.bf16 %v4280, %v4275
      %v4526 = vpack.c.bf16 %v4281, %v4276
      %v4527 = vld [vmem:[%s2] sm:$0xf]
      %v4528 = vld [vmem:[%s2 + $0x4] sm:$0xf]
      %v4529 = vld [vmem:[%s2 + $0x8] sm:$0xf]
      %v4530 = vld [vmem:[%s2 + $0xc] sm:$0xf]
      %v4531 = vld [vmem:[%s2 + $0x10] sm:$0xf]
      %v4532 = vld [vmem:[%s2 + $0x14] sm:$0xf]
      %v4533 = vld [vmem:[%s2 + $0x18] sm:$0xf]
      %v4534 = vld [vmem:[%s2 + $0x1c] sm:$0xf]
      %v4535 = vld [vmem:[%s2 + $0x20] sm:$0xf]
      %v4536 = vld [vmem:[%s2 + $0x24] sm:$0xf]
      %v4537 = vld [vmem:[%s2 + $0x28] sm:$0xf]
      %v4538 = vld [vmem:[%s2 + $0x2c] sm:$0xf]
      %v4539 = vld [vmem:[%s2 + $0x30] sm:$0xf]
      %v4540 = vld [vmem:[%s2 + $0x34] sm:$0xf]
      %v4541 = vld [vmem:[%s2 + $0x38] sm:$0xf]
      %v4542 = vld [vmem:[%s2 + $0x3c] sm:$0xf]
      %v4543 = vld [vmem:[%s2 + $0x40] sm:$0xf]
      %v4544 = vld [vmem:[%s2 + $0x44] sm:$0xf]
      %v4545 = vld [vmem:[%s2 + $0x48] sm:$0xf]
      %v4546 = vld [vmem:[%s2 + $0x4c] sm:$0xf]
      %v4547 = vld [vmem:[%s2 + $0x50] sm:$0xf]
      %v4548 = vld [vmem:[%s2 + $0x54] sm:$0xf]
      %v4549 = vld [vmem:[%s2 + $0x58] sm:$0xf]
      %v4550 = vld [vmem:[%s2 + $0x5c] sm:$0xf]
      %v4551 = vld [vmem:[%s2 + $0x60] sm:$0xf]
      %v4552 = vld [vmem:[%s2 + $0x64] sm:$0xf]
      %v4553 = vld [vmem:[%s2 + $0x68] sm:$0xf]
      %v4554 = vld [vmem:[%s2 + $0x6c] sm:$0xf]
      %v4555 = vld [vmem:[%s2 + $0x70] sm:$0xf]
      %v4556 = vld [vmem:[%s2 + $0x74] sm:$0xf]
      %v4557 = vld [vmem:[%s2 + $0x78] sm:$0xf]
      %v4558 = vld [vmem:[%s2 + $0x7c] sm:$0xf]
      %v4559 = vld [vmem:[%s2 + $0x80] sm:$0xf]
      %v4560 = vld [vmem:[%s2 + $0x84] sm:$0xf]
      %v4561 = vld [vmem:[%s2 + $0x88] sm:$0xf]
      %v4562 = vld [vmem:[%s2 + $0x8c] sm:$0xf]
      %v4563 = vld [vmem:[%s2 + $0x90] sm:$0xf]
      %v4564 = vld [vmem:[%s2 + $0x94] sm:$0xf]
      %v4565 = vld [vmem:[%s2 + $0x98] sm:$0xf]
      %v4566 = vld [vmem:[%s2 + $0x9c] sm:$0xf]
      %v4567 = vld [vmem:[%s2 + $0xa0] sm:$0xf]
      %v4568 = vld [vmem:[%s2 + $0xa4] sm:$0xf]
      %v4569 = vld [vmem:[%s2 + $0xa8] sm:$0xf]
      %v4570 = vld [vmem:[%s2 + $0xac] sm:$0xf]
      %v4571 = vld [vmem:[%s2 + $0xb0] sm:$0xf]
      %v4572 = vld [vmem:[%s2 + $0xb4] sm:$0xf]
      %v4573 = vld [vmem:[%s2 + $0xb8] sm:$0xf]
      %v4574 = vld [vmem:[%s2 + $0xbc] sm:$0xf]
      %v4575 = vld [vmem:[%s2 + $0xc0] sm:$0xf]
      %v4576 = vld [vmem:[%s2 + $0xc4] sm:$0xf]
      %v4577 = vld [vmem:[%s2 + $0xc8] sm:$0xf]
      %v4578 = vld [vmem:[%s2 + $0xcc] sm:$0xf]
      %v4579 = vld [vmem:[%s2 + $0xd0] sm:$0xf]
      %v4580 = vld [vmem:[%s2 + $0xd4] sm:$0xf]
      %v4581 = vld [vmem:[%s2 + $0xd8] sm:$0xf]
      %v4582 = vld [vmem:[%s2 + $0xdc] sm:$0xf]
      %v4583 = vld [vmem:[%s2 + $0xe0] sm:$0xf]
      %v4584 = vld [vmem:[%s2 + $0xe4] sm:$0xf]
      %v4585 = vld [vmem:[%s2 + $0xe8] sm:$0xf]
      %v4586 = vld [vmem:[%s2 + $0xec] sm:$0xf]
      %v4587 = vld [vmem:[%s2 + $0xf0] sm:$0xf]
      %v4588 = vld [vmem:[%s2 + $0xf4] sm:$0xf]
      %v4589 = vld [vmem:[%s2 + $0xf8] sm:$0xf]
      %v4590 = vld [vmem:[%s2 + $0xfc] sm:$0xf]
      %v4591 = vld [vmem:[%s2 + $0x100] sm:$0xf]
      %v4592 = vld [vmem:[%s2 + $0x104] sm:$0xf]
      %v4593 = vld [vmem:[%s2 + $0x108] sm:$0xf]
      %v4594 = vld [vmem:[%s2 + $0x10c] sm:$0xf]
      %v4595 = vld [vmem:[%s2 + $0x110] sm:$0xf]
      %v4596 = vld [vmem:[%s2 + $0x114] sm:$0xf]
      %v4597 = vld [vmem:[%s2 + $0x118] sm:$0xf]
      %v4598 = vld [vmem:[%s2 + $0x11c] sm:$0xf]
      %v4599 = vld [vmem:[%s3] sm:$0x1]
      %v4601 = vlaneseq
      %v4602 = vshrl.u32 %v4601, 7
      %v4603 = vsub.s32 0, %v4602
      %v4604 = vrot.slane %v4599, %v4603
      %v4678 = vunpack.c.l.b16 %v4527
      %v4679 = vunpack.c.l.b16 %v4528
      %v4680 = vunpack.c.l.b16 %v4529
      %v4681 = vunpack.c.l.b16 %v4530
      %v4682 = vunpack.c.l.b16 %v4531
      %v4683 = vunpack.c.l.b16 %v4532
      %v4684 = vunpack.c.l.b16 %v4533
      %v4685 = vunpack.c.l.b16 %v4534
      %v4686 = vunpack.c.l.b16 %v4535
      %v4687 = vunpack.c.l.b16 %v4536
      %v4688 = vunpack.c.l.b16 %v4537
      %v4689 = vunpack.c.l.b16 %v4538
      %v4690 = vunpack.c.l.b16 %v4539
      %v4691 = vunpack.c.l.b16 %v4540
      %v4692 = vunpack.c.l.b16 %v4541
      %v4693 = vunpack.c.l.b16 %v4542
      %v4694 = vunpack.c.l.b16 %v4543
      %v4695 = vunpack.c.l.b16 %v4544
      %v4696 = vunpack.c.l.b16 %v4545
      %v4697 = vunpack.c.l.b16 %v4546
      %v4698 = vunpack.c.l.b16 %v4547
      %v4699 = vunpack.c.l.b16 %v4548
      %v4700 = vunpack.c.l.b16 %v4549
      %v4701 = vunpack.c.l.b16 %v4550
      %v4702 = vunpack.c.l.b16 %v4551
      %v4703 = vunpack.c.l.b16 %v4552
      %v4704 = vunpack.c.l.b16 %v4553
      %v4705 = vunpack.c.l.b16 %v4554
      %v4706 = vunpack.c.l.b16 %v4555
      %v4707 = vunpack.c.l.b16 %v4556
      %v4708 = vunpack.c.l.b16 %v4557
      %v4709 = vunpack.c.l.b16 %v4558
      %v4710 = vunpack.c.l.b16 %v4559
      %v4711 = vunpack.c.l.b16 %v4560
      %v4712 = vunpack.c.l.b16 %v4561
      %v4713 = vunpack.c.l.b16 %v4562
      %v4714 = vunpack.c.l.b16 %v4563
      %v4715 = vunpack.c.l.b16 %v4564
      %v4716 = vunpack.c.l.b16 %v4565
      %v4717 = vunpack.c.l.b16 %v4566
      %v4718 = vunpack.c.l.b16 %v4567
      %v4719 = vunpack.c.l.b16 %v4568
      %v4720 = vunpack.c.l.b16 %v4569
      %v4721 = vunpack.c.l.b16 %v4570
      %v4722 = vunpack.c.l.b16 %v4571
      %v4723 = vunpack.c.l.b16 %v4572
      %v4724 = vunpack.c.l.b16 %v4573
      %v4725 = vunpack.c.l.b16 %v4574
      %v4726 = vunpack.c.l.b16 %v4575
      %v4727 = vunpack.c.l.b16 %v4576
      %v4728 = vunpack.c.l.b16 %v4577
      %v4729 = vunpack.c.l.b16 %v4578
      %v4730 = vunpack.c.l.b16 %v4579
      %v4731 = vunpack.c.l.b16 %v4580
      %v4732 = vunpack.c.l.b16 %v4581
      %v4733 = vunpack.c.l.b16 %v4582
      %v4734 = vunpack.c.l.b16 %v4583
      %v4735 = vunpack.c.l.b16 %v4584
      %v4736 = vunpack.c.l.b16 %v4585
      %v4737 = vunpack.c.l.b16 %v4586
      %v4738 = vunpack.c.l.b16 %v4587
      %v4739 = vunpack.c.l.b16 %v4588
      %v4740 = vunpack.c.l.b16 %v4589
      %v4741 = vunpack.c.l.b16 %v4590
      %v4742 = vunpack.c.l.b16 %v4591
      %v4743 = vunpack.c.l.b16 %v4592
      %v4744 = vunpack.c.l.b16 %v4593
      %v4745 = vunpack.c.l.b16 %v4594
      %v4746 = vunpack.c.l.b16 %v4595
      %v4747 = vunpack.c.l.b16 %v4596
      %v4748 = vunpack.c.l.b16 %v4597
      %v4749 = vunpack.c.l.b16 %v4598
      %v4750 = vpack.c.b16 %v4679, %v4678
      %v4751 = vpack.c.b16 %v4681, %v4680
      %v4752 = vpack.c.b16 %v4683, %v4682
      %v4753 = vpack.c.b16 %v4685, %v4684
      %v4754 = vpack.c.b16 %v4687, %v4686
      %v4755 = vpack.c.b16 %v4689, %v4688
      %v4756 = vpack.c.b16 %v4691, %v4690
      %v4757 = vpack.c.b16 %v4693, %v4692
      %v4758 = vpack.c.b16 %v4695, %v4694
      %v4759 = vpack.c.b16 %v4697, %v4696
      %v4760 = vpack.c.b16 %v4699, %v4698
      %v4761 = vpack.c.b16 %v4701, %v4700
      %v4762 = vpack.c.b16 %v4703, %v4702
      %v4763 = vpack.c.b16 %v4705, %v4704
      %v4764 = vpack.c.b16 %v4707, %v4706
      %v4765 = vpack.c.b16 %v4709, %v4708
      %v4766 = vpack.c.b16 %v4711, %v4710
      %v4767 = vpack.c.b16 %v4713, %v4712
      %v4768 = vpack.c.b16 %v4715, %v4714
      %v4769 = vpack.c.b16 %v4717, %v4716
      %v4770 = vpack.c.b16 %v4719, %v4718
      %v4771 = vpack.c.b16 %v4721, %v4720
      %v4772 = vpack.c.b16 %v4723, %v4722
      %v4773 = vpack.c.b16 %v4725, %v4724
      %v4774 = vpack.c.b16 %v4727, %v4726
      %v4775 = vpack.c.b16 %v4729, %v4728
      %v4776 = vpack.c.b16 %v4731, %v4730
      %v4777 = vpack.c.b16 %v4733, %v4732
      %v4778 = vpack.c.b16 %v4735, %v4734
      %v4779 = vpack.c.b16 %v4737, %v4736
      %v4780 = vpack.c.b16 %v4739, %v4738
      %v4781 = vpack.c.b16 %v4741, %v4740
      %v4782 = vpack.c.b16 %v4743, %v4742
      %v4783 = vpack.c.b16 %v4745, %v4744
      %v4784 = vpack.c.b16 %v4747, %v4746
      %v4785 = vpack.c.b16 %v4749, %v4748
      %vm4822 = vcmask 523264
      %v4824 = vsel %vm4822, %v4286, 0
      %v4827 = vsel %vm4822, %v4291, 0
      %v4830 = vsel %vm4822, %v4296, 0
      %v4833 = vsel %vm4822, %v4301, 0
      %v4836 = vsel %vm4822, %v4306, 0
      %v4839 = vsel %vm4822, %v4311, 0
      %v4842 = vsel %vm4822, %v4316, 0
      %v4845 = vsel %vm4822, %v4321, 0
      %v4848 = vsel %vm4822, %v4326, 0
      %v4851 = vsel %vm4822, %v4331, 0
      %v4854 = vsel %vm4822, %v4336, 0
      %v4857 = vsel %vm4822, %v4341, 0
      %v4860 = vsel %vm4822, %v4346, 0
      %v4863 = vsel %vm4822, %v4351, 0
      %v4866 = vsel %vm4822, %v4356, 0
      %v4869 = vsel %vm4822, %v4361, 0
      %v4872 = vsel %vm4822, %v4366, 0
      %v4875 = vsel %vm4822, %v4371, 0
      %v4878 = vsel %vm4822, %v4376, 0
      %v4881 = vsel %vm4822, %v4381, 0
      %v4884 = vsel %vm4822, %v4386, 0
      %v4887 = vsel %vm4822, %v4391, 0
      %v4890 = vsel %vm4822, %v4396, 0
      %v4893 = vsel %vm4822, %v4401, 0
      %v4896 = vsel %vm4822, %v4406, 0
      %v4899 = vsel %vm4822, %v4411, 0
      %v4902 = vsel %vm4822, %v4416, 0
      %v4905 = vsel %vm4822, %v4421, 0
      %v4908 = vsel %vm4822, %v4426, 0
      %v4911 = vsel %vm4822, %v4431, 0
      %v4914 = vsel %vm4822, %v4436, 0
      %v4917 = vsel %vm4822, %v4441, 0
      %v4920 = vsel %vm4822, %v4446, 0
      %v4923 = vsel %vm4822, %v4451, 0
      %v4926 = vsel %vm4822, %v4456, 0
      %v4929 = vsel %vm4822, %v4461, 0
      %v4932 = vsel %vm4822, %v4466, 0
      %v4935 = vsel %vm4822, %v4471, 0
      %v4938 = vsel %vm4822, %v4476, 0
      %v4941 = vsel %vm4822, %v4481, 0
      %v4944 = vsel %vm4822, %v4486, 0
      %v4947 = vsel %vm4822, %v4491, 0
      %v4950 = vsel %vm4822, %v4496, 0
      %v4953 = vsel %vm4822, %v4501, 0
      %v4956 = vsel %vm4822, %v4506, 0
      %v4959 = vsel %vm4822, %v4511, 0
      %v4962 = vsel %vm4822, %v4516, 0
      %v4965 = vsel %vm4822, %v4521, 0
      %v4968 = vsel %vm4822, %v4526, 0
      %4970 = vmatprep.subr.bf16.mxu0 0
      %4971 = vmatpush1.bf16.msra.mxu0 %v4750
      %4972 = vmatprep.subr.bf16.mxu0 0
      %4973 = vmatpush1.bf16.msra.mxu0 %v4751
      %4974 = vmatprep.subr.bf16.mxu0 0
      %4975 = vmatpush1.bf16.msra.mxu0 %v4752
      %4976 = vmatprep.subr.bf16.mxu0 0
      %4977 = vmatpush1.bf16.msra.mxu0 %v4753
      %4978 = vmatprep.subr.bf16.mxu0 0
      %4979 = vmatpush1.bf16.msra.mxu0 %v4754
      %4980 = vmatprep.subr.bf16.mxu0 0
      %4981 = vmatpush1.bf16.msra.mxu0 %v4755
      %4982 = vmatprep.subr.bf16.mxu0 0
      %4983 = vmatpush1.bf16.msra.mxu0 %v4756
      %4984 = vmatprep.subr.bf16.mxu0 0
      %4985 = vmatpush1.bf16.msra.mxu0 %v4757
      %4986 = vmatprep.subr.bf16.mxu0 0
      %4987 = vmatpush1.bf16.msra.mxu0 %v4758
      %4988 = vmatprep.subr.bf16.mxu0 0
      %4989 = vmatpush1.bf16.msra.mxu0 %v4759
      %4990 = vmatprep.subr.bf16.mxu0 0
      %4991 = vmatpush1.bf16.msra.mxu0 %v4760
      %4992 = vmatprep.subr.bf16.mxu0 0
      %4993 = vmatpush1.bf16.msra.mxu0 %v4761
      %4994 = vmatprep.subr.bf16.mxu0 0
      %4995 = vmatpush1.bf16.msra.mxu0 %v4762
      %4996 = vmatprep.subr.bf16.mxu0 0
      %4997 = vmatpush1.bf16.msra.mxu0 %v4763
      %4998 = vmatprep.subr.bf16.mxu0 0
      %4999 = vmatpush1.bf16.msra.mxu0 %v4764
      %5000 = vmatprep.subr.bf16.mxu0 0
      %5001 = vmatpush1.bf16.msra.mxu0 %v4765
      %5002 = vmatprep.mubr.bf16.mxu0 %v4283
      %5003 = vmatmul.mubr.bf16.gmra.mrb[0].mxu0 %v4282
      %v5004 = vpop.f32.mrb[0].mxu0
      %v5005 = vadd.f32 %v4604, %v5004
      %v5006 = vpop.f32.mrb[0].mxu0
      %v5007 = vpop.f32.mrb[0].mxu0
      %v5008 = vadd.f32 %v4604, %v5007
      %v5009 = vpop.f32.mrb[0].mxu0
      %5010 = vmatprep.mubr.bf16.mxu0 %v4288
      %5011 = vmatmul.mubr.bf16.gmra.mrb[0].mxu0 %v4287
      %v5012 = vpop.f32.mrb[0].mxu0
      %v5013 = vadd.f32 %v4604, %v5012
      %v5014 = vpop.f32.mrb[0].mxu0
      %v5015 = vpop.f32.mrb[0].mxu0
      %v5016 = vadd.f32 %v4604, %v5015
      %v5017 = vpop.f32.mrb[0].mxu0
      %5018 = vmatprep.mubr.bf16.mxu0 %v4293
      %5019 = vmatmul.mubr.bf16.gmra.mrb[0].mxu0 %v4292
      %v5020 = vpop.f32.mrb[0].mxu0
      %v5021 = vadd.f32 %v4604, %v5020
      %v5022 = vpop.f32.mrb[0].mxu0
      %v5023 = vpop.f32.mrb[0].mxu0
      %v5024 = vadd.f32 %v4604, %v5023
      %v5025 = vpop.f32.mrb[0].mxu0
      %5026 = vmatprep.mubr.bf16.mxu0 %v4298
      %5027 = vmatmul.mubr.bf16.gmra.mrb[0].mxu0 %v4297
      %v5028 = vpop.f32.mrb[0].mxu0
      %v5029 = vadd.f32 %v4604, %v5028
      %v5030 = vpop.f32.mrb[0].mxu0
      %v5031 = vpop.f32.mrb[0].mxu0
      %v5032 = vadd.f32 %v4604, %v5031
      %v5033 = vpop.f32.mrb[0].mxu0
      %5034 = vmatprep.mubr.bf16.mxu0 %v4303
      %5035 = vmatmul.mubr.bf16.gmra.mrb[0].mxu0 %v4302
      %v5036 = vpop.f32.mrb[0].mxu0
      %v5037 = vadd.f32 %v4604, %v5036
      %v5038 = vpop.f32.mrb[0].mxu0
      %v5039 = vpop.f32.mrb[0].mxu0
      %v5040 = vadd.f32 %v4604, %v5039
      %v5041 = vpop.f32.mrb[0].mxu0
      %5042 = vmatprep.mubr.bf16.mxu0 %v4308
      %5043 = vmatmul.mubr.bf16.gmra.mrb[0].mxu0 %v4307
      %v5044 = vpop.f32.mrb[0].mxu0
      %v5045 = vadd.f32 %v4604, %v5044
      %v5046 = vpop.f32.mrb[0].mxu0
      %v5047 = vpop.f32.mrb[0].mxu0
      %v5048 = vadd.f32 %v4604, %v5047
      %v5049 = vpop.f32.mrb[0].mxu0
      %5050 = vmatprep.mubr.bf16.mxu0 %v4313
      %5051 = vmatmul.mubr.bf16.gmra.mrb[0].mxu0 %v4312
      %v5052 = vpop.f32.mrb[0].mxu0
      %v5053 = vadd.f32 %v4604, %v5052
      %v5054 = vpop.f32.mrb[0].mxu0
      %v5055 = vpop.f32.mrb[0].mxu0
      %v5056 = vadd.f32 %v4604, %v5055
      %v5057 = vpop.f32.mrb[0].mxu0
      %5058 = vmatprep.mubr.bf16.mxu0 %v4318
      %5059 = vmatmul.mubr.bf16.gmra.mrb[0].mxu0 %v4317
      %v5060 = vpop.f32.mrb[0].mxu0
      %v5061 = vadd.f32 %v4604, %v5060
      %v5062 = vpop.f32.mrb[0].mxu0
      %v5063 = vpop.f32.mrb[0].mxu0
      %v5064 = vadd.f32 %v4604, %v5063
      %v5065 = vpop.f32.mrb[0].mxu0
      %5066 = vmatprep.mubr.bf16.mxu0 %v4323
      %5067 = vmatmul.mubr.bf16.gmra.mrb[0].mxu0 %v4322
      %v5068 = vpop.f32.mrb[0].mxu0
      %v5069 = vadd.f32 %v4604, %v5068
      %v5070 = vpop.f32.mrb[0].mxu0
      %v5071 = vpop.f32.mrb[0].mxu0
      %v5072 = vadd.f32 %v4604, %v5071
      %v5073 = vpop.f32.mrb[0].mxu0
      %5074 = vmatprep.mubr.bf16.mxu0 %v4328
      %5075 = vmatmul.mubr.bf16.gmra.mrb[0].mxu0 %v4327
      %v5076 = vpop.f32.mrb[0].mxu0
      %v5077 = vadd.f32 %v4604, %v5076
      %v5078 = vpop.f32.mrb[0].mxu0
      %v5079 = vpop.f32.mrb[0].mxu0
      %v5080 = vadd.f32 %v4604, %v5079
      %v5081 = vpop.f32.mrb[0].mxu0
      %5082 = vmatprep.mubr.bf16.mxu0 %v4333
      %5083 = vmatmul.mubr.bf16.gmra.mrb[0].mxu0 %v4332
      %v5084 = vpop.f32.mrb[0].mxu0
      %v5085 = vadd.f32 %v4604, %v5084
      %v5086 = vpop.f32.mrb[0].mxu0
      %v5087 = vpop.f32.mrb[0].mxu0
      %v5088 = vadd.f32 %v4604, %v5087
      %v5089 = vpop.f32.mrb[0].mxu0
      %5090 = vmatprep.mubr.bf16.mxu0 %v4338
      %5091 = vmatmul.mubr.bf16.gmra.mrb[0].mxu0 %v4337
      %v5092 = vpop.f32.mrb[0].mxu0
      %v5093 = vadd.f32 %v4604, %v5092
      %v5094 = vpop.f32.mrb[0].mxu0
      %v5095 = vpop.f32.mrb[0].mxu0
      %v5096 = vadd.f32 %v4604, %v5095
      %v5097 = vpop.f32.mrb[0].mxu0
      %5098 = vmatprep.mubr.bf16.mxu0 %v4343
      %5099 = vmatmul.mubr.bf16.gmra.mrb[0].mxu0 %v4342
      %v5100 = vpop.f32.mrb[0].mxu0
      %v5101 = vadd.f32 %v4604, %v5100
      %v5102 = vpop.f32.mrb[0].mxu0
      %v5103 = vpop.f32.mrb[0].mxu0
      %v5104 = vadd.f32 %v4604, %v5103
      %v5105 = vpop.f32.mrb[0].mxu0
      %5106 = vmatprep.mubr.bf16.mxu0 %v4348
      %5107 = vmatmul.mubr.bf16.gmra.mrb[0].mxu0 %v4347
      %v5108 = vpop.f32.mrb[0].mxu0
      %v5109 = vadd.f32 %v4604, %v5108
      %v5110 = vpop.f32.mrb[0].mxu0
      %v5111 = vpop.f32.mrb[0].mxu0
      %v5112 = vadd.f32 %v4604, %v5111
      %v5113 = vpop.f32.mrb[0].mxu0
      %5114 = vmatprep.mubr.bf16.mxu0 %v4353
      %5115 = vmatmul.mubr.bf16.gmra.mrb[0].mxu0 %v4352
      %v5116 = vpop.f32.mrb[0].mxu0
      %v5117 = vadd.f32 %v4604, %v5116
      %v5118 = vpop.f32.mrb[0].mxu0
      %v5119 = vpop.f32.mrb[0].mxu0
      %v5120 = vadd.f32 %v4604, %v5119
      %v5121 = vpop.f32.mrb[0].mxu0
      %5122 = vmatprep.mubr.bf16.mxu0 %v4358
      %5123 = vmatmul.mubr.bf16.gmra.mrb[0].mxu0 %v4357
      %v5124 = vpop.f32.mrb[0].mxu0
      %v5125 = vadd.f32 %v4604, %v5124
      %v5126 = vpop.f32.mrb[0].mxu0
      %v5127 = vpop.f32.mrb[0].mxu0
      %v5128 = vadd.f32 %v4604, %v5127
      %v5129 = vpop.f32.mrb[0].mxu0
      %5130 = vmatprep.mubr.bf16.mxu0 %v4363
      %5131 = vmatmul.mubr.bf16.gmra.mrb[0].mxu0 %v4362
      %v5132 = vpop.f32.mrb[0].mxu0
      %v5133 = vadd.f32 %v4604, %v5132
      %v5134 = vpop.f32.mrb[0].mxu0
      %v5135 = vpop.f32.mrb[0].mxu0
      %v5136 = vadd.f32 %v4604, %v5135
      %v5137 = vpop.f32.mrb[0].mxu0
      %5138 = vmatprep.mubr.bf16.mxu0 %v4368
      %5139 = vmatmul.mubr.bf16.gmra.mrb[0].mxu0 %v4367
      %v5140 = vpop.f32.mrb[0].mxu0
      %v5141 = vadd.f32 %v4604, %v5140
      %v5142 = vpop.f32.mrb[0].mxu0
      %v5143 = vpop.f32.mrb[0].mxu0
      %v5144 = vadd.f32 %v4604, %v5143
      %v5145 = vpop.f32.mrb[0].mxu0
      %5146 = vmatprep.mubr.bf16.mxu0 %v4373
      %5147 = vmatmul.mubr.bf16.gmra.mrb[0].mxu0 %v4372
      %v5148 = vpop.f32.mrb[0].mxu0
      %v5149 = vadd.f32 %v4604, %v5148
      %v5150 = vpop.f32.mrb[0].mxu0
      %v5151 = vpop.f32.mrb[0].mxu0
      %v5152 = vadd.f32 %v4604, %v5151
      %v5153 = vpop.f32.mrb[0].mxu0
      %5154 = vmatprep.mubr.bf16.mxu0 %v4378
      %5155 = vmatmul.mubr.bf16.gmra.mrb[0].mxu0 %v4377
      %v5156 = vpop.f32.mrb[0].mxu0
      %v5157 = vadd.f32 %v4604, %v5156
      %v5158 = vpop.f32.mrb[0].mxu0
      %v5159 = vpop.f32.mrb[0].mxu0
      %v5160 = vadd.f32 %v4604, %v5159
      %v5161 = vpop.f32.mrb[0].mxu0
      %5162 = vmatprep.mubr.bf16.mxu0 %v4383
      %5163 = vmatmul.mubr.bf16.gmra.mrb[0].mxu0 %v4382
      %v5164 = vpop.f32.mrb[0].mxu0
      %v5165 = vadd.f32 %v4604, %v5164
      %v5166 = vpop.f32.mrb[0].mxu0
      %v5167 = vpop.f32.mrb[0].mxu0
      %v5168 = vadd.f32 %v4604, %v5167
      %v5169 = vpop.f32.mrb[0].mxu0
      %5170 = vmatprep.mubr.bf16.mxu0 %v4388
      %5171 = vmatmul.mubr.bf16.gmra.mrb[0].mxu0 %v4387
      %v5172 = vpop.f32.mrb[0].mxu0
      %v5173 = vadd.f32 %v4604, %v5172
      %v5174 = vpop.f32.mrb[0].mxu0
      %v5175 = vpop.f32.mrb[0].mxu0
      %v5176 = vadd.f32 %v4604, %v5175
      %v5177 = vpop.f32.mrb[0].mxu0
      %5178 = vmatprep.mubr.bf16.mxu0 %v4393
      %5179 = vmatmul.mubr.bf16.gmra.mrb[0].mxu0 %v4392
      %v5180 = vpop.f32.mrb[0].mxu0
      %v5181 = vadd.f32 %v4604, %v5180
      %v5182 = vpop.f32.mrb[0].mxu0
      %v5183 = vpop.f32.mrb[0].mxu0
      %v5184 = vadd.f32 %v4604, %v5183
      %v5185 = vpop.f32.mrb[0].mxu0
      %5186 = vmatprep.mubr.bf16.mxu0 %v4398
      %5187 = vmatmul.mubr.bf16.gmra.mrb[0].mxu0 %v4397
      %v5188 = vpop.f32.mrb[0].mxu0
      %v5189 = vadd.f32 %v4604, %v5188
      %v5190 = vpop.f32.mrb[0].mxu0
      %v5191 = vpop.f32.mrb[0].mxu0
      %v5192 = vadd.f32 %v4604, %v5191
      %v5193 = vpop.f32.mrb[0].mxu0
      %5194 = vmatprep.mubr.bf16.mxu0 %v4403
      %5195 = vmatmul.mubr.bf16.gmra.mrb[0].mxu0 %v4402
      %v5196 = vpop.f32.mrb[0].mxu0
      %v5197 = vadd.f32 %v4604, %v5196
      %v5198 = vpop.f32.mrb[0].mxu0
      %v5199 = vpop.f32.mrb[0].mxu0
      %v5200 = vadd.f32 %v4604, %v5199
      %v5201 = vpop.f32.mrb[0].mxu0
      %5202 = vmatprep.mubr.bf16.mxu0 %v4408
      %5203 = vmatmul.mubr.bf16.gmra.mrb[0].mxu0 %v4407
      %v5204 = vpop.f32.mrb[0].mxu0
      %v5205 = vadd.f32 %v4604, %v5204
      %v5206 = vpop.f32.mrb[0].mxu0
      %v5207 = vpop.f32.mrb[0].mxu0
      %v5208 = vadd.f32 %v4604, %v5207
      %v5209 = vpop.f32.mrb[0].mxu0
      %5210 = vmatprep.mubr.bf16.mxu0 %v4413
      %5211 = vmatmul.mubr.bf16.gmra.mrb[0].mxu0 %v4412
      %v5212 = vpop.f32.mrb[0].mxu0
      %v5213 = vadd.f32 %v4604, %v5212
      %v5214 = vpop.f32.mrb[0].mxu0
      %v5215 = vpop.f32.mrb[0].mxu0
      %v5216 = vadd.f32 %v4604, %v5215
      %v5217 = vpop.f32.mrb[0].mxu0
      %5218 = vmatprep.mubr.bf16.mxu0 %v4418
      %5219 = vmatmul.mubr.bf16.gmra.mrb[0].mxu0 %v4417
      %v5220 = vpop.f32.mrb[0].mxu0
      %v5221 = vadd.f32 %v4604, %v5220
      %v5222 = vpop.f32.mrb[0].mxu0
      %v5223 = vpop.f32.mrb[0].mxu0
      %v5224 = vadd.f32 %v4604, %v5223
      %v5225 = vpop.f32.mrb[0].mxu0
      %5226 = vmatprep.mubr.bf16.mxu0 %v4423
      %5227 = vmatmul.mubr.bf16.gmra.mrb[0].mxu0 %v4422
      %v5228 = vpop.f32.mrb[0].mxu0
      %v5229 = vadd.f32 %v4604, %v5228
      %v5230 = vpop.f32.mrb[0].mxu0
      %v5231 = vpop.f32.mrb[0].mxu0
      %v5232 = vadd.f32 %v4604, %v5231
      %v5233 = vpop.f32.mrb[0].mxu0
      %5234 = vmatprep.mubr.bf16.mxu0 %v4428
      %5235 = vmatmul.mubr.bf16.gmra.mrb[0].mxu0 %v4427
      %v5236 = vpop.f32.mrb[0].mxu0
      %v5237 = vadd.f32 %v4604, %v5236
      %v5238 = vpop.f32.mrb[0].mxu0
      %v5239 = vpop.f32.mrb[0].mxu0
      %v5240 = vadd.f32 %v4604, %v5239
      %v5241 = vpop.f32.mrb[0].mxu0
      %5242 = vmatprep.mubr.bf16.mxu0 %v4433
      %5243 = vmatmul.mubr.bf16.gmra.mrb[0].mxu0 %v4432
      %v5244 = vpop.f32.mrb[0].mxu0
      %v5245 = vadd.f32 %v4604, %v5244
      %v5246 = vpop.f32.mrb[0].mxu0
      %v5247 = vpop.f32.mrb[0].mxu0
      %v5248 = vadd.f32 %v4604, %v5247
      %v5249 = vpop.f32.mrb[0].mxu0
      %5250 = vmatprep.mubr.bf16.mxu0 %v4438
      %5251 = vmatmul.mubr.bf16.gmra.mrb[0].mxu0 %v4437
      %v5252 = vpop.f32.mrb[0].mxu0
      %v5253 = vadd.f32 %v4604, %v5252
      %v5254 = vpop.f32.mrb[0].mxu0
      %v5255 = vpop.f32.mrb[0].mxu0
      %v5256 = vadd.f32 %v4604, %v5255
      %v5257 = vpop.f32.mrb[0].mxu0
      %5258 = vmatprep.mubr.bf16.mxu0 %v4443
      %5259 = vmatmul.mubr.bf16.gmra.mrb[0].mxu0 %v4442
      %v5260 = vpop.f32.mrb[0].mxu0
      %v5261 = vadd.f32 %v4604, %v5260
      %v5262 = vpop.f32.mrb[0].mxu0
      %v5263 = vpop.f32.mrb[0].mxu0
      %v5264 = vadd.f32 %v4604, %v5263
      %v5265 = vpop.f32.mrb[0].mxu0
      %5266 = vmatprep.mubr.bf16.mxu0 %v4448
      %5267 = vmatmul.mubr.bf16.gmra.mrb[0].mxu0 %v4447
      %v5268 = vpop.f32.mrb[0].mxu0
      %v5269 = vadd.f32 %v4604, %v5268
      %v5270 = vpop.f32.mrb[0].mxu0
      %v5271 = vpop.f32.mrb[0].mxu0
      %v5272 = vadd.f32 %v4604, %v5271
      %v5273 = vpop.f32.mrb[0].mxu0
      %5274 = vmatprep.mubr.bf16.mxu0 %v4453
      %5275 = vmatmul.mubr.bf16.gmra.mrb[0].mxu0 %v4452
      %v5276 = vpop.f32.mrb[0].mxu0
      %v5277 = vadd.f32 %v4604, %v5276
      %v5278 = vpop.f32.mrb[0].mxu0
      %v5279 = vpop.f32.mrb[0].mxu0
      %v5280 = vadd.f32 %v4604, %v5279
      %v5281 = vpop.f32.mrb[0].mxu0
      %5282 = vmatprep.mubr.bf16.mxu0 %v4458
      %5283 = vmatmul.mubr.bf16.gmra.mrb[0].mxu0 %v4457
      %v5284 = vpop.f32.mrb[0].mxu0
      %v5285 = vadd.f32 %v4604, %v5284
      %v5286 = vpop.f32.mrb[0].mxu0
      %v5287 = vpop.f32.mrb[0].mxu0
      %v5288 = vadd.f32 %v4604, %v5287
      %v5289 = vpop.f32.mrb[0].mxu0
      %5290 = vmatprep.mubr.bf16.mxu0 %v4463
      %5291 = vmatmul.mubr.bf16.gmra.mrb[0].mxu0 %v4462
      %v5292 = vpop.f32.mrb[0].mxu0
      %v5293 = vadd.f32 %v4604, %v5292
      %v5294 = vpop.f32.mrb[0].mxu0
      %v5295 = vpop.f32.mrb[0].mxu0
      %v5296 = vadd.f32 %v4604, %v5295
      %v5297 = vpop.f32.mrb[0].mxu0
      %5298 = vmatprep.mubr.bf16.mxu0 %v4468
      %5299 = vmatmul.mubr.bf16.gmra.mrb[0].mxu0 %v4467
      %v5300 = vpop.f32.mrb[0].mxu0
      %v5301 = vadd.f32 %v4604, %v5300
      %v5302 = vpop.f32.mrb[0].mxu0
      %v5303 = vpop.f32.mrb[0].mxu0
      %v5304 = vadd.f32 %v4604, %v5303
      %v5305 = vpop.f32.mrb[0].mxu0
      %5306 = vmatprep.mubr.bf16.mxu0 %v4473
      %5307 = vmatmul.mubr.bf16.gmra.mrb[0].mxu0 %v4472
      %v5308 = vpop.f32.mrb[0].mxu0
      %v5309 = vadd.f32 %v4604, %v5308
      %v5310 = vpop.f32.mrb[0].mxu0
      %v5311 = vpop.f32.mrb[0].mxu0
      %v5312 = vadd.f32 %v4604, %v5311
      %v5313 = vpop.f32.mrb[0].mxu0
      %5314 = vmatprep.mubr.bf16.mxu0 %v4478
      %5315 = vmatmul.mubr.bf16.gmra.mrb[0].mxu0 %v4477
      %v5316 = vpop.f32.mrb[0].mxu0
      %v5317 = vadd.f32 %v4604, %v5316
      %v5318 = vpop.f32.mrb[0].mxu0
      %v5319 = vpop.f32.mrb[0].mxu0
      %v5320 = vadd.f32 %v4604, %v5319
      %v5321 = vpop.f32.mrb[0].mxu0
      %5322 = vmatprep.mubr.bf16.mxu0 %v4483
      %5323 = vmatmul.mubr.bf16.gmra.mrb[0].mxu0 %v4482
      %v5324 = vpop.f32.mrb[0].mxu0
      %v5325 = vadd.f32 %v4604, %v5324
      %v5326 = vpop.f32.mrb[0].mxu0
      %v5327 = vpop.f32.mrb[0].mxu0
      %v5328 = vadd.f32 %v4604, %v5327
      %v5329 = vpop.f32.mrb[0].mxu0
      %5330 = vmatprep.mubr.bf16.mxu0 %v4488
      %5331 = vmatmul.mubr.bf16.gmra.mrb[0].mxu0 %v4487
      %v5332 = vpop.f32.mrb[0].mxu0
      %v5333 = vadd.f32 %v4604, %v5332
      %v5334 = vpop.f32.mrb[0].mxu0
      %v5335 = vpop.f32.mrb[0].mxu0
      %v5336 = vadd.f32 %v4604, %v5335
      %v5337 = vpop.f32.mrb[0].mxu0
      %5338 = vmatprep.mubr.bf16.mxu0 %v4493
      %5339 = vmatmul.mubr.bf16.gmra.mrb[0].mxu0 %v4492
      %v5340 = vpop.f32.mrb[0].mxu0
      %v5341 = vadd.f32 %v4604, %v5340
      %v5342 = vpop.f32.mrb[0].mxu0
      %v5343 = vpop.f32.mrb[0].mxu0
      %v5344 = vadd.f32 %v4604, %v5343
      %v5345 = vpop.f32.mrb[0].mxu0
      %5346 = vmatprep.mubr.bf16.mxu0 %v4498
      %5347 = vmatmul.mubr.bf16.gmra.mrb[0].mxu0 %v4497
      %v5348 = vpop.f32.mrb[0].mxu0
      %v5349 = vadd.f32 %v4604, %v5348
      %v5350 = vpop.f32.mrb[0].mxu0
      %v5351 = vpop.f32.mrb[0].mxu0
      %v5352 = vadd.f32 %v4604, %v5351
      %v5353 = vpop.f32.mrb[0].mxu0
      %5354 = vmatprep.mubr.bf16.mxu0 %v4503
      %5355 = vmatmul.mubr.bf16.gmra.mrb[0].mxu0 %v4502
      %v5356 = vpop.f32.mrb[0].mxu0
      %v5357 = vadd.f32 %v4604, %v5356
      %v5358 = vpop.f32.mrb[0].mxu0
      %v5359 = vpop.f32.mrb[0].mxu0
      %v5360 = vadd.f32 %v4604, %v5359
      %v5361 = vpop.f32.mrb[0].mxu0
      %5362 = vmatprep.mubr.bf16.mxu0 %v4508
      %5363 = vmatmul.mubr.bf16.gmra.mrb[0].mxu0 %v4507
      %v5364 = vpop.f32.mrb[0].mxu0
      %v5365 = vadd.f32 %v4604, %v5364
      %v5366 = vpop.f32.mrb[0].mxu0
      %v5367 = vpop.f32.mrb[0].mxu0
      %v5368 = vadd.f32 %v4604, %v5367
      %v5369 = vpop.f32.mrb[0].mxu0
      %5370 = vmatprep.mubr.bf16.mxu0 %v4513
      %5371 = vmatmul.mubr.bf16.gmra.mrb[0].mxu0 %v4512
      %v5372 = vpop.f32.mrb[0].mxu0
      %v5373 = vadd.f32 %v4604, %v5372
      %v5374 = vpop.f32.mrb[0].mxu0
      %v5375 = vpop.f32.mrb[0].mxu0
      %v5376 = vadd.f32 %v4604, %v5375
      %v5377 = vpop.f32.mrb[0].mxu0
      %5378 = vmatprep.mubr.bf16.mxu0 %v4518
      %5379 = vmatmul.mubr.bf16.gmra.mrb[0].mxu0 %v4517
      %v5380 = vpop.f32.mrb[0].mxu0
      %v5381 = vadd.f32 %v4604, %v5380
      %v5382 = vpop.f32.mrb[0].mxu0
      %v5383 = vpop.f32.mrb[0].mxu0
      %v5384 = vadd.f32 %v4604, %v5383
      %v5385 = vpop.f32.mrb[0].mxu0
      %5386 = vmatprep.mubr.bf16.mxu0 %v4523
      %5387 = vmatmul.mubr.bf16.gmra.mrb[0].mxu0 %v4522
      %v5388 = vpop.f32.mrb[0].mxu0
      %v5389 = vadd.f32 %v4604, %v5388
      %v5390 = vpop.f32.mrb[0].mxu0
      %v5391 = vpop.f32.mrb[0].mxu0
      %v5392 = vadd.f32 %v4604, %v5391
      %v5393 = vpop.f32.mrb[0].mxu0
      %5394 = vdwg.mxu0
      %5395 = vmatprep.subr.bf16.mxu0 0
      %5396 = vmatpush1.bf16.msra.mxu0 %v4766
      %5397 = vmatprep.subr.bf16.mxu0 0
      %5398 = vmatpush1.bf16.msra.mxu0 %v4767
      %5399 = vmatprep.subr.bf16.mxu0 0
      %5400 = vmatpush1.bf16.msra.mxu0 %v4768
      %5401 = vmatprep.subr.bf16.mxu0 0
      %5402 = vmatpush1.bf16.msra.mxu0 %v4769
      %5403 = vmatprep.subr.bf16.mxu0 0
      %5404 = vmatpush1.bf16.msra.mxu0 %v4770
      %5405 = vmatprep.subr.bf16.mxu0 0
      %5406 = vmatpush1.bf16.msra.mxu0 %v4771
      %5407 = vmatprep.subr.bf16.mxu0 0
      %5408 = vmatpush1.bf16.msra.mxu0 %v4772
      %5409 = vmatprep.subr.bf16.mxu0 0
      %5410 = vmatpush1.bf16.msra.mxu0 %v4773
      %5411 = vmatprep.subr.bf16.mxu0 0
      %5412 = vmatpush1.bf16.msra.mxu0 %v4774
      %5413 = vmatprep.subr.bf16.mxu0 0
      %5414 = vmatpush1.bf16.msra.mxu0 %v4775
      %5415 = vmatprep.subr.bf16.mxu0 0
      %5416 = vmatpush1.bf16.msra.mxu0 %v4776
      %5417 = vmatprep.subr.bf16.mxu0 0
      %5418 = vmatpush1.bf16.msra.mxu0 %v4777
      %5419 = vmatprep.subr.bf16.mxu0 0
      %5420 = vmatpush1.bf16.msra.mxu0 %v4778
      %5421 = vmatprep.subr.bf16.mxu0 0
      %5422 = vmatpush1.bf16.msra.mxu0 %v4779
      %5423 = vmatprep.subr.bf16.mxu0 0
      %5424 = vmatpush1.bf16.msra.mxu0 %v4780
      %5425 = vmatprep.subr.bf16.mxu0 0
      %5426 = vmatpush1.bf16.msra.mxu0 %v4781
      %5427 = vmatprep.mubr.bf16.mxu0 %v4285
      %5428 = vmatmul.mubr.bf16.gmra.mrb[0].mxu0 %v4284
      %v5429 = vpop.f32.mrb[0].mxu0
      %v5430 = vadd.f32 %v5005, %v5429
      %v5431 = vpop.f32.mrb[0].mxu0
      %v5432 = vpop.f32.mrb[0].mxu0
      %v5433 = vadd.f32 %v5008, %v5432
      %v5434 = vpop.f32.mrb[0].mxu0
      %5435 = vmatprep.mubr.bf16.mxu0 %v4290
      %5436 = vmatmul.mubr.bf16.gmra.mrb[0].mxu0 %v4289
      %v5437 = vpop.f32.mrb[0].mxu0
      %v5438 = vadd.f32 %v5013, %v5437
      %v5439 = vpop.f32.mrb[0].mxu0
      %v5440 = vpop.f32.mrb[0].mxu0
      %v5441 = vadd.f32 %v5016, %v5440
      %v5442 = vpop.f32.mrb[0].mxu0
      %5443 = vmatprep.mubr.bf16.mxu0 %v4295
      %5444 = vmatmul.mubr.bf16.gmra.mrb[0].mxu0 %v4294
      %v5445 = vpop.f32.mrb[0].mxu0
      %v5446 = vadd.f32 %v5021, %v5445
      %v5447 = vpop.f32.mrb[0].mxu0
      %v5448 = vpop.f32.mrb[0].mxu0
      %v5449 = vadd.f32 %v5024, %v5448
      %v5450 = vpop.f32.mrb[0].mxu0
      %5451 = vmatprep.mubr.bf16.mxu0 %v4300
      %5452 = vmatmul.mubr.bf16.gmra.mrb[0].mxu0 %v4299
      %v5453 = vpop.f32.mrb[0].mxu0
      %v5454 = vadd.f32 %v5029, %v5453
      %v5455 = vpop.f32.mrb[0].mxu0
      %v5456 = vpop.f32.mrb[0].mxu0
      %v5457 = vadd.f32 %v5032, %v5456
      %v5458 = vpop.f32.mrb[0].mxu0
      %5459 = vmatprep.mubr.bf16.mxu0 %v4305
      %5460 = vmatmul.mubr.bf16.gmra.mrb[0].mxu0 %v4304
      %v5461 = vpop.f32.mrb[0].mxu0
      %v5462 = vadd.f32 %v5037, %v5461
      %v5463 = vpop.f32.mrb[0].mxu0
      %v5464 = vpop.f32.mrb[0].mxu0
      %v5465 = vadd.f32 %v5040, %v5464
      %v5466 = vpop.f32.mrb[0].mxu0
      %5467 = vmatprep.mubr.bf16.mxu0 %v4310
      %5468 = vmatmul.mubr.bf16.gmra.mrb[0].mxu0 %v4309
      %v5469 = vpop.f32.mrb[0].mxu0
      %v5470 = vadd.f32 %v5045, %v5469
      %v5471 = vpop.f32.mrb[0].mxu0
      %v5472 = vpop.f32.mrb[0].mxu0
      %v5473 = vadd.f32 %v5048, %v5472
      %v5474 = vpop.f32.mrb[0].mxu0
      %5475 = vmatprep.mubr.bf16.mxu0 %v4315
      %5476 = vmatmul.mubr.bf16.gmra.mrb[0].mxu0 %v4314
      %v5477 = vpop.f32.mrb[0].mxu0
      %v5478 = vadd.f32 %v5053, %v5477
      %v5479 = vpop.f32.mrb[0].mxu0
      %v5480 = vpop.f32.mrb[0].mxu0
      %v5481 = vadd.f32 %v5056, %v5480
      %v5482 = vpop.f32.mrb[0].mxu0
      %5483 = vmatprep.mubr.bf16.mxu0 %v4320
      %5484 = vmatmul.mubr.bf16.gmra.mrb[0].mxu0 %v4319
      %v5485 = vpop.f32.mrb[0].mxu0
      %v5486 = vadd.f32 %v5061, %v5485
      %v5487 = vpop.f32.mrb[0].mxu0
      %v5488 = vpop.f32.mrb[0].mxu0
      %v5489 = vadd.f32 %v5064, %v5488
      %v5490 = vpop.f32.mrb[0].mxu0
      %5491 = vmatprep.mubr.bf16.mxu0 %v4325
      %5492 = vmatmul.mubr.bf16.gmra.mrb[0].mxu0 %v4324
      %v5493 = vpop.f32.mrb[0].mxu0
      %v5494 = vadd.f32 %v5069, %v5493
      %v5495 = vpop.f32.mrb[0].mxu0
      %v5496 = vpop.f32.mrb[0].mxu0
      %v5497 = vadd.f32 %v5072, %v5496
      %v5498 = vpop.f32.mrb[0].mxu0
      %5499 = vmatprep.mubr.bf16.mxu0 %v4330
      %5500 = vmatmul.mubr.bf16.gmra.mrb[0].mxu0 %v4329
      %v5501 = vpop.f32.mrb[0].mxu0
      %v5502 = vadd.f32 %v5077, %v5501
      %v5503 = vpop.f32.mrb[0].mxu0
      %v5504 = vpop.f32.mrb[0].mxu0
      %v5505 = vadd.f32 %v5080, %v5504
      %v5506 = vpop.f32.mrb[0].mxu0
      %5507 = vmatprep.mubr.bf16.mxu0 %v4335
      %5508 = vmatmul.mubr.bf16.gmra.mrb[0].mxu0 %v4334
      %v5509 = vpop.f32.mrb[0].mxu0
      %v5510 = vadd.f32 %v5085, %v5509
      %v5511 = vpop.f32.mrb[0].mxu0
      %v5512 = vpop.f32.mrb[0].mxu0
      %v5513 = vadd.f32 %v5088, %v5512
      %v5514 = vpop.f32.mrb[0].mxu0
      %5515 = vmatprep.mubr.bf16.mxu0 %v4340
      %5516 = vmatmul.mubr.bf16.gmra.mrb[0].mxu0 %v4339
      %v5517 = vpop.f32.mrb[0].mxu0
      %v5518 = vadd.f32 %v5093, %v5517
      %v5519 = vpop.f32.mrb[0].mxu0
      %v5520 = vpop.f32.mrb[0].mxu0
      %v5521 = vadd.f32 %v5096, %v5520
      %v5522 = vpop.f32.mrb[0].mxu0
      %5523 = vmatprep.mubr.bf16.mxu0 %v4345
      %5524 = vmatmul.mubr.bf16.gmra.mrb[0].mxu0 %v4344
      %v5525 = vpop.f32.mrb[0].mxu0
      %v5526 = vadd.f32 %v5101, %v5525
      %v5527 = vpop.f32.mrb[0].mxu0
      %v5528 = vpop.f32.mrb[0].mxu0
      %v5529 = vadd.f32 %v5104, %v5528
      %v5530 = vpop.f32.mrb[0].mxu0
      %5531 = vmatprep.mubr.bf16.mxu0 %v4350
      %5532 = vmatmul.mubr.bf16.gmra.mrb[0].mxu0 %v4349
      %v5533 = vpop.f32.mrb[0].mxu0
      %v5534 = vadd.f32 %v5109, %v5533
      %v5535 = vpop.f32.mrb[0].mxu0
      %v5536 = vpop.f32.mrb[0].mxu0
      %v5537 = vadd.f32 %v5112, %v5536
      %v5538 = vpop.f32.mrb[0].mxu0
      %5539 = vmatprep.mubr.bf16.mxu0 %v4355
      %5540 = vmatmul.mubr.bf16.gmra.mrb[0].mxu0 %v4354
      %v5541 = vpop.f32.mrb[0].mxu0
      %v5542 = vadd.f32 %v5117, %v5541
      %v5543 = vpop.f32.mrb[0].mxu0
      %v5544 = vpop.f32.mrb[0].mxu0
      %v5545 = vadd.f32 %v5120, %v5544
      %v5546 = vpop.f32.mrb[0].mxu0
      %5547 = vmatprep.mubr.bf16.mxu0 %v4360
      %5548 = vmatmul.mubr.bf16.gmra.mrb[0].mxu0 %v4359
      %v5549 = vpop.f32.mrb[0].mxu0
      %v5550 = vadd.f32 %v5125, %v5549
      %v5551 = vpop.f32.mrb[0].mxu0
      %v5552 = vpop.f32.mrb[0].mxu0
      %v5553 = vadd.f32 %v5128, %v5552
      %v5554 = vpop.f32.mrb[0].mxu0
      %5555 = vmatprep.mubr.bf16.mxu0 %v4365
      %5556 = vmatmul.mubr.bf16.gmra.mrb[0].mxu0 %v4364
      %v5557 = vpop.f32.mrb[0].mxu0
      %v5558 = vadd.f32 %v5133, %v5557
      %v5559 = vpop.f32.mrb[0].mxu0
      %v5560 = vpop.f32.mrb[0].mxu0
      %v5561 = vadd.f32 %v5136, %v5560
      %v5562 = vpop.f32.mrb[0].mxu0
      %5563 = vmatprep.mubr.bf16.mxu0 %v4370
      %5564 = vmatmul.mubr.bf16.gmra.mrb[0].mxu0 %v4369
      %v5565 = vpop.f32.mrb[0].mxu0
      %v5566 = vadd.f32 %v5141, %v5565
      %v5567 = vpop.f32.mrb[0].mxu0
      %v5568 = vpop.f32.mrb[0].mxu0
      %v5569 = vadd.f32 %v5144, %v5568
      %v5570 = vpop.f32.mrb[0].mxu0
      %5571 = vmatprep.mubr.bf16.mxu0 %v4375
      %5572 = vmatmul.mubr.bf16.gmra.mrb[0].mxu0 %v4374
      %v5573 = vpop.f32.mrb[0].mxu0
      %v5574 = vadd.f32 %v5149, %v5573
      %v5575 = vpop.f32.mrb[0].mxu0
      %v5576 = vpop.f32.mrb[0].mxu0
      %v5577 = vadd.f32 %v5152, %v5576
      %v5578 = vpop.f32.mrb[0].mxu0
      %5579 = vmatprep.mubr.bf16.mxu0 %v4380
      %5580 = vmatmul.mubr.bf16.gmra.mrb[0].mxu0 %v4379
      %v5581 = vpop.f32.mrb[0].mxu0
      %v5582 = vadd.f32 %v5157, %v5581
      %v5583 = vpop.f32.mrb[0].mxu0
      %v5584 = vpop.f32.mrb[0].mxu0
      %v5585 = vadd.f32 %v5160, %v5584
      %v5586 = vpop.f32.mrb[0].mxu0
      %5587 = vmatprep.mubr.bf16.mxu0 %v4385
      %5588 = vmatmul.mubr.bf16.gmra.mrb[0].mxu0 %v4384
      %v5589 = vpop.f32.mrb[0].mxu0
      %v5590 = vadd.f32 %v5165, %v5589
      %v5591 = vpop.f32.mrb[0].mxu0
      %v5592 = vpop.f32.mrb[0].mxu0
      %v5593 = vadd.f32 %v5168, %v5592
      %v5594 = vpop.f32.mrb[0].mxu0
      %5595 = vmatprep.mubr.bf16.mxu0 %v4390
      %5596 = vmatmul.mubr.bf16.gmra.mrb[0].mxu0 %v4389
      %v5597 = vpop.f32.mrb[0].mxu0
      %v5598 = vadd.f32 %v5173, %v5597
      %v5599 = vpop.f32.mrb[0].mxu0
      %v5600 = vpop.f32.mrb[0].mxu0
      %v5601 = vadd.f32 %v5176, %v5600
      %v5602 = vpop.f32.mrb[0].mxu0
      %5603 = vmatprep.mubr.bf16.mxu0 %v4395
      %5604 = vmatmul.mubr.bf16.gmra.mrb[0].mxu0 %v4394
      %v5605 = vpop.f32.mrb[0].mxu0
      %v5606 = vadd.f32 %v5181, %v5605
      %v5607 = vpop.f32.mrb[0].mxu0
      %v5608 = vpop.f32.mrb[0].mxu0
      %v5609 = vadd.f32 %v5184, %v5608
      %v5610 = vpop.f32.mrb[0].mxu0
      %5611 = vmatprep.mubr.bf16.mxu0 %v4400
      %5612 = vmatmul.mubr.bf16.gmra.mrb[0].mxu0 %v4399
      %v5613 = vpop.f32.mrb[0].mxu0
      %v5614 = vadd.f32 %v5189, %v5613
      %v5615 = vpop.f32.mrb[0].mxu0
      %v5616 = vpop.f32.mrb[0].mxu0
      %v5617 = vadd.f32 %v5192, %v5616
      %v5618 = vpop.f32.mrb[0].mxu0
      %5619 = vmatprep.mubr.bf16.mxu0 %v4405
      %5620 = vmatmul.mubr.bf16.gmra.mrb[0].mxu0 %v4404
      %v5621 = vpop.f32.mrb[0].mxu0
      %v5622 = vadd.f32 %v5197, %v5621
      %v5623 = vpop.f32.mrb[0].mxu0
      %v5624 = vpop.f32.mrb[0].mxu0
      %v5625 = vadd.f32 %v5200, %v5624
      %v5626 = vpop.f32.mrb[0].mxu0
      %5627 = vmatprep.mubr.bf16.mxu0 %v4410
      %5628 = vmatmul.mubr.bf16.gmra.mrb[0].mxu0 %v4409
      %v5629 = vpop.f32.mrb[0].mxu0
      %v5630 = vadd.f32 %v5205, %v5629
      %v5631 = vpop.f32.mrb[0].mxu0
      %v5632 = vpop.f32.mrb[0].mxu0
      %v5633 = vadd.f32 %v5208, %v5632
      %v5634 = vpop.f32.mrb[0].mxu0
      %5635 = vmatprep.mubr.bf16.mxu0 %v4415
      %5636 = vmatmul.mubr.bf16.gmra.mrb[0].mxu0 %v4414
      %v5637 = vpop.f32.mrb[0].mxu0
      %v5638 = vadd.f32 %v5213, %v5637
      %v5639 = vpop.f32.mrb[0].mxu0
      %v5640 = vpop.f32.mrb[0].mxu0
      %v5641 = vadd.f32 %v5216, %v5640
      %v5642 = vpop.f32.mrb[0].mxu0
      %5643 = vmatprep.mubr.bf16.mxu0 %v4420
      %5644 = vmatmul.mubr.bf16.gmra.mrb[0].mxu0 %v4419
      %v5645 = vpop.f32.mrb[0].mxu0
      %v5646 = vadd.f32 %v5221, %v5645
      %v5647 = vpop.f32.mrb[0].mxu0
      %v5648 = vpop.f32.mrb[0].mxu0
      %v5649 = vadd.f32 %v5224, %v5648
      %v5650 = vpop.f32.mrb[0].mxu0
      %5651 = vmatprep.mubr.bf16.mxu0 %v4425
      %5652 = vmatmul.mubr.bf16.gmra.mrb[0].mxu0 %v4424
      %v5653 = vpop.f32.mrb[0].mxu0
      %v5654 = vadd.f32 %v5229, %v5653
      %v5655 = vpop.f32.mrb[0].mxu0
      %v5656 = vpop.f32.mrb[0].mxu0
      %v5657 = vadd.f32 %v5232, %v5656
      %v5658 = vpop.f32.mrb[0].mxu0
      %5659 = vmatprep.mubr.bf16.mxu0 %v4430
      %5660 = vmatmul.mubr.bf16.gmra.mrb[0].mxu0 %v4429
      %v5661 = vpop.f32.mrb[0].mxu0
      %v5662 = vadd.f32 %v5237, %v5661
      %v5663 = vpop.f32.mrb[0].mxu0
      %v5664 = vpop.f32.mrb[0].mxu0
      %v5665 = vadd.f32 %v5240, %v5664
      %v5666 = vpop.f32.mrb[0].mxu0
      %5667 = vmatprep.mubr.bf16.mxu0 %v4435
      %5668 = vmatmul.mubr.bf16.gmra.mrb[0].mxu0 %v4434
      %v5669 = vpop.f32.mrb[0].mxu0
      %v5670 = vadd.f32 %v5245, %v5669
      %v5671 = vpop.f32.mrb[0].mxu0
      %v5672 = vpop.f32.mrb[0].mxu0
      %v5673 = vadd.f32 %v5248, %v5672
      %v5674 = vpop.f32.mrb[0].mxu0
      %5675 = vmatprep.mubr.bf16.mxu0 %v4440
      %5676 = vmatmul.mubr.bf16.gmra.mrb[0].mxu0 %v4439
      %v5677 = vpop.f32.mrb[0].mxu0
      %v5678 = vadd.f32 %v5253, %v5677
      %v5679 = vpop.f32.mrb[0].mxu0
      %v5680 = vpop.f32.mrb[0].mxu0
      %v5681 = vadd.f32 %v5256, %v5680
      %v5682 = vpop.f32.mrb[0].mxu0
      %5683 = vmatprep.mubr.bf16.mxu0 %v4445
      %5684 = vmatmul.mubr.bf16.gmra.mrb[0].mxu0 %v4444
      %v5685 = vpop.f32.mrb[0].mxu0
      %v5686 = vadd.f32 %v5261, %v5685
      %v5687 = vpop.f32.mrb[0].mxu0
      %v5688 = vpop.f32.mrb[0].mxu0
      %v5689 = vadd.f32 %v5264, %v5688
      %v5690 = vpop.f32.mrb[0].mxu0
      %5691 = vmatprep.mubr.bf16.mxu0 %v4450
      %5692 = vmatmul.mubr.bf16.gmra.mrb[0].mxu0 %v4449
      %v5693 = vpop.f32.mrb[0].mxu0
      %v5694 = vadd.f32 %v5269, %v5693
      %v5695 = vpop.f32.mrb[0].mxu0
      %v5696 = vpop.f32.mrb[0].mxu0
      %v5697 = vadd.f32 %v5272, %v5696
      %v5698 = vpop.f32.mrb[0].mxu0
      %5699 = vmatprep.mubr.bf16.mxu0 %v4455
      %5700 = vmatmul.mubr.bf16.gmra.mrb[0].mxu0 %v4454
      %v5701 = vpop.f32.mrb[0].mxu0
      %v5702 = vadd.f32 %v5277, %v5701
      %v5703 = vpop.f32.mrb[0].mxu0
      %v5704 = vpop.f32.mrb[0].mxu0
      %v5705 = vadd.f32 %v5280, %v5704
      %v5706 = vpop.f32.mrb[0].mxu0
      %5707 = vmatprep.mubr.bf16.mxu0 %v4460
      %5708 = vmatmul.mubr.bf16.gmra.mrb[0].mxu0 %v4459
      %v5709 = vpop.f32.mrb[0].mxu0
      %v5710 = vadd.f32 %v5285, %v5709
      %v5711 = vpop.f32.mrb[0].mxu0
      %v5712 = vpop.f32.mrb[0].mxu0
      %v5713 = vadd.f32 %v5288, %v5712
      %v5714 = vpop.f32.mrb[0].mxu0
      %5715 = vmatprep.mubr.bf16.mxu0 %v4465
      %5716 = vmatmul.mubr.bf16.gmra.mrb[0].mxu0 %v4464
      %v5717 = vpop.f32.mrb[0].mxu0
      %v5718 = vadd.f32 %v5293, %v5717
      %v5719 = vpop.f32.mrb[0].mxu0
      %v5720 = vpop.f32.mrb[0].mxu0
      %v5721 = vadd.f32 %v5296, %v5720
      %v5722 = vpop.f32.mrb[0].mxu0
      %5723 = vmatprep.mubr.bf16.mxu0 %v4470
      %5724 = vmatmul.mubr.bf16.gmra.mrb[0].mxu0 %v4469
      %v5725 = vpop.f32.mrb[0].mxu0
      %v5726 = vadd.f32 %v5301, %v5725
      %v5727 = vpop.f32.mrb[0].mxu0
      %v5728 = vpop.f32.mrb[0].mxu0
      %v5729 = vadd.f32 %v5304, %v5728
      %v5730 = vpop.f32.mrb[0].mxu0
      %5731 = vmatprep.mubr.bf16.mxu0 %v4475
      %5732 = vmatmul.mubr.bf16.gmra.mrb[0].mxu0 %v4474
      %v5733 = vpop.f32.mrb[0].mxu0
      %v5734 = vadd.f32 %v5309, %v5733
      %v5735 = vpop.f32.mrb[0].mxu0
      %v5736 = vpop.f32.mrb[0].mxu0
      %v5737 = vadd.f32 %v5312, %v5736
      %v5738 = vpop.f32.mrb[0].mxu0
      %5739 = vmatprep.mubr.bf16.mxu0 %v4480
      %5740 = vmatmul.mubr.bf16.gmra.mrb[0].mxu0 %v4479
      %v5741 = vpop.f32.mrb[0].mxu0
      %v5742 = vadd.f32 %v5317, %v5741
      %v5743 = vpop.f32.mrb[0].mxu0
      %v5744 = vpop.f32.mrb[0].mxu0
      %v5745 = vadd.f32 %v5320, %v5744
      %v5746 = vpop.f32.mrb[0].mxu0
      %5747 = vmatprep.mubr.bf16.mxu0 %v4485
      %5748 = vmatmul.mubr.bf16.gmra.mrb[0].mxu0 %v4484
      %v5749 = vpop.f32.mrb[0].mxu0
      %v5750 = vadd.f32 %v5325, %v5749
      %v5751 = vpop.f32.mrb[0].mxu0
      %v5752 = vpop.f32.mrb[0].mxu0
      %v5753 = vadd.f32 %v5328, %v5752
      %v5754 = vpop.f32.mrb[0].mxu0
      %5755 = vmatprep.mubr.bf16.mxu0 %v4490
      %5756 = vmatmul.mubr.bf16.gmra.mrb[0].mxu0 %v4489
      %v5757 = vpop.f32.mrb[0].mxu0
      %v5758 = vadd.f32 %v5333, %v5757
      %v5759 = vpop.f32.mrb[0].mxu0
      %v5760 = vpop.f32.mrb[0].mxu0
      %v5761 = vadd.f32 %v5336, %v5760
      %v5762 = vpop.f32.mrb[0].mxu0
      %5763 = vmatprep.mubr.bf16.mxu0 %v4495
      %5764 = vmatmul.mubr.bf16.gmra.mrb[0].mxu0 %v4494
      %v5765 = vpop.f32.mrb[0].mxu0
      %v5766 = vadd.f32 %v5341, %v5765
      %v5767 = vpop.f32.mrb[0].mxu0
      %v5768 = vpop.f32.mrb[0].mxu0
      %v5769 = vadd.f32 %v5344, %v5768
      %v5770 = vpop.f32.mrb[0].mxu0
      %5771 = vmatprep.mubr.bf16.mxu0 %v4500
      %5772 = vmatmul.mubr.bf16.gmra.mrb[0].mxu0 %v4499
      %v5773 = vpop.f32.mrb[0].mxu0
      %v5774 = vadd.f32 %v5349, %v5773
      %v5775 = vpop.f32.mrb[0].mxu0
      %v5776 = vpop.f32.mrb[0].mxu0
      %v5777 = vadd.f32 %v5352, %v5776
      %v5778 = vpop.f32.mrb[0].mxu0
      %5779 = vmatprep.mubr.bf16.mxu0 %v4505
      %5780 = vmatmul.mubr.bf16.gmra.mrb[0].mxu0 %v4504
      %v5781 = vpop.f32.mrb[0].mxu0
      %v5782 = vadd.f32 %v5357, %v5781
      %v5783 = vpop.f32.mrb[0].mxu0
      %v5784 = vpop.f32.mrb[0].mxu0
      %v5785 = vadd.f32 %v5360, %v5784
      %v5786 = vpop.f32.mrb[0].mxu0
      %5787 = vmatprep.mubr.bf16.mxu0 %v4510
      %5788 = vmatmul.mubr.bf16.gmra.mrb[0].mxu0 %v4509
      %v5789 = vpop.f32.mrb[0].mxu0
      %v5790 = vadd.f32 %v5365, %v5789
      %v5791 = vpop.f32.mrb[0].mxu0
      %v5792 = vpop.f32.mrb[0].mxu0
      %v5793 = vadd.f32 %v5368, %v5792
      %v5794 = vpop.f32.mrb[0].mxu0
      %5795 = vmatprep.mubr.bf16.mxu0 %v4515
      %5796 = vmatmul.mubr.bf16.gmra.mrb[0].mxu0 %v4514
      %v5797 = vpop.f32.mrb[0].mxu0
      %v5798 = vadd.f32 %v5373, %v5797
      %v5799 = vpop.f32.mrb[0].mxu0
      %v5800 = vpop.f32.mrb[0].mxu0
      %v5801 = vadd.f32 %v5376, %v5800
      %v5802 = vpop.f32.mrb[0].mxu0
      %5803 = vmatprep.mubr.bf16.mxu0 %v4520
      %5804 = vmatmul.mubr.bf16.gmra.mrb[0].mxu0 %v4519
      %v5805 = vpop.f32.mrb[0].mxu0
      %v5806 = vadd.f32 %v5381, %v5805
      %v5807 = vpop.f32.mrb[0].mxu0
      %v5808 = vpop.f32.mrb[0].mxu0
      %v5809 = vadd.f32 %v5384, %v5808
      %v5810 = vpop.f32.mrb[0].mxu0
      %5811 = vmatprep.mubr.bf16.mxu0 %v4525
      %5812 = vmatmul.mubr.bf16.gmra.mrb[0].mxu0 %v4524
      %v5813 = vpop.f32.mrb[0].mxu0
      %v5814 = vadd.f32 %v5389, %v5813
      %v5815 = vpop.f32.mrb[0].mxu0
      %v5816 = vpop.f32.mrb[0].mxu0
      %v5817 = vadd.f32 %v5392, %v5816
      %v5818 = vpop.f32.mrb[0].mxu0
      %5819 = vdwg.mxu0
      %5820 = vmatprep.subr.bf16.mxu0 0
      %5821 = vmatpush1.bf16.msra.mxu0 %v4782
      %5822 = vmatprep.subr.bf16.mxu0 0
      %5823 = vmatpush1.bf16.msra.mxu0 %v4783
      %5824 = vmatprep.subr.bf16.mxu0 0
      %5825 = vmatpush1.bf16.msra.mxu0 %v4784
      %5826 = vmatprep.subr.bf16.mxu0 0
      %5827 = vmatpush1.bf16.msra.mxu0 %v4785
      %5828 = vmatprep.subr.bf16.mxu0 0
      %5829 = vmatpush1.bf16.msra.mxu0 0
      %5830 = vmatprep.subr.bf16.mxu0 0
      %5831 = vmatpush1.bf16.msra.mxu0 0
      %5832 = vmatprep.subr.bf16.mxu0 0
      %5833 = vmatpush1.bf16.msra.mxu0 0
      %5834 = vmatprep.subr.bf16.mxu0 0
      %5835 = vmatpush1.bf16.msra.mxu0 0
      %5836 = vmatprep.subr.bf16.mxu0 0
      %5837 = vmatpush1.bf16.msra.mxu0 0
      %5838 = vmatprep.subr.bf16.mxu0 0
      %5839 = vmatpush1.bf16.msra.mxu0 0
      %5840 = vmatprep.subr.bf16.mxu0 0
      %5841 = vmatpush1.bf16.msra.mxu0 0
      %5842 = vmatprep.subr.bf16.mxu0 0
      %5843 = vmatpush1.bf16.msra.mxu0 0
      %5844 = vmatprep.subr.bf16.mxu0 0
      %5845 = vmatpush1.bf16.msra.mxu0 0
      %5846 = vmatprep.subr.bf16.mxu0 0
      %5847 = vmatpush1.bf16.msra.mxu0 0
      %5848 = vmatprep.subr.bf16.mxu0 0
      %5849 = vmatpush1.bf16.msra.mxu0 0
      %5850 = vmatprep.subr.bf16.mxu0 0
      %5851 = vmatpush1.bf16.msra.mxu0 0
      %5852 = vmatprep.mubr.bf16.mxu0 0
      %5853 = vmatmul.mubr.bf16.gmra.mrb[0].mxu0 %v4824
      %v5854 = vpop.f32.mrb[0].mxu0
      %v5855 = vadd.f32 %v5430, %v5854
      %v5856 = vpop.f32.mrb[0].mxu0
      %v5857 = vpop.f32.mrb[0].mxu0
      %v5858 = vadd.f32 %v5433, %v5857
      %v5859 = vpop.f32.mrb[0].mxu0
      %5860 = vmatprep.mubr.bf16.mxu0 0
      %5861 = vmatmul.mubr.bf16.gmra.mrb[0].mxu0 %v4827
      %v5862 = vpop.f32.mrb[0].mxu0
      %v5863 = vadd.f32 %v5438, %v5862
      %v5864 = vpop.f32.mrb[0].mxu0
      %v5865 = vpop.f32.mrb[0].mxu0
      %v5866 = vadd.f32 %v5441, %v5865
      %v5867 = vpop.f32.mrb[0].mxu0
      %5868 = vmatprep.mubr.bf16.mxu0 0
      %5869 = vmatmul.mubr.bf16.gmra.mrb[0].mxu0 %v4830
      %v5870 = vpop.f32.mrb[0].mxu0
      %v5871 = vadd.f32 %v5446, %v5870
      %v5872 = vpop.f32.mrb[0].mxu0
      %v5873 = vpop.f32.mrb[0].mxu0
      %v5874 = vadd.f32 %v5449, %v5873
      %v5875 = vpop.f32.mrb[0].mxu0
      %5876 = vmatprep.mubr.bf16.mxu0 0
      %5877 = vmatmul.mubr.bf16.gmra.mrb[0].mxu0 %v4833
      %v5878 = vpop.f32.mrb[0].mxu0
      %v5879 = vadd.f32 %v5454, %v5878
      %v5880 = vpop.f32.mrb[0].mxu0
      %v5881 = vpop.f32.mrb[0].mxu0
      %v5882 = vadd.f32 %v5457, %v5881
      %v5883 = vpop.f32.mrb[0].mxu0
      %5884 = vmatprep.mubr.bf16.mxu0 0
      %5885 = vmatmul.mubr.bf16.gmra.mrb[0].mxu0 %v4836
      %v5886 = vpop.f32.mrb[0].mxu0
      %v5887 = vadd.f32 %v5462, %v5886
      %v5888 = vpop.f32.mrb[0].mxu0
      %v5889 = vpop.f32.mrb[0].mxu0
      %v5890 = vadd.f32 %v5465, %v5889
      %v5891 = vpop.f32.mrb[0].mxu0
      %5892 = vmatprep.mubr.bf16.mxu0 0
      %5893 = vmatmul.mubr.bf16.gmra.mrb[0].mxu0 %v4839
      %v5894 = vpop.f32.mrb[0].mxu0
      %v5895 = vadd.f32 %v5470, %v5894
      %v5896 = vpop.f32.mrb[0].mxu0
      %v5897 = vpop.f32.mrb[0].mxu0
      %v5898 = vadd.f32 %v5473, %v5897
      %v5899 = vpop.f32.mrb[0].mxu0
      %5900 = vmatprep.mubr.bf16.mxu0 0
      %5901 = vmatmul.mubr.bf16.gmra.mrb[0].mxu0 %v4842
      %v5902 = vpop.f32.mrb[0].mxu0
      %v5903 = vadd.f32 %v5478, %v5902
      %v5904 = vpop.f32.mrb[0].mxu0
      %v5905 = vpop.f32.mrb[0].mxu0
      %v5906 = vadd.f32 %v5481, %v5905
      %v5907 = vpop.f32.mrb[0].mxu0
      %5908 = vmatprep.mubr.bf16.mxu0 0
      %5909 = vmatmul.mubr.bf16.gmra.mrb[0].mxu0 %v4845
      %v5910 = vpop.f32.mrb[0].mxu0
      %v5911 = vadd.f32 %v5486, %v5910
      %v5912 = vpop.f32.mrb[0].mxu0
      %v5913 = vpop.f32.mrb[0].mxu0
      %v5914 = vadd.f32 %v5489, %v5913
      %v5915 = vpop.f32.mrb[0].mxu0
      %5916 = vmatprep.mubr.bf16.mxu0 0
      %5917 = vmatmul.mubr.bf16.gmra.mrb[0].mxu0 %v4848
      %v5918 = vpop.f32.mrb[0].mxu0
      %v5919 = vadd.f32 %v5494, %v5918
      %v5920 = vpop.f32.mrb[0].mxu0
      %v5921 = vpop.f32.mrb[0].mxu0
      %v5922 = vadd.f32 %v5497, %v5921
      %v5923 = vpop.f32.mrb[0].mxu0
      %5924 = vmatprep.mubr.bf16.mxu0 0
      %5925 = vmatmul.mubr.bf16.gmra.mrb[0].mxu0 %v4851
      %v5926 = vpop.f32.mrb[0].mxu0
      %v5927 = vadd.f32 %v5502, %v5926
      %v5928 = vpop.f32.mrb[0].mxu0
      %v5929 = vpop.f32.mrb[0].mxu0
      %v5930 = vadd.f32 %v5505, %v5929
      %v5931 = vpop.f32.mrb[0].mxu0
      %5932 = vmatprep.mubr.bf16.mxu0 0
      %5933 = vmatmul.mubr.bf16.gmra.mrb[0].mxu0 %v4854
      %v5934 = vpop.f32.mrb[0].mxu0
      %v5935 = vadd.f32 %v5510, %v5934
      %v5936 = vpop.f32.mrb[0].mxu0
      %v5937 = vpop.f32.mrb[0].mxu0
      %v5938 = vadd.f32 %v5513, %v5937
      %v5939 = vpop.f32.mrb[0].mxu0
      %5940 = vmatprep.mubr.bf16.mxu0 0
      %5941 = vmatmul.mubr.bf16.gmra.mrb[0].mxu0 %v4857
      %v5942 = vpop.f32.mrb[0].mxu0
      %v5943 = vadd.f32 %v5518, %v5942
      %v5944 = vpop.f32.mrb[0].mxu0
      %v5945 = vpop.f32.mrb[0].mxu0
      %v5946 = vadd.f32 %v5521, %v5945
      %v5947 = vpop.f32.mrb[0].mxu0
      %5948 = vmatprep.mubr.bf16.mxu0 0
      %5949 = vmatmul.mubr.bf16.gmra.mrb[0].mxu0 %v4860
      %v5950 = vpop.f32.mrb[0].mxu0
      %v5951 = vadd.f32 %v5526, %v5950
      %v5952 = vpop.f32.mrb[0].mxu0
      %v5953 = vpop.f32.mrb[0].mxu0
      %v5954 = vadd.f32 %v5529, %v5953
      %v5955 = vpop.f32.mrb[0].mxu0
      %5956 = vmatprep.mubr.bf16.mxu0 0
      %5957 = vmatmul.mubr.bf16.gmra.mrb[0].mxu0 %v4863
      %v5958 = vpop.f32.mrb[0].mxu0
      %v5959 = vadd.f32 %v5534, %v5958
      %v5960 = vpop.f32.mrb[0].mxu0
      %v5961 = vpop.f32.mrb[0].mxu0
      %v5962 = vadd.f32 %v5537, %v5961
      %v5963 = vpop.f32.mrb[0].mxu0
      %5964 = vmatprep.mubr.bf16.mxu0 0
      %5965 = vmatmul.mubr.bf16.gmra.mrb[0].mxu0 %v4866
      %v5966 = vpop.f32.mrb[0].mxu0
      %v5967 = vadd.f32 %v5542, %v5966
      %v5968 = vpop.f32.mrb[0].mxu0
      %v5969 = vpop.f32.mrb[0].mxu0
      %v5970 = vadd.f32 %v5545, %v5969
      %v5971 = vpop.f32.mrb[0].mxu0
      %5972 = vmatprep.mubr.bf16.mxu0 0
      %5973 = vmatmul.mubr.bf16.gmra.mrb[0].mxu0 %v4869
      %v5974 = vpop.f32.mrb[0].mxu0
      %v5975 = vadd.f32 %v5550, %v5974
      %v5976 = vpop.f32.mrb[0].mxu0
      %v5977 = vpop.f32.mrb[0].mxu0
      %v5978 = vadd.f32 %v5553, %v5977
      %v5979 = vpop.f32.mrb[0].mxu0
      %5980 = vmatprep.mubr.bf16.mxu0 0
      %5981 = vmatmul.mubr.bf16.gmra.mrb[0].mxu0 %v4872
      %v5982 = vpop.f32.mrb[0].mxu0
      %v5983 = vadd.f32 %v5558, %v5982
      %v5984 = vpop.f32.mrb[0].mxu0
      %v5985 = vpop.f32.mrb[0].mxu0
      %v5986 = vadd.f32 %v5561, %v5985
      %v5987 = vpop.f32.mrb[0].mxu0
      %5988 = vmatprep.mubr.bf16.mxu0 0
      %5989 = vmatmul.mubr.bf16.gmra.mrb[0].mxu0 %v4875
      %v5990 = vpop.f32.mrb[0].mxu0
      %v5991 = vadd.f32 %v5566, %v5990
      %v5992 = vpop.f32.mrb[0].mxu0
      %v5993 = vpop.f32.mrb[0].mxu0
      %v5994 = vadd.f32 %v5569, %v5993
      %v5995 = vpop.f32.mrb[0].mxu0
      %5996 = vmatprep.mubr.bf16.mxu0 0
      %5997 = vmatmul.mubr.bf16.gmra.mrb[0].mxu0 %v4878
      %v5998 = vpop.f32.mrb[0].mxu0
      %v5999 = vadd.f32 %v5574, %v5998
      %v6000 = vpop.f32.mrb[0].mxu0
      %v6001 = vpop.f32.mrb[0].mxu0
      %v6002 = vadd.f32 %v5577, %v6001
      %v6003 = vpop.f32.mrb[0].mxu0
      %6004 = vmatprep.mubr.bf16.mxu0 0
      %6005 = vmatmul.mubr.bf16.gmra.mrb[0].mxu0 %v4881
      %v6006 = vpop.f32.mrb[0].mxu0
      %v6007 = vadd.f32 %v5582, %v6006
      %v6008 = vpop.f32.mrb[0].mxu0
      %v6009 = vpop.f32.mrb[0].mxu0
      %v6010 = vadd.f32 %v5585, %v6009
      %v6011 = vpop.f32.mrb[0].mxu0
      %6012 = vmatprep.mubr.bf16.mxu0 0
      %6013 = vmatmul.mubr.bf16.gmra.mrb[0].mxu0 %v4884
      %v6014 = vpop.f32.mrb[0].mxu0
      %v6015 = vadd.f32 %v5590, %v6014
      %v6016 = vpop.f32.mrb[0].mxu0
      %v6017 = vpop.f32.mrb[0].mxu0
      %v6018 = vadd.f32 %v5593, %v6017
      %v6019 = vpop.f32.mrb[0].mxu0
      %6020 = vmatprep.mubr.bf16.mxu0 0
      %6021 = vmatmul.mubr.bf16.gmra.mrb[0].mxu0 %v4887
      %v6022 = vpop.f32.mrb[0].mxu0
      %v6023 = vadd.f32 %v5598, %v6022
      %v6024 = vpop.f32.mrb[0].mxu0
      %v6025 = vpop.f32.mrb[0].mxu0
      %v6026 = vadd.f32 %v5601, %v6025
      %v6027 = vpop.f32.mrb[0].mxu0
      %6028 = vmatprep.mubr.bf16.mxu0 0
      %6029 = vmatmul.mubr.bf16.gmra.mrb[0].mxu0 %v4890
      %v6030 = vpop.f32.mrb[0].mxu0
      %v6031 = vadd.f32 %v5606, %v6030
      %v6032 = vpop.f32.mrb[0].mxu0
      %v6033 = vpop.f32.mrb[0].mxu0
      %v6034 = vadd.f32 %v5609, %v6033
      %v6035 = vpop.f32.mrb[0].mxu0
      %6036 = vmatprep.mubr.bf16.mxu0 0
      %6037 = vmatmul.mubr.bf16.gmra.mrb[0].mxu0 %v4893
      %v6038 = vpop.f32.mrb[0].mxu0
      %v6039 = vadd.f32 %v5614, %v6038
      %v6040 = vpop.f32.mrb[0].mxu0
      %v6041 = vpop.f32.mrb[0].mxu0
      %v6042 = vadd.f32 %v5617, %v6041
      %v6043 = vpop.f32.mrb[0].mxu0
      %6044 = vmatprep.mubr.bf16.mxu0 0
      %6045 = vmatmul.mubr.bf16.gmra.mrb[0].mxu0 %v4896
      %v6046 = vpop.f32.mrb[0].mxu0
      %v6047 = vadd.f32 %v5622, %v6046
      %v6048 = vpop.f32.mrb[0].mxu0
      %v6049 = vpop.f32.mrb[0].mxu0
      %v6050 = vadd.f32 %v5625, %v6049
      %v6051 = vpop.f32.mrb[0].mxu0
      %6052 = vmatprep.mubr.bf16.mxu0 0
      %6053 = vmatmul.mubr.bf16.gmra.mrb[0].mxu0 %v4899
      %v6054 = vpop.f32.mrb[0].mxu0
      %v6055 = vadd.f32 %v5630, %v6054
      %v6056 = vpop.f32.mrb[0].mxu0
      %v6057 = vpop.f32.mrb[0].mxu0
      %v6058 = vadd.f32 %v5633, %v6057
      %v6059 = vpop.f32.mrb[0].mxu0
      %6060 = vmatprep.mubr.bf16.mxu0 0
      %6061 = vmatmul.mubr.bf16.gmra.mrb[0].mxu0 %v4902
      %v6062 = vpop.f32.mrb[0].mxu0
      %v6063 = vadd.f32 %v5638, %v6062
      %v6064 = vpop.f32.mrb[0].mxu0
      %v6065 = vpop.f32.mrb[0].mxu0
      %v6066 = vadd.f32 %v5641, %v6065
      %v6067 = vpop.f32.mrb[0].mxu0
      %6068 = vmatprep.mubr.bf16.mxu0 0
      %6069 = vmatmul.mubr.bf16.gmra.mrb[0].mxu0 %v4905
      %v6070 = vpop.f32.mrb[0].mxu0
      %v6071 = vadd.f32 %v5646, %v6070
      %v6072 = vpop.f32.mrb[0].mxu0
      %v6073 = vpop.f32.mrb[0].mxu0
      %v6074 = vadd.f32 %v5649, %v6073
      %v6075 = vpop.f32.mrb[0].mxu0
      %6076 = vmatprep.mubr.bf16.mxu0 0
      %6077 = vmatmul.mubr.bf16.gmra.mrb[0].mxu0 %v4908
      %v6078 = vpop.f32.mrb[0].mxu0
      %v6079 = vadd.f32 %v5654, %v6078
      %v6080 = vpop.f32.mrb[0].mxu0
      %v6081 = vpop.f32.mrb[0].mxu0
      %v6082 = vadd.f32 %v5657, %v6081
      %v6083 = vpop.f32.mrb[0].mxu0
      %6084 = vmatprep.mubr.bf16.mxu0 0
      %6085 = vmatmul.mubr.bf16.gmra.mrb[0].mxu0 %v4911
      %v6086 = vpop.f32.mrb[0].mxu0
      %v6087 = vadd.f32 %v5662, %v6086
      %v6088 = vpop.f32.mrb[0].mxu0
      %v6089 = vpop.f32.mrb[0].mxu0
      %v6090 = vadd.f32 %v5665, %v6089
      %v6091 = vpop.f32.mrb[0].mxu0
      %6092 = vmatprep.mubr.bf16.mxu0 0
      %6093 = vmatmul.mubr.bf16.gmra.mrb[0].mxu0 %v4914
      %v6094 = vpop.f32.mrb[0].mxu0
      %v6095 = vadd.f32 %v5670, %v6094
      %v6096 = vpop.f32.mrb[0].mxu0
      %v6097 = vpop.f32.mrb[0].mxu0
      %v6098 = vadd.f32 %v5673, %v6097
      %v6099 = vpop.f32.mrb[0].mxu0
      %6100 = vmatprep.mubr.bf16.mxu0 0
      %6101 = vmatmul.mubr.bf16.gmra.mrb[0].mxu0 %v4917
      %v6102 = vpop.f32.mrb[0].mxu0
      %v6103 = vadd.f32 %v5678, %v6102
      %v6104 = vpop.f32.mrb[0].mxu0
      %v6105 = vpop.f32.mrb[0].mxu0
      %v6106 = vadd.f32 %v5681, %v6105
      %v6107 = vpop.f32.mrb[0].mxu0
      %6108 = vmatprep.mubr.bf16.mxu0 0
      %6109 = vmatmul.mubr.bf16.gmra.mrb[0].mxu0 %v4920
      %v6110 = vpop.f32.mrb[0].mxu0
      %v6111 = vadd.f32 %v5686, %v6110
      %v6112 = vpop.f32.mrb[0].mxu0
      %v6113 = vpop.f32.mrb[0].mxu0
      %v6114 = vadd.f32 %v5689, %v6113
      %v6115 = vpop.f32.mrb[0].mxu0
      %6116 = vmatprep.mubr.bf16.mxu0 0
      %6117 = vmatmul.mubr.bf16.gmra.mrb[0].mxu0 %v4923
      %v6118 = vpop.f32.mrb[0].mxu0
      %v6119 = vadd.f32 %v5694, %v6118
      %v6120 = vpop.f32.mrb[0].mxu0
      %v6121 = vpop.f32.mrb[0].mxu0
      %v6122 = vadd.f32 %v5697, %v6121
      %v6123 = vpop.f32.mrb[0].mxu0
      %6124 = vmatprep.mubr.bf16.mxu0 0
      %6125 = vmatmul.mubr.bf16.gmra.mrb[0].mxu0 %v4926
      %v6126 = vpop.f32.mrb[0].mxu0
      %v6127 = vadd.f32 %v5702, %v6126
      %v6128 = vpop.f32.mrb[0].mxu0
      %v6129 = vpop.f32.mrb[0].mxu0
      %v6130 = vadd.f32 %v5705, %v6129
      %v6131 = vpop.f32.mrb[0].mxu0
      %6132 = vmatprep.mubr.bf16.mxu0 0
      %6133 = vmatmul.mubr.bf16.gmra.mrb[0].mxu0 %v4929
      %v6134 = vpop.f32.mrb[0].mxu0
      %v6135 = vadd.f32 %v5710, %v6134
      %v6136 = vpop.f32.mrb[0].mxu0
      %v6137 = vpop.f32.mrb[0].mxu0
      %v6138 = vadd.f32 %v5713, %v6137
      %v6139 = vpop.f32.mrb[0].mxu0
      %6140 = vmatprep.mubr.bf16.mxu0 0
      %6141 = vmatmul.mubr.bf16.gmra.mrb[0].mxu0 %v4932
      %v6142 = vpop.f32.mrb[0].mxu0
      %v6143 = vadd.f32 %v5718, %v6142
      %v6144 = vpop.f32.mrb[0].mxu0
      %v6145 = vpop.f32.mrb[0].mxu0
      %v6146 = vadd.f32 %v5721, %v6145
      %v6147 = vpop.f32.mrb[0].mxu0
      %6148 = vmatprep.mubr.bf16.mxu0 0
      %6149 = vmatmul.mubr.bf16.gmra.mrb[0].mxu0 %v4935
      %v6150 = vpop.f32.mrb[0].mxu0
      %v6151 = vadd.f32 %v5726, %v6150
      %v6152 = vpop.f32.mrb[0].mxu0
      %v6153 = vpop.f32.mrb[0].mxu0
      %v6154 = vadd.f32 %v5729, %v6153
      %v6155 = vpop.f32.mrb[0].mxu0
      %6156 = vmatprep.mubr.bf16.mxu0 0
      %6157 = vmatmul.mubr.bf16.gmra.mrb[0].mxu0 %v4938
      %v6158 = vpop.f32.mrb[0].mxu0
      %v6159 = vadd.f32 %v5734, %v6158
      %v6160 = vpop.f32.mrb[0].mxu0
      %v6161 = vpop.f32.mrb[0].mxu0
      %v6162 = vadd.f32 %v5737, %v6161
      %v6163 = vpop.f32.mrb[0].mxu0
      %6164 = vmatprep.mubr.bf16.mxu0 0
      %6165 = vmatmul.mubr.bf16.gmra.mrb[0].mxu0 %v4941
      %v6166 = vpop.f32.mrb[0].mxu0
      %v6167 = vadd.f32 %v5742, %v6166
      %v6168 = vpop.f32.mrb[0].mxu0
      %v6169 = vpop.f32.mrb[0].mxu0
      %v6170 = vadd.f32 %v5745, %v6169
      %v6171 = vpop.f32.mrb[0].mxu0
      %6172 = vmatprep.mubr.bf16.mxu0 0
      %6173 = vmatmul.mubr.bf16.gmra.mrb[0].mxu0 %v4944
      %v6174 = vpop.f32.mrb[0].mxu0
      %v6175 = vadd.f32 %v5750, %v6174
      %v6176 = vpop.f32.mrb[0].mxu0
      %v6177 = vpop.f32.mrb[0].mxu0
      %v6178 = vadd.f32 %v5753, %v6177
      %v6179 = vpop.f32.mrb[0].mxu0
      %6180 = vmatprep.mubr.bf16.mxu0 0
      %6181 = vmatmul.mubr.bf16.gmra.mrb[0].mxu0 %v4947
      %v6182 = vpop.f32.mrb[0].mxu0
      %v6183 = vadd.f32 %v5758, %v6182
      %v6184 = vpop.f32.mrb[0].mxu0
      %v6185 = vpop.f32.mrb[0].mxu0
      %v6186 = vadd.f32 %v5761, %v6185
      %v6187 = vpop.f32.mrb[0].mxu0
      %6188 = vmatprep.mubr.bf16.mxu0 0
      %6189 = vmatmul.mubr.bf16.gmra.mrb[0].mxu0 %v4950
      %v6190 = vpop.f32.mrb[0].mxu0
      %v6191 = vadd.f32 %v5766, %v6190
      %v6192 = vpop.f32.mrb[0].mxu0
      %v6193 = vpop.f32.mrb[0].mxu0
      %v6194 = vadd.f32 %v5769, %v6193
      %v6195 = vpop.f32.mrb[0].mxu0
      %6196 = vmatprep.mubr.bf16.mxu0 0
      %6197 = vmatmul.mubr.bf16.gmra.mrb[0].mxu0 %v4953
      %v6198 = vpop.f32.mrb[0].mxu0
      %v6199 = vadd.f32 %v5774, %v6198
      %v6200 = vpop.f32.mrb[0].mxu0
      %v6201 = vpop.f32.mrb[0].mxu0
      %v6202 = vadd.f32 %v5777, %v6201
      %v6203 = vpop.f32.mrb[0].mxu0
      %6204 = vmatprep.mubr.bf16.mxu0 0
      %6205 = vmatmul.mubr.bf16.gmra.mrb[0].mxu0 %v4956
      %v6206 = vpop.f32.mrb[0].mxu0
      %v6207 = vadd.f32 %v5782, %v6206
      %v6208 = vpop.f32.mrb[0].mxu0
      %v6209 = vpop.f32.mrb[0].mxu0
      %v6210 = vadd.f32 %v5785, %v6209
      %v6211 = vpop.f32.mrb[0].mxu0
      %6212 = vmatprep.mubr.bf16.mxu0 0
      %6213 = vmatmul.mubr.bf16.gmra.mrb[0].mxu0 %v4959
      %v6214 = vpop.f32.mrb[0].mxu0
      %v6215 = vadd.f32 %v5790, %v6214
      %v6216 = vpop.f32.mrb[0].mxu0
      %v6217 = vpop.f32.mrb[0].mxu0
      %v6218 = vadd.f32 %v5793, %v6217
      %v6219 = vpop.f32.mrb[0].mxu0
      %6220 = vmatprep.mubr.bf16.mxu0 0
      %6221 = vmatmul.mubr.bf16.gmra.mrb[0].mxu0 %v4962
      %v6222 = vpop.f32.mrb[0].mxu0
      %v6223 = vadd.f32 %v5798, %v6222
      %v6224 = vpop.f32.mrb[0].mxu0
      %v6225 = vpop.f32.mrb[0].mxu0
      %v6226 = vadd.f32 %v5801, %v6225
      %v6227 = vpop.f32.mrb[0].mxu0
      %6228 = vmatprep.mubr.bf16.mxu0 0
      %6229 = vmatmul.mubr.bf16.gmra.mrb[0].mxu0 %v4965
      %v6230 = vpop.f32.mrb[0].mxu0
      %v6231 = vadd.f32 %v5806, %v6230
      %v6232 = vpop.f32.mrb[0].mxu0
      %v6233 = vpop.f32.mrb[0].mxu0
      %v6234 = vadd.f32 %v5809, %v6233
      %v6235 = vpop.f32.mrb[0].mxu0
      %6236 = vmatprep.mubr.bf16.mxu0 0
      %6237 = vmatmul.mubr.bf16.gmra.mrb[0].mxu0 %v4968
      %v6238 = vpop.f32.mrb[0].mxu0
      %v6239 = vadd.f32 %v5814, %v6238
      %v6240 = vpop.f32.mrb[0].mxu0
      %v6241 = vpop.f32.mrb[0].mxu0
      %v6242 = vadd.f32 %v5817, %v6241
      %v6243 = vpop.f32.mrb[0].mxu0
      %6244 = vdwg.mxu0
      %vm6245 = vcmp.gt.f32.partialorder %v5855, 0.0
      %vm6246 = vcmp.gt.f32.partialorder %v5858, 0.0
      %vm6247 = vcmp.gt.f32.partialorder %v5863, 0.0
      %vm6248 = vcmp.gt.f32.partialorder %v5866, 0.0
      %vm6249 = vcmp.gt.f32.partialorder %v5871, 0.0
      %vm6250 = vcmp.gt.f32.partialorder %v5874, 0.0
      %vm6251 = vcmp.gt.f32.partialorder %v5879, 0.0
      %vm6252 = vcmp.gt.f32.partialorder %v5882, 0.0
      %vm6253 = vcmp.gt.f32.partialorder %v5887, 0.0
      %vm6254 = vcmp.gt.f32.partialorder %v5890, 0.0
      %vm6255 = vcmp.gt.f32.partialorder %v5895, 0.0
      %vm6256 = vcmp.gt.f32.partialorder %v5898, 0.0
      %vm6257 = vcmp.gt.f32.partialorder %v5903, 0.0
      %vm6258 = vcmp.gt.f32.partialorder %v5906, 0.0
      %vm6259 = vcmp.gt.f32.partialorder %v5911, 0.0
      %vm6260 = vcmp.gt.f32.partialorder %v5914, 0.0
      %vm6261 = vcmp.gt.f32.partialorder %v5919, 0.0
      %vm6262 = vcmp.gt.f32.partialorder %v5922, 0.0
      %vm6263 = vcmp.gt.f32.partialorder %v5927, 0.0
      %vm6264 = vcmp.gt.f32.partialorder %v5930, 0.0
      %vm6265 = vcmp.gt.f32.partialorder %v5935, 0.0
      %vm6266 = vcmp.gt.f32.partialorder %v5938, 0.0
      %vm6267 = vcmp.gt.f32.partialorder %v5943, 0.0
      %vm6268 = vcmp.gt.f32.partialorder %v5946, 0.0
      %vm6269 = vcmp.gt.f32.partialorder %v5951, 0.0
      %vm6270 = vcmp.gt.f32.partialorder %v5954, 0.0
      %vm6271 = vcmp.gt.f32.partialorder %v5959, 0.0
      %vm6272 = vcmp.gt.f32.partialorder %v5962, 0.0
      %vm6273 = vcmp.gt.f32.partialorder %v5967, 0.0
      %vm6274 = vcmp.gt.f32.partialorder %v5970, 0.0
      %vm6275 = vcmp.gt.f32.partialorder %v5975, 0.0
      %vm6276 = vcmp.gt.f32.partialorder %v5978, 0.0
      %vm6277 = vcmp.gt.f32.partialorder %v5983, 0.0
      %vm6278 = vcmp.gt.f32.partialorder %v5986, 0.0
      %vm6279 = vcmp.gt.f32.partialorder %v5991, 0.0
      %vm6280 = vcmp.gt.f32.partialorder %v5994, 0.0
      %vm6281 = vcmp.gt.f32.partialorder %v5999, 0.0
      %vm6282 = vcmp.gt.f32.partialorder %v6002, 0.0
      %vm6283 = vcmp.gt.f32.partialorder %v6007, 0.0
      %vm6284 = vcmp.gt.f32.partialorder %v6010, 0.0
      %vm6285 = vcmp.gt.f32.partialorder %v6015, 0.0
      %vm6286 = vcmp.gt.f32.partialorder %v6018, 0.0
      %vm6287 = vcmp.gt.f32.partialorder %v6023, 0.0
      %vm6288 = vcmp.gt.f32.partialorder %v6026, 0.0
      %vm6289 = vcmp.gt.f32.partialorder %v6031, 0.0
      %vm6290 = vcmp.gt.f32.partialorder %v6034, 0.0
      %vm6291 = vcmp.gt.f32.partialorder %v6039, 0.0
      %vm6292 = vcmp.gt.f32.partialorder %v6042, 0.0
      %vm6293 = vcmp.gt.f32.partialorder %v6047, 0.0
      %vm6294 = vcmp.gt.f32.partialorder %v6050, 0.0
      %vm6295 = vcmp.gt.f32.partialorder %v6055, 0.0
      %vm6296 = vcmp.gt.f32.partialorder %v6058, 0.0
      %vm6297 = vcmp.gt.f32.partialorder %v6063, 0.0
      %vm6298 = vcmp.gt.f32.partialorder %v6066, 0.0
      %vm6299 = vcmp.gt.f32.partialorder %v6071, 0.0
      %vm6300 = vcmp.gt.f32.partialorder %v6074, 0.0
      %vm6301 = vcmp.gt.f32.partialorder %v6079, 0.0
      %vm6302 = vcmp.gt.f32.partialorder %v6082, 0.0
      %vm6303 = vcmp.gt.f32.partialorder %v6087, 0.0
      %vm6304 = vcmp.gt.f32.partialorder %v6090, 0.0
      %vm6305 = vcmp.gt.f32.partialorder %v6095, 0.0
      %vm6306 = vcmp.gt.f32.partialorder %v6098, 0.0
      %vm6307 = vcmp.gt.f32.partialorder %v6103, 0.0
      %vm6308 = vcmp.gt.f32.partialorder %v6106, 0.0
      %vm6309 = vcmp.gt.f32.partialorder %v6111, 0.0
      %vm6310 = vcmp.gt.f32.partialorder %v6114, 0.0
      %vm6311 = vcmp.gt.f32.partialorder %v6119, 0.0
      %vm6312 = vcmp.gt.f32.partialorder %v6122, 0.0
      %vm6313 = vcmp.gt.f32.partialorder %v6127, 0.0
      %vm6314 = vcmp.gt.f32.partialorder %v6130, 0.0
      %vm6315 = vcmp.gt.f32.partialorder %v6135, 0.0
      %vm6316 = vcmp.gt.f32.partialorder %v6138, 0.0
      %vm6317 = vcmp.gt.f32.partialorder %v6143, 0.0
      %vm6318 = vcmp.gt.f32.partialorder %v6146, 0.0
      %vm6319 = vcmp.gt.f32.partialorder %v6151, 0.0
      %vm6320 = vcmp.gt.f32.partialorder %v6154, 0.0
      %vm6321 = vcmp.gt.f32.partialorder %v6159, 0.0
      %vm6322 = vcmp.gt.f32.partialorder %v6162, 0.0
      %vm6323 = vcmp.gt.f32.partialorder %v6167, 0.0
      %vm6324 = vcmp.gt.f32.partialorder %v6170, 0.0
      %vm6325 = vcmp.gt.f32.partialorder %v6175, 0.0
      %vm6326 = vcmp.gt.f32.partialorder %v6178, 0.0
      %vm6327 = vcmp.gt.f32.partialorder %v6183, 0.0
      %vm6328 = vcmp.gt.f32.partialorder %v6186, 0.0
      %vm6329 = vcmp.gt.f32.partialorder %v6191, 0.0
      %vm6330 = vcmp.gt.f32.partialorder %v6194, 0.0
      %vm6331 = vcmp.gt.f32.partialorder %v6199, 0.0
      %vm6332 = vcmp.gt.f32.partialorder %v6202, 0.0
      %vm6333 = vcmp.gt.f32.partialorder %v6207, 0.0
      %vm6334 = vcmp.gt.f32.partialorder %v6210, 0.0
      %vm6335 = vcmp.gt.f32.partialorder %v6215, 0.0
      %vm6336 = vcmp.gt.f32.partialorder %v6218, 0.0
      %vm6337 = vcmp.gt.f32.partialorder %v6223, 0.0
      %vm6338 = vcmp.gt.f32.partialorder %v6226, 0.0
      %vm6339 = vcmp.gt.f32.partialorder %v6231, 0.0
      %vm6340 = vcmp.gt.f32.partialorder %v6234, 0.0
      %vm6341 = vcmp.gt.f32.partialorder %v6239, 0.0
      %vm6342 = vcmp.gt.f32.partialorder %v6242, 0.0
      %v6343 = vmul.f32 %v5855, 0.2
      %v6344 = vmul.f32 %v5858, 0.2
      %v6345 = vmul.f32 %v5863, 0.2
      %v6346 = vmul.f32 %v5866, 0.2
      %v6347 = vmul.f32 %v5871, 0.2
      %v6348 = vmul.f32 %v5874, 0.2
      %v6349 = vmul.f32 %v5879, 0.2
      %v6350 = vmul.f32 %v5882, 0.2
      %v6351 = vmul.f32 %v5887, 0.2
      %v6352 = vmul.f32 %v5890, 0.2
      %v6353 = vmul.f32 %v5895, 0.2
      %v6354 = vmul.f32 %v5898, 0.2
      %v6355 = vmul.f32 %v5903, 0.2
      %v6356 = vmul.f32 %v5906, 0.2
      %v6357 = vmul.f32 %v5911, 0.2
      %v6358 = vmul.f32 %v5914, 0.2
      %v6359 = vmul.f32 %v5919, 0.2
      %v6360 = vmul.f32 %v5922, 0.2
      %v6361 = vmul.f32 %v5927, 0.2
      %v6362 = vmul.f32 %v5930, 0.2
      %v6363 = vmul.f32 %v5935, 0.2
      %v6364 = vmul.f32 %v5938, 0.2
      %v6365 = vmul.f32 %v5943, 0.2
      %v6366 = vmul.f32 %v5946, 0.2
      %v6367 = vmul.f32 %v5951, 0.2
      %v6368 = vmul.f32 %v5954, 0.2
      %v6369 = vmul.f32 %v5959, 0.2
      %v6370 = vmul.f32 %v5962, 0.2
      %v6371 = vmul.f32 %v5967, 0.2
      %v6372 = vmul.f32 %v5970, 0.2
      %v6373 = vmul.f32 %v5975, 0.2
      %v6374 = vmul.f32 %v5978, 0.2
      %v6375 = vmul.f32 %v5983, 0.2
      %v6376 = vmul.f32 %v5986, 0.2
      %v6377 = vmul.f32 %v5991, 0.2
      %v6378 = vmul.f32 %v5994, 0.2
      %v6379 = vmul.f32 %v5999, 0.2
      %v6380 = vmul.f32 %v6002, 0.2
      %v6381 = vmul.f32 %v6007, 0.2
      %v6382 = vmul.f32 %v6010, 0.2
      %v6383 = vmul.f32 %v6015, 0.2
      %v6384 = vmul.f32 %v6018, 0.2
      %v6385 = vmul.f32 %v6023, 0.2
      %v6386 = vmul.f32 %v6026, 0.2
      %v6387 = vmul.f32 %v6031, 0.2
      %v6388 = vmul.f32 %v6034, 0.2
      %v6389 = vmul.f32 %v6039, 0.2
      %v6390 = vmul.f32 %v6042, 0.2
      %v6391 = vmul.f32 %v6047, 0.2
      %v6392 = vmul.f32 %v6050, 0.2
      %v6393 = vmul.f32 %v6055, 0.2
      %v6394 = vmul.f32 %v6058, 0.2
      %v6395 = vmul.f32 %v6063, 0.2
      %v6396 = vmul.f32 %v6066, 0.2
      %v6397 = vmul.f32 %v6071, 0.2
      %v6398 = vmul.f32 %v6074, 0.2
      %v6399 = vmul.f32 %v6079, 0.2
      %v6400 = vmul.f32 %v6082, 0.2
      %v6401 = vmul.f32 %v6087, 0.2
      %v6402 = vmul.f32 %v6090, 0.2
      %v6403 = vmul.f32 %v6095, 0.2
      %v6404 = vmul.f32 %v6098, 0.2
      %v6405 = vmul.f32 %v6103, 0.2
      %v6406 = vmul.f32 %v6106, 0.2
      %v6407 = vmul.f32 %v6111, 0.2
      %v6408 = vmul.f32 %v6114, 0.2
      %v6409 = vmul.f32 %v6119, 0.2
      %v6410 = vmul.f32 %v6122, 0.2
      %v6411 = vmul.f32 %v6127, 0.2
      %v6412 = vmul.f32 %v6130, 0.2
      %v6413 = vmul.f32 %v6135, 0.2
      %v6414 = vmul.f32 %v6138, 0.2
      %v6415 = vmul.f32 %v6143, 0.2
      %v6416 = vmul.f32 %v6146, 0.2
      %v6417 = vmul.f32 %v6151, 0.2
      %v6418 = vmul.f32 %v6154, 0.2
      %v6419 = vmul.f32 %v6159, 0.2
      %v6420 = vmul.f32 %v6162, 0.2
      %v6421 = vmul.f32 %v6167, 0.2
      %v6422 = vmul.f32 %v6170, 0.2
      %v6423 = vmul.f32 %v6175, 0.2
      %v6424 = vmul.f32 %v6178, 0.2
      %v6425 = vmul.f32 %v6183, 0.2
      %v6426 = vmul.f32 %v6186, 0.2
      %v6427 = vmul.f32 %v6191, 0.2
      %v6428 = vmul.f32 %v6194, 0.2
      %v6429 = vmul.f32 %v6199, 0.2
      %v6430 = vmul.f32 %v6202, 0.2
      %v6431 = vmul.f32 %v6207, 0.2
      %v6432 = vmul.f32 %v6210, 0.2
      %v6433 = vmul.f32 %v6215, 0.2
      %v6434 = vmul.f32 %v6218, 0.2
      %v6435 = vmul.f32 %v6223, 0.2
      %v6436 = vmul.f32 %v6226, 0.2
      %v6437 = vmul.f32 %v6231, 0.2
      %v6438 = vmul.f32 %v6234, 0.2
      %v6439 = vmul.f32 %v6239, 0.2
      %v6440 = vmul.f32 %v6242, 0.2
      %v6441 = vsel %vm6245, %v5855, %v6343
      %v6442 = vsel %vm6246, %v5858, %v6344
      %v6443 = vsel %vm6247, %v5863, %v6345
      %v6444 = vsel %vm6248, %v5866, %v6346
      %v6445 = vsel %vm6249, %v5871, %v6347
      %v6446 = vsel %vm6250, %v5874, %v6348
      %v6447 = vsel %vm6251, %v5879, %v6349
      %v6448 = vsel %vm6252, %v5882, %v6350
      %v6449 = vsel %vm6253, %v5887, %v6351
      %v6450 = vsel %vm6254, %v5890, %v6352
      %v6451 = vsel %vm6255, %v5895, %v6353
      %v6452 = vsel %vm6256, %v5898, %v6354
      %v6453 = vsel %vm6257, %v5903, %v6355
      %v6454 = vsel %vm6258, %v5906, %v6356
      %v6455 = vsel %vm6259, %v5911, %v6357
      %v6456 = vsel %vm6260, %v5914, %v6358
      %v6457 = vsel %vm6261, %v5919, %v6359
      %v6458 = vsel %vm6262, %v5922, %v6360
      %v6459 = vsel %vm6263, %v5927, %v6361
      %v6460 = vsel %vm6264, %v5930, %v6362
      %v6461 = vsel %vm6265, %v5935, %v6363
      %v6462 = vsel %vm6266, %v5938, %v6364
      %v6463 = vsel %vm6267, %v5943, %v6365
      %v6464 = vsel %vm6268, %v5946, %v6366
      %v6465 = vsel %vm6269, %v5951, %v6367
      %v6466 = vsel %vm6270, %v5954, %v6368
      %v6467 = vsel %vm6271, %v5959, %v6369
      %v6468 = vsel %vm6272, %v5962, %v6370
      %v6469 = vsel %vm6273, %v5967, %v6371
      %v6470 = vsel %vm6274, %v5970, %v6372
      %v6471 = vsel %vm6275, %v5975, %v6373
      %v6472 = vsel %vm6276, %v5978, %v6374
      %v6473 = vsel %vm6277, %v5983, %v6375
      %v6474 = vsel %vm6278, %v5986, %v6376
      %v6475 = vsel %vm6279, %v5991, %v6377
      %v6476 = vsel %vm6280, %v5994, %v6378
      %v6477 = vsel %vm6281, %v5999, %v6379
      %v6478 = vsel %vm6282, %v6002, %v6380
      %v6479 = vsel %vm6283, %v6007, %v6381
      %v6480 = vsel %vm6284, %v6010, %v6382
      %v6481 = vsel %vm6285, %v6015, %v6383
      %v6482 = vsel %vm6286, %v6018, %v6384
      %v6483 = vsel %vm6287, %v6023, %v6385
      %v6484 = vsel %vm6288, %v6026, %v6386
      %v6485 = vsel %vm6289, %v6031, %v6387
      %v6486 = vsel %vm6290, %v6034, %v6388
      %v6487 = vsel %vm6291, %v6039, %v6389
      %v6488 = vsel %vm6292, %v6042, %v6390
      %v6489 = vsel %vm6293, %v6047, %v6391
      %v6490 = vsel %vm6294, %v6050, %v6392
      %v6491 = vsel %vm6295, %v6055, %v6393
      %v6492 = vsel %vm6296, %v6058, %v6394
      %v6493 = vsel %vm6297, %v6063, %v6395
      %v6494 = vsel %vm6298, %v6066, %v6396
      %v6495 = vsel %vm6299, %v6071, %v6397
      %v6496 = vsel %vm6300, %v6074, %v6398
      %v6497 = vsel %vm6301, %v6079, %v6399
      %v6498 = vsel %vm6302, %v6082, %v6400
      %v6499 = vsel %vm6303, %v6087, %v6401
      %v6500 = vsel %vm6304, %v6090, %v6402
      %v6501 = vsel %vm6305, %v6095, %v6403
      %v6502 = vsel %vm6306, %v6098, %v6404
      %v6503 = vsel %vm6307, %v6103, %v6405
      %v6504 = vsel %vm6308, %v6106, %v6406
      %v6505 = vsel %vm6309, %v6111, %v6407
      %v6506 = vsel %vm6310, %v6114, %v6408
      %v6507 = vsel %vm6311, %v6119, %v6409
      %v6508 = vsel %vm6312, %v6122, %v6410
      %v6509 = vsel %vm6313, %v6127, %v6411
      %v6510 = vsel %vm6314, %v6130, %v6412
      %v6511 = vsel %vm6315, %v6135, %v6413
      %v6512 = vsel %vm6316, %v6138, %v6414
      %v6513 = vsel %vm6317, %v6143, %v6415
      %v6514 = vsel %vm6318, %v6146, %v6416
      %v6515 = vsel %vm6319, %v6151, %v6417
      %v6516 = vsel %vm6320, %v6154, %v6418
      %v6517 = vsel %vm6321, %v6159, %v6419
      %v6518 = vsel %vm6322, %v6162, %v6420
      %v6519 = vsel %vm6323, %v6167, %v6421
      %v6520 = vsel %vm6324, %v6170, %v6422
      %v6521 = vsel %vm6325, %v6175, %v6423
      %v6522 = vsel %vm6326, %v6178, %v6424
      %v6523 = vsel %vm6327, %v6183, %v6425
      %v6524 = vsel %vm6328, %v6186, %v6426
      %v6525 = vsel %vm6329, %v6191, %v6427
      %v6526 = vsel %vm6330, %v6194, %v6428
      %v6527 = vsel %vm6331, %v6199, %v6429
      %v6528 = vsel %vm6332, %v6202, %v6430
      %v6529 = vsel %vm6333, %v6207, %v6431
      %v6530 = vsel %vm6334, %v6210, %v6432
      %v6531 = vsel %vm6335, %v6215, %v6433
      %v6532 = vsel %vm6336, %v6218, %v6434
      %v6533 = vsel %vm6337, %v6223, %v6435
      %v6534 = vsel %vm6338, %v6226, %v6436
      %v6535 = vsel %vm6339, %v6231, %v6437
      %v6536 = vsel %vm6340, %v6234, %v6438
      %v6537 = vsel %vm6341, %v6239, %v6439
      %v6538 = vsel %vm6342, %v6242, %v6440
      %v6539 = vld [vmem:[%s4] sm:$0xff]
      %v6540 = vld [vmem:[%s4 + $0x8] sm:$0xff]
      %v6541 = vld [vmem:[%s4 + $0x10] sm:$0xff]
      %v6542 = vld [vmem:[%s4 + $0x18] sm:$0xff]
      %v6543 = vld [vmem:[%s4 + $0x20] sm:$0xff]
      %v6544 = vld [vmem:[%s4 + $0x28] sm:$0xff]
      %v6545 = vld [vmem:[%s4 + $0x30] sm:$0xff]
      %v6546 = vld [vmem:[%s4 + $0x38] sm:$0xff]
      %v6547 = vld [vmem:[%s4 + $0x40] sm:$0xff]
      %v6548 = vld [vmem:[%s4 + $0x48] sm:$0xff]
      %v6549 = vld [vmem:[%s4 + $0x50] sm:$0xff]
      %v6550 = vld [vmem:[%s4 + $0x58] sm:$0xff]
      %v6551 = vld [vmem:[%s4 + $0x60] sm:$0xff]
      %v6552 = vld [vmem:[%s4 + $0x68] sm:$0xff]
      %v6553 = vld [vmem:[%s4 + $0x70] sm:$0xff]
      %v6554 = vld [vmem:[%s4 + $0x78] sm:$0xff]
      %v6555 = vld [vmem:[%s4 + $0x80] sm:$0xff]
      %v6556 = vld [vmem:[%s4 + $0x88] sm:$0xff]
      %v6557 = vld [vmem:[%s4 + $0x90] sm:$0xff]
      %v6558 = vld [vmem:[%s4 + $0x98] sm:$0xff]
      %v6559 = vld [vmem:[%s4 + $0xa0] sm:$0xff]
      %v6560 = vld [vmem:[%s4 + $0xa8] sm:$0xff]
      %v6561 = vld [vmem:[%s4 + $0xb0] sm:$0xff]
      %v6562 = vld [vmem:[%s4 + $0xb8] sm:$0xff]
      %v6563 = vld [vmem:[%s4 + $0xc0] sm:$0xff]
      %v6564 = vld [vmem:[%s4 + $0xc8] sm:$0xff]
      %v6565 = vld [vmem:[%s4 + $0xd0] sm:$0xff]
      %v6566 = vld [vmem:[%s4 + $0xd8] sm:$0xff]
      %v6567 = vld [vmem:[%s4 + $0xe0] sm:$0xff]
      %v6568 = vld [vmem:[%s4 + $0xe8] sm:$0xff]
      %v6569 = vld [vmem:[%s4 + $0xf0] sm:$0xff]
      %v6570 = vld [vmem:[%s4 + $0xf8] sm:$0xff]
      %v6571 = vld [vmem:[%s4 + $0x100] sm:$0xff]
      %v6572 = vld [vmem:[%s4 + $0x108] sm:$0xff]
      %v6573 = vld [vmem:[%s4 + $0x110] sm:$0xff]
      %v6574 = vld [vmem:[%s4 + $0x118] sm:$0xff]
      %v6575 = vld [vmem:[%s4 + $0x120] sm:$0xff]
      %v6576 = vld [vmem:[%s4 + $0x128] sm:$0xff]
      %v6577 = vld [vmem:[%s4 + $0x130] sm:$0xff]
      %v6578 = vld [vmem:[%s4 + $0x138] sm:$0xff]
      %v6579 = vld [vmem:[%s4 + $0x140] sm:$0xff]
      %v6580 = vld [vmem:[%s4 + $0x148] sm:$0xff]
      %v6581 = vld [vmem:[%s4 + $0x150] sm:$0xff]
      %v6582 = vld [vmem:[%s4 + $0x158] sm:$0xff]
      %v6583 = vld [vmem:[%s4 + $0x160] sm:$0xff]
      %v6584 = vld [vmem:[%s4 + $0x168] sm:$0xff]
      %v6585 = vld [vmem:[%s4 + $0x170] sm:$0xff]
      %v6586 = vld [vmem:[%s4 + $0x178] sm:$0xff]
      %v6587 = vld [vmem:[%s4 + $0x180] sm:$0xff]
      %v6588 = vld [vmem:[%s4 + $0x188] sm:$0xff]
      %v6589 = vld [vmem:[%s4 + $0x190] sm:$0xff]
      %v6590 = vld [vmem:[%s4 + $0x198] sm:$0xff]
      %v6591 = vld [vmem:[%s4 + $0x1a0] sm:$0xff]
      %v6592 = vld [vmem:[%s4 + $0x1a8] sm:$0xff]
      %v6593 = vld [vmem:[%s4 + $0x1b0] sm:$0xff]
      %v6594 = vld [vmem:[%s4 + $0x1b8] sm:$0xff]
      %v6595 = vld [vmem:[%s4 + $0x1c0] sm:$0xff]
      %v6596 = vld [vmem:[%s4 + $0x1c8] sm:$0xff]
      %v6597 = vld [vmem:[%s4 + $0x1d0] sm:$0xff]
      %v6598 = vld [vmem:[%s4 + $0x1d8] sm:$0xff]
      %v6599 = vld [vmem:[%s4 + $0x1e0] sm:$0xff]
      %v6600 = vld [vmem:[%s4 + $0x1e8] sm:$0xff]
      %v6601 = vld [vmem:[%s4 + $0x1f0] sm:$0xff]
      %v6602 = vld [vmem:[%s4 + $0x1f8] sm:$0xff]
      %v6603 = vld [vmem:[%s4 + $0x200] sm:$0xff]
      %v6604 = vld [vmem:[%s4 + $0x208] sm:$0xff]
      %v6605 = vld [vmem:[%s4 + $0x210] sm:$0xff]
      %v6606 = vld [vmem:[%s4 + $0x218] sm:$0xff]
      %v6607 = vld [vmem:[%s4 + $0x220] sm:$0xff]
      %v6608 = vld [vmem:[%s4 + $0x228] sm:$0xff]
      %v6609 = vld [vmem:[%s4 + $0x230] sm:$0xff]
      %v6610 = vld [vmem:[%s4 + $0x238] sm:$0xff]
      %v6611 = vld [vmem:[%s4 + $0x240] sm:$0xff]
      %v6612 = vld [vmem:[%s4 + $0x248] sm:$0xff]
      %v6613 = vld [vmem:[%s4 + $0x250] sm:$0xff]
      %v6614 = vld [vmem:[%s4 + $0x258] sm:$0xff]
      %v6615 = vld [vmem:[%s4 + $0x260] sm:$0xff]
      %v6616 = vld [vmem:[%s4 + $0x268] sm:$0xff]
      %v6617 = vld [vmem:[%s4 + $0x270] sm:$0xff]
      %v6618 = vld [vmem:[%s4 + $0x278] sm:$0xff]
      %v6619 = vld [vmem:[%s4 + $0x280] sm:$0xff]
      %v6620 = vld [vmem:[%s4 + $0x288] sm:$0xff]
      %v6621 = vld [vmem:[%s4 + $0x290] sm:$0xff]
      %v6622 = vld [vmem:[%s4 + $0x298] sm:$0xff]
      %v6623 = vld [vmem:[%s4 + $0x2a0] sm:$0xff]
      %v6624 = vld [vmem:[%s4 + $0x2a8] sm:$0xff]
      %v6625 = vld [vmem:[%s4 + $0x2b0] sm:$0xff]
      %v6626 = vld [vmem:[%s4 + $0x2b8] sm:$0xff]
      %v6627 = vld [vmem:[%s4 + $0x2c0] sm:$0xff]
      %v6628 = vld [vmem:[%s4 + $0x2c8] sm:$0xff]
      %v6629 = vld [vmem:[%s4 + $0x2d0] sm:$0xff]
      %v6630 = vld [vmem:[%s4 + $0x2d8] sm:$0xff]
      %v6631 = vld [vmem:[%s4 + $0x2e0] sm:$0xff]
      %v6632 = vld [vmem:[%s4 + $0x2e8] sm:$0xff]
      %v6633 = vld [vmem:[%s4 + $0x2f0] sm:$0xff]
      %v6634 = vld [vmem:[%s4 + $0x2f8] sm:$0xff]
      %v6635 = vld [vmem:[%s4 + $0x300] sm:$0xff]
      %v6636 = vld [vmem:[%s4 + $0x308] sm:$0xff]
      %v6637 = vmul.f32 %v6441, %v6539
      %v6638 = vmul.f32 %v6442, %v6540
      %v6639 = vmul.f32 %v6443, %v6541
      %v6640 = vmul.f32 %v6444, %v6542
      %v6641 = vmul.f32 %v6445, %v6543
      %v6642 = vmul.f32 %v6446, %v6544
      %v6643 = vmul.f32 %v6447, %v6545
      %v6644 = vmul.f32 %v6448, %v6546
      %v6645 = vmul.f32 %v6449, %v6547
      %v6646 = vmul.f32 %v6450, %v6548
      %v6647 = vmul.f32 %v6451, %v6549
      %v6648 = vmul.f32 %v6452, %v6550
      %v6649 = vmul.f32 %v6453, %v6551
      %v6650 = vmul.f32 %v6454, %v6552
      %v6651 = vmul.f32 %v6455, %v6553
      %v6652 = vmul.f32 %v6456, %v6554
      %v6653 = vmul.f32 %v6457, %v6555
      %v6654 = vmul.f32 %v6458, %v6556
      %v6655 = vmul.f32 %v6459, %v6557
      %v6656 = vmul.f32 %v6460, %v6558
      %v6657 = vmul.f32 %v6461, %v6559
      %v6658 = vmul.f32 %v6462, %v6560
      %v6659 = vmul.f32 %v6463, %v6561
      %v6660 = vmul.f32 %v6464, %v6562
      %v6661 = vmul.f32 %v6465, %v6563
      %v6662 = vmul.f32 %v6466, %v6564
      %v6663 = vmul.f32 %v6467, %v6565
      %v6664 = vmul.f32 %v6468, %v6566
      %v6665 = vmul.f32 %v6469, %v6567
      %v6666 = vmul.f32 %v6470, %v6568
      %v6667 = vmul.f32 %v6471, %v6569
      %v6668 = vmul.f32 %v6472, %v6570
      %v6669 = vmul.f32 %v6473, %v6571
      %v6670 = vmul.f32 %v6474, %v6572
      %v6671 = vmul.f32 %v6475, %v6573
      %v6672 = vmul.f32 %v6476, %v6574
      %v6673 = vmul.f32 %v6477, %v6575
      %v6674 = vmul.f32 %v6478, %v6576
      %v6675 = vmul.f32 %v6479, %v6577
      %v6676 = vmul.f32 %v6480, %v6578
      %v6677 = vmul.f32 %v6481, %v6579
      %v6678 = vmul.f32 %v6482, %v6580
      %v6679 = vmul.f32 %v6483, %v6581
      %v6680 = vmul.f32 %v6484, %v6582
      %v6681 = vmul.f32 %v6485, %v6583
      %v6682 = vmul.f32 %v6486, %v6584
      %v6683 = vmul.f32 %v6487, %v6585
      %v6684 = vmul.f32 %v6488, %v6586
      %v6685 = vmul.f32 %v6489, %v6587
      %v6686 = vmul.f32 %v6490, %v6588
      %v6687 = vmul.f32 %v6491, %v6589
      %v6688 = vmul.f32 %v6492, %v6590
      %v6689 = vmul.f32 %v6493, %v6591
      %v6690 = vmul.f32 %v6494, %v6592
      %v6691 = vmul.f32 %v6495, %v6593
      %v6692 = vmul.f32 %v6496, %v6594
      %v6693 = vmul.f32 %v6497, %v6595
      %v6694 = vmul.f32 %v6498, %v6596
      %v6695 = vmul.f32 %v6499, %v6597
      %v6696 = vmul.f32 %v6500, %v6598
      %v6697 = vmul.f32 %v6501, %v6599
      %v6698 = vmul.f32 %v6502, %v6600
      %v6699 = vmul.f32 %v6503, %v6601
      %v6700 = vmul.f32 %v6504, %v6602
      %v6701 = vmul.f32 %v6505, %v6603
      %v6702 = vmul.f32 %v6506, %v6604
      %v6703 = vmul.f32 %v6507, %v6605
      %v6704 = vmul.f32 %v6508, %v6606
      %v6705 = vmul.f32 %v6509, %v6607
      %v6706 = vmul.f32 %v6510, %v6608
      %v6707 = vmul.f32 %v6511, %v6609
      %v6708 = vmul.f32 %v6512, %v6610
      %v6709 = vmul.f32 %v6513, %v6611
      %v6710 = vmul.f32 %v6514, %v6612
      %v6711 = vmul.f32 %v6515, %v6613
      %v6712 = vmul.f32 %v6516, %v6614
      %v6713 = vmul.f32 %v6517, %v6615
      %v6714 = vmul.f32 %v6518, %v6616
      %v6715 = vmul.f32 %v6519, %v6617
      %v6716 = vmul.f32 %v6520, %v6618
      %v6717 = vmul.f32 %v6521, %v6619
      %v6718 = vmul.f32 %v6522, %v6620
      %v6719 = vmul.f32 %v6523, %v6621
      %v6720 = vmul.f32 %v6524, %v6622
      %v6721 = vmul.f32 %v6525, %v6623
      %v6722 = vmul.f32 %v6526, %v6624
      %v6723 = vmul.f32 %v6527, %v6625
      %v6724 = vmul.f32 %v6528, %v6626
      %v6725 = vmul.f32 %v6529, %v6627
      %v6726 = vmul.f32 %v6530, %v6628
      %v6727 = vmul.f32 %v6531, %v6629
      %v6728 = vmul.f32 %v6532, %v6630
      %v6729 = vmul.f32 %v6533, %v6631
      %v6730 = vmul.f32 %v6534, %v6632
      %v6731 = vmul.f32 %v6535, %v6633
      %v6732 = vmul.f32 %v6536, %v6634
      %v6733 = vmul.f32 %v6537, %v6635
      %v6734 = vmul.f32 %v6538, %v6636
      %6735 = vadd.xlane.f32.xlu0 %v6637
      %v6736 = vpop.xlane.xlu0 %6735
      %6737 = vadd.xlane.f32.xlu0 %v6638
      %v6738 = vpop.xlane.xlu0 %6737
      %6739 = vadd.xlane.f32.xlu0 %v6639
      %v6740 = vpop.xlane.xlu0 %6739
      %6741 = vadd.xlane.f32.xlu0 %v6640
      %v6742 = vpop.xlane.xlu0 %6741
      %6743 = vadd.xlane.f32.xlu0 %v6641
      %v6744 = vpop.xlane.xlu0 %6743
      %6745 = vadd.xlane.f32.xlu0 %v6642
      %v6746 = vpop.xlane.xlu0 %6745
      %6747 = vadd.xlane.f32.xlu0 %v6643
      %v6748 = vpop.xlane.xlu0 %6747
      %6749 = vadd.xlane.f32.xlu0 %v6644
      %v6750 = vpop.xlane.xlu0 %6749
      %6751 = vadd.xlane.f32.xlu0 %v6645
      %v6752 = vpop.xlane.xlu0 %6751
      %6753 = vadd.xlane.f32.xlu0 %v6646
      %v6754 = vpop.xlane.xlu0 %6753
      %6755 = vadd.xlane.f32.xlu0 %v6647
      %v6756 = vpop.xlane.xlu0 %6755
      %6757 = vadd.xlane.f32.xlu0 %v6648
      %v6758 = vpop.xlane.xlu0 %6757
      %6759 = vadd.xlane.f32.xlu0 %v6649
      %v6760 = vpop.xlane.xlu0 %6759
      %6761 = vadd.xlane.f32.xlu0 %v6650
      %v6762 = vpop.xlane.xlu0 %6761
      %6763 = vadd.xlane.f32.xlu0 %v6651
      %v6764 = vpop.xlane.xlu0 %6763
      %6765 = vadd.xlane.f32.xlu0 %v6652
      %v6766 = vpop.xlane.xlu0 %6765
      %6767 = vadd.xlane.f32.xlu0 %v6653
      %v6768 = vpop.xlane.xlu0 %6767
      %6769 = vadd.xlane.f32.xlu0 %v6654
      %v6770 = vpop.xlane.xlu0 %6769
      %6771 = vadd.xlane.f32.xlu0 %v6655
      %v6772 = vpop.xlane.xlu0 %6771
      %6773 = vadd.xlane.f32.xlu0 %v6656
      %v6774 = vpop.xlane.xlu0 %6773
      %6775 = vadd.xlane.f32.xlu0 %v6657
      %v6776 = vpop.xlane.xlu0 %6775
      %6777 = vadd.xlane.f32.xlu0 %v6658
      %v6778 = vpop.xlane.xlu0 %6777
      %6779 = vadd.xlane.f32.xlu0 %v6659
      %v6780 = vpop.xlane.xlu0 %6779
      %6781 = vadd.xlane.f32.xlu0 %v6660
      %v6782 = vpop.xlane.xlu0 %6781
      %6783 = vadd.xlane.f32.xlu0 %v6661
      %v6784 = vpop.xlane.xlu0 %6783
      %6785 = vadd.xlane.f32.xlu0 %v6662
      %v6786 = vpop.xlane.xlu0 %6785
      %6787 = vadd.xlane.f32.xlu0 %v6663
      %v6788 = vpop.xlane.xlu0 %6787
      %6789 = vadd.xlane.f32.xlu0 %v6664
      %v6790 = vpop.xlane.xlu0 %6789
      %6791 = vadd.xlane.f32.xlu0 %v6665
      %v6792 = vpop.xlane.xlu0 %6791
      %6793 = vadd.xlane.f32.xlu0 %v6666
      %v6794 = vpop.xlane.xlu0 %6793
      %6795 = vadd.xlane.f32.xlu0 %v6667
      %v6796 = vpop.xlane.xlu0 %6795
      %6797 = vadd.xlane.f32.xlu0 %v6668
      %v6798 = vpop.xlane.xlu0 %6797
      %6799 = vadd.xlane.f32.xlu0 %v6669
      %v6800 = vpop.xlane.xlu0 %6799
      %6801 = vadd.xlane.f32.xlu0 %v6670
      %v6802 = vpop.xlane.xlu0 %6801
      %6803 = vadd.xlane.f32.xlu0 %v6671
      %v6804 = vpop.xlane.xlu0 %6803
      %6805 = vadd.xlane.f32.xlu0 %v6672
      %v6806 = vpop.xlane.xlu0 %6805
      %6807 = vadd.xlane.f32.xlu0 %v6673
      %v6808 = vpop.xlane.xlu0 %6807
      %6809 = vadd.xlane.f32.xlu0 %v6674
      %v6810 = vpop.xlane.xlu0 %6809
      %6811 = vadd.xlane.f32.xlu0 %v6675
      %v6812 = vpop.xlane.xlu0 %6811
      %6813 = vadd.xlane.f32.xlu0 %v6676
      %v6814 = vpop.xlane.xlu0 %6813
      %6815 = vadd.xlane.f32.xlu0 %v6677
      %v6816 = vpop.xlane.xlu0 %6815
      %6817 = vadd.xlane.f32.xlu0 %v6678
      %v6818 = vpop.xlane.xlu0 %6817
      %6819 = vadd.xlane.f32.xlu0 %v6679
      %v6820 = vpop.xlane.xlu0 %6819
      %6821 = vadd.xlane.f32.xlu0 %v6680
      %v6822 = vpop.xlane.xlu0 %6821
      %6823 = vadd.xlane.f32.xlu0 %v6681
      %v6824 = vpop.xlane.xlu0 %6823
      %6825 = vadd.xlane.f32.xlu0 %v6682
      %v6826 = vpop.xlane.xlu0 %6825
      %6827 = vadd.xlane.f32.xlu0 %v6683
      %v6828 = vpop.xlane.xlu0 %6827
      %6829 = vadd.xlane.f32.xlu0 %v6684
      %v6830 = vpop.xlane.xlu0 %6829
      %6831 = vadd.xlane.f32.xlu0 %v6685
      %v6832 = vpop.xlane.xlu0 %6831
      %6833 = vadd.xlane.f32.xlu0 %v6686
      %v6834 = vpop.xlane.xlu0 %6833
      %6835 = vadd.xlane.f32.xlu0 %v6687
      %v6836 = vpop.xlane.xlu0 %6835
      %6837 = vadd.xlane.f32.xlu0 %v6688
      %v6838 = vpop.xlane.xlu0 %6837
      %6839 = vadd.xlane.f32.xlu0 %v6689
      %v6840 = vpop.xlane.xlu0 %6839
      %6841 = vadd.xlane.f32.xlu0 %v6690
      %v6842 = vpop.xlane.xlu0 %6841
      %6843 = vadd.xlane.f32.xlu0 %v6691
      %v6844 = vpop.xlane.xlu0 %6843
      %6845 = vadd.xlane.f32.xlu0 %v6692
      %v6846 = vpop.xlane.xlu0 %6845
      %6847 = vadd.xlane.f32.xlu0 %v6693
      %v6848 = vpop.xlane.xlu0 %6847
      %6849 = vadd.xlane.f32.xlu0 %v6694
      %v6850 = vpop.xlane.xlu0 %6849
      %6851 = vadd.xlane.f32.xlu0 %v6695
      %v6852 = vpop.xlane.xlu0 %6851
      %6853 = vadd.xlane.f32.xlu0 %v6696
      %v6854 = vpop.xlane.xlu0 %6853
      %6855 = vadd.xlane.f32.xlu0 %v6697
      %v6856 = vpop.xlane.xlu0 %6855
      %6857 = vadd.xlane.f32.xlu0 %v6698
      %v6858 = vpop.xlane.xlu0 %6857
      %6859 = vadd.xlane.f32.xlu0 %v6699
      %v6860 = vpop.xlane.xlu0 %6859
      %6861 = vadd.xlane.f32.xlu0 %v6700
      %v6862 = vpop.xlane.xlu0 %6861
      %6863 = vadd.xlane.f32.xlu0 %v6701
      %v6864 = vpop.xlane.xlu0 %6863
      %6865 = vadd.xlane.f32.xlu0 %v6702
      %v6866 = vpop.xlane.xlu0 %6865
      %6867 = vadd.xlane.f32.xlu0 %v6703
      %v6868 = vpop.xlane.xlu0 %6867
      %6869 = vadd.xlane.f32.xlu0 %v6704
      %v6870 = vpop.xlane.xlu0 %6869
      %6871 = vadd.xlane.f32.xlu0 %v6705
      %v6872 = vpop.xlane.xlu0 %6871
      %6873 = vadd.xlane.f32.xlu0 %v6706
      %v6874 = vpop.xlane.xlu0 %6873
      %6875 = vadd.xlane.f32.xlu0 %v6707
      %v6876 = vpop.xlane.xlu0 %6875
      %6877 = vadd.xlane.f32.xlu0 %v6708
      %v6878 = vpop.xlane.xlu0 %6877
      %6879 = vadd.xlane.f32.xlu0 %v6709
      %v6880 = vpop.xlane.xlu0 %6879
      %6881 = vadd.xlane.f32.xlu0 %v6710
      %v6882 = vpop.xlane.xlu0 %6881
      %6883 = vadd.xlane.f32.xlu0 %v6711
      %v6884 = vpop.xlane.xlu0 %6883
      %6885 = vadd.xlane.f32.xlu0 %v6712
      %v6886 = vpop.xlane.xlu0 %6885
      %6887 = vadd.xlane.f32.xlu0 %v6713
      %v6888 = vpop.xlane.xlu0 %6887
      %6889 = vadd.xlane.f32.xlu0 %v6714
      %v6890 = vpop.xlane.xlu0 %6889
      %6891 = vadd.xlane.f32.xlu0 %v6715
      %v6892 = vpop.xlane.xlu0 %6891
      %6893 = vadd.xlane.f32.xlu0 %v6716
      %v6894 = vpop.xlane.xlu0 %6893
      %6895 = vadd.xlane.f32.xlu0 %v6717
      %v6896 = vpop.xlane.xlu0 %6895
      %6897 = vadd.xlane.f32.xlu0 %v6718
      %v6898 = vpop.xlane.xlu0 %6897
      %6899 = vadd.xlane.f32.xlu0 %v6719
      %v6900 = vpop.xlane.xlu0 %6899
      %6901 = vadd.xlane.f32.xlu0 %v6720
      %v6902 = vpop.xlane.xlu0 %6901
      %6903 = vadd.xlane.f32.xlu0 %v6721
      %v6904 = vpop.xlane.xlu0 %6903
      %6905 = vadd.xlane.f32.xlu0 %v6722
      %v6906 = vpop.xlane.xlu0 %6905
      %6907 = vadd.xlane.f32.xlu0 %v6723
      %v6908 = vpop.xlane.xlu0 %6907
      %6909 = vadd.xlane.f32.xlu0 %v6724
      %v6910 = vpop.xlane.xlu0 %6909
      %6911 = vadd.xlane.f32.xlu0 %v6725
      %v6912 = vpop.xlane.xlu0 %6911
      %6913 = vadd.xlane.f32.xlu0 %v6726
      %v6914 = vpop.xlane.xlu0 %6913
      %6915 = vadd.xlane.f32.xlu0 %v6727
      %v6916 = vpop.xlane.xlu0 %6915
      %6917 = vadd.xlane.f32.xlu0 %v6728
      %v6918 = vpop.xlane.xlu0 %6917
      %6919 = vadd.xlane.f32.xlu0 %v6729
      %v6920 = vpop.xlane.xlu0 %6919
      %6921 = vadd.xlane.f32.xlu0 %v6730
      %v6922 = vpop.xlane.xlu0 %6921
      %6923 = vadd.xlane.f32.xlu0 %v6731
      %v6924 = vpop.xlane.xlu0 %6923
      %6925 = vadd.xlane.f32.xlu0 %v6732
      %v6926 = vpop.xlane.xlu0 %6925
      %6927 = vadd.xlane.f32.xlu0 %v6733
      %v6928 = vpop.xlane.xlu0 %6927
      %6929 = vadd.xlane.f32.xlu0 %v6734
      %v6930 = vpop.xlane.xlu0 %6929
      %v6931 = vld [vmem:[%s5] sm:$0xff]
      %v6932 = vld [vmem:[%s5 + $0x8] sm:$0xff]
      %v6933 = vld [vmem:[%s5 + $0x10] sm:$0xff]
      %v6934 = vld [vmem:[%s5 + $0x18] sm:$0xff]
      %v6935 = vld [vmem:[%s5 + $0x20] sm:$0xff]
      %v6936 = vld [vmem:[%s5 + $0x28] sm:$0xff]
      %v6937 = vld [vmem:[%s5 + $0x30] sm:$0xff]
      %v6938 = vld [vmem:[%s5 + $0x38] sm:$0xff]
      %v6939 = vld [vmem:[%s5 + $0x40] sm:$0xff]
      %v6940 = vld [vmem:[%s5 + $0x48] sm:$0xff]
      %v6941 = vld [vmem:[%s5 + $0x50] sm:$0xff]
      %v6942 = vld [vmem:[%s5 + $0x58] sm:$0xff]
      %v6943 = vld [vmem:[%s5 + $0x60] sm:$0xff]
      %v6944 = vld [vmem:[%s5 + $0x68] sm:$0xff]
      %v6945 = vld [vmem:[#allocation2] sm:$0x1]
      %v6947 = vlaneseq
      %v6948 = vshrl.u32 %v6947, 7
      %v6949 = vsub.s32 0, %v6948
      %v6950 = vrot.slane %v6945, %v6949
      %vm6952 = vcmask 130048
      %v6954 = vsel %vm6952, %v6937, 0
      %v6957 = vsel %vm6952, %v6944, 0
      %6959 = vmatprep.subr.mxu0 0.0
      %6960 = vmatpush1.msra.mxu0 %v6736
      %6961 = vmatprep.subr.mxu0 0.0
      %6962 = vmatpush1.msra.mxu0 %v6738
      %6963 = vmatprep.subr.mxu0 0.0
      %6964 = vmatpush1.msra.mxu0 %v6740
      %6965 = vmatprep.subr.mxu0 0.0
      %6966 = vmatpush1.msra.mxu0 %v6742
      %6967 = vmatprep.subr.mxu0 0.0
      %6968 = vmatpush1.msra.mxu0 %v6744
      %6969 = vmatprep.subr.mxu0 0.0
      %6970 = vmatpush1.msra.mxu0 %v6746
      %6971 = vmatprep.subr.mxu0 0.0
      %6972 = vmatpush1.msra.mxu0 %v6748
      %6973 = vmatprep.subr.mxu0 0.0
      %6974 = vmatpush1.msra.mxu0 %v6750
      %6975 = vmatprep.subr.mxu0 0.0
      %6976 = vmatpush1.msra.mxu0 %v6752
      %6977 = vmatprep.subr.mxu0 0.0
      %6978 = vmatpush1.msra.mxu0 %v6754
      %6979 = vmatprep.subr.mxu0 0.0
      %6980 = vmatpush1.msra.mxu0 %v6756
      %6981 = vmatprep.subr.mxu0 0.0
      %6982 = vmatpush1.msra.mxu0 %v6758
      %6983 = vmatprep.subr.mxu0 0.0
      %6984 = vmatpush1.msra.mxu0 %v6760
      %6985 = vmatprep.subr.mxu0 0.0
      %6986 = vmatpush1.msra.mxu0 %v6762
      %6987 = vmatprep.subr.mxu0 0.0
      %6988 = vmatpush1.msra.mxu0 %v6764
      %6989 = vmatprep.subr.mxu0 0.0
      %6990 = vmatpush1.msra.mxu0 %v6766
      %6991 = vmatprep.subr.mxu0 0.0
      %6992 = vmatpush1.msra.mxu0 %v6768
      %6993 = vmatprep.subr.mxu0 0.0
      %6994 = vmatpush1.msra.mxu0 %v6770
      %6995 = vmatprep.subr.mxu0 0.0
      %6996 = vmatpush1.msra.mxu0 %v6772
      %6997 = vmatprep.subr.mxu0 0.0
      %6998 = vmatpush1.msra.mxu0 %v6774
      %6999 = vmatprep.subr.mxu0 0.0
      %7000 = vmatpush1.msra.mxu0 %v6776
      %7001 = vmatprep.subr.mxu0 0.0
      %7002 = vmatpush1.msra.mxu0 %v6778
      %7003 = vmatprep.subr.mxu0 0.0
      %7004 = vmatpush1.msra.mxu0 %v6780
      %7005 = vmatprep.subr.mxu0 0.0
      %7006 = vmatpush1.msra.mxu0 %v6782
      %7007 = vmatprep.subr.mxu0 0.0
      %7008 = vmatpush1.msra.mxu0 %v6784
      %7009 = vmatprep.subr.mxu0 0.0
      %7010 = vmatpush1.msra.mxu0 %v6786
      %7011 = vmatprep.subr.mxu0 0.0
      %7012 = vmatpush1.msra.mxu0 %v6788
      %7013 = vmatprep.subr.mxu0 0.0
      %7014 = vmatpush1.msra.mxu0 %v6790
      %7015 = vmatprep.subr.mxu0 0.0
      %7016 = vmatpush1.msra.mxu0 %v6792
      %7017 = vmatprep.subr.mxu0 0.0
      %7018 = vmatpush1.msra.mxu0 %v6794
      %7019 = vmatprep.subr.mxu0 0.0
      %7020 = vmatpush1.msra.mxu0 %v6796
      %7021 = vmatprep.subr.mxu0 0.0
      %7022 = vmatpush1.msra.mxu0 %v6798
      %7023 = vmatprep.mubr.f32.mxu0 %v6932
      %7024 = vmatmul.mubr.f32.gmra.mrb[0].mxu0 %v6931
      %v7025 = vpop.f32.mrb[0].mxu0
      %v7026 = vadd.f32 %v6950, %v7025
      %v7027 = vpop.f32.mrb[0].mxu0
      %7028 = vmatprep.mubr.f32.mxu0 %v6939
      %7029 = vmatmul.mubr.f32.gmra.mrb[0].mxu0 %v6938
      %v7030 = vpop.f32.mrb[0].mxu0
      %v7031 = vadd.f32 %v6950, %v7030
      %v7032 = vpop.f32.mrb[0].mxu0
      %7033 = vdwg.mxu0
      %7034 = vmatprep.subr.mxu0 0.0
      %7035 = vmatpush1.msra.mxu0 %v6800
      %7036 = vmatprep.subr.mxu0 0.0
      %7037 = vmatpush1.msra.mxu0 %v6802
      %7038 = vmatprep.subr.mxu0 0.0
      %7039 = vmatpush1.msra.mxu0 %v6804
      %7040 = vmatprep.subr.mxu0 0.0
      %7041 = vmatpush1.msra.mxu0 %v6806
      %7042 = vmatprep.subr.mxu0 0.0
      %7043 = vmatpush1.msra.mxu0 %v6808
      %7044 = vmatprep.subr.mxu0 0.0
      %7045 = vmatpush1.msra.mxu0 %v6810
      %7046 = vmatprep.subr.mxu0 0.0
      %7047 = vmatpush1.msra.mxu0 %v6812
      %7048 = vmatprep.subr.mxu0 0.0
      %7049 = vmatpush1.msra.mxu0 %v6814
      %7050 = vmatprep.subr.mxu0 0.0
      %7051 = vmatpush1.msra.mxu0 %v6816
      %7052 = vmatprep.subr.mxu0 0.0
      %7053 = vmatpush1.msra.mxu0 %v6818
      %7054 = vmatprep.subr.mxu0 0.0
      %7055 = vmatpush1.msra.mxu0 %v6820
      %7056 = vmatprep.subr.mxu0 0.0
      %7057 = vmatpush1.msra.mxu0 %v6822
      %7058 = vmatprep.subr.mxu0 0.0
      %7059 = vmatpush1.msra.mxu0 %v6824
      %7060 = vmatprep.subr.mxu0 0.0
      %7061 = vmatpush1.msra.mxu0 %v6826
      %7062 = vmatprep.subr.mxu0 0.0
      %7063 = vmatpush1.msra.mxu0 %v6828
      %7064 = vmatprep.subr.mxu0 0.0
      %7065 = vmatpush1.msra.mxu0 %v6830
      %7066 = vmatprep.subr.mxu0 0.0
      %7067 = vmatpush1.msra.mxu0 %v6832
      %7068 = vmatprep.subr.mxu0 0.0
      %7069 = vmatpush1.msra.mxu0 %v6834
      %7070 = vmatprep.subr.mxu0 0.0
      %7071 = vmatpush1.msra.mxu0 %v6836
      %7072 = vmatprep.subr.mxu0 0.0
      %7073 = vmatpush1.msra.mxu0 %v6838
      %7074 = vmatprep.subr.mxu0 0.0
      %7075 = vmatpush1.msra.mxu0 %v6840
      %7076 = vmatprep.subr.mxu0 0.0
      %7077 = vmatpush1.msra.mxu0 %v6842
      %7078 = vmatprep.subr.mxu0 0.0
      %7079 = vmatpush1.msra.mxu0 %v6844
      %7080 = vmatprep.subr.mxu0 0.0
      %7081 = vmatpush1.msra.mxu0 %v6846
      %7082 = vmatprep.subr.mxu0 0.0
      %7083 = vmatpush1.msra.mxu0 %v6848
      %7084 = vmatprep.subr.mxu0 0.0
      %7085 = vmatpush1.msra.mxu0 %v6850
      %7086 = vmatprep.subr.mxu0 0.0
      %7087 = vmatpush1.msra.mxu0 %v6852
      %7088 = vmatprep.subr.mxu0 0.0
      %7089 = vmatpush1.msra.mxu0 %v6854
      %7090 = vmatprep.subr.mxu0 0.0
      %7091 = vmatpush1.msra.mxu0 %v6856
      %7092 = vmatprep.subr.mxu0 0.0
      %7093 = vmatpush1.msra.mxu0 %v6858
      %7094 = vmatprep.subr.mxu0 0.0
      %7095 = vmatpush1.msra.mxu0 %v6860
      %7096 = vmatprep.subr.mxu0 0.0
      %7097 = vmatpush1.msra.mxu0 %v6862
      %7098 = vmatprep.mubr.f32.mxu0 %v6934
      %7099 = vmatmul.mubr.f32.gmra.mrb[0].mxu0 %v6933
      %v7100 = vpop.f32.mrb[0].mxu0
      %v7101 = vadd.f32 %v7026, %v7100
      %v7102 = vpop.f32.mrb[0].mxu0
      %7103 = vmatprep.mubr.f32.mxu0 %v6941
      %7104 = vmatmul.mubr.f32.gmra.mrb[0].mxu0 %v6940
      %v7105 = vpop.f32.mrb[0].mxu0
      %v7106 = vadd.f32 %v7031, %v7105
      %v7107 = vpop.f32.mrb[0].mxu0
      %7108 = vdwg.mxu0
      %7109 = vmatprep.subr.mxu0 0.0
      %7110 = vmatpush1.msra.mxu0 %v6864
      %7111 = vmatprep.subr.mxu0 0.0
      %7112 = vmatpush1.msra.mxu0 %v6866
      %7113 = vmatprep.subr.mxu0 0.0
      %7114 = vmatpush1.msra.mxu0 %v6868
      %7115 = vmatprep.subr.mxu0 0.0
      %7116 = vmatpush1.msra.mxu0 %v6870
      %7117 = vmatprep.subr.mxu0 0.0
      %7118 = vmatpush1.msra.mxu0 %v6872
      %7119 = vmatprep.subr.mxu0 0.0
      %7120 = vmatpush1.msra.mxu0 %v6874
      %7121 = vmatprep.subr.mxu0 0.0
      %7122 = vmatpush1.msra.mxu0 %v6876
      %7123 = vmatprep.subr.mxu0 0.0
      %7124 = vmatpush1.msra.mxu0 %v6878
      %7125 = vmatprep.subr.mxu0 0.0
      %7126 = vmatpush1.msra.mxu0 %v6880
      %7127 = vmatprep.subr.mxu0 0.0
      %7128 = vmatpush1.msra.mxu0 %v6882
      %7129 = vmatprep.subr.mxu0 0.0
      %7130 = vmatpush1.msra.mxu0 %v6884
      %7131 = vmatprep.subr.mxu0 0.0
      %7132 = vmatpush1.msra.mxu0 %v6886
      %7133 = vmatprep.subr.mxu0 0.0
      %7134 = vmatpush1.msra.mxu0 %v6888
      %7135 = vmatprep.subr.mxu0 0.0
      %7136 = vmatpush1.msra.mxu0 %v6890
      %7137 = vmatprep.subr.mxu0 0.0
      %7138 = vmatpush1.msra.mxu0 %v6892
      %7139 = vmatprep.subr.mxu0 0.0
      %7140 = vmatpush1.msra.mxu0 %v6894
      %7141 = vmatprep.subr.mxu0 0.0
      %7142 = vmatpush1.msra.mxu0 %v6896
      %7143 = vmatprep.subr.mxu0 0.0
      %7144 = vmatpush1.msra.mxu0 %v6898
      %7145 = vmatprep.subr.mxu0 0.0
      %7146 = vmatpush1.msra.mxu0 %v6900
      %7147 = vmatprep.subr.mxu0 0.0
      %7148 = vmatpush1.msra.mxu0 %v6902
      %7149 = vmatprep.subr.mxu0 0.0
      %7150 = vmatpush1.msra.mxu0 %v6904
      %7151 = vmatprep.subr.mxu0 0.0
      %7152 = vmatpush1.msra.mxu0 %v6906
      %7153 = vmatprep.subr.mxu0 0.0
      %7154 = vmatpush1.msra.mxu0 %v6908
      %7155 = vmatprep.subr.mxu0 0.0
      %7156 = vmatpush1.msra.mxu0 %v6910
      %7157 = vmatprep.subr.mxu0 0.0
      %7158 = vmatpush1.msra.mxu0 %v6912
      %7159 = vmatprep.subr.mxu0 0.0
      %7160 = vmatpush1.msra.mxu0 %v6914
      %7161 = vmatprep.subr.mxu0 0.0
      %7162 = vmatpush1.msra.mxu0 %v6916
      %7163 = vmatprep.subr.mxu0 0.0
      %7164 = vmatpush1.msra.mxu0 %v6918
      %7165 = vmatprep.subr.mxu0 0.0
      %7166 = vmatpush1.msra.mxu0 %v6920
      %7167 = vmatprep.subr.mxu0 0.0
      %7168 = vmatpush1.msra.mxu0 %v6922
      %7169 = vmatprep.subr.mxu0 0.0
      %7170 = vmatpush1.msra.mxu0 %v6924
      %7171 = vmatprep.subr.mxu0 0.0
      %7172 = vmatpush1.msra.mxu0 %v6926
      %7173 = vmatprep.mubr.f32.mxu0 %v6936
      %7174 = vmatmul.mubr.f32.gmra.mrb[0].mxu0 %v6935
      %v7175 = vpop.f32.mrb[0].mxu0
      %v7176 = vadd.f32 %v7101, %v7175
      %v7177 = vpop.f32.mrb[0].mxu0
      %7178 = vmatprep.mubr.f32.mxu0 %v6943
      %7179 = vmatmul.mubr.f32.gmra.mrb[0].mxu0 %v6942
      %v7180 = vpop.f32.mrb[0].mxu0
      %v7181 = vadd.f32 %v7106, %v7180
      %v7182 = vpop.f32.mrb[0].mxu0
      %7183 = vdwg.mxu0
      %7184 = vmatprep.subr.mxu0 0.0
      %7185 = vmatpush1.msra.mxu0 %v6928
      %7186 = vmatprep.subr.mxu0 0.0
      %7187 = vmatpush1.msra.mxu0 %v6930
      %7188 = vmatprep.subr.mxu0 0.0
      %7189 = vmatpush1.msra.mxu0 0.0
      %7190 = vmatprep.subr.mxu0 0.0
      %7191 = vmatpush1.msra.mxu0 0.0
      %7192 = vmatprep.subr.mxu0 0.0
      %7193 = vmatpush1.msra.mxu0 0.0
      %7194 = vmatprep.subr.mxu0 0.0
      %7195 = vmatpush1.msra.mxu0 0.0
      %7196 = vmatprep.subr.mxu0 0.0
      %7197 = vmatpush1.msra.mxu0 0.0
      %7198 = vmatprep.subr.mxu0 0.0
      %7199 = vmatpush1.msra.mxu0 0.0
      %7200 = vmatprep.subr.mxu0 0.0
      %7201 = vmatpush1.msra.mxu0 0.0
      %7202 = vmatprep.subr.mxu0 0.0
      %7203 = vmatpush1.msra.mxu0 0.0
      %7204 = vmatprep.subr.mxu0 0.0
      %7205 = vmatpush1.msra.mxu0 0.0
      %7206 = vmatprep.subr.mxu0 0.0
      %7207 = vmatpush1.msra.mxu0 0.0
      %7208 = vmatprep.subr.mxu0 0.0
      %7209 = vmatpush1.msra.mxu0 0.0
      %7210 = vmatprep.subr.mxu0 0.0
      %7211 = vmatpush1.msra.mxu0 0.0
      %7212 = vmatprep.subr.mxu0 0.0
      %7213 = vmatpush1.msra.mxu0 0.0
      %7214 = vmatprep.subr.mxu0 0.0
      %7215 = vmatpush1.msra.mxu0 0.0
      %7216 = vmatprep.subr.mxu0 0.0
      %7217 = vmatpush1.msra.mxu0 0.0
      %7218 = vmatprep.subr.mxu0 0.0
      %7219 = vmatpush1.msra.mxu0 0.0
      %7220 = vmatprep.subr.mxu0 0.0
      %7221 = vmatpush1.msra.mxu0 0.0
      %7222 = vmatprep.subr.mxu0 0.0
      %7223 = vmatpush1.msra.mxu0 0.0
      %7224 = vmatprep.subr.mxu0 0.0
      %7225 = vmatpush1.msra.mxu0 0.0
      %7226 = vmatprep.subr.mxu0 0.0
      %7227 = vmatpush1.msra.mxu0 0.0
      %7228 = vmatprep.subr.mxu0 0.0
      %7229 = vmatpush1.msra.mxu0 0.0
      %7230 = vmatprep.subr.mxu0 0.0
      %7231 = vmatpush1.msra.mxu0 0.0
      %7232 = vmatprep.subr.mxu0 0.0
      %7233 = vmatpush1.msra.mxu0 0.0
      %7234 = vmatprep.subr.mxu0 0.0
      %7235 = vmatpush1.msra.mxu0 0.0
      %7236 = vmatprep.subr.mxu0 0.0
      %7237 = vmatpush1.msra.mxu0 0.0
      %7238 = vmatprep.subr.mxu0 0.0
      %7239 = vmatpush1.msra.mxu0 0.0
      %7240 = vmatprep.subr.mxu0 0.0
      %7241 = vmatpush1.msra.mxu0 0.0
      %7242 = vmatprep.subr.mxu0 0.0
      %7243 = vmatpush1.msra.mxu0 0.0
      %7244 = vmatprep.subr.mxu0 0.0
      %7245 = vmatpush1.msra.mxu0 0.0
      %7246 = vmatprep.subr.mxu0 0.0
      %7247 = vmatpush1.msra.mxu0 0.0
      %7248 = vmatprep.mubr.f32.mxu0 0.0
      %7249 = vmatmul.mubr.f32.gmra.mrb[0].mxu0 %v6954
      %v7250 = vpop.f32.mrb[0].mxu0
      %v7251 = vadd.f32 %v7176, %v7250
      %v7252 = vpop.f32.mrb[0].mxu0
      %7253 = vmatprep.mubr.f32.mxu0 0.0
      %7254 = vmatmul.mubr.f32.gmra.mrb[0].mxu0 %v6957
      %v7255 = vpop.f32.mrb[0].mxu0
      %v7256 = vadd.f32 %v7181, %v7255
      %v7257 = vpop.f32.mrb[0].mxu0
      %7258 = vdwg.mxu0
      %v7259 = vsub.f32 0.0, %v7251
      %v7260 = vsub.f32 0.0, %v7256
      %v7261 = vmul.f32 %v7259, 1.442695
      %v7262 = vpow.pop %v7261
      %v7263 = vmul.f32 %v7260, 1.442695
      %v7264 = vpow.pop %v7263
      %v7265 = vadd.f32 %v7262, 1.0
      %v7266 = vadd.f32 %v7264, 1.0
      %v7267 = vrcp.pop %v7265
      %v7268 = vrcp.pop %v7266
      %vm7269 = vcmask 7168
      %7270 = vst.msk [vmem:[%s285] sm:$0xff] %vm7269, %v7267
      %7271 = vst.msk [vmem:[%s285 + $0x8] sm:$0xff] %vm7269, %v7268
      %s7272 = smul.u32 2, %s20
      %p7273 = scmp.lt.s32.totalorder %s7272, 3
      %s7274 = scalar_select %p7273, %s7272, 3
      %s7275 = smul.addr %s7274, 8
      %s7276 = scalar_lea.vmem %s7, %s7275
      // Predicated region
      $region49: #{discriminator_forward.1} parent=47 // pred_check
        %p7277 = pneg %p190
      $region50: #{discriminator_forward.1} parent=47 // pred_check_branch
        %7279 = sbr.rel (%p7277) target = $region52
      $region51: #{discriminator_forward.1} parent=47 // pred_region
        %s7280 = smul.u32 2, %s20
      $region52: #{discriminator_forward.1} parent=47 // pred_fallthru
        _
    $region48: #{discriminator_forward.1} parent=5 // pred_fallthru
      _
    %p7281 = scmp.le.s32.totalorder 2, %s15
    // Predicated region
    $region53: #{discriminator_forward.1} parent=5 // pred_check
      %p7282 = pneg %p7281
    $region54: #{discriminator_forward.1} parent=5 // pred_check_branch
      %7284 = sbr.rel (%p7282) target = $region56
    $region55: #{discriminator_forward.1} parent=5 // pred_region
      %s7285 = ssub.s32 %s15, 2
      // Predicated region
      $region57: #{discriminator_forward.1} parent=55 // pred_check
        %p7286 = pneg %p196
      $region58: #{discriminator_forward.1} parent=55 // pred_check_branch
        %7288 = sbr.rel (%p7286) target = $region60
      $region59: #{discriminator_forward.1} parent=55 // pred_region
        %s7289 = smul.u32 2, %s21
        %p7290 = scmp.lt.s32.totalorder %s7289, 3
        %s7291 = scalar_select %p7290, %s7289, 3
        %s7292 = smul.addr %s7291, 8
        %s7293 = scalar_lea.vmem %s7, %s7292
      $region60: #{discriminator_forward.1} parent=55 // pred_fallthru
        _
    $region56: #{discriminator_forward.1} parent=5 // pred_fallthru
      _
  $region6: #{discriminator_forward.1} parent=0 // loop_footer
    %s19 = sadd.s32 1, %s15
  $region7: #{discriminator_forward.1} parent=0 // loop_footer_branch
    %14 = sbr.rel target = $region3
  $region8: #{discriminator_forward.1} parent=0 // loop_exit
    _

</llo_original>
